<compile_context>
chip_gen: v7x
topology: tpu7x:2x2x1
jax: 0.10.0
libtpu: 0.0.40
codegen_flags: <defaults>
</compile_context>

<pallas_src>
import functools

import jax
import jax.numpy as jnp
from jax.experimental import pallas as pl
from jax.experimental.pallas import tpu as pltpu

BN_EPS = 1e-5
LANE = 128

_LAYER_CFG = (
    # (weight, stride, pad, BN gamma, BN beta) -- mirrors the nn.Sequential order.
    ("w1", 1, 0, "g1", "b1"),
    ("w2", 2, 1, "g2", "b2"),
    ("w3", 2, 1, "g3", "b3"),
    ("w4", 2, 1, "g4", "b4"),
    ("w5", 1, 1, None, None),
)


def _round_up(x, m):
    return (x + m - 1) // m * m


# ---------------------------------------------------------------------------
# Pallas kernels.  Each layer's whole problem fits in a single VMEM block
# (largest operand: 2048x256 bf16 = 1 MiB), so grid=(1,) keeps x, w and the f32
# accumulator VMEM-resident and the kernel sees the full batch for the BN stats.
# ---------------------------------------------------------------------------
def _conv_bn_relu_kernel(x_ref, w_ref, g_ref, b_ref, o_ref):
    # bf16 MXU matmul with f32 accumulation.
    y = jnp.dot(x_ref[...], w_ref[...], preferred_element_type=jnp.float32)
    # Training-mode BatchNorm (biased variance over all N*H*W rows), in-kernel.
    mean = jnp.mean(y, axis=0, keepdims=True)
    var = jnp.mean(jnp.square(y - mean), axis=0, keepdims=True)
    scale = g_ref[...] * jax.lax.rsqrt(var + BN_EPS)
    shift = b_ref[...] - mean * scale
    o_ref[...] = jnp.maximum(y * scale + shift, 0.0).astype(o_ref.dtype)


def _conv_tanh_kernel(x_ref, w_ref, o_ref):
    y = jnp.dot(x_ref[...], w_ref[...], preferred_element_type=jnp.float32)
    o_ref[...] = jnp.tanh(y).astype(o_ref.dtype)


def _layer_call(x_rows, wpack, gamma=None, beta=None, out_dtype=jnp.bfloat16):
    m, kdim = x_rows.shape
    cpack = wpack.shape[1]
    # TODO(synk): for larger batch/feature_maps, tile M on an "arbitrary" grid axis
    # with two-pass/Welford BN stats and budget resident blocks <= ~24 MiB (v7x VMEM).
    full = lambda i: (0, 0)
    x_spec = pl.BlockSpec((m, kdim), full)
    w_spec = pl.BlockSpec((kdim, cpack), full)
    o_spec = pl.BlockSpec((m, cpack), full)
    cparams = pltpu.CompilerParams(dimension_semantics=("arbitrary",))
    if gamma is None:
        return pl.pallas_call(
            _conv_tanh_kernel,
            out_shape=jax.ShapeDtypeStruct((m, cpack), out_dtype),
            grid=(1,),
            in_specs=[x_spec, w_spec],
            out_specs=o_spec,
            compiler_params=cparams,
        )(x_rows, wpack)
    v_spec = pl.BlockSpec((1, cpack), full)
    return pl.pallas_call(
        _conv_bn_relu_kernel,
        out_shape=jax.ShapeDtypeStruct((m, cpack), out_dtype),
        grid=(1,),
        in_specs=[x_spec, w_spec, v_spec, v_spec],
        out_specs=o_spec,
        compiler_params=cparams,
    )(x_rows, wpack, gamma, beta)


# ---------------------------------------------------------------------------
# Gather-only XLA glue (no scatters): zero-dilation + padding turns each
# ConvTranspose2d into a stride-1 VALID convolution; im2col builds the
# lane-dense (M, k*k*Cin) matmul operand.
# ---------------------------------------------------------------------------
def _dilate_pad(x_nhwc, k, stride, pad):
    e = k - 1 - pad
    cfg = [(0, 0, 0), (e, e, stride - 1), (e, e, stride - 1), (0, 0, 0)]
    return jax.lax.pad(x_nhwc, jnp.zeros((), x_nhwc.dtype), cfg)


def _im2col(xp, k, ho, wo):
    n, _, _, c = xp.shape
    taps = [xp[:, i:i + ho, j:j + wo, :] for i in range(k) for j in range(k)]
    cols = jnp.concatenate(taps, axis=-1).reshape(n * ho * wo, k * k * c)
    kpad = _round_up(k * k * c, LANE)
    if kpad != k * k * c:
        cols = jnp.pad(cols, ((0, 0), (0, kpad - k * k * c)))
    return cols


# ---------------------------------------------------------------------------
# One-time parameter packing (hoisted out of the forward, per perf review).
# ---------------------------------------------------------------------------
def pack_generator_params(params):
    """ConvTranspose2d weights -> flipped, (kh,kw,cin) x cout, lane-padded bf16
    matmul operands; BN gamma/beta -> zero-padded (1, 128) f32 rows.
    Returns (packed pytree, static layer config)."""
    packed, cfg = {}, []
    for wname, stride, pad, gname, bname in _LAYER_CFG:
        w = params[wname]                                    # (Cin, Cout, kH, kW)
        cin, cout, kh, kw = (int(s) for s in w.shape)
        wf = w[:, :, ::-1, ::-1]                             # ConvT -> Conv kernel flip
        wm = jnp.transpose(wf, (2, 3, 0, 1)).reshape(kh * kw * cin, cout)
        kdim = _round_up(kh * kw * cin, LANE)
        cpack = _round_up(cout, LANE)
        wm = jnp.pad(wm, ((0, kdim - kh * kw * cin), (0, cpack - cout)))
        packed[wname] = wm.astype(jnp.bfloat16)
        if gname is not None:
            packed[gname] = jnp.pad(params[gname], (0, cpack - cout)
                                    ).reshape(1, cpack).astype(jnp.float32)
            packed[bname] = jnp.pad(params[bname], (0, cpack - cout)
                                    ).reshape(1, cpack).astype(jnp.float32)
        cfg.append((wname, gname, bname, kh, cout, stride, pad))
    return packed, tuple(cfg)


# ---------------------------------------------------------------------------
# Generator forward (matches the PyTorch nn.Sequential, training-mode BN).
# ---------------------------------------------------------------------------
@functools.partial(jax.jit, static_argnums=(2,))
def generator_forward(x_nchw, packed, cfg):
    n = x_nchw.shape[0]
    a = jnp.transpose(x_nchw, (0, 2, 3, 1)).astype(jnp.bfloat16)   # NHWC activations
    for wname, gname, bname, k, cout, stride, pad in cfg:
        h, w = a.shape[1], a.shape[2]
        ho = (h - 1) * stride + k - 2 * pad
        wo = (w - 1) * stride + k - 2 * pad
        cols = _im2col(_dilate_pad(a, k, stride, pad), k, ho, wo)
        if gname is not None:
            y = _layer_call(cols, packed[wname], packed[gname], packed[bname],
                            out_dtype=jnp.bfloat16)
        else:
            y = _layer_call(cols, packed[wname], out_dtype=jnp.float32)
        a = y.reshape(n, ho, wo, -1)[:, :, :, :cout]               # drop lane padding
    return jnp.transpose(a, (0, 3, 1, 2))                          # NHWC -> NCHW


# ---------------------------------------------------------------------------
# Pure-JAX/XLA f32 reference for correctness checking.
# ---------------------------------------------------------------------------
def _convt_ref(x, w, stride, pad):
    k = w.shape[2]
    w_conv = jnp.transpose(w[:, :, ::-1, ::-1], (1, 0, 2, 3))       # (Cout, Cin, k, k)
    return jax.lax.conv_general_dilated(
        x, w_conv, window_strides=(1, 1),
        padding=[(k - 1 - pad, k - 1 - pad)] * 2,
        lhs_dilation=(stride, stride),
        dimension_numbers=("NCHW", "OIHW", "NCHW"))


def _bn_relu_ref(y, g, b):
    mean = y.mean(axis=(0, 2, 3), keepdims=True)
    var = jnp.square(y - mean).mean(axis=(0, 2, 3), keepdims=True)
    yhat = (y - mean) / jnp.sqrt(var + BN_EPS)
    return jnp.maximum(yhat * g.reshape(1, -1, 1, 1) + b.reshape(1, -1, 1, 1), 0.0)


def generator_reference(x, p):
    y = _bn_relu_ref(_convt_ref(x, p["w1"], 1, 0), p["g1"], p["b1"])
    y = _bn_relu_ref(_convt_ref(y, p["w2"], 2, 1), p["g2"], p["b2"])
    y = _bn_relu_ref(_convt_ref(y, p["w3"], 2, 1), p["g3"], p["b3"])
    y = _bn_relu_ref(_convt_ref(y, p["w4"], 2, 1), p["g4"], p["b4"])
    return jnp.tanh(_convt_ref(y, p["w5"], 1, 1))


# ---------------------------------------------------------------------------
# Main
# ---------------------------------------------------------------------------
if __name__ == "__main__":
    # Small config: input_dim=16, feature_maps=8, img_channels=3, batch=2.
    input_dim, fm, img_ch, batch = 16, 8, 3, 2

    key = jax.random.PRNGKey(0)
    ks = jax.random.split(key, 16)

    def nrm(k, shape, scale=0.05):
        return (scale * jax.random.normal(k, shape)).astype(jnp.float32)

    params = {
        # ConvTranspose2d weights: (C_in, C_out, kH, kW), bias=False
        "w1": nrm(ks[0], (input_dim, fm * 8, 4, 4)),
        "w2": nrm(ks[1], (fm * 8, fm * 4, 4, 4)),
        "w3": nrm(ks[2], (fm * 4, fm * 2, 4, 4)),
        "w4": nrm(ks[3], (fm * 2, fm, 4, 4)),
        "w5": nrm(ks[4], (fm, img_ch, 3, 3)),
        # BatchNorm affine params
        "g1": (1.0 + nrm(ks[5], (fm * 8,), 0.1)), "b1": nrm(ks[6], (fm * 8,), 0.1),
        "g2": (1.0 + nrm(ks[7], (fm * 4,), 0.1)), "b2": nrm(ks[8], (fm * 4,), 0.1),
        "g3": (1.0 + nrm(ks[9], (fm * 2,), 0.1)), "b3": nrm(ks[10], (fm * 2,), 0.1),
        "g4": (1.0 + nrm(ks[11], (fm,), 0.1)),    "b4": nrm(ks[12], (fm,), 0.1),
    }

    # Typical DCGAN latent input: (N, input_dim, 1, 1)
    x = jax.random.normal(ks[13], (batch, input_dim, 1, 1), dtype=jnp.float32)

    packed, cfg = pack_generator_params(params)   # hoisted one-time packing
    out = generator_forward(x, packed, cfg)
    out = jax.block_until_ready(out)
    assert out.shape == (batch, img_ch, 32, 32), out.shape

    ref = jax.block_until_ready(generator_reference(x, params))
    max_err = float(jnp.max(jnp.abs(out - ref)))
    # Tolerance accounts for bf16 MXU operands (f32 accumulation) vs the f32 reference.
    assert max_err < 7.5e-2, f"mismatch vs reference: {max_err}"

    print("KERNEL_OK")
</pallas_src>

<mosaic_0001>
module attributes {stable_mosaic.version = 11 : i64} {
  func.func @_conv_bn_relu_kernel(%arg0: i32, %arg1: memref<32x256xbf16, #tpu.memory_space<vmem>>, %arg2: memref<256x128xbf16, #tpu.memory_space<vmem>>, %arg3: memref<1x128xf32, #tpu.memory_space<vmem>>, %arg4: memref<1x128xf32, #tpu.memory_space<vmem>>, %arg5: memref<32x128xbf16, #tpu.memory_space<vmem>>) attributes {dimension_semantics = [#tpu.dimension_semantics<arbitrary>], iteration_bounds = array<i64: 1>, scalar_prefetch = 0 : i64, scratch_operands = 0 : i64, tpu.core_type = #tpu.core_type<tc>, window_params = [{pipeline_mode = #tpu.pipeline_mode<synchronous>, transform_indices = @transform_0, window_bounds = array<i64: 32, 256>}, {pipeline_mode = #tpu.pipeline_mode<synchronous>, transform_indices = @transform_1, window_bounds = array<i64: 256, 128>}, {pipeline_mode = #tpu.pipeline_mode<synchronous>, transform_indices = @transform_2, window_bounds = array<i64: 1, 128>}, {pipeline_mode = #tpu.pipeline_mode<synchronous>, transform_indices = @transform_3, window_bounds = array<i64: 1, 128>}, {pipeline_mode = #tpu.pipeline_mode<synchronous>, transform_indices = @transform_4, window_bounds = array<i64: 32, 128>}]} {
    %c0 = arith.constant 0 : index
    %c0_0 = arith.constant 0 : index
    %0 = vector.load %arg1[%c0, %c0_0] : memref<32x256xbf16, #tpu.memory_space<vmem>>, vector<32x256xbf16>
    %c0_1 = arith.constant 0 : index
    %c0_2 = arith.constant 0 : index
    %1 = vector.load %arg2[%c0_1, %c0_2] : memref<256x128xbf16, #tpu.memory_space<vmem>>, vector<256x128xbf16>
    %cst = arith.constant dense<0.000000e+00> : vector<32x128xf32>
    %2 = tpu.matmul %0, %1, %cst {dimension_numbers = #tpu.dot_dimension_numbers<[1], [0], [0], [1], [0, 0, 1, 1], [], []>} : vector<32x256xbf16>, vector<256x128xbf16>, vector<32x128xf32> -> vector<32x128xf32>
    %cst_3 = arith.constant dense<0.000000e+00> : vector<128xf32>
    %3 = vector.multi_reduction <add>, %2, %cst_3 [0] : vector<32x128xf32> to vector<128xf32>
    %4 = vector.shape_cast %3 : vector<128xf32> to vector<1x128xf32>
    %cst_4 = arith.constant 3.200000e+01 : f32
    %5 = vector.broadcast %cst_4 : f32 to vector<1x128xf32>
    %6 = arith.divf %4, %5 : vector<1x128xf32>
    %7 = vector.broadcast %6 : vector<1x128xf32> to vector<32x128xf32>
    %8 = arith.subf %2, %7 : vector<32x128xf32>
    %9 = arith.mulf %8, %8 : vector<32x128xf32>
    %cst_5 = arith.constant dense<0.000000e+00> : vector<128xf32>
    %10 = vector.multi_reduction <add>, %9, %cst_5 [0] : vector<32x128xf32> to vector<128xf32>
    %11 = vector.shape_cast %10 : vector<128xf32> to vector<1x128xf32>
    %cst_6 = arith.constant 3.200000e+01 : f32
    %12 = vector.broadcast %cst_6 : f32 to vector<1x128xf32>
    %13 = arith.divf %11, %12 : vector<1x128xf32>
    %c0_7 = arith.constant 0 : index
    %c0_8 = arith.constant 0 : index
    %14 = vector.load %arg3[%c0_7, %c0_8] : memref<1x128xf32, #tpu.memory_space<vmem>>, vector<1x128xf32>
    %cst_9 = arith.constant 9.99999974E-6 : f32
    %15 = vector.broadcast %cst_9 : f32 to vector<1x128xf32>
    %16 = arith.addf %13, %15 : vector<1x128xf32>
    %17 = math.rsqrt %16 : vector<1x128xf32>
    %18 = arith.mulf %14, %17 : vector<1x128xf32>
    %c0_10 = arith.constant 0 : index
    %c0_11 = arith.constant 0 : index
    %19 = vector.load %arg4[%c0_10, %c0_11] : memref<1x128xf32, #tpu.memory_space<vmem>>, vector<1x128xf32>
    %20 = arith.mulf %6, %18 : vector<1x128xf32>
    %21 = arith.subf %19, %20 : vector<1x128xf32>
    %22 = vector.broadcast %18 : vector<1x128xf32> to vector<32x128xf32>
    %23 = arith.mulf %2, %22 : vector<32x128xf32>
    %24 = vector.broadcast %21 : vector<1x128xf32> to vector<32x128xf32>
    %25 = arith.addf %23, %24 : vector<32x128xf32>
    %cst_12 = arith.constant 0.000000e+00 : f32
    %26 = vector.broadcast %cst_12 : f32 to vector<32x128xf32>
    %27 = arith.maximumf %25, %26 : vector<32x128xf32>
    %28 = arith.truncf %27 : vector<32x128xf32> to vector<32x128xbf16>
    %c0_13 = arith.constant 0 : index
    %c0_14 = arith.constant 0 : index
    %29 = vector.load %arg5[%c0_13, %c0_14] : memref<32x128xbf16, #tpu.memory_space<vmem>>, vector<32x128xbf16>
    tpu.vector_store %arg5[%c0_13, %c0_14], %28 {strides = array<i32>} : memref<32x128xbf16, #tpu.memory_space<vmem>>, vector<32x128xbf16>,
    return
  }
  func.func @transform_0(%arg0: i32) -> (i32, i32) {
    %c0_i32 = arith.constant 0 : i32
    %c0_i32_0 = arith.constant 0 : i32
    %c0_i32_1 = arith.constant 0 : i32
    return %c0_i32, %c0_i32_0 : i32, i32
  }
  func.func @transform_1(%arg0: i32) -> (i32, i32) {
    %c0_i32 = arith.constant 0 : i32
    %c0_i32_0 = arith.constant 0 : i32
    %c0_i32_1 = arith.constant 0 : i32
    return %c0_i32, %c0_i32_0 : i32, i32
  }
  func.func @transform_2(%arg0: i32) -> (i32, i32) {
    %c0_i32 = arith.constant 0 : i32
    %c0_i32_0 = arith.constant 0 : i32
    %c0_i32_1 = arith.constant 0 : i32
    return %c0_i32, %c0_i32_0 : i32, i32
  }
  func.func @transform_3(%arg0: i32) -> (i32, i32) {
    %c0_i32 = arith.constant 0 : i32
    %c0_i32_0 = arith.constant 0 : i32
    %c0_i32_1 = arith.constant 0 : i32
    return %c0_i32, %c0_i32_0 : i32, i32
  }
  func.func @transform_4(%arg0: i32) -> (i32, i32) {
    %c0_i32 = arith.constant 0 : i32
    %c0_i32_0 = arith.constant 0 : i32
    %c0_i32_1 = arith.constant 0 : i32
    return %c0_i32, %c0_i32_0 : i32, i32
  }
}

module attributes {stable_mosaic.version = 11 : i64} {
  func.func @_conv_bn_relu_kernel(%arg0: i32, %arg1: memref<128x1024xbf16, #tpu.memory_space<vmem>>, %arg2: memref<1024x128xbf16, #tpu.memory_space<vmem>>, %arg3: memref<1x128xf32, #tpu.memory_space<vmem>>, %arg4: memref<1x128xf32, #tpu.memory_space<vmem>>, %arg5: memref<128x128xbf16, #tpu.memory_space<vmem>>) attributes {dimension_semantics = [#tpu.dimension_semantics<arbitrary>], iteration_bounds = array<i64: 1>, scalar_prefetch = 0 : i64, scratch_operands = 0 : i64, tpu.core_type = #tpu.core_type<tc>, window_params = [{pipeline_mode = #tpu.pipeline_mode<synchronous>, transform_indices = @transform_0, window_bounds = array<i64: 128, 1024>}, {pipeline_mode = #tpu.pipeline_mode<synchronous>, transform_indices = @transform_1, window_bounds = array<i64: 1024, 128>}, {pipeline_mode = #tpu.pipeline_mode<synchronous>, transform_indices = @transform_2, window_bounds = array<i64: 1, 128>}, {pipeline_mode = #tpu.pipeline_mode<synchronous>, transform_indices = @transform_3, window_bounds = array<i64: 1, 128>}, {pipeline_mode = #tpu.pipeline_mode<synchronous>, transform_indices = @transform_4, window_bounds = array<i64: 128, 128>}]} {
    %c0 = arith.constant 0 : index
    %c0_0 = arith.constant 0 : index
    %0 = vector.load %arg1[%c0, %c0_0] : memref<128x1024xbf16, #tpu.memory_space<vmem>>, vector<128x1024xbf16>
    %c0_1 = arith.constant 0 : index
    %c0_2 = arith.constant 0 : index
    %1 = vector.load %arg2[%c0_1, %c0_2] : memref<1024x128xbf16, #tpu.memory_space<vmem>>, vector<1024x128xbf16>
    %cst = arith.constant dense<0.000000e+00> : vector<128x128xf32>
    %2 = tpu.matmul %0, %1, %cst {dimension_numbers = #tpu.dot_dimension_numbers<[1], [0], [0], [1], [0, 0, 1, 1], [], []>} : vector<128x1024xbf16>, vector<1024x128xbf16>, vector<128x128xf32> -> vector<128x128xf32>
    %cst_3 = arith.constant dense<0.000000e+00> : vector<128xf32>
    %3 = vector.multi_reduction <add>, %2, %cst_3 [0] : vector<128x128xf32> to vector<128xf32>
    %4 = vector.shape_cast %3 : vector<128xf32> to vector<1x128xf32>
    %cst_4 = arith.constant 1.280000e+02 : f32
    %5 = vector.broadcast %cst_4 : f32 to vector<1x128xf32>
    %6 = arith.divf %4, %5 : vector<1x128xf32>
    %7 = vector.broadcast %6 : vector<1x128xf32> to vector<128x128xf32>
    %8 = arith.subf %2, %7 : vector<128x128xf32>
    %9 = arith.mulf %8, %8 : vector<128x128xf32>
    %cst_5 = arith.constant dense<0.000000e+00> : vector<128xf32>
    %10 = vector.multi_reduction <add>, %9, %cst_5 [0] : vector<128x128xf32> to vector<128xf32>
    %11 = vector.shape_cast %10 : vector<128xf32> to vector<1x128xf32>
    %cst_6 = arith.constant 1.280000e+02 : f32
    %12 = vector.broadcast %cst_6 : f32 to vector<1x128xf32>
    %13 = arith.divf %11, %12 : vector<1x128xf32>
    %c0_7 = arith.constant 0 : index
    %c0_8 = arith.constant 0 : index
    %14 = vector.load %arg3[%c0_7, %c0_8] : memref<1x128xf32, #tpu.memory_space<vmem>>, vector<1x128xf32>
    %cst_9 = arith.constant 9.99999974E-6 : f32
    %15 = vector.broadcast %cst_9 : f32 to vector<1x128xf32>
    %16 = arith.addf %13, %15 : vector<1x128xf32>
    %17 = math.rsqrt %16 : vector<1x128xf32>
    %18 = arith.mulf %14, %17 : vector<1x128xf32>
    %c0_10 = arith.constant 0 : index
    %c0_11 = arith.constant 0 : index
    %19 = vector.load %arg4[%c0_10, %c0_11] : memref<1x128xf32, #tpu.memory_space<vmem>>, vector<1x128xf32>
    %20 = arith.mulf %6, %18 : vector<1x128xf32>
    %21 = arith.subf %19, %20 : vector<1x128xf32>
    %22 = vector.broadcast %18 : vector<1x128xf32> to vector<128x128xf32>
    %23 = arith.mulf %2, %22 : vector<128x128xf32>
    %24 = vector.broadcast %21 : vector<1x128xf32> to vector<128x128xf32>
    %25 = arith.addf %23, %24 : vector<128x128xf32>
    %cst_12 = arith.constant 0.000000e+00 : f32
    %26 = vector.broadcast %cst_12 : f32 to vector<128x128xf32>
    %27 = arith.maximumf %25, %26 : vector<128x128xf32>
    %28 = arith.truncf %27 : vector<128x128xf32> to vector<128x128xbf16>
    %c0_13 = arith.constant 0 : index
    %c0_14 = arith.constant 0 : index
    %29 = vector.load %arg5[%c0_13, %c0_14] : memref<128x128xbf16, #tpu.memory_space<vmem>>, vector<128x128xbf16>
    tpu.vector_store %arg5[%c0_13, %c0_14], %28 {strides = array<i32>} : memref<128x128xbf16, #tpu.memory_space<vmem>>, vector<128x128xbf16>,
    return
  }
  func.func @transform_0(%arg0: i32) -> (i32, i32) {
    %c0_i32 = arith.constant 0 : i32
    %c0_i32_0 = arith.constant 0 : i32
    %c0_i32_1 = arith.constant 0 : i32
    return %c0_i32, %c0_i32_0 : i32, i32
  }
  func.func @transform_1(%arg0: i32) -> (i32, i32) {
    %c0_i32 = arith.constant 0 : i32
    %c0_i32_0 = arith.constant 0 : i32
    %c0_i32_1 = arith.constant 0 : i32
    return %c0_i32, %c0_i32_0 : i32, i32
  }
  func.func @transform_2(%arg0: i32) -> (i32, i32) {
    %c0_i32 = arith.constant 0 : i32
    %c0_i32_0 = arith.constant 0 : i32
    %c0_i32_1 = arith.constant 0 : i32
    return %c0_i32, %c0_i32_0 : i32, i32
  }
  func.func @transform_3(%arg0: i32) -> (i32, i32) {
    %c0_i32 = arith.constant 0 : i32
    %c0_i32_0 = arith.constant 0 : i32
    %c0_i32_1 = arith.constant 0 : i32
    return %c0_i32, %c0_i32_0 : i32, i32
  }
  func.func @transform_4(%arg0: i32) -> (i32, i32) {
    %c0_i32 = arith.constant 0 : i32
    %c0_i32_0 = arith.constant 0 : i32
    %c0_i32_1 = arith.constant 0 : i32
    return %c0_i32, %c0_i32_0 : i32, i32
  }
}

module attributes {stable_mosaic.version = 11 : i64} {
  func.func @_conv_bn_relu_kernel(%arg0: i32, %arg1: memref<512x512xbf16, #tpu.memory_space<vmem>>, %arg2: memref<512x128xbf16, #tpu.memory_space<vmem>>, %arg3: memref<1x128xf32, #tpu.memory_space<vmem>>, %arg4: memref<1x128xf32, #tpu.memory_space<vmem>>, %arg5: memref<512x128xbf16, #tpu.memory_space<vmem>>) attributes {dimension_semantics = [#tpu.dimension_semantics<arbitrary>], iteration_bounds = array<i64: 1>, scalar_prefetch = 0 : i64, scratch_operands = 0 : i64, tpu.core_type = #tpu.core_type<tc>, window_params = [{pipeline_mode = #tpu.pipeline_mode<synchronous>, transform_indices = @transform_0, window_bounds = array<i64: 512, 512>}, {pipeline_mode = #tpu.pipeline_mode<synchronous>, transform_indices = @transform_1, window_bounds = array<i64: 512, 128>}, {pipeline_mode = #tpu.pipeline_mode<synchronous>, transform_indices = @transform_2, window_bounds = array<i64: 1, 128>}, {pipeline_mode = #tpu.pipeline_mode<synchronous>, transform_indices = @transform_3, window_bounds = array<i64: 1, 128>}, {pipeline_mode = #tpu.pipeline_mode<synchronous>, transform_indices = @transform_4, window_bounds = array<i64: 512, 128>}]} {
    %c0 = arith.constant 0 : index
    %c0_0 = arith.constant 0 : index
    %0 = vector.load %arg1[%c0, %c0_0] : memref<512x512xbf16, #tpu.memory_space<vmem>>, vector<512x512xbf16>
    %c0_1 = arith.constant 0 : index
    %c0_2 = arith.constant 0 : index
    %1 = vector.load %arg2[%c0_1, %c0_2] : memref<512x128xbf16, #tpu.memory_space<vmem>>, vector<512x128xbf16>
    %cst = arith.constant dense<0.000000e+00> : vector<512x128xf32>
    %2 = tpu.matmul %0, %1, %cst {dimension_numbers = #tpu.dot_dimension_numbers<[1], [0], [0], [1], [0, 0, 1, 1], [], []>} : vector<512x512xbf16>, vector<512x128xbf16>, vector<512x128xf32> -> vector<512x128xf32>
    %cst_3 = arith.constant dense<0.000000e+00> : vector<128xf32>
    %3 = vector.multi_reduction <add>, %2, %cst_3 [0] : vector<512x128xf32> to vector<128xf32>
    %4 = vector.shape_cast %3 : vector<128xf32> to vector<1x128xf32>
    %cst_4 = arith.constant 5.120000e+02 : f32
    %5 = vector.broadcast %cst_4 : f32 to vector<1x128xf32>
    %6 = arith.divf %4, %5 : vector<1x128xf32>
    %7 = vector.broadcast %6 : vector<1x128xf32> to vector<512x128xf32>
    %8 = arith.subf %2, %7 : vector<512x128xf32>
    %9 = arith.mulf %8, %8 : vector<512x128xf32>
    %cst_5 = arith.constant dense<0.000000e+00> : vector<128xf32>
    %10 = vector.multi_reduction <add>, %9, %cst_5 [0] : vector<512x128xf32> to vector<128xf32>
    %11 = vector.shape_cast %10 : vector<128xf32> to vector<1x128xf32>
    %cst_6 = arith.constant 5.120000e+02 : f32
    %12 = vector.broadcast %cst_6 : f32 to vector<1x128xf32>
    %13 = arith.divf %11, %12 : vector<1x128xf32>
    %c0_7 = arith.constant 0 : index
    %c0_8 = arith.constant 0 : index
    %14 = vector.load %arg3[%c0_7, %c0_8] : memref<1x128xf32, #tpu.memory_space<vmem>>, vector<1x128xf32>
    %cst_9 = arith.constant 9.99999974E-6 : f32
    %15 = vector.broadcast %cst_9 : f32 to vector<1x128xf32>
    %16 = arith.addf %13, %15 : vector<1x128xf32>
    %17 = math.rsqrt %16 : vector<1x128xf32>
    %18 = arith.mulf %14, %17 : vector<1x128xf32>
    %c0_10 = arith.constant 0 : index
    %c0_11 = arith.constant 0 : index
    %19 = vector.load %arg4[%c0_10, %c0_11] : memref<1x128xf32, #tpu.memory_space<vmem>>, vector<1x128xf32>
    %20 = arith.mulf %6, %18 : vector<1x128xf32>
    %21 = arith.subf %19, %20 : vector<1x128xf32>
    %22 = vector.broadcast %18 : vector<1x128xf32> to vector<512x128xf32>
    %23 = arith.mulf %2, %22 : vector<512x128xf32>
    %24 = vector.broadcast %21 : vector<1x128xf32> to vector<512x128xf32>
    %25 = arith.addf %23, %24 : vector<512x128xf32>
    %cst_12 = arith.constant 0.000000e+00 : f32
    %26 = vector.broadcast %cst_12 : f32 to vector<512x128xf32>
    %27 = arith.maximumf %25, %26 : vector<512x128xf32>
    %28 = arith.truncf %27 : vector<512x128xf32> to vector<512x128xbf16>
    %c0_13 = arith.constant 0 : index
    %c0_14 = arith.constant 0 : index
    %29 = vector.load %arg5[%c0_13, %c0_14] : memref<512x128xbf16, #tpu.memory_space<vmem>>, vector<512x128xbf16>
    tpu.vector_store %arg5[%c0_13, %c0_14], %28 {strides = array<i32>} : memref<512x128xbf16, #tpu.memory_space<vmem>>, vector<512x128xbf16>,
    return
  }
  func.func @transform_0(%arg0: i32) -> (i32, i32) {
    %c0_i32 = arith.constant 0 : i32
    %c0_i32_0 = arith.constant 0 : i32
    %c0_i32_1 = arith.constant 0 : i32
    return %c0_i32, %c0_i32_0 : i32, i32
  }
  func.func @transform_1(%arg0: i32) -> (i32, i32) {
    %c0_i32 = arith.constant 0 : i32
    %c0_i32_0 = arith.constant 0 : i32
    %c0_i32_1 = arith.constant 0 : i32
    return %c0_i32, %c0_i32_0 : i32, i32
  }
  func.func @transform_2(%arg0: i32) -> (i32, i32) {
    %c0_i32 = arith.constant 0 : i32
    %c0_i32_0 = arith.constant 0 : i32
    %c0_i32_1 = arith.constant 0 : i32
    return %c0_i32, %c0_i32_0 : i32, i32
  }
  func.func @transform_3(%arg0: i32) -> (i32, i32) {
    %c0_i32 = arith.constant 0 : i32
    %c0_i32_0 = arith.constant 0 : i32
    %c0_i32_1 = arith.constant 0 : i32
    return %c0_i32, %c0_i32_0 : i32, i32
  }
  func.func @transform_4(%arg0: i32) -> (i32, i32) {
    %c0_i32 = arith.constant 0 : i32
    %c0_i32_0 = arith.constant 0 : i32
    %c0_i32_1 = arith.constant 0 : i32
    return %c0_i32, %c0_i32_0 : i32, i32
  }
}

module attributes {stable_mosaic.version = 11 : i64} {
  func.func @_conv_bn_relu_kernel(%arg0: i32, %arg1: memref<2048x256xbf16, #tpu.memory_space<vmem>>, %arg2: memref<256x128xbf16, #tpu.memory_space<vmem>>, %arg3: memref<1x128xf32, #tpu.memory_space<vmem>>, %arg4: memref<1x128xf32, #tpu.memory_space<vmem>>, %arg5: memref<2048x128xbf16, #tpu.memory_space<vmem>>) attributes {dimension_semantics = [#tpu.dimension_semantics<arbitrary>], iteration_bounds = array<i64: 1>, scalar_prefetch = 0 : i64, scratch_operands = 0 : i64, tpu.core_type = #tpu.core_type<tc>, window_params = [{pipeline_mode = #tpu.pipeline_mode<synchronous>, transform_indices = @transform_0, window_bounds = array<i64: 2048, 256>}, {pipeline_mode = #tpu.pipeline_mode<synchronous>, transform_indices = @transform_1, window_bounds = array<i64: 256, 128>}, {pipeline_mode = #tpu.pipeline_mode<synchronous>, transform_indices = @transform_2, window_bounds = array<i64: 1, 128>}, {pipeline_mode = #tpu.pipeline_mode<synchronous>, transform_indices = @transform_3, window_bounds = array<i64: 1, 128>}, {pipeline_mode = #tpu.pipeline_mode<synchronous>, transform_indices = @transform_4, window_bounds = array<i64: 2048, 128>}]} {
    %c0 = arith.constant 0 : index
    %c0_0 = arith.constant 0 : index
    %0 = vector.load %arg1[%c0, %c0_0] : memref<2048x256xbf16, #tpu.memory_space<vmem>>, vector<2048x256xbf16>
    %c0_1 = arith.constant 0 : index
    %c0_2 = arith.constant 0 : index
    %1 = vector.load %arg2[%c0_1, %c0_2] : memref<256x128xbf16, #tpu.memory_space<vmem>>, vector<256x128xbf16>
    %cst = arith.constant dense<0.000000e+00> : vector<2048x128xf32>
    %2 = tpu.matmul %0, %1, %cst {dimension_numbers = #tpu.dot_dimension_numbers<[1], [0], [0], [1], [0, 0, 1, 1], [], []>} : vector<2048x256xbf16>, vector<256x128xbf16>, vector<2048x128xf32> -> vector<2048x128xf32>
    %cst_3 = arith.constant dense<0.000000e+00> : vector<128xf32>
    %3 = vector.multi_reduction <add>, %2, %cst_3 [0] : vector<2048x128xf32> to vector<128xf32>
    %4 = vector.shape_cast %3 : vector<128xf32> to vector<1x128xf32>
    %cst_4 = arith.constant 2.048000e+03 : f32
    %5 = vector.broadcast %cst_4 : f32 to vector<1x128xf32>
    %6 = arith.divf %4, %5 : vector<1x128xf32>
    %7 = vector.broadcast %6 : vector<1x128xf32> to vector<2048x128xf32>
    %8 = arith.subf %2, %7 : vector<2048x128xf32>
    %9 = arith.mulf %8, %8 : vector<2048x128xf32>
    %cst_5 = arith.constant dense<0.000000e+00> : vector<128xf32>
    %10 = vector.multi_reduction <add>, %9, %cst_5 [0] : vector<2048x128xf32> to vector<128xf32>
    %11 = vector.shape_cast %10 : vector<128xf32> to vector<1x128xf32>
    %cst_6 = arith.constant 2.048000e+03 : f32
    %12 = vector.broadcast %cst_6 : f32 to vector<1x128xf32>
    %13 = arith.divf %11, %12 : vector<1x128xf32>
    %c0_7 = arith.constant 0 : index
    %c0_8 = arith.constant 0 : index
    %14 = vector.load %arg3[%c0_7, %c0_8] : memref<1x128xf32, #tpu.memory_space<vmem>>, vector<1x128xf32>
    %cst_9 = arith.constant 9.99999974E-6 : f32
    %15 = vector.broadcast %cst_9 : f32 to vector<1x128xf32>
    %16 = arith.addf %13, %15 : vector<1x128xf32>
    %17 = math.rsqrt %16 : vector<1x128xf32>
    %18 = arith.mulf %14, %17 : vector<1x128xf32>
    %c0_10 = arith.constant 0 : index
    %c0_11 = arith.constant 0 : index
    %19 = vector.load %arg4[%c0_10, %c0_11] : memref<1x128xf32, #tpu.memory_space<vmem>>, vector<1x128xf32>
    %20 = arith.mulf %6, %18 : vector<1x128xf32>
    %21 = arith.subf %19, %20 : vector<1x128xf32>
    %22 = vector.broadcast %18 : vector<1x128xf32> to vector<2048x128xf32>
    %23 = arith.mulf %2, %22 : vector<2048x128xf32>
    %24 = vector.broadcast %21 : vector<1x128xf32> to vector<2048x128xf32>
    %25 = arith.addf %23, %24 : vector<2048x128xf32>
    %cst_12 = arith.constant 0.000000e+00 : f32
    %26 = vector.broadcast %cst_12 : f32 to vector<2048x128xf32>
    %27 = arith.maximumf %25, %26 : vector<2048x128xf32>
    %28 = arith.truncf %27 : vector<2048x128xf32> to vector<2048x128xbf16>
    %c0_13 = arith.constant 0 : index
    %c0_14 = arith.constant 0 : index
    %29 = vector.load %arg5[%c0_13, %c0_14] : memref<2048x128xbf16, #tpu.memory_space<vmem>>, vector<2048x128xbf16>
    tpu.vector_store %arg5[%c0_13, %c0_14], %28 {strides = array<i32>} : memref<2048x128xbf16, #tpu.memory_space<vmem>>, vector<2048x128xbf16>,
    return
  }
  func.func @transform_0(%arg0: i32) -> (i32, i32) {
    %c0_i32 = arith.constant 0 : i32
    %c0_i32_0 = arith.constant 0 : i32
    %c0_i32_1 = arith.constant 0 : i32
    return %c0_i32, %c0_i32_0 : i32, i32
  }
  func.func @transform_1(%arg0: i32) -> (i32, i32) {
    %c0_i32 = arith.constant 0 : i32
    %c0_i32_0 = arith.constant 0 : i32
    %c0_i32_1 = arith.constant 0 : i32
    return %c0_i32, %c0_i32_0 : i32, i32
  }
  func.func @transform_2(%arg0: i32) -> (i32, i32) {
    %c0_i32 = arith.constant 0 : i32
    %c0_i32_0 = arith.constant 0 : i32
    %c0_i32_1 = arith.constant 0 : i32
    return %c0_i32, %c0_i32_0 : i32, i32
  }
  func.func @transform_3(%arg0: i32) -> (i32, i32) {
    %c0_i32 = arith.constant 0 : i32
    %c0_i32_0 = arith.constant 0 : i32
    %c0_i32_1 = arith.constant 0 : i32
    return %c0_i32, %c0_i32_0 : i32, i32
  }
  func.func @transform_4(%arg0: i32) -> (i32, i32) {
    %c0_i32 = arith.constant 0 : i32
    %c0_i32_0 = arith.constant 0 : i32
    %c0_i32_1 = arith.constant 0 : i32
    return %c0_i32, %c0_i32_0 : i32, i32
  }
}

module attributes {stable_mosaic.version = 11 : i64} {
  func.func @_conv_tanh_kernel(%arg0: i32, %arg1: memref<2048x128xbf16, #tpu.memory_space<vmem>>, %arg2: memref<128x128xbf16, #tpu.memory_space<vmem>>, %arg3: memref<2048x128xf32, #tpu.memory_space<vmem>>) attributes {dimension_semantics = [#tpu.dimension_semantics<arbitrary>], iteration_bounds = array<i64: 1>, scalar_prefetch = 0 : i64, scratch_operands = 0 : i64, tpu.core_type = #tpu.core_type<tc>, window_params = [{pipeline_mode = #tpu.pipeline_mode<synchronous>, transform_indices = @transform_0, window_bounds = array<i64: 2048, 128>}, {pipeline_mode = #tpu.pipeline_mode<synchronous>, transform_indices = @transform_1, window_bounds = array<i64: 128, 128>}, {pipeline_mode = #tpu.pipeline_mode<synchronous>, transform_indices = @transform_2, window_bounds = array<i64: 2048, 128>}]} {
    %c0 = arith.constant 0 : index
    %c0_0 = arith.constant 0 : index
    %0 = vector.load %arg1[%c0, %c0_0] : memref<2048x128xbf16, #tpu.memory_space<vmem>>, vector<2048x128xbf16>
    %c0_1 = arith.constant 0 : index
    %c0_2 = arith.constant 0 : index
    %1 = vector.load %arg2[%c0_1, %c0_2] : memref<128x128xbf16, #tpu.memory_space<vmem>>, vector<128x128xbf16>
    %cst = arith.constant dense<0.000000e+00> : vector<2048x128xf32>
    %2 = tpu.matmul %0, %1, %cst {dimension_numbers = #tpu.dot_dimension_numbers<[1], [0], [0], [1], [0, 0, 1, 1], [], []>} : vector<2048x128xbf16>, vector<128x128xbf16>, vector<2048x128xf32> -> vector<2048x128xf32>
    %3 = math.tanh %2 : vector<2048x128xf32>
    %c0_3 = arith.constant 0 : index
    %c0_4 = arith.constant 0 : index
    %4 = vector.load %arg3[%c0_3, %c0_4] : memref<2048x128xf32, #tpu.memory_space<vmem>>, vector<2048x128xf32>
    tpu.vector_store %arg3[%c0_3, %c0_4], %3 {strides = array<i32>} : memref<2048x128xf32, #tpu.memory_space<vmem>>, vector<2048x128xf32>,
    return
  }
  func.func @transform_0(%arg0: i32) -> (i32, i32) {
    %c0_i32 = arith.constant 0 : i32
    %c0_i32_0 = arith.constant 0 : i32
    %c0_i32_1 = arith.constant 0 : i32
    return %c0_i32, %c0_i32_0 : i32, i32
  }
  func.func @transform_1(%arg0: i32) -> (i32, i32) {
    %c0_i32 = arith.constant 0 : i32
    %c0_i32_0 = arith.constant 0 : i32
    %c0_i32_1 = arith.constant 0 : i32
    return %c0_i32, %c0_i32_0 : i32, i32
  }
  func.func @transform_2(%arg0: i32) -> (i32, i32) {
    %c0_i32 = arith.constant 0 : i32
    %c0_i32_0 = arith.constant 0 : i32
    %c0_i32_1 = arith.constant 0 : i32
    return %c0_i32, %c0_i32_0 : i32, i32
  }
}

</mosaic_0001>

<llo_original>
// kernel: generator_forward.5
$region0: #{generator_forward.5}
  #allocation0 [shape = 'u32[]', space=smem, size = 0x4, offset = 0x4, fixed_abs, tag = 'smem constant byte address 0x4 - core index']
  #allocation1 [shape = 'u32[144,128]{1,0:T(1,128)}', space=vmem, size = 0x12000, scoped, tag = 'internal scratch']
  %s0 = inlined_call_operand.vmem [shape: bf16[32,256], index: 0, kind: input, shape index: {}]
  %s1 = inlined_call_operand.vmem [shape: bf16[256,128], index: 1, kind: input, shape index: {}]
  %s2 = inlined_call_operand.vmem [shape: f32[1,128], index: 2, kind: input, shape index: {}]
  %s3 = inlined_call_operand.vmem [shape: f32[1,128], index: 3, kind: input, shape index: {}]
  %s4 = inlined_call_operand.vmem [shape: bf16[32,128], index: 4, kind: output, shape index: {}]
  %s5 = sld [smem:[#allocation0]]
  $region26: #{generator_forward.5} parent=0
    _
  %s7 = ssub.s32 1, %s5
  %s8 = scalar_select 0, %s7, %s5
  // Predicated region
  $region2: #{generator_forward.5} parent=0 // pred_check
    _
  $region3: #{generator_forward.5} parent=0 // pred_check_branch
    %10 = sbr.rel (0) target = $region5
  $region4: #{generator_forward.5} parent=0 // pred_region
    _
  $region5: #{generator_forward.5} parent=0 // pred_fallthru
    _
  // Predicated region
  $region6: #{generator_forward.5} parent=0 // pred_check
    _
  $region7: #{generator_forward.5} parent=0 // pred_check_branch
    %12 = sbr.rel (0) target = $region9
  $region8: #{generator_forward.5} parent=0 // pred_region
    _
  $region9: #{generator_forward.5} parent=0 // pred_fallthru
    _
  // Predicated region
  $region10: #{generator_forward.5} parent=0 // pred_check
    _
  $region11: #{generator_forward.5} parent=0 // pred_check_branch
    %14 = sbr.rel (0) target = $region13
  $region12: #{generator_forward.5} parent=0 // pred_region
    _
  $region13: #{generator_forward.5} parent=0 // pred_fallthru
    _
  // Predicated region
  $region14: #{generator_forward.5} parent=0 // pred_check
    _
  $region15: #{generator_forward.5} parent=0 // pred_check_branch
    %16 = sbr.rel (0) target = $region17
  $region16: #{generator_forward.5} parent=0 // pred_region
    _
  $region17: #{generator_forward.5} parent=0 // pred_fallthru
    _
  %v18 = vld [vmem:[%s0] sm:$0xff]
  %v19 = vld [vmem:[%s0 + $0x8] sm:$0xff]
  %v20 = vld [vmem:[%s0 + $0x10] sm:$0xff]
  %v21 = vld [vmem:[%s0 + $0x18] sm:$0xff]
  %v22 = vld [vmem:[%s1] sm:$0xf]
  %v23 = vld [vmem:[%s1 + $0x4] sm:$0xf]
  %v24 = vld [vmem:[%s1 + $0x8] sm:$0xf]
  %v25 = vld [vmem:[%s1 + $0xc] sm:$0xf]
  %v26 = vld [vmem:[%s1 + $0x10] sm:$0xf]
  %v27 = vld [vmem:[%s1 + $0x14] sm:$0xf]
  %v28 = vld [vmem:[%s1 + $0x18] sm:$0xf]
  %v29 = vld [vmem:[%s1 + $0x1c] sm:$0xf]
  %v30 = vld [vmem:[%s1 + $0x20] sm:$0xf]
  %v31 = vld [vmem:[%s1 + $0x24] sm:$0xf]
  %v32 = vld [vmem:[%s1 + $0x28] sm:$0xf]
  %v33 = vld [vmem:[%s1 + $0x2c] sm:$0xf]
  %v34 = vld [vmem:[%s1 + $0x30] sm:$0xf]
  %v35 = vld [vmem:[%s1 + $0x34] sm:$0xf]
  %v36 = vld [vmem:[%s1 + $0x38] sm:$0xf]
  %v37 = vld [vmem:[%s1 + $0x3c] sm:$0xf]
  %v38 = vld [vmem:[%s1 + $0x40] sm:$0xf]
  %v39 = vld [vmem:[%s1 + $0x44] sm:$0xf]
  %v40 = vld [vmem:[%s1 + $0x48] sm:$0xf]
  %v41 = vld [vmem:[%s1 + $0x4c] sm:$0xf]
  %v42 = vld [vmem:[%s1 + $0x50] sm:$0xf]
  %v43 = vld [vmem:[%s1 + $0x54] sm:$0xf]
  %v44 = vld [vmem:[%s1 + $0x58] sm:$0xf]
  %v45 = vld [vmem:[%s1 + $0x5c] sm:$0xf]
  %v46 = vld [vmem:[%s1 + $0x60] sm:$0xf]
  %v47 = vld [vmem:[%s1 + $0x64] sm:$0xf]
  %v48 = vld [vmem:[%s1 + $0x68] sm:$0xf]
  %v49 = vld [vmem:[%s1 + $0x6c] sm:$0xf]
  %v50 = vld [vmem:[%s1 + $0x70] sm:$0xf]
  %v51 = vld [vmem:[%s1 + $0x74] sm:$0xf]
  %v52 = vld [vmem:[%s1 + $0x78] sm:$0xf]
  %v53 = vld [vmem:[%s1 + $0x7c] sm:$0xf]
  %v58 = vunpack.c.l.b16 %v18
  %v59 = vunpack.c.h.b16 %v18
  %v60 = vunpack.c.l.b16 %v19
  %v61 = vunpack.c.h.b16 %v19
  %v62 = vunpack.c.l.b16 %v20
  %v63 = vunpack.c.h.b16 %v20
  %v64 = vunpack.c.l.b16 %v21
  %v65 = vunpack.c.h.b16 %v21
  %v66 = vpack.c.b16 %v60, %v58
  %v67 = vpack.c.b16 %v61, %v59
  %v68 = vpack.c.b16 %v64, %v62
  %v69 = vpack.c.b16 %v65, %v63
  %v106 = vunpack.c.l.b16 %v22
  %v107 = vunpack.c.l.b16 %v23
  %v108 = vunpack.c.l.b16 %v24
  %v109 = vunpack.c.l.b16 %v25
  %v110 = vunpack.c.l.b16 %v26
  %v111 = vunpack.c.l.b16 %v27
  %v112 = vunpack.c.l.b16 %v28
  %v113 = vunpack.c.l.b16 %v29
  %v114 = vunpack.c.l.b16 %v30
  %v115 = vunpack.c.l.b16 %v31
  %v116 = vunpack.c.l.b16 %v32
  %v117 = vunpack.c.l.b16 %v33
  %v118 = vunpack.c.l.b16 %v34
  %v119 = vunpack.c.l.b16 %v35
  %v120 = vunpack.c.l.b16 %v36
  %v121 = vunpack.c.l.b16 %v37
  %v122 = vunpack.c.l.b16 %v38
  %v123 = vunpack.c.l.b16 %v39
  %v124 = vunpack.c.l.b16 %v40
  %v125 = vunpack.c.l.b16 %v41
  %v126 = vunpack.c.l.b16 %v42
  %v127 = vunpack.c.l.b16 %v43
  %v128 = vunpack.c.l.b16 %v44
  %v129 = vunpack.c.l.b16 %v45
  %v130 = vunpack.c.l.b16 %v46
  %v131 = vunpack.c.l.b16 %v47
  %v132 = vunpack.c.l.b16 %v48
  %v133 = vunpack.c.l.b16 %v49
  %v134 = vunpack.c.l.b16 %v50
  %v135 = vunpack.c.l.b16 %v51
  %v136 = vunpack.c.l.b16 %v52
  %v137 = vunpack.c.l.b16 %v53
  %v138 = vpack.c.b16 %v107, %v106
  %v139 = vpack.c.b16 %v109, %v108
  %v140 = vpack.c.b16 %v111, %v110
  %v141 = vpack.c.b16 %v113, %v112
  %v142 = vpack.c.b16 %v115, %v114
  %v143 = vpack.c.b16 %v117, %v116
  %v144 = vpack.c.b16 %v119, %v118
  %v145 = vpack.c.b16 %v121, %v120
  %v146 = vpack.c.b16 %v123, %v122
  %v147 = vpack.c.b16 %v125, %v124
  %v148 = vpack.c.b16 %v127, %v126
  %v149 = vpack.c.b16 %v129, %v128
  %v150 = vpack.c.b16 %v131, %v130
  %v151 = vpack.c.b16 %v133, %v132
  %v152 = vpack.c.b16 %v135, %v134
  %v153 = vpack.c.b16 %v137, %v136
  %170 = vmatprep.subr.bf16.mxu0 0
  %171 = vmatpush1.bf16.msra.mxu0 %v138
  %172 = vmatprep.subr.bf16.mxu0 0
  %173 = vmatpush1.bf16.msra.mxu0 %v139
  %174 = vmatprep.subr.bf16.mxu0 0
  %175 = vmatpush1.bf16.msra.mxu0 %v140
  %176 = vmatprep.subr.bf16.mxu0 0
  %177 = vmatpush1.bf16.msra.mxu0 %v141
  %178 = vmatprep.subr.bf16.mxu0 0
  %179 = vmatpush1.bf16.msra.mxu0 %v142
  %180 = vmatprep.subr.bf16.mxu0 0
  %181 = vmatpush1.bf16.msra.mxu0 %v143
  %182 = vmatprep.subr.bf16.mxu0 0
  %183 = vmatpush1.bf16.msra.mxu0 %v144
  %184 = vmatprep.subr.bf16.mxu0 0
  %185 = vmatpush1.bf16.msra.mxu0 %v145
  %186 = vmatprep.subr.bf16.mxu0 0
  %187 = vmatpush1.bf16.msra.mxu0 %v146
  %188 = vmatprep.subr.bf16.mxu0 0
  %189 = vmatpush1.bf16.msra.mxu0 %v147
  %190 = vmatprep.subr.bf16.mxu0 0
  %191 = vmatpush1.bf16.msra.mxu0 %v148
  %192 = vmatprep.subr.bf16.mxu0 0
  %193 = vmatpush1.bf16.msra.mxu0 %v149
  %194 = vmatprep.subr.bf16.mxu0 0
  %195 = vmatpush1.bf16.msra.mxu0 %v150
  %196 = vmatprep.subr.bf16.mxu0 0
  %197 = vmatpush1.bf16.msra.mxu0 %v151
  %198 = vmatprep.subr.bf16.mxu0 0
  %199 = vmatpush1.bf16.msra.mxu0 %v152
  %200 = vmatprep.subr.bf16.mxu0 0
  %201 = vmatpush1.bf16.msra.mxu0 %v153
  %202 = vmatprep.mubr.bf16.mxu0 %v67
  %203 = vmatmul.mubr.bf16.gmra.mrb[0].mxu0 %v66
  %v204 = vpop.f32.mrb[0].mxu0
  %v205 = vadd.f32 0.0, %v204
  %v206 = vpop.f32.mrb[0].mxu0
  %v207 = vpop.f32.mrb[0].mxu0
  %v208 = vadd.f32 0.0, %v207
  %v209 = vpop.f32.mrb[0].mxu0
  %210 = vmatprep.mubr.bf16.mxu0 %v69
  %211 = vmatmul.mubr.bf16.gmra.mrb[0].mxu0 %v68
  %v212 = vpop.f32.mrb[0].mxu0
  %v213 = vadd.f32 0.0, %v212
  %v214 = vpop.f32.mrb[0].mxu0
  %v215 = vpop.f32.mrb[0].mxu0
  %v216 = vadd.f32 0.0, %v215
  %v217 = vpop.f32.mrb[0].mxu0
  %218 = vdwg.mxu0
  %v219 = vadd.f32 %v205, %v208
  %v220 = vadd.f32 %v219, %v213
  %v221 = vadd.f32 %v220, %v216
  %v222 = vrot.slane %v221, 4
  %v223 = vadd.f32 %v221, %v222
  %v224 = vrot.slane %v223, 2
  %v225 = vadd.f32 %v223, %v224
  %v226 = vrot.slane %v225, 1
  %v227 = vadd.f32 %v225, %v226
  %v228 = vrcp.pop 32.0
  %v229 = vmul.f32 %v227, %v228
  %v230 = vsub.f32 %v205, %v229
  %v231 = vsub.f32 %v208, %v229
  %v232 = vsub.f32 %v213, %v229
  %v233 = vsub.f32 %v216, %v229
  %v234 = vmul.f32 %v230, %v230
  %v235 = vmul.f32 %v231, %v231
  %v236 = vmul.f32 %v232, %v232
  %v237 = vmul.f32 %v233, %v233
  %v238 = vadd.f32 %v234, %v235
  %v239 = vadd.f32 %v238, %v236
  %v240 = vadd.f32 %v239, %v237
  %v241 = vrot.slane %v240, 4
  %v242 = vadd.f32 %v240, %v241
  %v243 = vrot.slane %v242, 2
  %v244 = vadd.f32 %v242, %v243
  %v245 = vrot.slane %v244, 1
  %v246 = vadd.f32 %v244, %v245
  %v247 = vmul.f32 %v246, %v228
  %v248 = vld [vmem:[%s2] sm:$0x1]
  %v249 = vadd.f32 %v247, 1e-05
  %v250 = vrsqrt.pop %v249
  %v251 = vmul.f32 %v248, %v250
  %v252 = vld [vmem:[%s3] sm:$0x1]
  %v253 = vmul.f32 %v229, %v251
  %v254 = vsub.f32 %v252, %v253
  %v256 = vlaneseq
  %v257 = vshrl.u32 %v256, 7
  %v258 = vsub.s32 0, %v257
  %v259 = vrot.slane %v251, %v258
  %v261 = vmul.f32 %v205, %v259
  %v262 = vmul.f32 %v208, %v259
  %v263 = vmul.f32 %v213, %v259
  %v264 = vmul.f32 %v216, %v259
  %v266 = vlaneseq
  %v267 = vshrl.u32 %v266, 7
  %v268 = vsub.s32 0, %v267
  %v269 = vrot.slane %v254, %v268
  %v271 = vadd.f32 %v261, %v269
  %v272 = vadd.f32 %v262, %v269
  %v273 = vadd.f32 %v263, %v269
  %v274 = vadd.f32 %v264, %v269
  %v275 = vmax.f32 %v271, 0.0
  %v276 = vmax.f32 %v272, 0.0
  %v277 = vmax.f32 %v273, 0.0
  %v278 = vmax.f32 %v274, 0.0
  %v279 = vpack.c.bf16 %v276, %v275
  %v280 = vpack.c.bf16 %v278, %v277
  %v283 = vunpack.c.l.b16 %v279
  %v284 = vunpack.c.h.b16 %v279
  %v285 = vunpack.c.l.b16 %v280
  %v286 = vunpack.c.h.b16 %v280
  %v287 = vpack.c.b16 %v283, %v283
  %v288 = vpack.c.b16 %v284, %v284
  %v289 = vpack.c.b16 %v285, %v285
  %v290 = vpack.c.b16 %v286, %v286
  %295 = vst [vmem:[%s4] sm:$0xf] %v287
  %296 = vst [vmem:[%s4 + $0x4] sm:$0xf] %v288
  %297 = vst [vmem:[%s4 + $0x8] sm:$0xf] %v289
  %298 = vst [vmem:[%s4 + $0xc] sm:$0xf] %v290
  // Predicated region
  $region18: #{generator_forward.5} parent=0 // pred_check
    _
  $region19: #{generator_forward.5} parent=0 // pred_check_branch
    %300 = sbr.rel (0) target = $region21
  $region20: #{generator_forward.5} parent=0 // pred_region
    _
  $region21: #{generator_forward.5} parent=0 // pred_fallthru
    _
  // Predicated region
  $region22: #{generator_forward.5} parent=0 // pred_check
    _
  $region23: #{generator_forward.5} parent=0 // pred_check_branch
    %302 = sbr.rel (0) target = $region25
  $region24: #{generator_forward.5} parent=0 // pred_region
    _
  $region25: #{generator_forward.5} parent=0 // pred_fallthru
    _

// kernel: generator_forward.6
$region0: #{generator_forward.6}
  #allocation0 [shape = 'u32[]', space=smem, size = 0x4, offset = 0x4, fixed_abs, tag = 'smem constant byte address 0x4 - core index']
  #allocation1 [shape = 'u32[144,128]{1,0:T(1,128)}', space=vmem, size = 0x12000, scoped, tag = 'internal scratch']
  %s0 = inlined_call_operand.vmem [shape: bf16[128,1024], index: 0, kind: input, shape index: {}]
  %s1 = inlined_call_operand.vmem [shape: bf16[1024,128], index: 1, kind: input, shape index: {}]
  %s2 = inlined_call_operand.vmem [shape: f32[1,128], index: 2, kind: input, shape index: {}]
  %s3 = inlined_call_operand.vmem [shape: f32[1,128], index: 3, kind: input, shape index: {}]
  %s4 = inlined_call_operand.vmem [shape: bf16[128,128], index: 4, kind: output, shape index: {}]
  %s5 = sld [smem:[#allocation0]]
  $region26: #{generator_forward.6} parent=0
    _
  %s7 = ssub.s32 1, %s5
  %s8 = scalar_select 0, %s7, %s5
  // Predicated region
  $region2: #{generator_forward.6} parent=0 // pred_check
    _
  $region3: #{generator_forward.6} parent=0 // pred_check_branch
    %10 = sbr.rel (0) target = $region5
  $region4: #{generator_forward.6} parent=0 // pred_region
    _
  $region5: #{generator_forward.6} parent=0 // pred_fallthru
    _
  // Predicated region
  $region6: #{generator_forward.6} parent=0 // pred_check
    _
  $region7: #{generator_forward.6} parent=0 // pred_check_branch
    %12 = sbr.rel (0) target = $region9
  $region8: #{generator_forward.6} parent=0 // pred_region
    _
  $region9: #{generator_forward.6} parent=0 // pred_fallthru
    _
  // Predicated region
  $region10: #{generator_forward.6} parent=0 // pred_check
    _
  $region11: #{generator_forward.6} parent=0 // pred_check_branch
    %14 = sbr.rel (0) target = $region13
  $region12: #{generator_forward.6} parent=0 // pred_region
    _
  $region13: #{generator_forward.6} parent=0 // pred_fallthru
    _
  // Predicated region
  $region14: #{generator_forward.6} parent=0 // pred_check
    _
  $region15: #{generator_forward.6} parent=0 // pred_check_branch
    %16 = sbr.rel (0) target = $region17
  $region16: #{generator_forward.6} parent=0 // pred_region
    _
  $region17: #{generator_forward.6} parent=0 // pred_fallthru
    _
  %v18 = vld [vmem:[%s0] sm:$0xff]
  %v19 = vld [vmem:[%s0 + $0x8] sm:$0xff]
  %v20 = vld [vmem:[%s0 + $0x10] sm:$0xff]
  %v21 = vld [vmem:[%s0 + $0x18] sm:$0xff]
  %v22 = vld [vmem:[%s0 + $0x20] sm:$0xff]
  %v23 = vld [vmem:[%s0 + $0x28] sm:$0xff]
  %v24 = vld [vmem:[%s0 + $0x30] sm:$0xff]
  %v25 = vld [vmem:[%s0 + $0x38] sm:$0xff]
  %v26 = vld [vmem:[%s0 + $0x40] sm:$0xff]
  %v27 = vld [vmem:[%s0 + $0x48] sm:$0xff]
  %v28 = vld [vmem:[%s0 + $0x50] sm:$0xff]
  %v29 = vld [vmem:[%s0 + $0x58] sm:$0xff]
  %v30 = vld [vmem:[%s0 + $0x60] sm:$0xff]
  %v31 = vld [vmem:[%s0 + $0x68] sm:$0xff]
  %v32 = vld [vmem:[%s0 + $0x70] sm:$0xff]
  %v33 = vld [vmem:[%s0 + $0x78] sm:$0xff]
  %v34 = vld [vmem:[%s0 + $0x80] sm:$0xff]
  %v35 = vld [vmem:[%s0 + $0x88] sm:$0xff]
  %v36 = vld [vmem:[%s0 + $0x90] sm:$0xff]
  %v37 = vld [vmem:[%s0 + $0x98] sm:$0xff]
  %v38 = vld [vmem:[%s0 + $0xa0] sm:$0xff]
  %v39 = vld [vmem:[%s0 + $0xa8] sm:$0xff]
  %v40 = vld [vmem:[%s0 + $0xb0] sm:$0xff]
  %v41 = vld [vmem:[%s0 + $0xb8] sm:$0xff]
  %v42 = vld [vmem:[%s0 + $0xc0] sm:$0xff]
  %v43 = vld [vmem:[%s0 + $0xc8] sm:$0xff]
  %v44 = vld [vmem:[%s0 + $0xd0] sm:$0xff]
  %v45 = vld [vmem:[%s0 + $0xd8] sm:$0xff]
  %v46 = vld [vmem:[%s0 + $0xe0] sm:$0xff]
  %v47 = vld [vmem:[%s0 + $0xe8] sm:$0xff]
  %v48 = vld [vmem:[%s0 + $0xf0] sm:$0xff]
  %v49 = vld [vmem:[%s0 + $0xf8] sm:$0xff]
  %v50 = vld [vmem:[%s0 + $0x100] sm:$0xff]
  %v51 = vld [vmem:[%s0 + $0x108] sm:$0xff]
  %v52 = vld [vmem:[%s0 + $0x110] sm:$0xff]
  %v53 = vld [vmem:[%s0 + $0x118] sm:$0xff]
  %v54 = vld [vmem:[%s0 + $0x120] sm:$0xff]
  %v55 = vld [vmem:[%s0 + $0x128] sm:$0xff]
  %v56 = vld [vmem:[%s0 + $0x130] sm:$0xff]
  %v57 = vld [vmem:[%s0 + $0x138] sm:$0xff]
  %v58 = vld [vmem:[%s0 + $0x140] sm:$0xff]
  %v59 = vld [vmem:[%s0 + $0x148] sm:$0xff]
  %v60 = vld [vmem:[%s0 + $0x150] sm:$0xff]
  %v61 = vld [vmem:[%s0 + $0x158] sm:$0xff]
  %v62 = vld [vmem:[%s0 + $0x160] sm:$0xff]
  %v63 = vld [vmem:[%s0 + $0x168] sm:$0xff]
  %v64 = vld [vmem:[%s0 + $0x170] sm:$0xff]
  %v65 = vld [vmem:[%s0 + $0x178] sm:$0xff]
  %v66 = vld [vmem:[%s0 + $0x180] sm:$0xff]
  %v67 = vld [vmem:[%s0 + $0x188] sm:$0xff]
  %v68 = vld [vmem:[%s0 + $0x190] sm:$0xff]
  %v69 = vld [vmem:[%s0 + $0x198] sm:$0xff]
  %v70 = vld [vmem:[%s0 + $0x1a0] sm:$0xff]
  %v71 = vld [vmem:[%s0 + $0x1a8] sm:$0xff]
  %v72 = vld [vmem:[%s0 + $0x1b0] sm:$0xff]
  %v73 = vld [vmem:[%s0 + $0x1b8] sm:$0xff]
  %v74 = vld [vmem:[%s0 + $0x1c0] sm:$0xff]
  %v75 = vld [vmem:[%s0 + $0x1c8] sm:$0xff]
  %v76 = vld [vmem:[%s0 + $0x1d0] sm:$0xff]
  %v77 = vld [vmem:[%s0 + $0x1d8] sm:$0xff]
  %v78 = vld [vmem:[%s0 + $0x1e0] sm:$0xff]
  %v79 = vld [vmem:[%s0 + $0x1e8] sm:$0xff]
  %v80 = vld [vmem:[%s0 + $0x1f0] sm:$0xff]
  %v81 = vld [vmem:[%s0 + $0x1f8] sm:$0xff]
  %v82 = vld [vmem:[%s1] sm:$0xf]
  %v83 = vld [vmem:[%s1 + $0x4] sm:$0xf]
  %v84 = vld [vmem:[%s1 + $0x8] sm:$0xf]
  %v85 = vld [vmem:[%s1 + $0xc] sm:$0xf]
  %v86 = vld [vmem:[%s1 + $0x10] sm:$0xf]
  %v87 = vld [vmem:[%s1 + $0x14] sm:$0xf]
  %v88 = vld [vmem:[%s1 + $0x18] sm:$0xf]
  %v89 = vld [vmem:[%s1 + $0x1c] sm:$0xf]
  %v90 = vld [vmem:[%s1 + $0x20] sm:$0xf]
  %v91 = vld [vmem:[%s1 + $0x24] sm:$0xf]
  %v92 = vld [vmem:[%s1 + $0x28] sm:$0xf]
  %v93 = vld [vmem:[%s1 + $0x2c] sm:$0xf]
  %v94 = vld [vmem:[%s1 + $0x30] sm:$0xf]
  %v95 = vld [vmem:[%s1 + $0x34] sm:$0xf]
  %v96 = vld [vmem:[%s1 + $0x38] sm:$0xf]
  %v97 = vld [vmem:[%s1 + $0x3c] sm:$0xf]
  %v98 = vld [vmem:[%s1 + $0x40] sm:$0xf]
  %v99 = vld [vmem:[%s1 + $0x44] sm:$0xf]
  %v100 = vld [vmem:[%s1 + $0x48] sm:$0xf]
  %v101 = vld [vmem:[%s1 + $0x4c] sm:$0xf]
  %v102 = vld [vmem:[%s1 + $0x50] sm:$0xf]
  %v103 = vld [vmem:[%s1 + $0x54] sm:$0xf]
  %v104 = vld [vmem:[%s1 + $0x58] sm:$0xf]
  %v105 = vld [vmem:[%s1 + $0x5c] sm:$0xf]
  %v106 = vld [vmem:[%s1 + $0x60] sm:$0xf]
  %v107 = vld [vmem:[%s1 + $0x64] sm:$0xf]
  %v108 = vld [vmem:[%s1 + $0x68] sm:$0xf]
  %v109 = vld [vmem:[%s1 + $0x6c] sm:$0xf]
  %v110 = vld [vmem:[%s1 + $0x70] sm:$0xf]
  %v111 = vld [vmem:[%s1 + $0x74] sm:$0xf]
  %v112 = vld [vmem:[%s1 + $0x78] sm:$0xf]
  %v113 = vld [vmem:[%s1 + $0x7c] sm:$0xf]
  %v114 = vld [vmem:[%s1 + $0x80] sm:$0xf]
  %v115 = vld [vmem:[%s1 + $0x84] sm:$0xf]
  %v116 = vld [vmem:[%s1 + $0x88] sm:$0xf]
  %v117 = vld [vmem:[%s1 + $0x8c] sm:$0xf]
  %v118 = vld [vmem:[%s1 + $0x90] sm:$0xf]
  %v119 = vld [vmem:[%s1 + $0x94] sm:$0xf]
  %v120 = vld [vmem:[%s1 + $0x98] sm:$0xf]
  %v121 = vld [vmem:[%s1 + $0x9c] sm:$0xf]
  %v122 = vld [vmem:[%s1 + $0xa0] sm:$0xf]
  %v123 = vld [vmem:[%s1 + $0xa4] sm:$0xf]
  %v124 = vld [vmem:[%s1 + $0xa8] sm:$0xf]
  %v125 = vld [vmem:[%s1 + $0xac] sm:$0xf]
  %v126 = vld [vmem:[%s1 + $0xb0] sm:$0xf]
  %v127 = vld [vmem:[%s1 + $0xb4] sm:$0xf]
  %v128 = vld [vmem:[%s1 + $0xb8] sm:$0xf]
  %v129 = vld [vmem:[%s1 + $0xbc] sm:$0xf]
  %v130 = vld [vmem:[%s1 + $0xc0] sm:$0xf]
  %v131 = vld [vmem:[%s1 + $0xc4] sm:$0xf]
  %v132 = vld [vmem:[%s1 + $0xc8] sm:$0xf]
  %v133 = vld [vmem:[%s1 + $0xcc] sm:$0xf]
  %v134 = vld [vmem:[%s1 + $0xd0] sm:$0xf]
  %v135 = vld [vmem:[%s1 + $0xd4] sm:$0xf]
  %v136 = vld [vmem:[%s1 + $0xd8] sm:$0xf]
  %v137 = vld [vmem:[%s1 + $0xdc] sm:$0xf]
  %v138 = vld [vmem:[%s1 + $0xe0] sm:$0xf]
  %v139 = vld [vmem:[%s1 + $0xe4] sm:$0xf]
  %v140 = vld [vmem:[%s1 + $0xe8] sm:$0xf]
  %v141 = vld [vmem:[%s1 + $0xec] sm:$0xf]
  %v142 = vld [vmem:[%s1 + $0xf0] sm:$0xf]
  %v143 = vld [vmem:[%s1 + $0xf4] sm:$0xf]
  %v144 = vld [vmem:[%s1 + $0xf8] sm:$0xf]
  %v145 = vld [vmem:[%s1 + $0xfc] sm:$0xf]
  %v146 = vld [vmem:[%s1 + $0x100] sm:$0xf]
  %v147 = vld [vmem:[%s1 + $0x104] sm:$0xf]
  %v148 = vld [vmem:[%s1 + $0x108] sm:$0xf]
  %v149 = vld [vmem:[%s1 + $0x10c] sm:$0xf]
  %v150 = vld [vmem:[%s1 + $0x110] sm:$0xf]
  %v151 = vld [vmem:[%s1 + $0x114] sm:$0xf]
  %v152 = vld [vmem:[%s1 + $0x118] sm:$0xf]
  %v153 = vld [vmem:[%s1 + $0x11c] sm:$0xf]
  %v154 = vld [vmem:[%s1 + $0x120] sm:$0xf]
  %v155 = vld [vmem:[%s1 + $0x124] sm:$0xf]
  %v156 = vld [vmem:[%s1 + $0x128] sm:$0xf]
  %v157 = vld [vmem:[%s1 + $0x12c] sm:$0xf]
  %v158 = vld [vmem:[%s1 + $0x130] sm:$0xf]
  %v159 = vld [vmem:[%s1 + $0x134] sm:$0xf]
  %v160 = vld [vmem:[%s1 + $0x138] sm:$0xf]
  %v161 = vld [vmem:[%s1 + $0x13c] sm:$0xf]
  %v162 = vld [vmem:[%s1 + $0x140] sm:$0xf]
  %v163 = vld [vmem:[%s1 + $0x144] sm:$0xf]
  %v164 = vld [vmem:[%s1 + $0x148] sm:$0xf]
  %v165 = vld [vmem:[%s1 + $0x14c] sm:$0xf]
  %v166 = vld [vmem:[%s1 + $0x150] sm:$0xf]
  %v167 = vld [vmem:[%s1 + $0x154] sm:$0xf]
  %v168 = vld [vmem:[%s1 + $0x158] sm:$0xf]
  %v169 = vld [vmem:[%s1 + $0x15c] sm:$0xf]
  %v170 = vld [vmem:[%s1 + $0x160] sm:$0xf]
  %v171 = vld [vmem:[%s1 + $0x164] sm:$0xf]
  %v172 = vld [vmem:[%s1 + $0x168] sm:$0xf]
  %v173 = vld [vmem:[%s1 + $0x16c] sm:$0xf]
  %v174 = vld [vmem:[%s1 + $0x170] sm:$0xf]
  %v175 = vld [vmem:[%s1 + $0x174] sm:$0xf]
  %v176 = vld [vmem:[%s1 + $0x178] sm:$0xf]
  %v177 = vld [vmem:[%s1 + $0x17c] sm:$0xf]
  %v178 = vld [vmem:[%s1 + $0x180] sm:$0xf]
  %v179 = vld [vmem:[%s1 + $0x184] sm:$0xf]
  %v180 = vld [vmem:[%s1 + $0x188] sm:$0xf]
  %v181 = vld [vmem:[%s1 + $0x18c] sm:$0xf]
  %v182 = vld [vmem:[%s1 + $0x190] sm:$0xf]
  %v183 = vld [vmem:[%s1 + $0x194] sm:$0xf]
  %v184 = vld [vmem:[%s1 + $0x198] sm:$0xf]
  %v185 = vld [vmem:[%s1 + $0x19c] sm:$0xf]
  %v186 = vld [vmem:[%s1 + $0x1a0] sm:$0xf]
  %v187 = vld [vmem:[%s1 + $0x1a4] sm:$0xf]
  %v188 = vld [vmem:[%s1 + $0x1a8] sm:$0xf]
  %v189 = vld [vmem:[%s1 + $0x1ac] sm:$0xf]
  %v190 = vld [vmem:[%s1 + $0x1b0] sm:$0xf]
  %v191 = vld [vmem:[%s1 + $0x1b4] sm:$0xf]
  %v192 = vld [vmem:[%s1 + $0x1b8] sm:$0xf]
  %v193 = vld [vmem:[%s1 + $0x1bc] sm:$0xf]
  %v194 = vld [vmem:[%s1 + $0x1c0] sm:$0xf]
  %v195 = vld [vmem:[%s1 + $0x1c4] sm:$0xf]
  %v196 = vld [vmem:[%s1 + $0x1c8] sm:$0xf]
  %v197 = vld [vmem:[%s1 + $0x1cc] sm:$0xf]
  %v198 = vld [vmem:[%s1 + $0x1d0] sm:$0xf]
  %v199 = vld [vmem:[%s1 + $0x1d4] sm:$0xf]
  %v200 = vld [vmem:[%s1 + $0x1d8] sm:$0xf]
  %v201 = vld [vmem:[%s1 + $0x1dc] sm:$0xf]
  %v202 = vld [vmem:[%s1 + $0x1e0] sm:$0xf]
  %v203 = vld [vmem:[%s1 + $0x1e4] sm:$0xf]
  %v204 = vld [vmem:[%s1 + $0x1e8] sm:$0xf]
  %v205 = vld [vmem:[%s1 + $0x1ec] sm:$0xf]
  %v206 = vld [vmem:[%s1 + $0x1f0] sm:$0xf]
  %v207 = vld [vmem:[%s1 + $0x1f4] sm:$0xf]
  %v208 = vld [vmem:[%s1 + $0x1f8] sm:$0xf]
  %v209 = vld [vmem:[%s1 + $0x1fc] sm:$0xf]
  %v274 = vunpack.c.l.b16 %v18
  %v275 = vunpack.c.h.b16 %v18
  %v276 = vunpack.c.l.b16 %v19
  %v277 = vunpack.c.h.b16 %v19
  %v278 = vunpack.c.l.b16 %v20
  %v279 = vunpack.c.h.b16 %v20
  %v280 = vunpack.c.l.b16 %v21
  %v281 = vunpack.c.h.b16 %v21
  %v282 = vunpack.c.l.b16 %v22
  %v283 = vunpack.c.h.b16 %v22
  %v284 = vunpack.c.l.b16 %v23
  %v285 = vunpack.c.h.b16 %v23
  %v286 = vunpack.c.l.b16 %v24
  %v287 = vunpack.c.h.b16 %v24
  %v288 = vunpack.c.l.b16 %v25
  %v289 = vunpack.c.h.b16 %v25
  %v290 = vunpack.c.l.b16 %v26
  %v291 = vunpack.c.h.b16 %v26
  %v292 = vunpack.c.l.b16 %v27
  %v293 = vunpack.c.h.b16 %v27
  %v294 = vunpack.c.l.b16 %v28
  %v295 = vunpack.c.h.b16 %v28
  %v296 = vunpack.c.l.b16 %v29
  %v297 = vunpack.c.h.b16 %v29
  %v298 = vunpack.c.l.b16 %v30
  %v299 = vunpack.c.h.b16 %v30
  %v300 = vunpack.c.l.b16 %v31
  %v301 = vunpack.c.h.b16 %v31
  %v302 = vunpack.c.l.b16 %v32
  %v303 = vunpack.c.h.b16 %v32
  %v304 = vunpack.c.l.b16 %v33
  %v305 = vunpack.c.h.b16 %v33
  %v306 = vunpack.c.l.b16 %v34
  %v307 = vunpack.c.h.b16 %v34
  %v308 = vunpack.c.l.b16 %v35
  %v309 = vunpack.c.h.b16 %v35
  %v310 = vunpack.c.l.b16 %v36
  %v311 = vunpack.c.h.b16 %v36
  %v312 = vunpack.c.l.b16 %v37
  %v313 = vunpack.c.h.b16 %v37
  %v314 = vunpack.c.l.b16 %v38
  %v315 = vunpack.c.h.b16 %v38
  %v316 = vunpack.c.l.b16 %v39
  %v317 = vunpack.c.h.b16 %v39
  %v318 = vunpack.c.l.b16 %v40
  %v319 = vunpack.c.h.b16 %v40
  %v320 = vunpack.c.l.b16 %v41
  %v321 = vunpack.c.h.b16 %v41
  %v322 = vunpack.c.l.b16 %v42
  %v323 = vunpack.c.h.b16 %v42
  %v324 = vunpack.c.l.b16 %v43
  %v325 = vunpack.c.h.b16 %v43
  %v326 = vunpack.c.l.b16 %v44
  %v327 = vunpack.c.h.b16 %v44
  %v328 = vunpack.c.l.b16 %v45
  %v329 = vunpack.c.h.b16 %v45
  %v330 = vunpack.c.l.b16 %v46
  %v331 = vunpack.c.h.b16 %v46
  %v332 = vunpack.c.l.b16 %v47
  %v333 = vunpack.c.h.b16 %v47
  %v334 = vunpack.c.l.b16 %v48
  %v335 = vunpack.c.h.b16 %v48
  %v336 = vunpack.c.l.b16 %v49
  %v337 = vunpack.c.h.b16 %v49
  %v338 = vunpack.c.l.b16 %v50
  %v339 = vunpack.c.h.b16 %v50
  %v340 = vunpack.c.l.b16 %v51
  %v341 = vunpack.c.h.b16 %v51
  %v342 = vunpack.c.l.b16 %v52
  %v343 = vunpack.c.h.b16 %v52
  %v344 = vunpack.c.l.b16 %v53
  %v345 = vunpack.c.h.b16 %v53
  %v346 = vunpack.c.l.b16 %v54
  %v347 = vunpack.c.h.b16 %v54
  %v348 = vunpack.c.l.b16 %v55
  %v349 = vunpack.c.h.b16 %v55
  %v350 = vunpack.c.l.b16 %v56
  %v351 = vunpack.c.h.b16 %v56
  %v352 = vunpack.c.l.b16 %v57
  %v353 = vunpack.c.h.b16 %v57
  %v354 = vunpack.c.l.b16 %v58
  %v355 = vunpack.c.h.b16 %v58
  %v356 = vunpack.c.l.b16 %v59
  %v357 = vunpack.c.h.b16 %v59
  %v358 = vunpack.c.l.b16 %v60
  %v359 = vunpack.c.h.b16 %v60
  %v360 = vunpack.c.l.b16 %v61
  %v361 = vunpack.c.h.b16 %v61
  %v362 = vunpack.c.l.b16 %v62
  %v363 = vunpack.c.h.b16 %v62
  %v364 = vunpack.c.l.b16 %v63
  %v365 = vunpack.c.h.b16 %v63
  %v366 = vunpack.c.l.b16 %v64
  %v367 = vunpack.c.h.b16 %v64
  %v368 = vunpack.c.l.b16 %v65
  %v369 = vunpack.c.h.b16 %v65
  %v370 = vunpack.c.l.b16 %v66
  %v371 = vunpack.c.h.b16 %v66
  %v372 = vunpack.c.l.b16 %v67
  %v373 = vunpack.c.h.b16 %v67
  %v374 = vunpack.c.l.b16 %v68
  %v375 = vunpack.c.h.b16 %v68
  %v376 = vunpack.c.l.b16 %v69
  %v377 = vunpack.c.h.b16 %v69
  %v378 = vunpack.c.l.b16 %v70
  %v379 = vunpack.c.h.b16 %v70
  %v380 = vunpack.c.l.b16 %v71
  %v381 = vunpack.c.h.b16 %v71
  %v382 = vunpack.c.l.b16 %v72
  %v383 = vunpack.c.h.b16 %v72
  %v384 = vunpack.c.l.b16 %v73
  %v385 = vunpack.c.h.b16 %v73
  %v386 = vunpack.c.l.b16 %v74
  %v387 = vunpack.c.h.b16 %v74
  %v388 = vunpack.c.l.b16 %v75
  %v389 = vunpack.c.h.b16 %v75
  %v390 = vunpack.c.l.b16 %v76
  %v391 = vunpack.c.h.b16 %v76
  %v392 = vunpack.c.l.b16 %v77
  %v393 = vunpack.c.h.b16 %v77
  %v394 = vunpack.c.l.b16 %v78
  %v395 = vunpack.c.h.b16 %v78
  %v396 = vunpack.c.l.b16 %v79
  %v397 = vunpack.c.h.b16 %v79
  %v398 = vunpack.c.l.b16 %v80
  %v399 = vunpack.c.h.b16 %v80
  %v400 = vunpack.c.l.b16 %v81
  %v401 = vunpack.c.h.b16 %v81
  %v402 = vpack.c.b16 %v282, %v274
  %v403 = vpack.c.b16 %v283, %v275
  %v404 = vpack.c.b16 %v284, %v276
  %v405 = vpack.c.b16 %v285, %v277
  %v406 = vpack.c.b16 %v286, %v278
  %v407 = vpack.c.b16 %v287, %v279
  %v408 = vpack.c.b16 %v288, %v280
  %v409 = vpack.c.b16 %v289, %v281
  %v410 = vpack.c.b16 %v298, %v290
  %v411 = vpack.c.b16 %v299, %v291
  %v412 = vpack.c.b16 %v300, %v292
  %v413 = vpack.c.b16 %v301, %v293
  %v414 = vpack.c.b16 %v302, %v294
  %v415 = vpack.c.b16 %v303, %v295
  %v416 = vpack.c.b16 %v304, %v296
  %v417 = vpack.c.b16 %v305, %v297
  %v418 = vpack.c.b16 %v314, %v306
  %v419 = vpack.c.b16 %v315, %v307
  %v420 = vpack.c.b16 %v316, %v308
  %v421 = vpack.c.b16 %v317, %v309
  %v422 = vpack.c.b16 %v318, %v310
  %v423 = vpack.c.b16 %v319, %v311
  %v424 = vpack.c.b16 %v320, %v312
  %v425 = vpack.c.b16 %v321, %v313
  %v426 = vpack.c.b16 %v330, %v322
  %v427 = vpack.c.b16 %v331, %v323
  %v428 = vpack.c.b16 %v332, %v324
  %v429 = vpack.c.b16 %v333, %v325
  %v430 = vpack.c.b16 %v334, %v326
  %v431 = vpack.c.b16 %v335, %v327
  %v432 = vpack.c.b16 %v336, %v328
  %v433 = vpack.c.b16 %v337, %v329
  %v434 = vpack.c.b16 %v346, %v338
  %v435 = vpack.c.b16 %v347, %v339
  %v436 = vpack.c.b16 %v348, %v340
  %v437 = vpack.c.b16 %v349, %v341
  %v438 = vpack.c.b16 %v350, %v342
  %v439 = vpack.c.b16 %v351, %v343
  %v440 = vpack.c.b16 %v352, %v344
  %v441 = vpack.c.b16 %v353, %v345
  %v442 = vpack.c.b16 %v362, %v354
  %v443 = vpack.c.b16 %v363, %v355
  %v444 = vpack.c.b16 %v364, %v356
  %v445 = vpack.c.b16 %v365, %v357
  %v446 = vpack.c.b16 %v366, %v358
  %v447 = vpack.c.b16 %v367, %v359
  %v448 = vpack.c.b16 %v368, %v360
  %v449 = vpack.c.b16 %v369, %v361
  %v450 = vpack.c.b16 %v378, %v370
  %v451 = vpack.c.b16 %v379, %v371
  %v452 = vpack.c.b16 %v380, %v372
  %v453 = vpack.c.b16 %v381, %v373
  %v454 = vpack.c.b16 %v382, %v374
  %v455 = vpack.c.b16 %v383, %v375
  %v456 = vpack.c.b16 %v384, %v376
  %v457 = vpack.c.b16 %v385, %v377
  %v458 = vpack.c.b16 %v394, %v386
  %v459 = vpack.c.b16 %v395, %v387
  %v460 = vpack.c.b16 %v396, %v388
  %v461 = vpack.c.b16 %v397, %v389
  %v462 = vpack.c.b16 %v398, %v390
  %v463 = vpack.c.b16 %v399, %v391
  %v464 = vpack.c.b16 %v400, %v392
  %v465 = vpack.c.b16 %v401, %v393
  %v658 = vunpack.c.l.b16 %v82
  %v659 = vunpack.c.l.b16 %v83
  %v660 = vunpack.c.l.b16 %v84
  %v661 = vunpack.c.l.b16 %v85
  %v662 = vunpack.c.l.b16 %v86
  %v663 = vunpack.c.l.b16 %v87
  %v664 = vunpack.c.l.b16 %v88
  %v665 = vunpack.c.l.b16 %v89
  %v666 = vunpack.c.l.b16 %v90
  %v667 = vunpack.c.l.b16 %v91
  %v668 = vunpack.c.l.b16 %v92
  %v669 = vunpack.c.l.b16 %v93
  %v670 = vunpack.c.l.b16 %v94
  %v671 = vunpack.c.l.b16 %v95
  %v672 = vunpack.c.l.b16 %v96
  %v673 = vunpack.c.l.b16 %v97
  %v674 = vunpack.c.l.b16 %v98
  %v675 = vunpack.c.l.b16 %v99
  %v676 = vunpack.c.l.b16 %v100
  %v677 = vunpack.c.l.b16 %v101
  %v678 = vunpack.c.l.b16 %v102
  %v679 = vunpack.c.l.b16 %v103
  %v680 = vunpack.c.l.b16 %v104
  %v681 = vunpack.c.l.b16 %v105
  %v682 = vunpack.c.l.b16 %v106
  %v683 = vunpack.c.l.b16 %v107
  %v684 = vunpack.c.l.b16 %v108
  %v685 = vunpack.c.l.b16 %v109
  %v686 = vunpack.c.l.b16 %v110
  %v687 = vunpack.c.l.b16 %v111
  %v688 = vunpack.c.l.b16 %v112
  %v689 = vunpack.c.l.b16 %v113
  %v690 = vunpack.c.l.b16 %v114
  %v691 = vunpack.c.l.b16 %v115
  %v692 = vunpack.c.l.b16 %v116
  %v693 = vunpack.c.l.b16 %v117
  %v694 = vunpack.c.l.b16 %v118
  %v695 = vunpack.c.l.b16 %v119
  %v696 = vunpack.c.l.b16 %v120
  %v697 = vunpack.c.l.b16 %v121
  %v698 = vunpack.c.l.b16 %v122
  %v699 = vunpack.c.l.b16 %v123
  %v700 = vunpack.c.l.b16 %v124
  %v701 = vunpack.c.l.b16 %v125
  %v702 = vunpack.c.l.b16 %v126
  %v703 = vunpack.c.l.b16 %v127
  %v704 = vunpack.c.l.b16 %v128
  %v705 = vunpack.c.l.b16 %v129
  %v706 = vunpack.c.l.b16 %v130
  %v707 = vunpack.c.l.b16 %v131
  %v708 = vunpack.c.l.b16 %v132
  %v709 = vunpack.c.l.b16 %v133
  %v710 = vunpack.c.l.b16 %v134
  %v711 = vunpack.c.l.b16 %v135
  %v712 = vunpack.c.l.b16 %v136
  %v713 = vunpack.c.l.b16 %v137
  %v714 = vunpack.c.l.b16 %v138
  %v715 = vunpack.c.l.b16 %v139
  %v716 = vunpack.c.l.b16 %v140
  %v717 = vunpack.c.l.b16 %v141
  %v718 = vunpack.c.l.b16 %v142
  %v719 = vunpack.c.l.b16 %v143
  %v720 = vunpack.c.l.b16 %v144
  %v721 = vunpack.c.l.b16 %v145
  %v722 = vunpack.c.l.b16 %v146
  %v723 = vunpack.c.l.b16 %v147
  %v724 = vunpack.c.l.b16 %v148
  %v725 = vunpack.c.l.b16 %v149
  %v726 = vunpack.c.l.b16 %v150
  %v727 = vunpack.c.l.b16 %v151
  %v728 = vunpack.c.l.b16 %v152
  %v729 = vunpack.c.l.b16 %v153
  %v730 = vunpack.c.l.b16 %v154
  %v731 = vunpack.c.l.b16 %v155
  %v732 = vunpack.c.l.b16 %v156
  %v733 = vunpack.c.l.b16 %v157
  %v734 = vunpack.c.l.b16 %v158
  %v735 = vunpack.c.l.b16 %v159
  %v736 = vunpack.c.l.b16 %v160
  %v737 = vunpack.c.l.b16 %v161
  %v738 = vunpack.c.l.b16 %v162
  %v739 = vunpack.c.l.b16 %v163
  %v740 = vunpack.c.l.b16 %v164
  %v741 = vunpack.c.l.b16 %v165
  %v742 = vunpack.c.l.b16 %v166
  %v743 = vunpack.c.l.b16 %v167
  %v744 = vunpack.c.l.b16 %v168
  %v745 = vunpack.c.l.b16 %v169
  %v746 = vunpack.c.l.b16 %v170
  %v747 = vunpack.c.l.b16 %v171
  %v748 = vunpack.c.l.b16 %v172
  %v749 = vunpack.c.l.b16 %v173
  %v750 = vunpack.c.l.b16 %v174
  %v751 = vunpack.c.l.b16 %v175
  %v752 = vunpack.c.l.b16 %v176
  %v753 = vunpack.c.l.b16 %v177
  %v754 = vunpack.c.l.b16 %v178
  %v755 = vunpack.c.l.b16 %v179
  %v756 = vunpack.c.l.b16 %v180
  %v757 = vunpack.c.l.b16 %v181
  %v758 = vunpack.c.l.b16 %v182
  %v759 = vunpack.c.l.b16 %v183
  %v760 = vunpack.c.l.b16 %v184
  %v761 = vunpack.c.l.b16 %v185
  %v762 = vunpack.c.l.b16 %v186
  %v763 = vunpack.c.l.b16 %v187
  %v764 = vunpack.c.l.b16 %v188
  %v765 = vunpack.c.l.b16 %v189
  %v766 = vunpack.c.l.b16 %v190
  %v767 = vunpack.c.l.b16 %v191
  %v768 = vunpack.c.l.b16 %v192
  %v769 = vunpack.c.l.b16 %v193
  %v770 = vunpack.c.l.b16 %v194
  %v771 = vunpack.c.l.b16 %v195
  %v772 = vunpack.c.l.b16 %v196
  %v773 = vunpack.c.l.b16 %v197
  %v774 = vunpack.c.l.b16 %v198
  %v775 = vunpack.c.l.b16 %v199
  %v776 = vunpack.c.l.b16 %v200
  %v777 = vunpack.c.l.b16 %v201
  %v778 = vunpack.c.l.b16 %v202
  %v779 = vunpack.c.l.b16 %v203
  %v780 = vunpack.c.l.b16 %v204
  %v781 = vunpack.c.l.b16 %v205
  %v782 = vunpack.c.l.b16 %v206
  %v783 = vunpack.c.l.b16 %v207
  %v784 = vunpack.c.l.b16 %v208
  %v785 = vunpack.c.l.b16 %v209
  %v786 = vpack.c.b16 %v659, %v658
  %v787 = vpack.c.b16 %v661, %v660
  %v788 = vpack.c.b16 %v663, %v662
  %v789 = vpack.c.b16 %v665, %v664
  %v790 = vpack.c.b16 %v667, %v666
  %v791 = vpack.c.b16 %v669, %v668
  %v792 = vpack.c.b16 %v671, %v670
  %v793 = vpack.c.b16 %v673, %v672
  %v794 = vpack.c.b16 %v675, %v674
  %v795 = vpack.c.b16 %v677, %v676
  %v796 = vpack.c.b16 %v679, %v678
  %v797 = vpack.c.b16 %v681, %v680
  %v798 = vpack.c.b16 %v683, %v682
  %v799 = vpack.c.b16 %v685, %v684
  %v800 = vpack.c.b16 %v687, %v686
  %v801 = vpack.c.b16 %v689, %v688
  %v802 = vpack.c.b16 %v691, %v690
  %v803 = vpack.c.b16 %v693, %v692
  %v804 = vpack.c.b16 %v695, %v694
  %v805 = vpack.c.b16 %v697, %v696
  %v806 = vpack.c.b16 %v699, %v698
  %v807 = vpack.c.b16 %v701, %v700
  %v808 = vpack.c.b16 %v703, %v702
  %v809 = vpack.c.b16 %v705, %v704
  %v810 = vpack.c.b16 %v707, %v706
  %v811 = vpack.c.b16 %v709, %v708
  %v812 = vpack.c.b16 %v711, %v710
  %v813 = vpack.c.b16 %v713, %v712
  %v814 = vpack.c.b16 %v715, %v714
  %v815 = vpack.c.b16 %v717, %v716
  %v816 = vpack.c.b16 %v719, %v718
  %v817 = vpack.c.b16 %v721, %v720
  %v818 = vpack.c.b16 %v723, %v722
  %v819 = vpack.c.b16 %v725, %v724
  %v820 = vpack.c.b16 %v727, %v726
  %v821 = vpack.c.b16 %v729, %v728
  %v822 = vpack.c.b16 %v731, %v730
  %v823 = vpack.c.b16 %v733, %v732
  %v824 = vpack.c.b16 %v735, %v734
  %v825 = vpack.c.b16 %v737, %v736
  %v826 = vpack.c.b16 %v739, %v738
  %v827 = vpack.c.b16 %v741, %v740
  %v828 = vpack.c.b16 %v743, %v742
  %v829 = vpack.c.b16 %v745, %v744
  %v830 = vpack.c.b16 %v747, %v746
  %v831 = vpack.c.b16 %v749, %v748
  %v832 = vpack.c.b16 %v751, %v750
  %v833 = vpack.c.b16 %v753, %v752
  %v834 = vpack.c.b16 %v755, %v754
  %v835 = vpack.c.b16 %v757, %v756
  %v836 = vpack.c.b16 %v759, %v758
  %v837 = vpack.c.b16 %v761, %v760
  %v838 = vpack.c.b16 %v763, %v762
  %v839 = vpack.c.b16 %v765, %v764
  %v840 = vpack.c.b16 %v767, %v766
  %v841 = vpack.c.b16 %v769, %v768
  %v842 = vpack.c.b16 %v771, %v770
  %v843 = vpack.c.b16 %v773, %v772
  %v844 = vpack.c.b16 %v775, %v774
  %v845 = vpack.c.b16 %v777, %v776
  %v846 = vpack.c.b16 %v779, %v778
  %v847 = vpack.c.b16 %v781, %v780
  %v848 = vpack.c.b16 %v783, %v782
  %v849 = vpack.c.b16 %v785, %v784
  %914 = vmatprep.subr.bf16.mxu0 0
  %915 = vmatpush1.bf16.msra.mxu0 %v786
  %916 = vmatprep.subr.bf16.mxu0 0
  %917 = vmatpush1.bf16.msra.mxu0 %v787
  %918 = vmatprep.subr.bf16.mxu0 0
  %919 = vmatpush1.bf16.msra.mxu0 %v788
  %920 = vmatprep.subr.bf16.mxu0 0
  %921 = vmatpush1.bf16.msra.mxu0 %v789
  %922 = vmatprep.subr.bf16.mxu0 0
  %923 = vmatpush1.bf16.msra.mxu0 %v790
  %924 = vmatprep.subr.bf16.mxu0 0
  %925 = vmatpush1.bf16.msra.mxu0 %v791
  %926 = vmatprep.subr.bf16.mxu0 0
  %927 = vmatpush1.bf16.msra.mxu0 %v792
  %928 = vmatprep.subr.bf16.mxu0 0
  %929 = vmatpush1.bf16.msra.mxu0 %v793
  %930 = vmatprep.subr.bf16.mxu0 0
  %931 = vmatpush1.bf16.msra.mxu0 %v794
  %932 = vmatprep.subr.bf16.mxu0 0
  %933 = vmatpush1.bf16.msra.mxu0 %v795
  %934 = vmatprep.subr.bf16.mxu0 0
  %935 = vmatpush1.bf16.msra.mxu0 %v796
  %936 = vmatprep.subr.bf16.mxu0 0
  %937 = vmatpush1.bf16.msra.mxu0 %v797
  %938 = vmatprep.subr.bf16.mxu0 0
  %939 = vmatpush1.bf16.msra.mxu0 %v798
  %940 = vmatprep.subr.bf16.mxu0 0
  %941 = vmatpush1.bf16.msra.mxu0 %v799
  %942 = vmatprep.subr.bf16.mxu0 0
  %943 = vmatpush1.bf16.msra.mxu0 %v800
  %944 = vmatprep.subr.bf16.mxu0 0
  %945 = vmatpush1.bf16.msra.mxu0 %v801
  %946 = vmatprep.mubr.bf16.mxu0 %v403
  %947 = vmatmul.mubr.bf16.gmra.mrb[0].mxu0 %v402
  %v948 = vpop.f32.mrb[0].mxu0
  %v949 = vadd.f32 0.0, %v948
  %v950 = vpop.f32.mrb[0].mxu0
  %v951 = vpop.f32.mrb[0].mxu0
  %v952 = vadd.f32 0.0, %v951
  %v953 = vpop.f32.mrb[0].mxu0
  %954 = vmatprep.mubr.bf16.mxu0 %v411
  %955 = vmatmul.mubr.bf16.gmra.mrb[0].mxu0 %v410
  %v956 = vpop.f32.mrb[0].mxu0
  %v957 = vadd.f32 0.0, %v956
  %v958 = vpop.f32.mrb[0].mxu0
  %v959 = vpop.f32.mrb[0].mxu0
  %v960 = vadd.f32 0.0, %v959
  %v961 = vpop.f32.mrb[0].mxu0
  %962 = vmatprep.mubr.bf16.mxu0 %v419
  %963 = vmatmul.mubr.bf16.gmra.mrb[0].mxu0 %v418
  %v964 = vpop.f32.mrb[0].mxu0
  %v965 = vadd.f32 0.0, %v964
  %v966 = vpop.f32.mrb[0].mxu0
  %v967 = vpop.f32.mrb[0].mxu0
  %v968 = vadd.f32 0.0, %v967
  %v969 = vpop.f32.mrb[0].mxu0
  %970 = vmatprep.mubr.bf16.mxu0 %v427
  %971 = vmatmul.mubr.bf16.gmra.mrb[0].mxu0 %v426
  %v972 = vpop.f32.mrb[0].mxu0
  %v973 = vadd.f32 0.0, %v972
  %v974 = vpop.f32.mrb[0].mxu0
  %v975 = vpop.f32.mrb[0].mxu0
  %v976 = vadd.f32 0.0, %v975
  %v977 = vpop.f32.mrb[0].mxu0
  %978 = vmatprep.mubr.bf16.mxu0 %v435
  %979 = vmatmul.mubr.bf16.gmra.mrb[0].mxu0 %v434
  %v980 = vpop.f32.mrb[0].mxu0
  %v981 = vadd.f32 0.0, %v980
  %v982 = vpop.f32.mrb[0].mxu0
  %v983 = vpop.f32.mrb[0].mxu0
  %v984 = vadd.f32 0.0, %v983
  %v985 = vpop.f32.mrb[0].mxu0
  %986 = vmatprep.mubr.bf16.mxu0 %v443
  %987 = vmatmul.mubr.bf16.gmra.mrb[0].mxu0 %v442
  %v988 = vpop.f32.mrb[0].mxu0
  %v989 = vadd.f32 0.0, %v988
  %v990 = vpop.f32.mrb[0].mxu0
  %v991 = vpop.f32.mrb[0].mxu0
  %v992 = vadd.f32 0.0, %v991
  %v993 = vpop.f32.mrb[0].mxu0
  %994 = vmatprep.mubr.bf16.mxu0 %v451
  %995 = vmatmul.mubr.bf16.gmra.mrb[0].mxu0 %v450
  %v996 = vpop.f32.mrb[0].mxu0
  %v997 = vadd.f32 0.0, %v996
  %v998 = vpop.f32.mrb[0].mxu0
  %v999 = vpop.f32.mrb[0].mxu0
  %v1000 = vadd.f32 0.0, %v999
  %v1001 = vpop.f32.mrb[0].mxu0
  %1002 = vmatprep.mubr.bf16.mxu0 %v459
  %1003 = vmatmul.mubr.bf16.gmra.mrb[0].mxu0 %v458
  %v1004 = vpop.f32.mrb[0].mxu0
  %v1005 = vadd.f32 0.0, %v1004
  %v1006 = vpop.f32.mrb[0].mxu0
  %v1007 = vpop.f32.mrb[0].mxu0
  %v1008 = vadd.f32 0.0, %v1007
  %v1009 = vpop.f32.mrb[0].mxu0
  %1010 = vdwg.mxu0
  %1011 = vmatprep.subr.bf16.mxu0 0
  %1012 = vmatpush1.bf16.msra.mxu0 %v802
  %1013 = vmatprep.subr.bf16.mxu0 0
  %1014 = vmatpush1.bf16.msra.mxu0 %v803
  %1015 = vmatprep.subr.bf16.mxu0 0
  %1016 = vmatpush1.bf16.msra.mxu0 %v804
  %1017 = vmatprep.subr.bf16.mxu0 0
  %1018 = vmatpush1.bf16.msra.mxu0 %v805
  %1019 = vmatprep.subr.bf16.mxu0 0
  %1020 = vmatpush1.bf16.msra.mxu0 %v806
  %1021 = vmatprep.subr.bf16.mxu0 0
  %1022 = vmatpush1.bf16.msra.mxu0 %v807
  %1023 = vmatprep.subr.bf16.mxu0 0
  %1024 = vmatpush1.bf16.msra.mxu0 %v808
  %1025 = vmatprep.subr.bf16.mxu0 0
  %1026 = vmatpush1.bf16.msra.mxu0 %v809
  %1027 = vmatprep.subr.bf16.mxu0 0
  %1028 = vmatpush1.bf16.msra.mxu0 %v810
  %1029 = vmatprep.subr.bf16.mxu0 0
  %1030 = vmatpush1.bf16.msra.mxu0 %v811
  %1031 = vmatprep.subr.bf16.mxu0 0
  %1032 = vmatpush1.bf16.msra.mxu0 %v812
  %1033 = vmatprep.subr.bf16.mxu0 0
  %1034 = vmatpush1.bf16.msra.mxu0 %v813
  %1035 = vmatprep.subr.bf16.mxu0 0
  %1036 = vmatpush1.bf16.msra.mxu0 %v814
  %1037 = vmatprep.subr.bf16.mxu0 0
  %1038 = vmatpush1.bf16.msra.mxu0 %v815
  %1039 = vmatprep.subr.bf16.mxu0 0
  %1040 = vmatpush1.bf16.msra.mxu0 %v816
  %1041 = vmatprep.subr.bf16.mxu0 0
  %1042 = vmatpush1.bf16.msra.mxu0 %v817
  %1043 = vmatprep.mubr.bf16.mxu0 %v405
  %1044 = vmatmul.mubr.bf16.gmra.mrb[0].mxu0 %v404
  %v1045 = vpop.f32.mrb[0].mxu0
  %v1046 = vadd.f32 %v949, %v1045
  %v1047 = vpop.f32.mrb[0].mxu0
  %v1048 = vpop.f32.mrb[0].mxu0
  %v1049 = vadd.f32 %v952, %v1048
  %v1050 = vpop.f32.mrb[0].mxu0
  %1051 = vmatprep.mubr.bf16.mxu0 %v413
  %1052 = vmatmul.mubr.bf16.gmra.mrb[0].mxu0 %v412
  %v1053 = vpop.f32.mrb[0].mxu0
  %v1054 = vadd.f32 %v957, %v1053
  %v1055 = vpop.f32.mrb[0].mxu0
  %v1056 = vpop.f32.mrb[0].mxu0
  %v1057 = vadd.f32 %v960, %v1056
  %v1058 = vpop.f32.mrb[0].mxu0
  %1059 = vmatprep.mubr.bf16.mxu0 %v421
  %1060 = vmatmul.mubr.bf16.gmra.mrb[0].mxu0 %v420
  %v1061 = vpop.f32.mrb[0].mxu0
  %v1062 = vadd.f32 %v965, %v1061
  %v1063 = vpop.f32.mrb[0].mxu0
  %v1064 = vpop.f32.mrb[0].mxu0
  %v1065 = vadd.f32 %v968, %v1064
  %v1066 = vpop.f32.mrb[0].mxu0
  %1067 = vmatprep.mubr.bf16.mxu0 %v429
  %1068 = vmatmul.mubr.bf16.gmra.mrb[0].mxu0 %v428
  %v1069 = vpop.f32.mrb[0].mxu0
  %v1070 = vadd.f32 %v973, %v1069
  %v1071 = vpop.f32.mrb[0].mxu0
  %v1072 = vpop.f32.mrb[0].mxu0
  %v1073 = vadd.f32 %v976, %v1072
  %v1074 = vpop.f32.mrb[0].mxu0
  %1075 = vmatprep.mubr.bf16.mxu0 %v437
  %1076 = vmatmul.mubr.bf16.gmra.mrb[0].mxu0 %v436
  %v1077 = vpop.f32.mrb[0].mxu0
  %v1078 = vadd.f32 %v981, %v1077
  %v1079 = vpop.f32.mrb[0].mxu0
  %v1080 = vpop.f32.mrb[0].mxu0
  %v1081 = vadd.f32 %v984, %v1080
  %v1082 = vpop.f32.mrb[0].mxu0
  %1083 = vmatprep.mubr.bf16.mxu0 %v445
  %1084 = vmatmul.mubr.bf16.gmra.mrb[0].mxu0 %v444
  %v1085 = vpop.f32.mrb[0].mxu0
  %v1086 = vadd.f32 %v989, %v1085
  %v1087 = vpop.f32.mrb[0].mxu0
  %v1088 = vpop.f32.mrb[0].mxu0
  %v1089 = vadd.f32 %v992, %v1088
  %v1090 = vpop.f32.mrb[0].mxu0
  %1091 = vmatprep.mubr.bf16.mxu0 %v453
  %1092 = vmatmul.mubr.bf16.gmra.mrb[0].mxu0 %v452
  %v1093 = vpop.f32.mrb[0].mxu0
  %v1094 = vadd.f32 %v997, %v1093
  %v1095 = vpop.f32.mrb[0].mxu0
  %v1096 = vpop.f32.mrb[0].mxu0
  %v1097 = vadd.f32 %v1000, %v1096
  %v1098 = vpop.f32.mrb[0].mxu0
  %1099 = vmatprep.mubr.bf16.mxu0 %v461
  %1100 = vmatmul.mubr.bf16.gmra.mrb[0].mxu0 %v460
  %v1101 = vpop.f32.mrb[0].mxu0
  %v1102 = vadd.f32 %v1005, %v1101
  %v1103 = vpop.f32.mrb[0].mxu0
  %v1104 = vpop.f32.mrb[0].mxu0
  %v1105 = vadd.f32 %v1008, %v1104
  %v1106 = vpop.f32.mrb[0].mxu0
  %1107 = vdwg.mxu0
  %1108 = vmatprep.subr.bf16.mxu0 0
  %1109 = vmatpush1.bf16.msra.mxu0 %v818
  %1110 = vmatprep.subr.bf16.mxu0 0
  %1111 = vmatpush1.bf16.msra.mxu0 %v819
  %1112 = vmatprep.subr.bf16.mxu0 0
  %1113 = vmatpush1.bf16.msra.mxu0 %v820
  %1114 = vmatprep.subr.bf16.mxu0 0
  %1115 = vmatpush1.bf16.msra.mxu0 %v821
  %1116 = vmatprep.subr.bf16.mxu0 0
  %1117 = vmatpush1.bf16.msra.mxu0 %v822
  %1118 = vmatprep.subr.bf16.mxu0 0
  %1119 = vmatpush1.bf16.msra.mxu0 %v823
  %1120 = vmatprep.subr.bf16.mxu0 0
  %1121 = vmatpush1.bf16.msra.mxu0 %v824
  %1122 = vmatprep.subr.bf16.mxu0 0
  %1123 = vmatpush1.bf16.msra.mxu0 %v825
  %1124 = vmatprep.subr.bf16.mxu0 0
  %1125 = vmatpush1.bf16.msra.mxu0 %v826
  %1126 = vmatprep.subr.bf16.mxu0 0
  %1127 = vmatpush1.bf16.msra.mxu0 %v827
  %1128 = vmatprep.subr.bf16.mxu0 0
  %1129 = vmatpush1.bf16.msra.mxu0 %v828
  %1130 = vmatprep.subr.bf16.mxu0 0
  %1131 = vmatpush1.bf16.msra.mxu0 %v829
  %1132 = vmatprep.subr.bf16.mxu0 0
  %1133 = vmatpush1.bf16.msra.mxu0 %v830
  %1134 = vmatprep.subr.bf16.mxu0 0
  %1135 = vmatpush1.bf16.msra.mxu0 %v831
  %1136 = vmatprep.subr.bf16.mxu0 0
  %1137 = vmatpush1.bf16.msra.mxu0 %v832
  %1138 = vmatprep.subr.bf16.mxu0 0
  %1139 = vmatpush1.bf16.msra.mxu0 %v833
  %1140 = vmatprep.mubr.bf16.mxu0 %v407
  %1141 = vmatmul.mubr.bf16.gmra.mrb[0].mxu0 %v406
  %v1142 = vpop.f32.mrb[0].mxu0
  %v1143 = vadd.f32 %v1046, %v1142
  %v1144 = vpop.f32.mrb[0].mxu0
  %v1145 = vpop.f32.mrb[0].mxu0
  %v1146 = vadd.f32 %v1049, %v1145
  %v1147 = vpop.f32.mrb[0].mxu0
  %1148 = vmatprep.mubr.bf16.mxu0 %v415
  %1149 = vmatmul.mubr.bf16.gmra.mrb[0].mxu0 %v414
  %v1150 = vpop.f32.mrb[0].mxu0
  %v1151 = vadd.f32 %v1054, %v1150
  %v1152 = vpop.f32.mrb[0].mxu0
  %v1153 = vpop.f32.mrb[0].mxu0
  %v1154 = vadd.f32 %v1057, %v1153
  %v1155 = vpop.f32.mrb[0].mxu0
  %1156 = vmatprep.mubr.bf16.mxu0 %v423
  %1157 = vmatmul.mubr.bf16.gmra.mrb[0].mxu0 %v422
  %v1158 = vpop.f32.mrb[0].mxu0
  %v1159 = vadd.f32 %v1062, %v1158
  %v1160 = vpop.f32.mrb[0].mxu0
  %v1161 = vpop.f32.mrb[0].mxu0
  %v1162 = vadd.f32 %v1065, %v1161
  %v1163 = vpop.f32.mrb[0].mxu0
  %1164 = vmatprep.mubr.bf16.mxu0 %v431
  %1165 = vmatmul.mubr.bf16.gmra.mrb[0].mxu0 %v430
  %v1166 = vpop.f32.mrb[0].mxu0
  %v1167 = vadd.f32 %v1070, %v1166
  %v1168 = vpop.f32.mrb[0].mxu0
  %v1169 = vpop.f32.mrb[0].mxu0
  %v1170 = vadd.f32 %v1073, %v1169
  %v1171 = vpop.f32.mrb[0].mxu0
  %1172 = vmatprep.mubr.bf16.mxu0 %v439
  %1173 = vmatmul.mubr.bf16.gmra.mrb[0].mxu0 %v438
  %v1174 = vpop.f32.mrb[0].mxu0
  %v1175 = vadd.f32 %v1078, %v1174
  %v1176 = vpop.f32.mrb[0].mxu0
  %v1177 = vpop.f32.mrb[0].mxu0
  %v1178 = vadd.f32 %v1081, %v1177
  %v1179 = vpop.f32.mrb[0].mxu0
  %1180 = vmatprep.mubr.bf16.mxu0 %v447
  %1181 = vmatmul.mubr.bf16.gmra.mrb[0].mxu0 %v446
  %v1182 = vpop.f32.mrb[0].mxu0
  %v1183 = vadd.f32 %v1086, %v1182
  %v1184 = vpop.f32.mrb[0].mxu0
  %v1185 = vpop.f32.mrb[0].mxu0
  %v1186 = vadd.f32 %v1089, %v1185
  %v1187 = vpop.f32.mrb[0].mxu0
  %1188 = vmatprep.mubr.bf16.mxu0 %v455
  %1189 = vmatmul.mubr.bf16.gmra.mrb[0].mxu0 %v454
  %v1190 = vpop.f32.mrb[0].mxu0
  %v1191 = vadd.f32 %v1094, %v1190
  %v1192 = vpop.f32.mrb[0].mxu0
  %v1193 = vpop.f32.mrb[0].mxu0
  %v1194 = vadd.f32 %v1097, %v1193
  %v1195 = vpop.f32.mrb[0].mxu0
  %1196 = vmatprep.mubr.bf16.mxu0 %v463
  %1197 = vmatmul.mubr.bf16.gmra.mrb[0].mxu0 %v462
  %v1198 = vpop.f32.mrb[0].mxu0
  %v1199 = vadd.f32 %v1102, %v1198
  %v1200 = vpop.f32.mrb[0].mxu0
  %v1201 = vpop.f32.mrb[0].mxu0
  %v1202 = vadd.f32 %v1105, %v1201
  %v1203 = vpop.f32.mrb[0].mxu0
  %1204 = vdwg.mxu0
  %1205 = vmatprep.subr.bf16.mxu0 0
  %1206 = vmatpush1.bf16.msra.mxu0 %v834
  %1207 = vmatprep.subr.bf16.mxu0 0
  %1208 = vmatpush1.bf16.msra.mxu0 %v835
  %1209 = vmatprep.subr.bf16.mxu0 0
  %1210 = vmatpush1.bf16.msra.mxu0 %v836
  %1211 = vmatprep.subr.bf16.mxu0 0
  %1212 = vmatpush1.bf16.msra.mxu0 %v837
  %1213 = vmatprep.subr.bf16.mxu0 0
  %1214 = vmatpush1.bf16.msra.mxu0 %v838
  %1215 = vmatprep.subr.bf16.mxu0 0
  %1216 = vmatpush1.bf16.msra.mxu0 %v839
  %1217 = vmatprep.subr.bf16.mxu0 0
  %1218 = vmatpush1.bf16.msra.mxu0 %v840
  %1219 = vmatprep.subr.bf16.mxu0 0
  %1220 = vmatpush1.bf16.msra.mxu0 %v841
  %1221 = vmatprep.subr.bf16.mxu0 0
  %1222 = vmatpush1.bf16.msra.mxu0 %v842
  %1223 = vmatprep.subr.bf16.mxu0 0
  %1224 = vmatpush1.bf16.msra.mxu0 %v843
  %1225 = vmatprep.subr.bf16.mxu0 0
  %1226 = vmatpush1.bf16.msra.mxu0 %v844
  %1227 = vmatprep.subr.bf16.mxu0 0
  %1228 = vmatpush1.bf16.msra.mxu0 %v845
  %1229 = vmatprep.subr.bf16.mxu0 0
  %1230 = vmatpush1.bf16.msra.mxu0 %v846
  %1231 = vmatprep.subr.bf16.mxu0 0
  %1232 = vmatpush1.bf16.msra.mxu0 %v847
  %1233 = vmatprep.subr.bf16.mxu0 0
  %1234 = vmatpush1.bf16.msra.mxu0 %v848
  %1235 = vmatprep.subr.bf16.mxu0 0
  %1236 = vmatpush1.bf16.msra.mxu0 %v849
  %1237 = vmatprep.mubr.bf16.mxu0 %v409
  %1238 = vmatmul.mubr.bf16.gmra.mrb[0].mxu0 %v408
  %v1239 = vpop.f32.mrb[0].mxu0
  %v1240 = vadd.f32 %v1143, %v1239
  %v1241 = vpop.f32.mrb[0].mxu0
  %v1242 = vpop.f32.mrb[0].mxu0
  %v1243 = vadd.f32 %v1146, %v1242
  %v1244 = vpop.f32.mrb[0].mxu0
  %1245 = vmatprep.mubr.bf16.mxu0 %v417
  %1246 = vmatmul.mubr.bf16.gmra.mrb[0].mxu0 %v416
  %v1247 = vpop.f32.mrb[0].mxu0
  %v1248 = vadd.f32 %v1151, %v1247
  %v1249 = vpop.f32.mrb[0].mxu0
  %v1250 = vpop.f32.mrb[0].mxu0
  %v1251 = vadd.f32 %v1154, %v1250
  %v1252 = vpop.f32.mrb[0].mxu0
  %1253 = vmatprep.mubr.bf16.mxu0 %v425
  %1254 = vmatmul.mubr.bf16.gmra.mrb[0].mxu0 %v424
  %v1255 = vpop.f32.mrb[0].mxu0
  %v1256 = vadd.f32 %v1159, %v1255
  %v1257 = vpop.f32.mrb[0].mxu0
  %v1258 = vpop.f32.mrb[0].mxu0
  %v1259 = vadd.f32 %v1162, %v1258
  %v1260 = vpop.f32.mrb[0].mxu0
  %1261 = vmatprep.mubr.bf16.mxu0 %v433
  %1262 = vmatmul.mubr.bf16.gmra.mrb[0].mxu0 %v432
  %v1263 = vpop.f32.mrb[0].mxu0
  %v1264 = vadd.f32 %v1167, %v1263
  %v1265 = vpop.f32.mrb[0].mxu0
  %v1266 = vpop.f32.mrb[0].mxu0
  %v1267 = vadd.f32 %v1170, %v1266
  %v1268 = vpop.f32.mrb[0].mxu0
  %1269 = vmatprep.mubr.bf16.mxu0 %v441
  %1270 = vmatmul.mubr.bf16.gmra.mrb[0].mxu0 %v440
  %v1271 = vpop.f32.mrb[0].mxu0
  %v1272 = vadd.f32 %v1175, %v1271
  %v1273 = vpop.f32.mrb[0].mxu0
  %v1274 = vpop.f32.mrb[0].mxu0
  %v1275 = vadd.f32 %v1178, %v1274
  %v1276 = vpop.f32.mrb[0].mxu0
  %1277 = vmatprep.mubr.bf16.mxu0 %v449
  %1278 = vmatmul.mubr.bf16.gmra.mrb[0].mxu0 %v448
  %v1279 = vpop.f32.mrb[0].mxu0
  %v1280 = vadd.f32 %v1183, %v1279
  %v1281 = vpop.f32.mrb[0].mxu0
  %v1282 = vpop.f32.mrb[0].mxu0
  %v1283 = vadd.f32 %v1186, %v1282
  %v1284 = vpop.f32.mrb[0].mxu0
  %1285 = vmatprep.mubr.bf16.mxu0 %v457
  %1286 = vmatmul.mubr.bf16.gmra.mrb[0].mxu0 %v456
  %v1287 = vpop.f32.mrb[0].mxu0
  %v1288 = vadd.f32 %v1191, %v1287
  %v1289 = vpop.f32.mrb[0].mxu0
  %v1290 = vpop.f32.mrb[0].mxu0
  %v1291 = vadd.f32 %v1194, %v1290
  %v1292 = vpop.f32.mrb[0].mxu0
  %1293 = vmatprep.mubr.bf16.mxu0 %v465
  %1294 = vmatmul.mubr.bf16.gmra.mrb[0].mxu0 %v464
  %v1295 = vpop.f32.mrb[0].mxu0
  %v1296 = vadd.f32 %v1199, %v1295
  %v1297 = vpop.f32.mrb[0].mxu0
  %v1298 = vpop.f32.mrb[0].mxu0
  %v1299 = vadd.f32 %v1202, %v1298
  %v1300 = vpop.f32.mrb[0].mxu0
  %1301 = vdwg.mxu0
  %v1302 = vadd.f32 %v1240, %v1243
  %v1303 = vadd.f32 %v1302, %v1248
  %v1304 = vadd.f32 %v1303, %v1251
  %v1305 = vadd.f32 %v1304, %v1256
  %v1306 = vadd.f32 %v1305, %v1259
  %v1307 = vadd.f32 %v1306, %v1264
  %v1308 = vadd.f32 %v1307, %v1267
  %v1309 = vadd.f32 %v1308, %v1272
  %v1310 = vadd.f32 %v1309, %v1275
  %v1311 = vadd.f32 %v1310, %v1280
  %v1312 = vadd.f32 %v1311, %v1283
  %v1313 = vadd.f32 %v1312, %v1288
  %v1314 = vadd.f32 %v1313, %v1291
  %v1315 = vadd.f32 %v1314, %v1296
  %v1316 = vadd.f32 %v1315, %v1299
  %v1317 = vrot.slane %v1316, 4
  %v1318 = vadd.f32 %v1316, %v1317
  %v1319 = vrot.slane %v1318, 2
  %v1320 = vadd.f32 %v1318, %v1319
  %v1321 = vrot.slane %v1320, 1
  %v1322 = vadd.f32 %v1320, %v1321
  %v1323 = vrcp.pop 128.0
  %v1324 = vmul.f32 %v1322, %v1323
  %v1325 = vsub.f32 %v1240, %v1324
  %v1326 = vsub.f32 %v1243, %v1324
  %v1327 = vsub.f32 %v1248, %v1324
  %v1328 = vsub.f32 %v1251, %v1324
  %v1329 = vsub.f32 %v1256, %v1324
  %v1330 = vsub.f32 %v1259, %v1324
  %v1331 = vsub.f32 %v1264, %v1324
  %v1332 = vsub.f32 %v1267, %v1324
  %v1333 = vsub.f32 %v1272, %v1324
  %v1334 = vsub.f32 %v1275, %v1324
  %v1335 = vsub.f32 %v1280, %v1324
  %v1336 = vsub.f32 %v1283, %v1324
  %v1337 = vsub.f32 %v1288, %v1324
  %v1338 = vsub.f32 %v1291, %v1324
  %v1339 = vsub.f32 %v1296, %v1324
  %v1340 = vsub.f32 %v1299, %v1324
  %v1341 = vmul.f32 %v1325, %v1325
  %v1342 = vmul.f32 %v1326, %v1326
  %v1343 = vmul.f32 %v1327, %v1327
  %v1344 = vmul.f32 %v1328, %v1328
  %v1345 = vmul.f32 %v1329, %v1329
  %v1346 = vmul.f32 %v1330, %v1330
  %v1347 = vmul.f32 %v1331, %v1331
  %v1348 = vmul.f32 %v1332, %v1332
  %v1349 = vmul.f32 %v1333, %v1333
  %v1350 = vmul.f32 %v1334, %v1334
  %v1351 = vmul.f32 %v1335, %v1335
  %v1352 = vmul.f32 %v1336, %v1336
  %v1353 = vmul.f32 %v1337, %v1337
  %v1354 = vmul.f32 %v1338, %v1338
  %v1355 = vmul.f32 %v1339, %v1339
  %v1356 = vmul.f32 %v1340, %v1340
  %v1357 = vadd.f32 %v1341, %v1342
  %v1358 = vadd.f32 %v1357, %v1343
  %v1359 = vadd.f32 %v1358, %v1344
  %v1360 = vadd.f32 %v1359, %v1345
  %v1361 = vadd.f32 %v1360, %v1346
  %v1362 = vadd.f32 %v1361, %v1347
  %v1363 = vadd.f32 %v1362, %v1348
  %v1364 = vadd.f32 %v1363, %v1349
  %v1365 = vadd.f32 %v1364, %v1350
  %v1366 = vadd.f32 %v1365, %v1351
  %v1367 = vadd.f32 %v1366, %v1352
  %v1368 = vadd.f32 %v1367, %v1353
  %v1369 = vadd.f32 %v1368, %v1354
  %v1370 = vadd.f32 %v1369, %v1355
  %v1371 = vadd.f32 %v1370, %v1356
  %v1372 = vrot.slane %v1371, 4
  %v1373 = vadd.f32 %v1371, %v1372
  %v1374 = vrot.slane %v1373, 2
  %v1375 = vadd.f32 %v1373, %v1374
  %v1376 = vrot.slane %v1375, 1
  %v1377 = vadd.f32 %v1375, %v1376
  %v1378 = vmul.f32 %v1377, %v1323
  %v1379 = vld [vmem:[%s2] sm:$0x1]
  %v1380 = vadd.f32 %v1378, 1e-05
  %v1381 = vrsqrt.pop %v1380
  %v1382 = vmul.f32 %v1379, %v1381
  %v1383 = vld [vmem:[%s3] sm:$0x1]
  %v1384 = vmul.f32 %v1324, %v1382
  %v1385 = vsub.f32 %v1383, %v1384
  %v1387 = vlaneseq
  %v1388 = vshrl.u32 %v1387, 7
  %v1389 = vsub.s32 0, %v1388
  %v1390 = vrot.slane %v1382, %v1389
  %v1392 = vmul.f32 %v1240, %v1390
  %v1393 = vmul.f32 %v1243, %v1390
  %v1394 = vmul.f32 %v1248, %v1390
  %v1395 = vmul.f32 %v1251, %v1390
  %v1396 = vmul.f32 %v1256, %v1390
  %v1397 = vmul.f32 %v1259, %v1390
  %v1398 = vmul.f32 %v1264, %v1390
  %v1399 = vmul.f32 %v1267, %v1390
  %v1400 = vmul.f32 %v1272, %v1390
  %v1401 = vmul.f32 %v1275, %v1390
  %v1402 = vmul.f32 %v1280, %v1390
  %v1403 = vmul.f32 %v1283, %v1390
  %v1404 = vmul.f32 %v1288, %v1390
  %v1405 = vmul.f32 %v1291, %v1390
  %v1406 = vmul.f32 %v1296, %v1390
  %v1407 = vmul.f32 %v1299, %v1390
  %v1409 = vlaneseq
  %v1410 = vshrl.u32 %v1409, 7
  %v1411 = vsub.s32 0, %v1410
  %v1412 = vrot.slane %v1385, %v1411
  %v1414 = vadd.f32 %v1392, %v1412
  %v1415 = vadd.f32 %v1393, %v1412
  %v1416 = vadd.f32 %v1394, %v1412
  %v1417 = vadd.f32 %v1395, %v1412
  %v1418 = vadd.f32 %v1396, %v1412
  %v1419 = vadd.f32 %v1397, %v1412
  %v1420 = vadd.f32 %v1398, %v1412
  %v1421 = vadd.f32 %v1399, %v1412
  %v1422 = vadd.f32 %v1400, %v1412
  %v1423 = vadd.f32 %v1401, %v1412
  %v1424 = vadd.f32 %v1402, %v1412
  %v1425 = vadd.f32 %v1403, %v1412
  %v1426 = vadd.f32 %v1404, %v1412
  %v1427 = vadd.f32 %v1405, %v1412
  %v1428 = vadd.f32 %v1406, %v1412
  %v1429 = vadd.f32 %v1407, %v1412
  %v1430 = vmax.f32 %v1414, 0.0
  %v1431 = vmax.f32 %v1415, 0.0
  %v1432 = vmax.f32 %v1416, 0.0
  %v1433 = vmax.f32 %v1417, 0.0
  %v1434 = vmax.f32 %v1418, 0.0
  %v1435 = vmax.f32 %v1419, 0.0
  %v1436 = vmax.f32 %v1420, 0.0
  %v1437 = vmax.f32 %v1421, 0.0
  %v1438 = vmax.f32 %v1422, 0.0
  %v1439 = vmax.f32 %v1423, 0.0
  %v1440 = vmax.f32 %v1424, 0.0
  %v1441 = vmax.f32 %v1425, 0.0
  %v1442 = vmax.f32 %v1426, 0.0
  %v1443 = vmax.f32 %v1427, 0.0
  %v1444 = vmax.f32 %v1428, 0.0
  %v1445 = vmax.f32 %v1429, 0.0
  %v1446 = vpack.c.bf16 %v1431, %v1430
  %v1447 = vpack.c.bf16 %v1433, %v1432
  %v1448 = vpack.c.bf16 %v1435, %v1434
  %v1449 = vpack.c.bf16 %v1437, %v1436
  %v1450 = vpack.c.bf16 %v1439, %v1438
  %v1451 = vpack.c.bf16 %v1441, %v1440
  %v1452 = vpack.c.bf16 %v1443, %v1442
  %v1453 = vpack.c.bf16 %v1445, %v1444
  %v1462 = vunpack.c.l.b16 %v1446
  %v1463 = vunpack.c.h.b16 %v1446
  %v1464 = vunpack.c.l.b16 %v1447
  %v1465 = vunpack.c.h.b16 %v1447
  %v1466 = vunpack.c.l.b16 %v1448
  %v1467 = vunpack.c.h.b16 %v1448
  %v1468 = vunpack.c.l.b16 %v1449
  %v1469 = vunpack.c.h.b16 %v1449
  %v1470 = vunpack.c.l.b16 %v1450
  %v1471 = vunpack.c.h.b16 %v1450
  %v1472 = vunpack.c.l.b16 %v1451
  %v1473 = vunpack.c.h.b16 %v1451
  %v1474 = vunpack.c.l.b16 %v1452
  %v1475 = vunpack.c.h.b16 %v1452
  %v1476 = vunpack.c.l.b16 %v1453
  %v1477 = vunpack.c.h.b16 %v1453
  %v1478 = vpack.c.b16 %v1462, %v1462
  %v1479 = vpack.c.b16 %v1463, %v1463
  %v1480 = vpack.c.b16 %v1464, %v1464
  %v1481 = vpack.c.b16 %v1465, %v1465
  %v1482 = vpack.c.b16 %v1466, %v1466
  %v1483 = vpack.c.b16 %v1467, %v1467
  %v1484 = vpack.c.b16 %v1468, %v1468
  %v1485 = vpack.c.b16 %v1469, %v1469
  %v1486 = vpack.c.b16 %v1470, %v1470
  %v1487 = vpack.c.b16 %v1471, %v1471
  %v1488 = vpack.c.b16 %v1472, %v1472
  %v1489 = vpack.c.b16 %v1473, %v1473
  %v1490 = vpack.c.b16 %v1474, %v1474
  %v1491 = vpack.c.b16 %v1475, %v1475
  %v1492 = vpack.c.b16 %v1476, %v1476
  %v1493 = vpack.c.b16 %v1477, %v1477
  %1510 = vst [vmem:[%s4] sm:$0xf] %v1478
  %1511 = vst [vmem:[%s4 + $0x4] sm:$0xf] %v1479
  %1512 = vst [vmem:[%s4 + $0x8] sm:$0xf] %v1480
  %1513 = vst [vmem:[%s4 + $0xc] sm:$0xf] %v1481
  %1514 = vst [vmem:[%s4 + $0x10] sm:$0xf] %v1482
  %1515 = vst [vmem:[%s4 + $0x14] sm:$0xf] %v1483
  %1516 = vst [vmem:[%s4 + $0x18] sm:$0xf] %v1484
  %1517 = vst [vmem:[%s4 + $0x1c] sm:$0xf] %v1485
  %1518 = vst [vmem:[%s4 + $0x20] sm:$0xf] %v1486
  %1519 = vst [vmem:[%s4 + $0x24] sm:$0xf] %v1487
  %1520 = vst [vmem:[%s4 + $0x28] sm:$0xf] %v1488
  %1521 = vst [vmem:[%s4 + $0x2c] sm:$0xf] %v1489
  %1522 = vst [vmem:[%s4 + $0x30] sm:$0xf] %v1490
  %1523 = vst [vmem:[%s4 + $0x34] sm:$0xf] %v1491
  %1524 = vst [vmem:[%s4 + $0x38] sm:$0xf] %v1492
  %1525 = vst [vmem:[%s4 + $0x3c] sm:$0xf] %v1493
  // Predicated region
  $region18: #{generator_forward.6} parent=0 // pred_check
    _
  $region19: #{generator_forward.6} parent=0 // pred_check_branch
    %1527 = sbr.rel (0) target = $region21
  $region20: #{generator_forward.6} parent=0 // pred_region
    _
  $region21: #{generator_forward.6} parent=0 // pred_fallthru
    _
  // Predicated region
  $region22: #{generator_forward.6} parent=0 // pred_check
    _
  $region23: #{generator_forward.6} parent=0 // pred_check_branch
    %1529 = sbr.rel (0) target = $region25
  $region24: #{generator_forward.6} parent=0 // pred_region
    _
  $region25: #{generator_forward.6} parent=0 // pred_fallthru
    _

// kernel: generator_forward.7
$region0: #{generator_forward.7}
  #allocation0 [shape = 'u32[]', space=smem, size = 0x4, offset = 0x4, fixed_abs, tag = 'smem constant byte address 0x4 - core index']
  #allocation1 [shape = 'u32[144,128]{1,0:T(1,128)}', space=vmem, size = 0x12000, scoped, tag = 'internal scratch']
  %s0 = inlined_call_operand.vmem [shape: bf16[512,512], index: 0, kind: input, shape index: {}]
  %s1 = inlined_call_operand.vmem [shape: bf16[512,128], index: 1, kind: input, shape index: {}]
  %s2 = inlined_call_operand.vmem [shape: f32[1,128], index: 2, kind: input, shape index: {}]
  %s3 = inlined_call_operand.vmem [shape: f32[1,128], index: 3, kind: input, shape index: {}]
  %s4 = inlined_call_operand.vmem [shape: bf16[512,128], index: 4, kind: output, shape index: {}]
  %s5 = sld [smem:[#allocation0]]
  $region26: #{generator_forward.7} parent=0
    _
  %s7 = ssub.s32 1, %s5
  %s8 = scalar_select 0, %s7, %s5
  // Predicated region
  $region2: #{generator_forward.7} parent=0 // pred_check
    _
  $region3: #{generator_forward.7} parent=0 // pred_check_branch
    %10 = sbr.rel (0) target = $region5
  $region4: #{generator_forward.7} parent=0 // pred_region
    _
  $region5: #{generator_forward.7} parent=0 // pred_fallthru
    _
  // Predicated region
  $region6: #{generator_forward.7} parent=0 // pred_check
    _
  $region7: #{generator_forward.7} parent=0 // pred_check_branch
    %12 = sbr.rel (0) target = $region9
  $region8: #{generator_forward.7} parent=0 // pred_region
    _
  $region9: #{generator_forward.7} parent=0 // pred_fallthru
    _
  // Predicated region
  $region10: #{generator_forward.7} parent=0 // pred_check
    _
  $region11: #{generator_forward.7} parent=0 // pred_check_branch
    %14 = sbr.rel (0) target = $region13
  $region12: #{generator_forward.7} parent=0 // pred_region
    _
  $region13: #{generator_forward.7} parent=0 // pred_fallthru
    _
  // Predicated region
  $region14: #{generator_forward.7} parent=0 // pred_check
    _
  $region15: #{generator_forward.7} parent=0 // pred_check_branch
    %16 = sbr.rel (0) target = $region17
  $region16: #{generator_forward.7} parent=0 // pred_region
    _
  $region17: #{generator_forward.7} parent=0 // pred_fallthru
    _
  %v18 = vld [vmem:[%s0] sm:$0xff]
  %v19 = vld [vmem:[%s0 + $0x8] sm:$0xff]
  %v20 = vld [vmem:[%s0 + $0x10] sm:$0xff]
  %v21 = vld [vmem:[%s0 + $0x18] sm:$0xff]
  %v22 = vld [vmem:[%s0 + $0x20] sm:$0xff]
  %v23 = vld [vmem:[%s0 + $0x28] sm:$0xff]
  %v24 = vld [vmem:[%s0 + $0x30] sm:$0xff]
  %v25 = vld [vmem:[%s0 + $0x38] sm:$0xff]
  %v26 = vld [vmem:[%s0 + $0x40] sm:$0xff]
  %v27 = vld [vmem:[%s0 + $0x48] sm:$0xff]
  %v28 = vld [vmem:[%s0 + $0x50] sm:$0xff]
  %v29 = vld [vmem:[%s0 + $0x58] sm:$0xff]
  %v30 = vld [vmem:[%s0 + $0x60] sm:$0xff]
  %v31 = vld [vmem:[%s0 + $0x68] sm:$0xff]
  %v32 = vld [vmem:[%s0 + $0x70] sm:$0xff]
  %v33 = vld [vmem:[%s0 + $0x78] sm:$0xff]
  %v34 = vld [vmem:[%s0 + $0x80] sm:$0xff]
  %v35 = vld [vmem:[%s0 + $0x88] sm:$0xff]
  %v36 = vld [vmem:[%s0 + $0x90] sm:$0xff]
  %v37 = vld [vmem:[%s0 + $0x98] sm:$0xff]
  %v38 = vld [vmem:[%s0 + $0xa0] sm:$0xff]
  %v39 = vld [vmem:[%s0 + $0xa8] sm:$0xff]
  %v40 = vld [vmem:[%s0 + $0xb0] sm:$0xff]
  %v41 = vld [vmem:[%s0 + $0xb8] sm:$0xff]
  %v42 = vld [vmem:[%s0 + $0xc0] sm:$0xff]
  %v43 = vld [vmem:[%s0 + $0xc8] sm:$0xff]
  %v44 = vld [vmem:[%s0 + $0xd0] sm:$0xff]
  %v45 = vld [vmem:[%s0 + $0xd8] sm:$0xff]
  %v46 = vld [vmem:[%s0 + $0xe0] sm:$0xff]
  %v47 = vld [vmem:[%s0 + $0xe8] sm:$0xff]
  %v48 = vld [vmem:[%s0 + $0xf0] sm:$0xff]
  %v49 = vld [vmem:[%s0 + $0xf8] sm:$0xff]
  %v50 = vld [vmem:[%s0 + $0x100] sm:$0xff]
  %v51 = vld [vmem:[%s0 + $0x108] sm:$0xff]
  %v52 = vld [vmem:[%s0 + $0x110] sm:$0xff]
  %v53 = vld [vmem:[%s0 + $0x118] sm:$0xff]
  %v54 = vld [vmem:[%s0 + $0x120] sm:$0xff]
  %v55 = vld [vmem:[%s0 + $0x128] sm:$0xff]
  %v56 = vld [vmem:[%s0 + $0x130] sm:$0xff]
  %v57 = vld [vmem:[%s0 + $0x138] sm:$0xff]
  %v58 = vld [vmem:[%s0 + $0x140] sm:$0xff]
  %v59 = vld [vmem:[%s0 + $0x148] sm:$0xff]
  %v60 = vld [vmem:[%s0 + $0x150] sm:$0xff]
  %v61 = vld [vmem:[%s0 + $0x158] sm:$0xff]
  %v62 = vld [vmem:[%s0 + $0x160] sm:$0xff]
  %v63 = vld [vmem:[%s0 + $0x168] sm:$0xff]
  %v64 = vld [vmem:[%s0 + $0x170] sm:$0xff]
  %v65 = vld [vmem:[%s0 + $0x178] sm:$0xff]
  %v66 = vld [vmem:[%s0 + $0x180] sm:$0xff]
  %v67 = vld [vmem:[%s0 + $0x188] sm:$0xff]
  %v68 = vld [vmem:[%s0 + $0x190] sm:$0xff]
  %v69 = vld [vmem:[%s0 + $0x198] sm:$0xff]
  %v70 = vld [vmem:[%s0 + $0x1a0] sm:$0xff]
  %v71 = vld [vmem:[%s0 + $0x1a8] sm:$0xff]
  %v72 = vld [vmem:[%s0 + $0x1b0] sm:$0xff]
  %v73 = vld [vmem:[%s0 + $0x1b8] sm:$0xff]
  %v74 = vld [vmem:[%s0 + $0x1c0] sm:$0xff]
  %v75 = vld [vmem:[%s0 + $0x1c8] sm:$0xff]
  %v76 = vld [vmem:[%s0 + $0x1d0] sm:$0xff]
  %v77 = vld [vmem:[%s0 + $0x1d8] sm:$0xff]
  %v78 = vld [vmem:[%s0 + $0x1e0] sm:$0xff]
  %v79 = vld [vmem:[%s0 + $0x1e8] sm:$0xff]
  %v80 = vld [vmem:[%s0 + $0x1f0] sm:$0xff]
  %v81 = vld [vmem:[%s0 + $0x1f8] sm:$0xff]
  %v82 = vld [vmem:[%s0 + $0x200] sm:$0xff]
  %v83 = vld [vmem:[%s0 + $0x208] sm:$0xff]
  %v84 = vld [vmem:[%s0 + $0x210] sm:$0xff]
  %v85 = vld [vmem:[%s0 + $0x218] sm:$0xff]
  %v86 = vld [vmem:[%s0 + $0x220] sm:$0xff]
  %v87 = vld [vmem:[%s0 + $0x228] sm:$0xff]
  %v88 = vld [vmem:[%s0 + $0x230] sm:$0xff]
  %v89 = vld [vmem:[%s0 + $0x238] sm:$0xff]
  %v90 = vld [vmem:[%s0 + $0x240] sm:$0xff]
  %v91 = vld [vmem:[%s0 + $0x248] sm:$0xff]
  %v92 = vld [vmem:[%s0 + $0x250] sm:$0xff]
  %v93 = vld [vmem:[%s0 + $0x258] sm:$0xff]
  %v94 = vld [vmem:[%s0 + $0x260] sm:$0xff]
  %v95 = vld [vmem:[%s0 + $0x268] sm:$0xff]
  %v96 = vld [vmem:[%s0 + $0x270] sm:$0xff]
  %v97 = vld [vmem:[%s0 + $0x278] sm:$0xff]
  %v98 = vld [vmem:[%s0 + $0x280] sm:$0xff]
  %v99 = vld [vmem:[%s0 + $0x288] sm:$0xff]
  %v100 = vld [vmem:[%s0 + $0x290] sm:$0xff]
  %v101 = vld [vmem:[%s0 + $0x298] sm:$0xff]
  %v102 = vld [vmem:[%s0 + $0x2a0] sm:$0xff]
  %v103 = vld [vmem:[%s0 + $0x2a8] sm:$0xff]
  %v104 = vld [vmem:[%s0 + $0x2b0] sm:$0xff]
  %v105 = vld [vmem:[%s0 + $0x2b8] sm:$0xff]
  %v106 = vld [vmem:[%s0 + $0x2c0] sm:$0xff]
  %v107 = vld [vmem:[%s0 + $0x2c8] sm:$0xff]
  %v108 = vld [vmem:[%s0 + $0x2d0] sm:$0xff]
  %v109 = vld [vmem:[%s0 + $0x2d8] sm:$0xff]
  %v110 = vld [vmem:[%s0 + $0x2e0] sm:$0xff]
  %v111 = vld [vmem:[%s0 + $0x2e8] sm:$0xff]
  %v112 = vld [vmem:[%s0 + $0x2f0] sm:$0xff]
  %v113 = vld [vmem:[%s0 + $0x2f8] sm:$0xff]
  %v114 = vld [vmem:[%s0 + $0x300] sm:$0xff]
  %v115 = vld [vmem:[%s0 + $0x308] sm:$0xff]
  %v116 = vld [vmem:[%s0 + $0x310] sm:$0xff]
  %v117 = vld [vmem:[%s0 + $0x318] sm:$0xff]
  %v118 = vld [vmem:[%s0 + $0x320] sm:$0xff]
  %v119 = vld [vmem:[%s0 + $0x328] sm:$0xff]
  %v120 = vld [vmem:[%s0 + $0x330] sm:$0xff]
  %v121 = vld [vmem:[%s0 + $0x338] sm:$0xff]
  %v122 = vld [vmem:[%s0 + $0x340] sm:$0xff]
  %v123 = vld [vmem:[%s0 + $0x348] sm:$0xff]
  %v124 = vld [vmem:[%s0 + $0x350] sm:$0xff]
  %v125 = vld [vmem:[%s0 + $0x358] sm:$0xff]
  %v126 = vld [vmem:[%s0 + $0x360] sm:$0xff]
  %v127 = vld [vmem:[%s0 + $0x368] sm:$0xff]
  %v128 = vld [vmem:[%s0 + $0x370] sm:$0xff]
  %v129 = vld [vmem:[%s0 + $0x378] sm:$0xff]
  %v130 = vld [vmem:[%s0 + $0x380] sm:$0xff]
  %v131 = vld [vmem:[%s0 + $0x388] sm:$0xff]
  %v132 = vld [vmem:[%s0 + $0x390] sm:$0xff]
  %v133 = vld [vmem:[%s0 + $0x398] sm:$0xff]
  %v134 = vld [vmem:[%s0 + $0x3a0] sm:$0xff]
  %v135 = vld [vmem:[%s0 + $0x3a8] sm:$0xff]
  %v136 = vld [vmem:[%s0 + $0x3b0] sm:$0xff]
  %v137 = vld [vmem:[%s0 + $0x3b8] sm:$0xff]
  %v138 = vld [vmem:[%s0 + $0x3c0] sm:$0xff]
  %v139 = vld [vmem:[%s0 + $0x3c8] sm:$0xff]
  %v140 = vld [vmem:[%s0 + $0x3d0] sm:$0xff]
  %v141 = vld [vmem:[%s0 + $0x3d8] sm:$0xff]
  %v142 = vld [vmem:[%s0 + $0x3e0] sm:$0xff]
  %v143 = vld [vmem:[%s0 + $0x3e8] sm:$0xff]
  %v144 = vld [vmem:[%s0 + $0x3f0] sm:$0xff]
  %v145 = vld [vmem:[%s0 + $0x3f8] sm:$0xff]
  %v146 = vld [vmem:[%s1] sm:$0xf]
  %v147 = vld [vmem:[%s1 + $0x4] sm:$0xf]
  %v148 = vld [vmem:[%s1 + $0x8] sm:$0xf]
  %v149 = vld [vmem:[%s1 + $0xc] sm:$0xf]
  %v150 = vld [vmem:[%s1 + $0x10] sm:$0xf]
  %v151 = vld [vmem:[%s1 + $0x14] sm:$0xf]
  %v152 = vld [vmem:[%s1 + $0x18] sm:$0xf]
  %v153 = vld [vmem:[%s1 + $0x1c] sm:$0xf]
  %v154 = vld [vmem:[%s1 + $0x20] sm:$0xf]
  %v155 = vld [vmem:[%s1 + $0x24] sm:$0xf]
  %v156 = vld [vmem:[%s1 + $0x28] sm:$0xf]
  %v157 = vld [vmem:[%s1 + $0x2c] sm:$0xf]
  %v158 = vld [vmem:[%s1 + $0x30] sm:$0xf]
  %v159 = vld [vmem:[%s1 + $0x34] sm:$0xf]
  %v160 = vld [vmem:[%s1 + $0x38] sm:$0xf]
  %v161 = vld [vmem:[%s1 + $0x3c] sm:$0xf]
  %v162 = vld [vmem:[%s1 + $0x40] sm:$0xf]
  %v163 = vld [vmem:[%s1 + $0x44] sm:$0xf]
  %v164 = vld [vmem:[%s1 + $0x48] sm:$0xf]
  %v165 = vld [vmem:[%s1 + $0x4c] sm:$0xf]
  %v166 = vld [vmem:[%s1 + $0x50] sm:$0xf]
  %v167 = vld [vmem:[%s1 + $0x54] sm:$0xf]
  %v168 = vld [vmem:[%s1 + $0x58] sm:$0xf]
  %v169 = vld [vmem:[%s1 + $0x5c] sm:$0xf]
  %v170 = vld [vmem:[%s1 + $0x60] sm:$0xf]
  %v171 = vld [vmem:[%s1 + $0x64] sm:$0xf]
  %v172 = vld [vmem:[%s1 + $0x68] sm:$0xf]
  %v173 = vld [vmem:[%s1 + $0x6c] sm:$0xf]
  %v174 = vld [vmem:[%s1 + $0x70] sm:$0xf]
  %v175 = vld [vmem:[%s1 + $0x74] sm:$0xf]
  %v176 = vld [vmem:[%s1 + $0x78] sm:$0xf]
  %v177 = vld [vmem:[%s1 + $0x7c] sm:$0xf]
  %v178 = vld [vmem:[%s1 + $0x80] sm:$0xf]
  %v179 = vld [vmem:[%s1 + $0x84] sm:$0xf]
  %v180 = vld [vmem:[%s1 + $0x88] sm:$0xf]
  %v181 = vld [vmem:[%s1 + $0x8c] sm:$0xf]
  %v182 = vld [vmem:[%s1 + $0x90] sm:$0xf]
  %v183 = vld [vmem:[%s1 + $0x94] sm:$0xf]
  %v184 = vld [vmem:[%s1 + $0x98] sm:$0xf]
  %v185 = vld [vmem:[%s1 + $0x9c] sm:$0xf]
  %v186 = vld [vmem:[%s1 + $0xa0] sm:$0xf]
  %v187 = vld [vmem:[%s1 + $0xa4] sm:$0xf]
  %v188 = vld [vmem:[%s1 + $0xa8] sm:$0xf]
  %v189 = vld [vmem:[%s1 + $0xac] sm:$0xf]
  %v190 = vld [vmem:[%s1 + $0xb0] sm:$0xf]
  %v191 = vld [vmem:[%s1 + $0xb4] sm:$0xf]
  %v192 = vld [vmem:[%s1 + $0xb8] sm:$0xf]
  %v193 = vld [vmem:[%s1 + $0xbc] sm:$0xf]
  %v194 = vld [vmem:[%s1 + $0xc0] sm:$0xf]
  %v195 = vld [vmem:[%s1 + $0xc4] sm:$0xf]
  %v196 = vld [vmem:[%s1 + $0xc8] sm:$0xf]
  %v197 = vld [vmem:[%s1 + $0xcc] sm:$0xf]
  %v198 = vld [vmem:[%s1 + $0xd0] sm:$0xf]
  %v199 = vld [vmem:[%s1 + $0xd4] sm:$0xf]
  %v200 = vld [vmem:[%s1 + $0xd8] sm:$0xf]
  %v201 = vld [vmem:[%s1 + $0xdc] sm:$0xf]
  %v202 = vld [vmem:[%s1 + $0xe0] sm:$0xf]
  %v203 = vld [vmem:[%s1 + $0xe4] sm:$0xf]
  %v204 = vld [vmem:[%s1 + $0xe8] sm:$0xf]
  %v205 = vld [vmem:[%s1 + $0xec] sm:$0xf]
  %v206 = vld [vmem:[%s1 + $0xf0] sm:$0xf]
  %v207 = vld [vmem:[%s1 + $0xf4] sm:$0xf]
  %v208 = vld [vmem:[%s1 + $0xf8] sm:$0xf]
  %v209 = vld [vmem:[%s1 + $0xfc] sm:$0xf]
  %v338 = vunpack.c.l.b16 %v18
  %v339 = vunpack.c.h.b16 %v18
  %v340 = vunpack.c.l.b16 %v19
  %v341 = vunpack.c.h.b16 %v19
  %v342 = vunpack.c.l.b16 %v20
  %v343 = vunpack.c.h.b16 %v20
  %v344 = vunpack.c.l.b16 %v21
  %v345 = vunpack.c.h.b16 %v21
  %v346 = vunpack.c.l.b16 %v22
  %v347 = vunpack.c.h.b16 %v22
  %v348 = vunpack.c.l.b16 %v23
  %v349 = vunpack.c.h.b16 %v23
  %v350 = vunpack.c.l.b16 %v24
  %v351 = vunpack.c.h.b16 %v24
  %v352 = vunpack.c.l.b16 %v25
  %v353 = vunpack.c.h.b16 %v25
  %v354 = vunpack.c.l.b16 %v26
  %v355 = vunpack.c.h.b16 %v26
  %v356 = vunpack.c.l.b16 %v27
  %v357 = vunpack.c.h.b16 %v27
  %v358 = vunpack.c.l.b16 %v28
  %v359 = vunpack.c.h.b16 %v28
  %v360 = vunpack.c.l.b16 %v29
  %v361 = vunpack.c.h.b16 %v29
  %v362 = vunpack.c.l.b16 %v30
  %v363 = vunpack.c.h.b16 %v30
  %v364 = vunpack.c.l.b16 %v31
  %v365 = vunpack.c.h.b16 %v31
  %v366 = vunpack.c.l.b16 %v32
  %v367 = vunpack.c.h.b16 %v32
  %v368 = vunpack.c.l.b16 %v33
  %v369 = vunpack.c.h.b16 %v33
  %v370 = vunpack.c.l.b16 %v34
  %v371 = vunpack.c.h.b16 %v34
  %v372 = vunpack.c.l.b16 %v35
  %v373 = vunpack.c.h.b16 %v35
  %v374 = vunpack.c.l.b16 %v36
  %v375 = vunpack.c.h.b16 %v36
  %v376 = vunpack.c.l.b16 %v37
  %v377 = vunpack.c.h.b16 %v37
  %v378 = vunpack.c.l.b16 %v38
  %v379 = vunpack.c.h.b16 %v38
  %v380 = vunpack.c.l.b16 %v39
  %v381 = vunpack.c.h.b16 %v39
  %v382 = vunpack.c.l.b16 %v40
  %v383 = vunpack.c.h.b16 %v40
  %v384 = vunpack.c.l.b16 %v41
  %v385 = vunpack.c.h.b16 %v41
  %v386 = vunpack.c.l.b16 %v42
  %v387 = vunpack.c.h.b16 %v42
  %v388 = vunpack.c.l.b16 %v43
  %v389 = vunpack.c.h.b16 %v43
  %v390 = vunpack.c.l.b16 %v44
  %v391 = vunpack.c.h.b16 %v44
  %v392 = vunpack.c.l.b16 %v45
  %v393 = vunpack.c.h.b16 %v45
  %v394 = vunpack.c.l.b16 %v46
  %v395 = vunpack.c.h.b16 %v46
  %v396 = vunpack.c.l.b16 %v47
  %v397 = vunpack.c.h.b16 %v47
  %v398 = vunpack.c.l.b16 %v48
  %v399 = vunpack.c.h.b16 %v48
  %v400 = vunpack.c.l.b16 %v49
  %v401 = vunpack.c.h.b16 %v49
  %v402 = vunpack.c.l.b16 %v50
  %v403 = vunpack.c.h.b16 %v50
  %v404 = vunpack.c.l.b16 %v51
  %v405 = vunpack.c.h.b16 %v51
  %v406 = vunpack.c.l.b16 %v52
  %v407 = vunpack.c.h.b16 %v52
  %v408 = vunpack.c.l.b16 %v53
  %v409 = vunpack.c.h.b16 %v53
  %v410 = vunpack.c.l.b16 %v54
  %v411 = vunpack.c.h.b16 %v54
  %v412 = vunpack.c.l.b16 %v55
  %v413 = vunpack.c.h.b16 %v55
  %v414 = vunpack.c.l.b16 %v56
  %v415 = vunpack.c.h.b16 %v56
  %v416 = vunpack.c.l.b16 %v57
  %v417 = vunpack.c.h.b16 %v57
  %v418 = vunpack.c.l.b16 %v58
  %v419 = vunpack.c.h.b16 %v58
  %v420 = vunpack.c.l.b16 %v59
  %v421 = vunpack.c.h.b16 %v59
  %v422 = vunpack.c.l.b16 %v60
  %v423 = vunpack.c.h.b16 %v60
  %v424 = vunpack.c.l.b16 %v61
  %v425 = vunpack.c.h.b16 %v61
  %v426 = vunpack.c.l.b16 %v62
  %v427 = vunpack.c.h.b16 %v62
  %v428 = vunpack.c.l.b16 %v63
  %v429 = vunpack.c.h.b16 %v63
  %v430 = vunpack.c.l.b16 %v64
  %v431 = vunpack.c.h.b16 %v64
  %v432 = vunpack.c.l.b16 %v65
  %v433 = vunpack.c.h.b16 %v65
  %v434 = vunpack.c.l.b16 %v66
  %v435 = vunpack.c.h.b16 %v66
  %v436 = vunpack.c.l.b16 %v67
  %v437 = vunpack.c.h.b16 %v67
  %v438 = vunpack.c.l.b16 %v68
  %v439 = vunpack.c.h.b16 %v68
  %v440 = vunpack.c.l.b16 %v69
  %v441 = vunpack.c.h.b16 %v69
  %v442 = vunpack.c.l.b16 %v70
  %v443 = vunpack.c.h.b16 %v70
  %v444 = vunpack.c.l.b16 %v71
  %v445 = vunpack.c.h.b16 %v71
  %v446 = vunpack.c.l.b16 %v72
  %v447 = vunpack.c.h.b16 %v72
  %v448 = vunpack.c.l.b16 %v73
  %v449 = vunpack.c.h.b16 %v73
  %v450 = vunpack.c.l.b16 %v74
  %v451 = vunpack.c.h.b16 %v74
  %v452 = vunpack.c.l.b16 %v75
  %v453 = vunpack.c.h.b16 %v75
  %v454 = vunpack.c.l.b16 %v76
  %v455 = vunpack.c.h.b16 %v76
  %v456 = vunpack.c.l.b16 %v77
  %v457 = vunpack.c.h.b16 %v77
  %v458 = vunpack.c.l.b16 %v78
  %v459 = vunpack.c.h.b16 %v78
  %v460 = vunpack.c.l.b16 %v79
  %v461 = vunpack.c.h.b16 %v79
  %v462 = vunpack.c.l.b16 %v80
  %v463 = vunpack.c.h.b16 %v80
  %v464 = vunpack.c.l.b16 %v81
  %v465 = vunpack.c.h.b16 %v81
  %v466 = vunpack.c.l.b16 %v82
  %v467 = vunpack.c.h.b16 %v82
  %v468 = vunpack.c.l.b16 %v83
  %v469 = vunpack.c.h.b16 %v83
  %v470 = vunpack.c.l.b16 %v84
  %v471 = vunpack.c.h.b16 %v84
  %v472 = vunpack.c.l.b16 %v85
  %v473 = vunpack.c.h.b16 %v85
  %v474 = vunpack.c.l.b16 %v86
  %v475 = vunpack.c.h.b16 %v86
  %v476 = vunpack.c.l.b16 %v87
  %v477 = vunpack.c.h.b16 %v87
  %v478 = vunpack.c.l.b16 %v88
  %v479 = vunpack.c.h.b16 %v88
  %v480 = vunpack.c.l.b16 %v89
  %v481 = vunpack.c.h.b16 %v89
  %v482 = vunpack.c.l.b16 %v90
  %v483 = vunpack.c.h.b16 %v90
  %v484 = vunpack.c.l.b16 %v91
  %v485 = vunpack.c.h.b16 %v91
  %v486 = vunpack.c.l.b16 %v92
  %v487 = vunpack.c.h.b16 %v92
  %v488 = vunpack.c.l.b16 %v93
  %v489 = vunpack.c.h.b16 %v93
  %v490 = vunpack.c.l.b16 %v94
  %v491 = vunpack.c.h.b16 %v94
  %v492 = vunpack.c.l.b16 %v95
  %v493 = vunpack.c.h.b16 %v95
  %v494 = vunpack.c.l.b16 %v96
  %v495 = vunpack.c.h.b16 %v96
  %v496 = vunpack.c.l.b16 %v97
  %v497 = vunpack.c.h.b16 %v97
  %v498 = vunpack.c.l.b16 %v98
  %v499 = vunpack.c.h.b16 %v98
  %v500 = vunpack.c.l.b16 %v99
  %v501 = vunpack.c.h.b16 %v99
  %v502 = vunpack.c.l.b16 %v100
  %v503 = vunpack.c.h.b16 %v100
  %v504 = vunpack.c.l.b16 %v101
  %v505 = vunpack.c.h.b16 %v101
  %v506 = vunpack.c.l.b16 %v102
  %v507 = vunpack.c.h.b16 %v102
  %v508 = vunpack.c.l.b16 %v103
  %v509 = vunpack.c.h.b16 %v103
  %v510 = vunpack.c.l.b16 %v104
  %v511 = vunpack.c.h.b16 %v104
  %v512 = vunpack.c.l.b16 %v105
  %v513 = vunpack.c.h.b16 %v105
  %v514 = vunpack.c.l.b16 %v106
  %v515 = vunpack.c.h.b16 %v106
  %v516 = vunpack.c.l.b16 %v107
  %v517 = vunpack.c.h.b16 %v107
  %v518 = vunpack.c.l.b16 %v108
  %v519 = vunpack.c.h.b16 %v108
  %v520 = vunpack.c.l.b16 %v109
  %v521 = vunpack.c.h.b16 %v109
  %v522 = vunpack.c.l.b16 %v110
  %v523 = vunpack.c.h.b16 %v110
  %v524 = vunpack.c.l.b16 %v111
  %v525 = vunpack.c.h.b16 %v111
  %v526 = vunpack.c.l.b16 %v112
  %v527 = vunpack.c.h.b16 %v112
  %v528 = vunpack.c.l.b16 %v113
  %v529 = vunpack.c.h.b16 %v113
  %v530 = vunpack.c.l.b16 %v114
  %v531 = vunpack.c.h.b16 %v114
  %v532 = vunpack.c.l.b16 %v115
  %v533 = vunpack.c.h.b16 %v115
  %v534 = vunpack.c.l.b16 %v116
  %v535 = vunpack.c.h.b16 %v116
  %v536 = vunpack.c.l.b16 %v117
  %v537 = vunpack.c.h.b16 %v117
  %v538 = vunpack.c.l.b16 %v118
  %v539 = vunpack.c.h.b16 %v118
  %v540 = vunpack.c.l.b16 %v119
  %v541 = vunpack.c.h.b16 %v119
  %v542 = vunpack.c.l.b16 %v120
  %v543 = vunpack.c.h.b16 %v120
  %v544 = vunpack.c.l.b16 %v121
  %v545 = vunpack.c.h.b16 %v121
  %v546 = vunpack.c.l.b16 %v122
  %v547 = vunpack.c.h.b16 %v122
  %v548 = vunpack.c.l.b16 %v123
  %v549 = vunpack.c.h.b16 %v123
  %v550 = vunpack.c.l.b16 %v124
  %v551 = vunpack.c.h.b16 %v124
  %v552 = vunpack.c.l.b16 %v125
  %v553 = vunpack.c.h.b16 %v125
  %v554 = vunpack.c.l.b16 %v126
  %v555 = vunpack.c.h.b16 %v126
  %v556 = vunpack.c.l.b16 %v127
  %v557 = vunpack.c.h.b16 %v127
  %v558 = vunpack.c.l.b16 %v128
  %v559 = vunpack.c.h.b16 %v128
  %v560 = vunpack.c.l.b16 %v129
  %v561 = vunpack.c.h.b16 %v129
  %v562 = vunpack.c.l.b16 %v130
  %v563 = vunpack.c.h.b16 %v130
  %v564 = vunpack.c.l.b16 %v131
  %v565 = vunpack.c.h.b16 %v131
  %v566 = vunpack.c.l.b16 %v132
  %v567 = vunpack.c.h.b16 %v132
  %v568 = vunpack.c.l.b16 %v133
  %v569 = vunpack.c.h.b16 %v133
  %v570 = vunpack.c.l.b16 %v134
  %v571 = vunpack.c.h.b16 %v134
  %v572 = vunpack.c.l.b16 %v135
  %v573 = vunpack.c.h.b16 %v135
  %v574 = vunpack.c.l.b16 %v136
  %v575 = vunpack.c.h.b16 %v136
  %v576 = vunpack.c.l.b16 %v137
  %v577 = vunpack.c.h.b16 %v137
  %v578 = vunpack.c.l.b16 %v138
  %v579 = vunpack.c.h.b16 %v138
  %v580 = vunpack.c.l.b16 %v139
  %v581 = vunpack.c.h.b16 %v139
  %v582 = vunpack.c.l.b16 %v140
  %v583 = vunpack.c.h.b16 %v140
  %v584 = vunpack.c.l.b16 %v141
  %v585 = vunpack.c.h.b16 %v141
  %v586 = vunpack.c.l.b16 %v142
  %v587 = vunpack.c.h.b16 %v142
  %v588 = vunpack.c.l.b16 %v143
  %v589 = vunpack.c.h.b16 %v143
  %v590 = vunpack.c.l.b16 %v144
  %v591 = vunpack.c.h.b16 %v144
  %v592 = vunpack.c.l.b16 %v145
  %v593 = vunpack.c.h.b16 %v145
  %v594 = vpack.c.b16 %v342, %v338
  %v595 = vpack.c.b16 %v343, %v339
  %v596 = vpack.c.b16 %v344, %v340
  %v597 = vpack.c.b16 %v345, %v341
  %v598 = vpack.c.b16 %v350, %v346
  %v599 = vpack.c.b16 %v351, %v347
  %v600 = vpack.c.b16 %v352, %v348
  %v601 = vpack.c.b16 %v353, %v349
  %v602 = vpack.c.b16 %v358, %v354
  %v603 = vpack.c.b16 %v359, %v355
  %v604 = vpack.c.b16 %v360, %v356
  %v605 = vpack.c.b16 %v361, %v357
  %v606 = vpack.c.b16 %v366, %v362
  %v607 = vpack.c.b16 %v367, %v363
  %v608 = vpack.c.b16 %v368, %v364
  %v609 = vpack.c.b16 %v369, %v365
  %v610 = vpack.c.b16 %v374, %v370
  %v611 = vpack.c.b16 %v375, %v371
  %v612 = vpack.c.b16 %v376, %v372
  %v613 = vpack.c.b16 %v377, %v373
  %v614 = vpack.c.b16 %v382, %v378
  %v615 = vpack.c.b16 %v383, %v379
  %v616 = vpack.c.b16 %v384, %v380
  %v617 = vpack.c.b16 %v385, %v381
  %v618 = vpack.c.b16 %v390, %v386
  %v619 = vpack.c.b16 %v391, %v387
  %v620 = vpack.c.b16 %v392, %v388
  %v621 = vpack.c.b16 %v393, %v389
  %v622 = vpack.c.b16 %v398, %v394
  %v623 = vpack.c.b16 %v399, %v395
  %v624 = vpack.c.b16 %v400, %v396
  %v625 = vpack.c.b16 %v401, %v397
  %v626 = vpack.c.b16 %v406, %v402
  %v627 = vpack.c.b16 %v407, %v403
  %v628 = vpack.c.b16 %v408, %v404
  %v629 = vpack.c.b16 %v409, %v405
  %v630 = vpack.c.b16 %v414, %v410
  %v631 = vpack.c.b16 %v415, %v411
  %v632 = vpack.c.b16 %v416, %v412
  %v633 = vpack.c.b16 %v417, %v413
  %v634 = vpack.c.b16 %v422, %v418
  %v635 = vpack.c.b16 %v423, %v419
  %v636 = vpack.c.b16 %v424, %v420
  %v637 = vpack.c.b16 %v425, %v421
  %v638 = vpack.c.b16 %v430, %v426
  %v639 = vpack.c.b16 %v431, %v427
  %v640 = vpack.c.b16 %v432, %v428
  %v641 = vpack.c.b16 %v433, %v429
  %v642 = vpack.c.b16 %v438, %v434
  %v643 = vpack.c.b16 %v439, %v435
  %v644 = vpack.c.b16 %v440, %v436
  %v645 = vpack.c.b16 %v441, %v437
  %v646 = vpack.c.b16 %v446, %v442
  %v647 = vpack.c.b16 %v447, %v443
  %v648 = vpack.c.b16 %v448, %v444
  %v649 = vpack.c.b16 %v449, %v445
  %v650 = vpack.c.b16 %v454, %v450
  %v651 = vpack.c.b16 %v455, %v451
  %v652 = vpack.c.b16 %v456, %v452
  %v653 = vpack.c.b16 %v457, %v453
  %v654 = vpack.c.b16 %v462, %v458
  %v655 = vpack.c.b16 %v463, %v459
  %v656 = vpack.c.b16 %v464, %v460
  %v657 = vpack.c.b16 %v465, %v461
  %v658 = vpack.c.b16 %v470, %v466
  %v659 = vpack.c.b16 %v471, %v467
  %v660 = vpack.c.b16 %v472, %v468
  %v661 = vpack.c.b16 %v473, %v469
  %v662 = vpack.c.b16 %v478, %v474
  %v663 = vpack.c.b16 %v479, %v475
  %v664 = vpack.c.b16 %v480, %v476
  %v665 = vpack.c.b16 %v481, %v477
  %v666 = vpack.c.b16 %v486, %v482
  %v667 = vpack.c.b16 %v487, %v483
  %v668 = vpack.c.b16 %v488, %v484
  %v669 = vpack.c.b16 %v489, %v485
  %v670 = vpack.c.b16 %v494, %v490
  %v671 = vpack.c.b16 %v495, %v491
  %v672 = vpack.c.b16 %v496, %v492
  %v673 = vpack.c.b16 %v497, %v493
  %v674 = vpack.c.b16 %v502, %v498
  %v675 = vpack.c.b16 %v503, %v499
  %v676 = vpack.c.b16 %v504, %v500
  %v677 = vpack.c.b16 %v505, %v501
  %v678 = vpack.c.b16 %v510, %v506
  %v679 = vpack.c.b16 %v511, %v507
  %v680 = vpack.c.b16 %v512, %v508
  %v681 = vpack.c.b16 %v513, %v509
  %v682 = vpack.c.b16 %v518, %v514
  %v683 = vpack.c.b16 %v519, %v515
  %v684 = vpack.c.b16 %v520, %v516
  %v685 = vpack.c.b16 %v521, %v517
  %v686 = vpack.c.b16 %v526, %v522
  %v687 = vpack.c.b16 %v527, %v523
  %v688 = vpack.c.b16 %v528, %v524
  %v689 = vpack.c.b16 %v529, %v525
  %v690 = vpack.c.b16 %v534, %v530
  %v691 = vpack.c.b16 %v535, %v531
  %v692 = vpack.c.b16 %v536, %v532
  %v693 = vpack.c.b16 %v537, %v533
  %v694 = vpack.c.b16 %v542, %v538
  %v695 = vpack.c.b16 %v543, %v539
  %v696 = vpack.c.b16 %v544, %v540
  %v697 = vpack.c.b16 %v545, %v541
  %v698 = vpack.c.b16 %v550, %v546
  %v699 = vpack.c.b16 %v551, %v547
  %v700 = vpack.c.b16 %v552, %v548
  %v701 = vpack.c.b16 %v553, %v549
  %v702 = vpack.c.b16 %v558, %v554
  %v703 = vpack.c.b16 %v559, %v555
  %v704 = vpack.c.b16 %v560, %v556
  %v705 = vpack.c.b16 %v561, %v557
  %v706 = vpack.c.b16 %v566, %v562
  %v707 = vpack.c.b16 %v567, %v563
  %v708 = vpack.c.b16 %v568, %v564
  %v709 = vpack.c.b16 %v569, %v565
  %v710 = vpack.c.b16 %v574, %v570
  %v711 = vpack.c.b16 %v575, %v571
  %v712 = vpack.c.b16 %v576, %v572
  %v713 = vpack.c.b16 %v577, %v573
  %v714 = vpack.c.b16 %v582, %v578
  %v715 = vpack.c.b16 %v583, %v579
  %v716 = vpack.c.b16 %v584, %v580
  %v717 = vpack.c.b16 %v585, %v581
  %v718 = vpack.c.b16 %v590, %v586
  %v719 = vpack.c.b16 %v591, %v587
  %v720 = vpack.c.b16 %v592, %v588
  %v721 = vpack.c.b16 %v593, %v589
  %v914 = vunpack.c.l.b16 %v146
  %v915 = vunpack.c.l.b16 %v147
  %v916 = vunpack.c.l.b16 %v148
  %v917 = vunpack.c.l.b16 %v149
  %v918 = vunpack.c.l.b16 %v150
  %v919 = vunpack.c.l.b16 %v151
  %v920 = vunpack.c.l.b16 %v152
  %v921 = vunpack.c.l.b16 %v153
  %v922 = vunpack.c.l.b16 %v154
  %v923 = vunpack.c.l.b16 %v155
  %v924 = vunpack.c.l.b16 %v156
  %v925 = vunpack.c.l.b16 %v157
  %v926 = vunpack.c.l.b16 %v158
  %v927 = vunpack.c.l.b16 %v159
  %v928 = vunpack.c.l.b16 %v160
  %v929 = vunpack.c.l.b16 %v161
  %v930 = vunpack.c.l.b16 %v162
  %v931 = vunpack.c.l.b16 %v163
  %v932 = vunpack.c.l.b16 %v164
  %v933 = vunpack.c.l.b16 %v165
  %v934 = vunpack.c.l.b16 %v166
  %v935 = vunpack.c.l.b16 %v167
  %v936 = vunpack.c.l.b16 %v168
  %v937 = vunpack.c.l.b16 %v169
  %v938 = vunpack.c.l.b16 %v170
  %v939 = vunpack.c.l.b16 %v171
  %v940 = vunpack.c.l.b16 %v172
  %v941 = vunpack.c.l.b16 %v173
  %v942 = vunpack.c.l.b16 %v174
  %v943 = vunpack.c.l.b16 %v175
  %v944 = vunpack.c.l.b16 %v176
  %v945 = vunpack.c.l.b16 %v177
  %v946 = vunpack.c.l.b16 %v178
  %v947 = vunpack.c.l.b16 %v179
  %v948 = vunpack.c.l.b16 %v180
  %v949 = vunpack.c.l.b16 %v181
  %v950 = vunpack.c.l.b16 %v182
  %v951 = vunpack.c.l.b16 %v183
  %v952 = vunpack.c.l.b16 %v184
  %v953 = vunpack.c.l.b16 %v185
  %v954 = vunpack.c.l.b16 %v186
  %v955 = vunpack.c.l.b16 %v187
  %v956 = vunpack.c.l.b16 %v188
  %v957 = vunpack.c.l.b16 %v189
  %v958 = vunpack.c.l.b16 %v190
  %v959 = vunpack.c.l.b16 %v191
  %v960 = vunpack.c.l.b16 %v192
  %v961 = vunpack.c.l.b16 %v193
  %v962 = vunpack.c.l.b16 %v194
  %v963 = vunpack.c.l.b16 %v195
  %v964 = vunpack.c.l.b16 %v196
  %v965 = vunpack.c.l.b16 %v197
  %v966 = vunpack.c.l.b16 %v198
  %v967 = vunpack.c.l.b16 %v199
  %v968 = vunpack.c.l.b16 %v200
  %v969 = vunpack.c.l.b16 %v201
  %v970 = vunpack.c.l.b16 %v202
  %v971 = vunpack.c.l.b16 %v203
  %v972 = vunpack.c.l.b16 %v204
  %v973 = vunpack.c.l.b16 %v205
  %v974 = vunpack.c.l.b16 %v206
  %v975 = vunpack.c.l.b16 %v207
  %v976 = vunpack.c.l.b16 %v208
  %v977 = vunpack.c.l.b16 %v209
  %v978 = vpack.c.b16 %v915, %v914
  %v979 = vpack.c.b16 %v917, %v916
  %v980 = vpack.c.b16 %v919, %v918
  %v981 = vpack.c.b16 %v921, %v920
  %v982 = vpack.c.b16 %v923, %v922
  %v983 = vpack.c.b16 %v925, %v924
  %v984 = vpack.c.b16 %v927, %v926
  %v985 = vpack.c.b16 %v929, %v928
  %v986 = vpack.c.b16 %v931, %v930
  %v987 = vpack.c.b16 %v933, %v932
  %v988 = vpack.c.b16 %v935, %v934
  %v989 = vpack.c.b16 %v937, %v936
  %v990 = vpack.c.b16 %v939, %v938
  %v991 = vpack.c.b16 %v941, %v940
  %v992 = vpack.c.b16 %v943, %v942
  %v993 = vpack.c.b16 %v945, %v944
  %v994 = vpack.c.b16 %v947, %v946
  %v995 = vpack.c.b16 %v949, %v948
  %v996 = vpack.c.b16 %v951, %v950
  %v997 = vpack.c.b16 %v953, %v952
  %v998 = vpack.c.b16 %v955, %v954
  %v999 = vpack.c.b16 %v957, %v956
  %v1000 = vpack.c.b16 %v959, %v958
  %v1001 = vpack.c.b16 %v961, %v960
  %v1002 = vpack.c.b16 %v963, %v962
  %v1003 = vpack.c.b16 %v965, %v964
  %v1004 = vpack.c.b16 %v967, %v966
  %v1005 = vpack.c.b16 %v969, %v968
  %v1006 = vpack.c.b16 %v971, %v970
  %v1007 = vpack.c.b16 %v973, %v972
  %v1008 = vpack.c.b16 %v975, %v974
  %v1009 = vpack.c.b16 %v977, %v976
  %1042 = vmatprep.subr.bf16.mxu0 0
  %1043 = vmatpush1.bf16.msra.mxu0 %v978
  %1044 = vmatprep.subr.bf16.mxu0 0
  %1045 = vmatpush1.bf16.msra.mxu0 %v979
  %1046 = vmatprep.subr.bf16.mxu0 0
  %1047 = vmatpush1.bf16.msra.mxu0 %v980
  %1048 = vmatprep.subr.bf16.mxu0 0
  %1049 = vmatpush1.bf16.msra.mxu0 %v981
  %1050 = vmatprep.subr.bf16.mxu0 0
  %1051 = vmatpush1.bf16.msra.mxu0 %v982
  %1052 = vmatprep.subr.bf16.mxu0 0
  %1053 = vmatpush1.bf16.msra.mxu0 %v983
  %1054 = vmatprep.subr.bf16.mxu0 0
  %1055 = vmatpush1.bf16.msra.mxu0 %v984
  %1056 = vmatprep.subr.bf16.mxu0 0
  %1057 = vmatpush1.bf16.msra.mxu0 %v985
  %1058 = vmatprep.subr.bf16.mxu0 0
  %1059 = vmatpush1.bf16.msra.mxu0 %v986
  %1060 = vmatprep.subr.bf16.mxu0 0
  %1061 = vmatpush1.bf16.msra.mxu0 %v987
  %1062 = vmatprep.subr.bf16.mxu0 0
  %1063 = vmatpush1.bf16.msra.mxu0 %v988
  %1064 = vmatprep.subr.bf16.mxu0 0
  %1065 = vmatpush1.bf16.msra.mxu0 %v989
  %1066 = vmatprep.subr.bf16.mxu0 0
  %1067 = vmatpush1.bf16.msra.mxu0 %v990
  %1068 = vmatprep.subr.bf16.mxu0 0
  %1069 = vmatpush1.bf16.msra.mxu0 %v991
  %1070 = vmatprep.subr.bf16.mxu0 0
  %1071 = vmatpush1.bf16.msra.mxu0 %v992
  %1072 = vmatprep.subr.bf16.mxu0 0
  %1073 = vmatpush1.bf16.msra.mxu0 %v993
  %1074 = vmatprep.mubr.bf16.mxu0 %v595
  %1075 = vmatmul.mubr.bf16.gmra.mrb[0].mxu0 %v594
  %v1076 = vpop.f32.mrb[0].mxu0
  %v1077 = vadd.f32 0.0, %v1076
  %v1078 = vpop.f32.mrb[0].mxu0
  %v1079 = vpop.f32.mrb[0].mxu0
  %v1080 = vadd.f32 0.0, %v1079
  %v1081 = vpop.f32.mrb[0].mxu0
  %1082 = vmatprep.mubr.bf16.mxu0 %v599
  %1083 = vmatmul.mubr.bf16.gmra.mrb[0].mxu0 %v598
  %v1084 = vpop.f32.mrb[0].mxu0
  %v1085 = vadd.f32 0.0, %v1084
  %v1086 = vpop.f32.mrb[0].mxu0
  %v1087 = vpop.f32.mrb[0].mxu0
  %v1088 = vadd.f32 0.0, %v1087
  %v1089 = vpop.f32.mrb[0].mxu0
  %1090 = vmatprep.mubr.bf16.mxu0 %v603
  %1091 = vmatmul.mubr.bf16.gmra.mrb[0].mxu0 %v602
  %v1092 = vpop.f32.mrb[0].mxu0
  %v1093 = vadd.f32 0.0, %v1092
  %v1094 = vpop.f32.mrb[0].mxu0
  %v1095 = vpop.f32.mrb[0].mxu0
  %v1096 = vadd.f32 0.0, %v1095
  %v1097 = vpop.f32.mrb[0].mxu0
  %1098 = vmatprep.mubr.bf16.mxu0 %v607
  %1099 = vmatmul.mubr.bf16.gmra.mrb[0].mxu0 %v606
  %v1100 = vpop.f32.mrb[0].mxu0
  %v1101 = vadd.f32 0.0, %v1100
  %v1102 = vpop.f32.mrb[0].mxu0
  %v1103 = vpop.f32.mrb[0].mxu0
  %v1104 = vadd.f32 0.0, %v1103
  %v1105 = vpop.f32.mrb[0].mxu0
  %1106 = vmatprep.mubr.bf16.mxu0 %v611
  %1107 = vmatmul.mubr.bf16.gmra.mrb[0].mxu0 %v610
  %v1108 = vpop.f32.mrb[0].mxu0
  %v1109 = vadd.f32 0.0, %v1108
  %v1110 = vpop.f32.mrb[0].mxu0
  %v1111 = vpop.f32.mrb[0].mxu0
  %v1112 = vadd.f32 0.0, %v1111
  %v1113 = vpop.f32.mrb[0].mxu0
  %1114 = vmatprep.mubr.bf16.mxu0 %v615
  %1115 = vmatmul.mubr.bf16.gmra.mrb[0].mxu0 %v614
  %v1116 = vpop.f32.mrb[0].mxu0
  %v1117 = vadd.f32 0.0, %v1116
  %v1118 = vpop.f32.mrb[0].mxu0
  %v1119 = vpop.f32.mrb[0].mxu0
  %v1120 = vadd.f32 0.0, %v1119
  %v1121 = vpop.f32.mrb[0].mxu0
  %1122 = vmatprep.mubr.bf16.mxu0 %v619
  %1123 = vmatmul.mubr.bf16.gmra.mrb[0].mxu0 %v618
  %v1124 = vpop.f32.mrb[0].mxu0
  %v1125 = vadd.f32 0.0, %v1124
  %v1126 = vpop.f32.mrb[0].mxu0
  %v1127 = vpop.f32.mrb[0].mxu0
  %v1128 = vadd.f32 0.0, %v1127
  %v1129 = vpop.f32.mrb[0].mxu0
  %1130 = vmatprep.mubr.bf16.mxu0 %v623
  %1131 = vmatmul.mubr.bf16.gmra.mrb[0].mxu0 %v622
  %v1132 = vpop.f32.mrb[0].mxu0
  %v1133 = vadd.f32 0.0, %v1132
  %v1134 = vpop.f32.mrb[0].mxu0
  %v1135 = vpop.f32.mrb[0].mxu0
  %v1136 = vadd.f32 0.0, %v1135
  %v1137 = vpop.f32.mrb[0].mxu0
  %1138 = vmatprep.mubr.bf16.mxu0 %v627
  %1139 = vmatmul.mubr.bf16.gmra.mrb[0].mxu0 %v626
  %v1140 = vpop.f32.mrb[0].mxu0
  %v1141 = vadd.f32 0.0, %v1140
  %v1142 = vpop.f32.mrb[0].mxu0
  %v1143 = vpop.f32.mrb[0].mxu0
  %v1144 = vadd.f32 0.0, %v1143
  %v1145 = vpop.f32.mrb[0].mxu0
  %1146 = vmatprep.mubr.bf16.mxu0 %v631
  %1147 = vmatmul.mubr.bf16.gmra.mrb[0].mxu0 %v630
  %v1148 = vpop.f32.mrb[0].mxu0
  %v1149 = vadd.f32 0.0, %v1148
  %v1150 = vpop.f32.mrb[0].mxu0
  %v1151 = vpop.f32.mrb[0].mxu0
  %v1152 = vadd.f32 0.0, %v1151
  %v1153 = vpop.f32.mrb[0].mxu0
  %1154 = vmatprep.mubr.bf16.mxu0 %v635
  %1155 = vmatmul.mubr.bf16.gmra.mrb[0].mxu0 %v634
  %v1156 = vpop.f32.mrb[0].mxu0
  %v1157 = vadd.f32 0.0, %v1156
  %v1158 = vpop.f32.mrb[0].mxu0
  %v1159 = vpop.f32.mrb[0].mxu0
  %v1160 = vadd.f32 0.0, %v1159
  %v1161 = vpop.f32.mrb[0].mxu0
  %1162 = vmatprep.mubr.bf16.mxu0 %v639
  %1163 = vmatmul.mubr.bf16.gmra.mrb[0].mxu0 %v638
  %v1164 = vpop.f32.mrb[0].mxu0
  %v1165 = vadd.f32 0.0, %v1164
  %v1166 = vpop.f32.mrb[0].mxu0
  %v1167 = vpop.f32.mrb[0].mxu0
  %v1168 = vadd.f32 0.0, %v1167
  %v1169 = vpop.f32.mrb[0].mxu0
  %1170 = vmatprep.mubr.bf16.mxu0 %v643
  %1171 = vmatmul.mubr.bf16.gmra.mrb[0].mxu0 %v642
  %v1172 = vpop.f32.mrb[0].mxu0
  %v1173 = vadd.f32 0.0, %v1172
  %v1174 = vpop.f32.mrb[0].mxu0
  %v1175 = vpop.f32.mrb[0].mxu0
  %v1176 = vadd.f32 0.0, %v1175
  %v1177 = vpop.f32.mrb[0].mxu0
  %1178 = vmatprep.mubr.bf16.mxu0 %v647
  %1179 = vmatmul.mubr.bf16.gmra.mrb[0].mxu0 %v646
  %v1180 = vpop.f32.mrb[0].mxu0
  %v1181 = vadd.f32 0.0, %v1180
  %v1182 = vpop.f32.mrb[0].mxu0
  %v1183 = vpop.f32.mrb[0].mxu0
  %v1184 = vadd.f32 0.0, %v1183
  %v1185 = vpop.f32.mrb[0].mxu0
  %1186 = vmatprep.mubr.bf16.mxu0 %v651
  %1187 = vmatmul.mubr.bf16.gmra.mrb[0].mxu0 %v650
  %v1188 = vpop.f32.mrb[0].mxu0
  %v1189 = vadd.f32 0.0, %v1188
  %v1190 = vpop.f32.mrb[0].mxu0
  %v1191 = vpop.f32.mrb[0].mxu0
  %v1192 = vadd.f32 0.0, %v1191
  %v1193 = vpop.f32.mrb[0].mxu0
  %1194 = vmatprep.mubr.bf16.mxu0 %v655
  %1195 = vmatmul.mubr.bf16.gmra.mrb[0].mxu0 %v654
  %v1196 = vpop.f32.mrb[0].mxu0
  %v1197 = vadd.f32 0.0, %v1196
  %v1198 = vpop.f32.mrb[0].mxu0
  %v1199 = vpop.f32.mrb[0].mxu0
  %v1200 = vadd.f32 0.0, %v1199
  %v1201 = vpop.f32.mrb[0].mxu0
  %1202 = vmatprep.mubr.bf16.mxu0 %v659
  %1203 = vmatmul.mubr.bf16.gmra.mrb[0].mxu0 %v658
  %v1204 = vpop.f32.mrb[0].mxu0
  %v1205 = vadd.f32 0.0, %v1204
  %v1206 = vpop.f32.mrb[0].mxu0
  %v1207 = vpop.f32.mrb[0].mxu0
  %v1208 = vadd.f32 0.0, %v1207
  %v1209 = vpop.f32.mrb[0].mxu0
  %1210 = vmatprep.mubr.bf16.mxu0 %v663
  %1211 = vmatmul.mubr.bf16.gmra.mrb[0].mxu0 %v662
  %v1212 = vpop.f32.mrb[0].mxu0
  %v1213 = vadd.f32 0.0, %v1212
  %v1214 = vpop.f32.mrb[0].mxu0
  %v1215 = vpop.f32.mrb[0].mxu0
  %v1216 = vadd.f32 0.0, %v1215
  %v1217 = vpop.f32.mrb[0].mxu0
  %1218 = vmatprep.mubr.bf16.mxu0 %v667
  %1219 = vmatmul.mubr.bf16.gmra.mrb[0].mxu0 %v666
  %v1220 = vpop.f32.mrb[0].mxu0
  %v1221 = vadd.f32 0.0, %v1220
  %v1222 = vpop.f32.mrb[0].mxu0
  %v1223 = vpop.f32.mrb[0].mxu0
  %v1224 = vadd.f32 0.0, %v1223
  %v1225 = vpop.f32.mrb[0].mxu0
  %1226 = vmatprep.mubr.bf16.mxu0 %v671
  %1227 = vmatmul.mubr.bf16.gmra.mrb[0].mxu0 %v670
  %v1228 = vpop.f32.mrb[0].mxu0
  %v1229 = vadd.f32 0.0, %v1228
  %v1230 = vpop.f32.mrb[0].mxu0
  %v1231 = vpop.f32.mrb[0].mxu0
  %v1232 = vadd.f32 0.0, %v1231
  %v1233 = vpop.f32.mrb[0].mxu0
  %1234 = vmatprep.mubr.bf16.mxu0 %v675
  %1235 = vmatmul.mubr.bf16.gmra.mrb[0].mxu0 %v674
  %v1236 = vpop.f32.mrb[0].mxu0
  %v1237 = vadd.f32 0.0, %v1236
  %v1238 = vpop.f32.mrb[0].mxu0
  %v1239 = vpop.f32.mrb[0].mxu0
  %v1240 = vadd.f32 0.0, %v1239
  %v1241 = vpop.f32.mrb[0].mxu0
  %1242 = vmatprep.mubr.bf16.mxu0 %v679
  %1243 = vmatmul.mubr.bf16.gmra.mrb[0].mxu0 %v678
  %v1244 = vpop.f32.mrb[0].mxu0
  %v1245 = vadd.f32 0.0, %v1244
  %v1246 = vpop.f32.mrb[0].mxu0
  %v1247 = vpop.f32.mrb[0].mxu0
  %v1248 = vadd.f32 0.0, %v1247
  %v1249 = vpop.f32.mrb[0].mxu0
  %1250 = vmatprep.mubr.bf16.mxu0 %v683
  %1251 = vmatmul.mubr.bf16.gmra.mrb[0].mxu0 %v682
  %v1252 = vpop.f32.mrb[0].mxu0
  %v1253 = vadd.f32 0.0, %v1252
  %v1254 = vpop.f32.mrb[0].mxu0
  %v1255 = vpop.f32.mrb[0].mxu0
  %v1256 = vadd.f32 0.0, %v1255
  %v1257 = vpop.f32.mrb[0].mxu0
  %1258 = vmatprep.mubr.bf16.mxu0 %v687
  %1259 = vmatmul.mubr.bf16.gmra.mrb[0].mxu0 %v686
  %v1260 = vpop.f32.mrb[0].mxu0
  %v1261 = vadd.f32 0.0, %v1260
  %v1262 = vpop.f32.mrb[0].mxu0
  %v1263 = vpop.f32.mrb[0].mxu0
  %v1264 = vadd.f32 0.0, %v1263
  %v1265 = vpop.f32.mrb[0].mxu0
  %1266 = vmatprep.mubr.bf16.mxu0 %v691
  %1267 = vmatmul.mubr.bf16.gmra.mrb[0].mxu0 %v690
  %v1268 = vpop.f32.mrb[0].mxu0
  %v1269 = vadd.f32 0.0, %v1268
  %v1270 = vpop.f32.mrb[0].mxu0
  %v1271 = vpop.f32.mrb[0].mxu0
  %v1272 = vadd.f32 0.0, %v1271
  %v1273 = vpop.f32.mrb[0].mxu0
  %1274 = vmatprep.mubr.bf16.mxu0 %v695
  %1275 = vmatmul.mubr.bf16.gmra.mrb[0].mxu0 %v694
  %v1276 = vpop.f32.mrb[0].mxu0
  %v1277 = vadd.f32 0.0, %v1276
  %v1278 = vpop.f32.mrb[0].mxu0
  %v1279 = vpop.f32.mrb[0].mxu0
  %v1280 = vadd.f32 0.0, %v1279
  %v1281 = vpop.f32.mrb[0].mxu0
  %1282 = vmatprep.mubr.bf16.mxu0 %v699
  %1283 = vmatmul.mubr.bf16.gmra.mrb[0].mxu0 %v698
  %v1284 = vpop.f32.mrb[0].mxu0
  %v1285 = vadd.f32 0.0, %v1284
  %v1286 = vpop.f32.mrb[0].mxu0
  %v1287 = vpop.f32.mrb[0].mxu0
  %v1288 = vadd.f32 0.0, %v1287
  %v1289 = vpop.f32.mrb[0].mxu0
  %1290 = vmatprep.mubr.bf16.mxu0 %v703
  %1291 = vmatmul.mubr.bf16.gmra.mrb[0].mxu0 %v702
  %v1292 = vpop.f32.mrb[0].mxu0
  %v1293 = vadd.f32 0.0, %v1292
  %v1294 = vpop.f32.mrb[0].mxu0
  %v1295 = vpop.f32.mrb[0].mxu0
  %v1296 = vadd.f32 0.0, %v1295
  %v1297 = vpop.f32.mrb[0].mxu0
  %1298 = vmatprep.mubr.bf16.mxu0 %v707
  %1299 = vmatmul.mubr.bf16.gmra.mrb[0].mxu0 %v706
  %v1300 = vpop.f32.mrb[0].mxu0
  %v1301 = vadd.f32 0.0, %v1300
  %v1302 = vpop.f32.mrb[0].mxu0
  %v1303 = vpop.f32.mrb[0].mxu0
  %v1304 = vadd.f32 0.0, %v1303
  %v1305 = vpop.f32.mrb[0].mxu0
  %1306 = vmatprep.mubr.bf16.mxu0 %v711
  %1307 = vmatmul.mubr.bf16.gmra.mrb[0].mxu0 %v710
  %v1308 = vpop.f32.mrb[0].mxu0
  %v1309 = vadd.f32 0.0, %v1308
  %v1310 = vpop.f32.mrb[0].mxu0
  %v1311 = vpop.f32.mrb[0].mxu0
  %v1312 = vadd.f32 0.0, %v1311
  %v1313 = vpop.f32.mrb[0].mxu0
  %1314 = vmatprep.mubr.bf16.mxu0 %v715
  %1315 = vmatmul.mubr.bf16.gmra.mrb[0].mxu0 %v714
  %v1316 = vpop.f32.mrb[0].mxu0
  %v1317 = vadd.f32 0.0, %v1316
  %v1318 = vpop.f32.mrb[0].mxu0
  %v1319 = vpop.f32.mrb[0].mxu0
  %v1320 = vadd.f32 0.0, %v1319
  %v1321 = vpop.f32.mrb[0].mxu0
  %1322 = vmatprep.mubr.bf16.mxu0 %v719
  %1323 = vmatmul.mubr.bf16.gmra.mrb[0].mxu0 %v718
  %v1324 = vpop.f32.mrb[0].mxu0
  %v1325 = vadd.f32 0.0, %v1324
  %v1326 = vpop.f32.mrb[0].mxu0
  %v1327 = vpop.f32.mrb[0].mxu0
  %v1328 = vadd.f32 0.0, %v1327
  %v1329 = vpop.f32.mrb[0].mxu0
  %1330 = vdwg.mxu0
  %1331 = vmatprep.subr.bf16.mxu0 0
  %1332 = vmatpush1.bf16.msra.mxu0 %v994
  %1333 = vmatprep.subr.bf16.mxu0 0
  %1334 = vmatpush1.bf16.msra.mxu0 %v995
  %1335 = vmatprep.subr.bf16.mxu0 0
  %1336 = vmatpush1.bf16.msra.mxu0 %v996
  %1337 = vmatprep.subr.bf16.mxu0 0
  %1338 = vmatpush1.bf16.msra.mxu0 %v997
  %1339 = vmatprep.subr.bf16.mxu0 0
  %1340 = vmatpush1.bf16.msra.mxu0 %v998
  %1341 = vmatprep.subr.bf16.mxu0 0
  %1342 = vmatpush1.bf16.msra.mxu0 %v999
  %1343 = vmatprep.subr.bf16.mxu0 0
  %1344 = vmatpush1.bf16.msra.mxu0 %v1000
  %1345 = vmatprep.subr.bf16.mxu0 0
  %1346 = vmatpush1.bf16.msra.mxu0 %v1001
  %1347 = vmatprep.subr.bf16.mxu0 0
  %1348 = vmatpush1.bf16.msra.mxu0 %v1002
  %1349 = vmatprep.subr.bf16.mxu0 0
  %1350 = vmatpush1.bf16.msra.mxu0 %v1003
  %1351 = vmatprep.subr.bf16.mxu0 0
  %1352 = vmatpush1.bf16.msra.mxu0 %v1004
  %1353 = vmatprep.subr.bf16.mxu0 0
  %1354 = vmatpush1.bf16.msra.mxu0 %v1005
  %1355 = vmatprep.subr.bf16.mxu0 0
  %1356 = vmatpush1.bf16.msra.mxu0 %v1006
  %1357 = vmatprep.subr.bf16.mxu0 0
  %1358 = vmatpush1.bf16.msra.mxu0 %v1007
  %1359 = vmatprep.subr.bf16.mxu0 0
  %1360 = vmatpush1.bf16.msra.mxu0 %v1008
  %1361 = vmatprep.subr.bf16.mxu0 0
  %1362 = vmatpush1.bf16.msra.mxu0 %v1009
  %1363 = vmatprep.mubr.bf16.mxu0 %v597
  %1364 = vmatmul.mubr.bf16.gmra.mrb[0].mxu0 %v596
  %v1365 = vpop.f32.mrb[0].mxu0
  %v1366 = vadd.f32 %v1077, %v1365
  %v1367 = vpop.f32.mrb[0].mxu0
  %v1368 = vpop.f32.mrb[0].mxu0
  %v1369 = vadd.f32 %v1080, %v1368
  %v1370 = vpop.f32.mrb[0].mxu0
  %1371 = vmatprep.mubr.bf16.mxu0 %v601
  %1372 = vmatmul.mubr.bf16.gmra.mrb[0].mxu0 %v600
  %v1373 = vpop.f32.mrb[0].mxu0
  %v1374 = vadd.f32 %v1085, %v1373
  %v1375 = vpop.f32.mrb[0].mxu0
  %v1376 = vpop.f32.mrb[0].mxu0
  %v1377 = vadd.f32 %v1088, %v1376
  %v1378 = vpop.f32.mrb[0].mxu0
  %1379 = vmatprep.mubr.bf16.mxu0 %v605
  %1380 = vmatmul.mubr.bf16.gmra.mrb[0].mxu0 %v604
  %v1381 = vpop.f32.mrb[0].mxu0
  %v1382 = vadd.f32 %v1093, %v1381
  %v1383 = vpop.f32.mrb[0].mxu0
  %v1384 = vpop.f32.mrb[0].mxu0
  %v1385 = vadd.f32 %v1096, %v1384
  %v1386 = vpop.f32.mrb[0].mxu0
  %1387 = vmatprep.mubr.bf16.mxu0 %v609
  %1388 = vmatmul.mubr.bf16.gmra.mrb[0].mxu0 %v608
  %v1389 = vpop.f32.mrb[0].mxu0
  %v1390 = vadd.f32 %v1101, %v1389
  %v1391 = vpop.f32.mrb[0].mxu0
  %v1392 = vpop.f32.mrb[0].mxu0
  %v1393 = vadd.f32 %v1104, %v1392
  %v1394 = vpop.f32.mrb[0].mxu0
  %1395 = vmatprep.mubr.bf16.mxu0 %v613
  %1396 = vmatmul.mubr.bf16.gmra.mrb[0].mxu0 %v612
  %v1397 = vpop.f32.mrb[0].mxu0
  %v1398 = vadd.f32 %v1109, %v1397
  %v1399 = vpop.f32.mrb[0].mxu0
  %v1400 = vpop.f32.mrb[0].mxu0
  %v1401 = vadd.f32 %v1112, %v1400
  %v1402 = vpop.f32.mrb[0].mxu0
  %1403 = vmatprep.mubr.bf16.mxu0 %v617
  %1404 = vmatmul.mubr.bf16.gmra.mrb[0].mxu0 %v616
  %v1405 = vpop.f32.mrb[0].mxu0
  %v1406 = vadd.f32 %v1117, %v1405
  %v1407 = vpop.f32.mrb[0].mxu0
  %v1408 = vpop.f32.mrb[0].mxu0
  %v1409 = vadd.f32 %v1120, %v1408
  %v1410 = vpop.f32.mrb[0].mxu0
  %1411 = vmatprep.mubr.bf16.mxu0 %v621
  %1412 = vmatmul.mubr.bf16.gmra.mrb[0].mxu0 %v620
  %v1413 = vpop.f32.mrb[0].mxu0
  %v1414 = vadd.f32 %v1125, %v1413
  %v1415 = vpop.f32.mrb[0].mxu0
  %v1416 = vpop.f32.mrb[0].mxu0
  %v1417 = vadd.f32 %v1128, %v1416
  %v1418 = vpop.f32.mrb[0].mxu0
  %1419 = vmatprep.mubr.bf16.mxu0 %v625
  %1420 = vmatmul.mubr.bf16.gmra.mrb[0].mxu0 %v624
  %v1421 = vpop.f32.mrb[0].mxu0
  %v1422 = vadd.f32 %v1133, %v1421
  %v1423 = vpop.f32.mrb[0].mxu0
  %v1424 = vpop.f32.mrb[0].mxu0
  %v1425 = vadd.f32 %v1136, %v1424
  %v1426 = vpop.f32.mrb[0].mxu0
  %1427 = vmatprep.mubr.bf16.mxu0 %v629
  %1428 = vmatmul.mubr.bf16.gmra.mrb[0].mxu0 %v628
  %v1429 = vpop.f32.mrb[0].mxu0
  %v1430 = vadd.f32 %v1141, %v1429
  %v1431 = vpop.f32.mrb[0].mxu0
  %v1432 = vpop.f32.mrb[0].mxu0
  %v1433 = vadd.f32 %v1144, %v1432
  %v1434 = vpop.f32.mrb[0].mxu0
  %1435 = vmatprep.mubr.bf16.mxu0 %v633
  %1436 = vmatmul.mubr.bf16.gmra.mrb[0].mxu0 %v632
  %v1437 = vpop.f32.mrb[0].mxu0
  %v1438 = vadd.f32 %v1149, %v1437
  %v1439 = vpop.f32.mrb[0].mxu0
  %v1440 = vpop.f32.mrb[0].mxu0
  %v1441 = vadd.f32 %v1152, %v1440
  %v1442 = vpop.f32.mrb[0].mxu0
  %1443 = vmatprep.mubr.bf16.mxu0 %v637
  %1444 = vmatmul.mubr.bf16.gmra.mrb[0].mxu0 %v636
  %v1445 = vpop.f32.mrb[0].mxu0
  %v1446 = vadd.f32 %v1157, %v1445
  %v1447 = vpop.f32.mrb[0].mxu0
  %v1448 = vpop.f32.mrb[0].mxu0
  %v1449 = vadd.f32 %v1160, %v1448
  %v1450 = vpop.f32.mrb[0].mxu0
  %1451 = vmatprep.mubr.bf16.mxu0 %v641
  %1452 = vmatmul.mubr.bf16.gmra.mrb[0].mxu0 %v640
  %v1453 = vpop.f32.mrb[0].mxu0
  %v1454 = vadd.f32 %v1165, %v1453
  %v1455 = vpop.f32.mrb[0].mxu0
  %v1456 = vpop.f32.mrb[0].mxu0
  %v1457 = vadd.f32 %v1168, %v1456
  %v1458 = vpop.f32.mrb[0].mxu0
  %1459 = vmatprep.mubr.bf16.mxu0 %v645
  %1460 = vmatmul.mubr.bf16.gmra.mrb[0].mxu0 %v644
  %v1461 = vpop.f32.mrb[0].mxu0
  %v1462 = vadd.f32 %v1173, %v1461
  %v1463 = vpop.f32.mrb[0].mxu0
  %v1464 = vpop.f32.mrb[0].mxu0
  %v1465 = vadd.f32 %v1176, %v1464
  %v1466 = vpop.f32.mrb[0].mxu0
  %1467 = vmatprep.mubr.bf16.mxu0 %v649
  %1468 = vmatmul.mubr.bf16.gmra.mrb[0].mxu0 %v648
  %v1469 = vpop.f32.mrb[0].mxu0
  %v1470 = vadd.f32 %v1181, %v1469
  %v1471 = vpop.f32.mrb[0].mxu0
  %v1472 = vpop.f32.mrb[0].mxu0
  %v1473 = vadd.f32 %v1184, %v1472
  %v1474 = vpop.f32.mrb[0].mxu0
  %1475 = vmatprep.mubr.bf16.mxu0 %v653
  %1476 = vmatmul.mubr.bf16.gmra.mrb[0].mxu0 %v652
  %v1477 = vpop.f32.mrb[0].mxu0
  %v1478 = vadd.f32 %v1189, %v1477
  %v1479 = vpop.f32.mrb[0].mxu0
  %v1480 = vpop.f32.mrb[0].mxu0
  %v1481 = vadd.f32 %v1192, %v1480
  %v1482 = vpop.f32.mrb[0].mxu0
  %1483 = vmatprep.mubr.bf16.mxu0 %v657
  %1484 = vmatmul.mubr.bf16.gmra.mrb[0].mxu0 %v656
  %v1485 = vpop.f32.mrb[0].mxu0
  %v1486 = vadd.f32 %v1197, %v1485
  %v1487 = vpop.f32.mrb[0].mxu0
  %v1488 = vpop.f32.mrb[0].mxu0
  %v1489 = vadd.f32 %v1200, %v1488
  %v1490 = vpop.f32.mrb[0].mxu0
  %1491 = vmatprep.mubr.bf16.mxu0 %v661
  %1492 = vmatmul.mubr.bf16.gmra.mrb[0].mxu0 %v660
  %v1493 = vpop.f32.mrb[0].mxu0
  %v1494 = vadd.f32 %v1205, %v1493
  %v1495 = vpop.f32.mrb[0].mxu0
  %v1496 = vpop.f32.mrb[0].mxu0
  %v1497 = vadd.f32 %v1208, %v1496
  %v1498 = vpop.f32.mrb[0].mxu0
  %1499 = vmatprep.mubr.bf16.mxu0 %v665
  %1500 = vmatmul.mubr.bf16.gmra.mrb[0].mxu0 %v664
  %v1501 = vpop.f32.mrb[0].mxu0
  %v1502 = vadd.f32 %v1213, %v1501
  %v1503 = vpop.f32.mrb[0].mxu0
  %v1504 = vpop.f32.mrb[0].mxu0
  %v1505 = vadd.f32 %v1216, %v1504
  %v1506 = vpop.f32.mrb[0].mxu0
  %1507 = vmatprep.mubr.bf16.mxu0 %v669
  %1508 = vmatmul.mubr.bf16.gmra.mrb[0].mxu0 %v668
  %v1509 = vpop.f32.mrb[0].mxu0
  %v1510 = vadd.f32 %v1221, %v1509
  %v1511 = vpop.f32.mrb[0].mxu0
  %v1512 = vpop.f32.mrb[0].mxu0
  %v1513 = vadd.f32 %v1224, %v1512
  %v1514 = vpop.f32.mrb[0].mxu0
  %1515 = vmatprep.mubr.bf16.mxu0 %v673
  %1516 = vmatmul.mubr.bf16.gmra.mrb[0].mxu0 %v672
  %v1517 = vpop.f32.mrb[0].mxu0
  %v1518 = vadd.f32 %v1229, %v1517
  %v1519 = vpop.f32.mrb[0].mxu0
  %v1520 = vpop.f32.mrb[0].mxu0
  %v1521 = vadd.f32 %v1232, %v1520
  %v1522 = vpop.f32.mrb[0].mxu0
  %1523 = vmatprep.mubr.bf16.mxu0 %v677
  %1524 = vmatmul.mubr.bf16.gmra.mrb[0].mxu0 %v676
  %v1525 = vpop.f32.mrb[0].mxu0
  %v1526 = vadd.f32 %v1237, %v1525
  %v1527 = vpop.f32.mrb[0].mxu0
  %v1528 = vpop.f32.mrb[0].mxu0
  %v1529 = vadd.f32 %v1240, %v1528
  %v1530 = vpop.f32.mrb[0].mxu0
  %1531 = vmatprep.mubr.bf16.mxu0 %v681
  %1532 = vmatmul.mubr.bf16.gmra.mrb[0].mxu0 %v680
  %v1533 = vpop.f32.mrb[0].mxu0
  %v1534 = vadd.f32 %v1245, %v1533
  %v1535 = vpop.f32.mrb[0].mxu0
  %v1536 = vpop.f32.mrb[0].mxu0
  %v1537 = vadd.f32 %v1248, %v1536
  %v1538 = vpop.f32.mrb[0].mxu0
  %1539 = vmatprep.mubr.bf16.mxu0 %v685
  %1540 = vmatmul.mubr.bf16.gmra.mrb[0].mxu0 %v684
  %v1541 = vpop.f32.mrb[0].mxu0
  %v1542 = vadd.f32 %v1253, %v1541
  %v1543 = vpop.f32.mrb[0].mxu0
  %v1544 = vpop.f32.mrb[0].mxu0
  %v1545 = vadd.f32 %v1256, %v1544
  %v1546 = vpop.f32.mrb[0].mxu0
  %1547 = vmatprep.mubr.bf16.mxu0 %v689
  %1548 = vmatmul.mubr.bf16.gmra.mrb[0].mxu0 %v688
  %v1549 = vpop.f32.mrb[0].mxu0
  %v1550 = vadd.f32 %v1261, %v1549
  %v1551 = vpop.f32.mrb[0].mxu0
  %v1552 = vpop.f32.mrb[0].mxu0
  %v1553 = vadd.f32 %v1264, %v1552
  %v1554 = vpop.f32.mrb[0].mxu0
  %1555 = vmatprep.mubr.bf16.mxu0 %v693
  %1556 = vmatmul.mubr.bf16.gmra.mrb[0].mxu0 %v692
  %v1557 = vpop.f32.mrb[0].mxu0
  %v1558 = vadd.f32 %v1269, %v1557
  %v1559 = vpop.f32.mrb[0].mxu0
  %v1560 = vpop.f32.mrb[0].mxu0
  %v1561 = vadd.f32 %v1272, %v1560
  %v1562 = vpop.f32.mrb[0].mxu0
  %1563 = vmatprep.mubr.bf16.mxu0 %v697
  %1564 = vmatmul.mubr.bf16.gmra.mrb[0].mxu0 %v696
  %v1565 = vpop.f32.mrb[0].mxu0
  %v1566 = vadd.f32 %v1277, %v1565
  %v1567 = vpop.f32.mrb[0].mxu0
  %v1568 = vpop.f32.mrb[0].mxu0
  %v1569 = vadd.f32 %v1280, %v1568
  %v1570 = vpop.f32.mrb[0].mxu0
  %1571 = vmatprep.mubr.bf16.mxu0 %v701
  %1572 = vmatmul.mubr.bf16.gmra.mrb[0].mxu0 %v700
  %v1573 = vpop.f32.mrb[0].mxu0
  %v1574 = vadd.f32 %v1285, %v1573
  %v1575 = vpop.f32.mrb[0].mxu0
  %v1576 = vpop.f32.mrb[0].mxu0
  %v1577 = vadd.f32 %v1288, %v1576
  %v1578 = vpop.f32.mrb[0].mxu0
  %1579 = vmatprep.mubr.bf16.mxu0 %v705
  %1580 = vmatmul.mubr.bf16.gmra.mrb[0].mxu0 %v704
  %v1581 = vpop.f32.mrb[0].mxu0
  %v1582 = vadd.f32 %v1293, %v1581
  %v1583 = vpop.f32.mrb[0].mxu0
  %v1584 = vpop.f32.mrb[0].mxu0
  %v1585 = vadd.f32 %v1296, %v1584
  %v1586 = vpop.f32.mrb[0].mxu0
  %1587 = vmatprep.mubr.bf16.mxu0 %v709
  %1588 = vmatmul.mubr.bf16.gmra.mrb[0].mxu0 %v708
  %v1589 = vpop.f32.mrb[0].mxu0
  %v1590 = vadd.f32 %v1301, %v1589
  %v1591 = vpop.f32.mrb[0].mxu0
  %v1592 = vpop.f32.mrb[0].mxu0
  %v1593 = vadd.f32 %v1304, %v1592
  %v1594 = vpop.f32.mrb[0].mxu0
  %1595 = vmatprep.mubr.bf16.mxu0 %v713
  %1596 = vmatmul.mubr.bf16.gmra.mrb[0].mxu0 %v712
  %v1597 = vpop.f32.mrb[0].mxu0
  %v1598 = vadd.f32 %v1309, %v1597
  %v1599 = vpop.f32.mrb[0].mxu0
  %v1600 = vpop.f32.mrb[0].mxu0
  %v1601 = vadd.f32 %v1312, %v1600
  %v1602 = vpop.f32.mrb[0].mxu0
  %1603 = vmatprep.mubr.bf16.mxu0 %v717
  %1604 = vmatmul.mubr.bf16.gmra.mrb[0].mxu0 %v716
  %v1605 = vpop.f32.mrb[0].mxu0
  %v1606 = vadd.f32 %v1317, %v1605
  %v1607 = vpop.f32.mrb[0].mxu0
  %v1608 = vpop.f32.mrb[0].mxu0
  %v1609 = vadd.f32 %v1320, %v1608
  %v1610 = vpop.f32.mrb[0].mxu0
  %1611 = vmatprep.mubr.bf16.mxu0 %v721
  %1612 = vmatmul.mubr.bf16.gmra.mrb[0].mxu0 %v720
  %v1613 = vpop.f32.mrb[0].mxu0
  %v1614 = vadd.f32 %v1325, %v1613
  %v1615 = vpop.f32.mrb[0].mxu0
  %v1616 = vpop.f32.mrb[0].mxu0
  %v1617 = vadd.f32 %v1328, %v1616
  %v1618 = vpop.f32.mrb[0].mxu0
  %1619 = vdwg.mxu0
  %v1620 = vadd.f32 %v1366, %v1369
  %v1621 = vadd.f32 %v1620, %v1374
  %v1622 = vadd.f32 %v1621, %v1377
  %v1623 = vadd.f32 %v1622, %v1382
  %v1624 = vadd.f32 %v1623, %v1385
  %v1625 = vadd.f32 %v1624, %v1390
  %v1626 = vadd.f32 %v1625, %v1393
  %v1627 = vadd.f32 %v1626, %v1398
  %v1628 = vadd.f32 %v1627, %v1401
  %v1629 = vadd.f32 %v1628, %v1406
  %v1630 = vadd.f32 %v1629, %v1409
  %v1631 = vadd.f32 %v1630, %v1414
  %v1632 = vadd.f32 %v1631, %v1417
  %v1633 = vadd.f32 %v1632, %v1422
  %v1634 = vadd.f32 %v1633, %v1425
  %v1635 = vadd.f32 %v1634, %v1430
  %v1636 = vadd.f32 %v1635, %v1433
  %v1637 = vadd.f32 %v1636, %v1438
  %v1638 = vadd.f32 %v1637, %v1441
  %v1639 = vadd.f32 %v1638, %v1446
  %v1640 = vadd.f32 %v1639, %v1449
  %v1641 = vadd.f32 %v1640, %v1454
  %v1642 = vadd.f32 %v1641, %v1457
  %v1643 = vadd.f32 %v1642, %v1462
  %v1644 = vadd.f32 %v1643, %v1465
  %v1645 = vadd.f32 %v1644, %v1470
  %v1646 = vadd.f32 %v1645, %v1473
  %v1647 = vadd.f32 %v1646, %v1478
  %v1648 = vadd.f32 %v1647, %v1481
  %v1649 = vadd.f32 %v1648, %v1486
  %v1650 = vadd.f32 %v1649, %v1489
  %v1651 = vadd.f32 %v1650, %v1494
  %v1652 = vadd.f32 %v1651, %v1497
  %v1653 = vadd.f32 %v1652, %v1502
  %v1654 = vadd.f32 %v1653, %v1505
  %v1655 = vadd.f32 %v1654, %v1510
  %v1656 = vadd.f32 %v1655, %v1513
  %v1657 = vadd.f32 %v1656, %v1518
  %v1658 = vadd.f32 %v1657, %v1521
  %v1659 = vadd.f32 %v1658, %v1526
  %v1660 = vadd.f32 %v1659, %v1529
  %v1661 = vadd.f32 %v1660, %v1534
  %v1662 = vadd.f32 %v1661, %v1537
  %v1663 = vadd.f32 %v1662, %v1542
  %v1664 = vadd.f32 %v1663, %v1545
  %v1665 = vadd.f32 %v1664, %v1550
  %v1666 = vadd.f32 %v1665, %v1553
  %v1667 = vadd.f32 %v1666, %v1558
  %v1668 = vadd.f32 %v1667, %v1561
  %v1669 = vadd.f32 %v1668, %v1566
  %v1670 = vadd.f32 %v1669, %v1569
  %v1671 = vadd.f32 %v1670, %v1574
  %v1672 = vadd.f32 %v1671, %v1577
  %v1673 = vadd.f32 %v1672, %v1582
  %v1674 = vadd.f32 %v1673, %v1585
  %v1675 = vadd.f32 %v1674, %v1590
  %v1676 = vadd.f32 %v1675, %v1593
  %v1677 = vadd.f32 %v1676, %v1598
  %v1678 = vadd.f32 %v1677, %v1601
  %v1679 = vadd.f32 %v1678, %v1606
  %v1680 = vadd.f32 %v1679, %v1609
  %v1681 = vadd.f32 %v1680, %v1614
  %v1682 = vadd.f32 %v1681, %v1617
  %v1683 = vrot.slane %v1682, 4
  %v1684 = vadd.f32 %v1682, %v1683
  %v1685 = vrot.slane %v1684, 2
  %v1686 = vadd.f32 %v1684, %v1685
  %v1687 = vrot.slane %v1686, 1
  %v1688 = vadd.f32 %v1686, %v1687
  %v1689 = vrcp.pop 512.0
  %v1690 = vmul.f32 %v1688, %v1689
  %v1691 = vsub.f32 %v1366, %v1690
  %v1692 = vsub.f32 %v1369, %v1690
  %v1693 = vsub.f32 %v1374, %v1690
  %v1694 = vsub.f32 %v1377, %v1690
  %v1695 = vsub.f32 %v1382, %v1690
  %v1696 = vsub.f32 %v1385, %v1690
  %v1697 = vsub.f32 %v1390, %v1690
  %v1698 = vsub.f32 %v1393, %v1690
  %v1699 = vsub.f32 %v1398, %v1690
  %v1700 = vsub.f32 %v1401, %v1690
  %v1701 = vsub.f32 %v1406, %v1690
  %v1702 = vsub.f32 %v1409, %v1690
  %v1703 = vsub.f32 %v1414, %v1690
  %v1704 = vsub.f32 %v1417, %v1690
  %v1705 = vsub.f32 %v1422, %v1690
  %v1706 = vsub.f32 %v1425, %v1690
  %v1707 = vsub.f32 %v1430, %v1690
  %v1708 = vsub.f32 %v1433, %v1690
  %v1709 = vsub.f32 %v1438, %v1690
  %v1710 = vsub.f32 %v1441, %v1690
  %v1711 = vsub.f32 %v1446, %v1690
  %v1712 = vsub.f32 %v1449, %v1690
  %v1713 = vsub.f32 %v1454, %v1690
  %v1714 = vsub.f32 %v1457, %v1690
  %v1715 = vsub.f32 %v1462, %v1690
  %v1716 = vsub.f32 %v1465, %v1690
  %v1717 = vsub.f32 %v1470, %v1690
  %v1718 = vsub.f32 %v1473, %v1690
  %v1719 = vsub.f32 %v1478, %v1690
  %v1720 = vsub.f32 %v1481, %v1690
  %v1721 = vsub.f32 %v1486, %v1690
  %v1722 = vsub.f32 %v1489, %v1690
  %v1723 = vsub.f32 %v1494, %v1690
  %v1724 = vsub.f32 %v1497, %v1690
  %v1725 = vsub.f32 %v1502, %v1690
  %v1726 = vsub.f32 %v1505, %v1690
  %v1727 = vsub.f32 %v1510, %v1690
  %v1728 = vsub.f32 %v1513, %v1690
  %v1729 = vsub.f32 %v1518, %v1690
  %v1730 = vsub.f32 %v1521, %v1690
  %v1731 = vsub.f32 %v1526, %v1690
  %v1732 = vsub.f32 %v1529, %v1690
  %v1733 = vsub.f32 %v1534, %v1690
  %v1734 = vsub.f32 %v1537, %v1690
  %v1735 = vsub.f32 %v1542, %v1690
  %v1736 = vsub.f32 %v1545, %v1690
  %v1737 = vsub.f32 %v1550, %v1690
  %v1738 = vsub.f32 %v1553, %v1690
  %v1739 = vsub.f32 %v1558, %v1690
  %v1740 = vsub.f32 %v1561, %v1690
  %v1741 = vsub.f32 %v1566, %v1690
  %v1742 = vsub.f32 %v1569, %v1690
  %v1743 = vsub.f32 %v1574, %v1690
  %v1744 = vsub.f32 %v1577, %v1690
  %v1745 = vsub.f32 %v1582, %v1690
  %v1746 = vsub.f32 %v1585, %v1690
  %v1747 = vsub.f32 %v1590, %v1690
  %v1748 = vsub.f32 %v1593, %v1690
  %v1749 = vsub.f32 %v1598, %v1690
  %v1750 = vsub.f32 %v1601, %v1690
  %v1751 = vsub.f32 %v1606, %v1690
  %v1752 = vsub.f32 %v1609, %v1690
  %v1753 = vsub.f32 %v1614, %v1690
  %v1754 = vsub.f32 %v1617, %v1690
  %v1755 = vmul.f32 %v1691, %v1691
  %v1756 = vmul.f32 %v1692, %v1692
  %v1757 = vmul.f32 %v1693, %v1693
  %v1758 = vmul.f32 %v1694, %v1694
  %v1759 = vmul.f32 %v1695, %v1695
  %v1760 = vmul.f32 %v1696, %v1696
  %v1761 = vmul.f32 %v1697, %v1697
  %v1762 = vmul.f32 %v1698, %v1698
  %v1763 = vmul.f32 %v1699, %v1699
  %v1764 = vmul.f32 %v1700, %v1700
  %v1765 = vmul.f32 %v1701, %v1701
  %v1766 = vmul.f32 %v1702, %v1702
  %v1767 = vmul.f32 %v1703, %v1703
  %v1768 = vmul.f32 %v1704, %v1704
  %v1769 = vmul.f32 %v1705, %v1705
  %v1770 = vmul.f32 %v1706, %v1706
  %v1771 = vmul.f32 %v1707, %v1707
  %v1772 = vmul.f32 %v1708, %v1708
  %v1773 = vmul.f32 %v1709, %v1709
  %v1774 = vmul.f32 %v1710, %v1710
  %v1775 = vmul.f32 %v1711, %v1711
  %v1776 = vmul.f32 %v1712, %v1712
  %v1777 = vmul.f32 %v1713, %v1713
  %v1778 = vmul.f32 %v1714, %v1714
  %v1779 = vmul.f32 %v1715, %v1715
  %v1780 = vmul.f32 %v1716, %v1716
  %v1781 = vmul.f32 %v1717, %v1717
  %v1782 = vmul.f32 %v1718, %v1718
  %v1783 = vmul.f32 %v1719, %v1719
  %v1784 = vmul.f32 %v1720, %v1720
  %v1785 = vmul.f32 %v1721, %v1721
  %v1786 = vmul.f32 %v1722, %v1722
  %v1787 = vmul.f32 %v1723, %v1723
  %v1788 = vmul.f32 %v1724, %v1724
  %v1789 = vmul.f32 %v1725, %v1725
  %v1790 = vmul.f32 %v1726, %v1726
  %v1791 = vmul.f32 %v1727, %v1727
  %v1792 = vmul.f32 %v1728, %v1728
  %v1793 = vmul.f32 %v1729, %v1729
  %v1794 = vmul.f32 %v1730, %v1730
  %v1795 = vmul.f32 %v1731, %v1731
  %v1796 = vmul.f32 %v1732, %v1732
  %v1797 = vmul.f32 %v1733, %v1733
  %v1798 = vmul.f32 %v1734, %v1734
  %v1799 = vmul.f32 %v1735, %v1735
  %v1800 = vmul.f32 %v1736, %v1736
  %v1801 = vmul.f32 %v1737, %v1737
  %v1802 = vmul.f32 %v1738, %v1738
  %v1803 = vmul.f32 %v1739, %v1739
  %v1804 = vmul.f32 %v1740, %v1740
  %v1805 = vmul.f32 %v1741, %v1741
  %v1806 = vmul.f32 %v1742, %v1742
  %v1807 = vmul.f32 %v1743, %v1743
  %v1808 = vmul.f32 %v1744, %v1744
  %v1809 = vmul.f32 %v1745, %v1745
  %v1810 = vmul.f32 %v1746, %v1746
  %v1811 = vmul.f32 %v1747, %v1747
  %v1812 = vmul.f32 %v1748, %v1748
  %v1813 = vmul.f32 %v1749, %v1749
  %v1814 = vmul.f32 %v1750, %v1750
  %v1815 = vmul.f32 %v1751, %v1751
  %v1816 = vmul.f32 %v1752, %v1752
  %v1817 = vmul.f32 %v1753, %v1753
  %v1818 = vmul.f32 %v1754, %v1754
  %v1819 = vadd.f32 %v1755, %v1756
  %v1820 = vadd.f32 %v1819, %v1757
  %v1821 = vadd.f32 %v1820, %v1758
  %v1822 = vadd.f32 %v1821, %v1759
  %v1823 = vadd.f32 %v1822, %v1760
  %v1824 = vadd.f32 %v1823, %v1761
  %v1825 = vadd.f32 %v1824, %v1762
  %v1826 = vadd.f32 %v1825, %v1763
  %v1827 = vadd.f32 %v1826, %v1764
  %v1828 = vadd.f32 %v1827, %v1765
  %v1829 = vadd.f32 %v1828, %v1766
  %v1830 = vadd.f32 %v1829, %v1767
  %v1831 = vadd.f32 %v1830, %v1768
  %v1832 = vadd.f32 %v1831, %v1769
  %v1833 = vadd.f32 %v1832, %v1770
  %v1834 = vadd.f32 %v1833, %v1771
  %v1835 = vadd.f32 %v1834, %v1772
  %v1836 = vadd.f32 %v1835, %v1773
  %v1837 = vadd.f32 %v1836, %v1774
  %v1838 = vadd.f32 %v1837, %v1775
  %v1839 = vadd.f32 %v1838, %v1776
  %v1840 = vadd.f32 %v1839, %v1777
  %v1841 = vadd.f32 %v1840, %v1778
  %v1842 = vadd.f32 %v1841, %v1779
  %v1843 = vadd.f32 %v1842, %v1780
  %v1844 = vadd.f32 %v1843, %v1781
  %v1845 = vadd.f32 %v1844, %v1782
  %v1846 = vadd.f32 %v1845, %v1783
  %v1847 = vadd.f32 %v1846, %v1784
  %v1848 = vadd.f32 %v1847, %v1785
  %v1849 = vadd.f32 %v1848, %v1786
  %v1850 = vadd.f32 %v1849, %v1787
  %v1851 = vadd.f32 %v1850, %v1788
  %v1852 = vadd.f32 %v1851, %v1789
  %v1853 = vadd.f32 %v1852, %v1790
  %v1854 = vadd.f32 %v1853, %v1791
  %v1855 = vadd.f32 %v1854, %v1792
  %v1856 = vadd.f32 %v1855, %v1793
  %v1857 = vadd.f32 %v1856, %v1794
  %v1858 = vadd.f32 %v1857, %v1795
  %v1859 = vadd.f32 %v1858, %v1796
  %v1860 = vadd.f32 %v1859, %v1797
  %v1861 = vadd.f32 %v1860, %v1798
  %v1862 = vadd.f32 %v1861, %v1799
  %v1863 = vadd.f32 %v1862, %v1800
  %v1864 = vadd.f32 %v1863, %v1801
  %v1865 = vadd.f32 %v1864, %v1802
  %v1866 = vadd.f32 %v1865, %v1803
  %v1867 = vadd.f32 %v1866, %v1804
  %v1868 = vadd.f32 %v1867, %v1805
  %v1869 = vadd.f32 %v1868, %v1806
  %v1870 = vadd.f32 %v1869, %v1807
  %v1871 = vadd.f32 %v1870, %v1808
  %v1872 = vadd.f32 %v1871, %v1809
  %v1873 = vadd.f32 %v1872, %v1810
  %v1874 = vadd.f32 %v1873, %v1811
  %v1875 = vadd.f32 %v1874, %v1812
  %v1876 = vadd.f32 %v1875, %v1813
  %v1877 = vadd.f32 %v1876, %v1814
  %v1878 = vadd.f32 %v1877, %v1815
  %v1879 = vadd.f32 %v1878, %v1816
  %v1880 = vadd.f32 %v1879, %v1817
  %v1881 = vadd.f32 %v1880, %v1818
  %v1882 = vrot.slane %v1881, 4
  %v1883 = vadd.f32 %v1881, %v1882
  %v1884 = vrot.slane %v1883, 2
  %v1885 = vadd.f32 %v1883, %v1884
  %v1886 = vrot.slane %v1885, 1
  %v1887 = vadd.f32 %v1885, %v1886
  %v1888 = vmul.f32 %v1887, %v1689
  %v1889 = vld [vmem:[%s2] sm:$0x1]
  %v1890 = vadd.f32 %v1888, 1e-05
  %v1891 = vrsqrt.pop %v1890
  %v1892 = vmul.f32 %v1889, %v1891
  %v1893 = vld [vmem:[%s3] sm:$0x1]
  %v1894 = vmul.f32 %v1690, %v1892
  %v1895 = vsub.f32 %v1893, %v1894
  %v1897 = vlaneseq
  %v1898 = vshrl.u32 %v1897, 7
  %v1899 = vsub.s32 0, %v1898
  %v1900 = vrot.slane %v1892, %v1899
  %v1902 = vmul.f32 %v1366, %v1900
  %v1903 = vmul.f32 %v1369, %v1900
  %v1904 = vmul.f32 %v1374, %v1900
  %v1905 = vmul.f32 %v1377, %v1900
  %v1906 = vmul.f32 %v1382, %v1900
  %v1907 = vmul.f32 %v1385, %v1900
  %v1908 = vmul.f32 %v1390, %v1900
  %v1909 = vmul.f32 %v1393, %v1900
  %v1910 = vmul.f32 %v1398, %v1900
  %v1911 = vmul.f32 %v1401, %v1900
  %v1912 = vmul.f32 %v1406, %v1900
  %v1913 = vmul.f32 %v1409, %v1900
  %v1914 = vmul.f32 %v1414, %v1900
  %v1915 = vmul.f32 %v1417, %v1900
  %v1916 = vmul.f32 %v1422, %v1900
  %v1917 = vmul.f32 %v1425, %v1900
  %v1918 = vmul.f32 %v1430, %v1900
  %v1919 = vmul.f32 %v1433, %v1900
  %v1920 = vmul.f32 %v1438, %v1900
  %v1921 = vmul.f32 %v1441, %v1900
  %v1922 = vmul.f32 %v1446, %v1900
  %v1923 = vmul.f32 %v1449, %v1900
  %v1924 = vmul.f32 %v1454, %v1900
  %v1925 = vmul.f32 %v1457, %v1900
  %v1926 = vmul.f32 %v1462, %v1900
  %v1927 = vmul.f32 %v1465, %v1900
  %v1928 = vmul.f32 %v1470, %v1900
  %v1929 = vmul.f32 %v1473, %v1900
  %v1930 = vmul.f32 %v1478, %v1900
  %v1931 = vmul.f32 %v1481, %v1900
  %v1932 = vmul.f32 %v1486, %v1900
  %v1933 = vmul.f32 %v1489, %v1900
  %v1934 = vmul.f32 %v1494, %v1900
  %v1935 = vmul.f32 %v1497, %v1900
  %v1936 = vmul.f32 %v1502, %v1900
  %v1937 = vmul.f32 %v1505, %v1900
  %v1938 = vmul.f32 %v1510, %v1900
  %v1939 = vmul.f32 %v1513, %v1900
  %v1940 = vmul.f32 %v1518, %v1900
  %v1941 = vmul.f32 %v1521, %v1900
  %v1942 = vmul.f32 %v1526, %v1900
  %v1943 = vmul.f32 %v1529, %v1900
  %v1944 = vmul.f32 %v1534, %v1900
  %v1945 = vmul.f32 %v1537, %v1900
  %v1946 = vmul.f32 %v1542, %v1900
  %v1947 = vmul.f32 %v1545, %v1900
  %v1948 = vmul.f32 %v1550, %v1900
  %v1949 = vmul.f32 %v1553, %v1900
  %v1950 = vmul.f32 %v1558, %v1900
  %v1951 = vmul.f32 %v1561, %v1900
  %v1952 = vmul.f32 %v1566, %v1900
  %v1953 = vmul.f32 %v1569, %v1900
  %v1954 = vmul.f32 %v1574, %v1900
  %v1955 = vmul.f32 %v1577, %v1900
  %v1956 = vmul.f32 %v1582, %v1900
  %v1957 = vmul.f32 %v1585, %v1900
  %v1958 = vmul.f32 %v1590, %v1900
  %v1959 = vmul.f32 %v1593, %v1900
  %v1960 = vmul.f32 %v1598, %v1900
  %v1961 = vmul.f32 %v1601, %v1900
  %v1962 = vmul.f32 %v1606, %v1900
  %v1963 = vmul.f32 %v1609, %v1900
  %v1964 = vmul.f32 %v1614, %v1900
  %v1965 = vmul.f32 %v1617, %v1900
  %v1967 = vlaneseq
  %v1968 = vshrl.u32 %v1967, 7
  %v1969 = vsub.s32 0, %v1968
  %v1970 = vrot.slane %v1895, %v1969
  %v1972 = vadd.f32 %v1902, %v1970
  %v1973 = vadd.f32 %v1903, %v1970
  %v1974 = vadd.f32 %v1904, %v1970
  %v1975 = vadd.f32 %v1905, %v1970
  %v1976 = vadd.f32 %v1906, %v1970
  %v1977 = vadd.f32 %v1907, %v1970
  %v1978 = vadd.f32 %v1908, %v1970
  %v1979 = vadd.f32 %v1909, %v1970
  %v1980 = vadd.f32 %v1910, %v1970
  %v1981 = vadd.f32 %v1911, %v1970
  %v1982 = vadd.f32 %v1912, %v1970
  %v1983 = vadd.f32 %v1913, %v1970
  %v1984 = vadd.f32 %v1914, %v1970
  %v1985 = vadd.f32 %v1915, %v1970
  %v1986 = vadd.f32 %v1916, %v1970
  %v1987 = vadd.f32 %v1917, %v1970
  %v1988 = vadd.f32 %v1918, %v1970
  %v1989 = vadd.f32 %v1919, %v1970
  %v1990 = vadd.f32 %v1920, %v1970
  %v1991 = vadd.f32 %v1921, %v1970
  %v1992 = vadd.f32 %v1922, %v1970
  %v1993 = vadd.f32 %v1923, %v1970
  %v1994 = vadd.f32 %v1924, %v1970
  %v1995 = vadd.f32 %v1925, %v1970
  %v1996 = vadd.f32 %v1926, %v1970
  %v1997 = vadd.f32 %v1927, %v1970
  %v1998 = vadd.f32 %v1928, %v1970
  %v1999 = vadd.f32 %v1929, %v1970
  %v2000 = vadd.f32 %v1930, %v1970
  %v2001 = vadd.f32 %v1931, %v1970
  %v2002 = vadd.f32 %v1932, %v1970
  %v2003 = vadd.f32 %v1933, %v1970
  %v2004 = vadd.f32 %v1934, %v1970
  %v2005 = vadd.f32 %v1935, %v1970
  %v2006 = vadd.f32 %v1936, %v1970
  %v2007 = vadd.f32 %v1937, %v1970
  %v2008 = vadd.f32 %v1938, %v1970
  %v2009 = vadd.f32 %v1939, %v1970
  %v2010 = vadd.f32 %v1940, %v1970
  %v2011 = vadd.f32 %v1941, %v1970
  %v2012 = vadd.f32 %v1942, %v1970
  %v2013 = vadd.f32 %v1943, %v1970
  %v2014 = vadd.f32 %v1944, %v1970
  %v2015 = vadd.f32 %v1945, %v1970
  %v2016 = vadd.f32 %v1946, %v1970
  %v2017 = vadd.f32 %v1947, %v1970
  %v2018 = vadd.f32 %v1948, %v1970
  %v2019 = vadd.f32 %v1949, %v1970
  %v2020 = vadd.f32 %v1950, %v1970
  %v2021 = vadd.f32 %v1951, %v1970
  %v2022 = vadd.f32 %v1952, %v1970
  %v2023 = vadd.f32 %v1953, %v1970
  %v2024 = vadd.f32 %v1954, %v1970
  %v2025 = vadd.f32 %v1955, %v1970
  %v2026 = vadd.f32 %v1956, %v1970
  %v2027 = vadd.f32 %v1957, %v1970
  %v2028 = vadd.f32 %v1958, %v1970
  %v2029 = vadd.f32 %v1959, %v1970
  %v2030 = vadd.f32 %v1960, %v1970
  %v2031 = vadd.f32 %v1961, %v1970
  %v2032 = vadd.f32 %v1962, %v1970
  %v2033 = vadd.f32 %v1963, %v1970
  %v2034 = vadd.f32 %v1964, %v1970
  %v2035 = vadd.f32 %v1965, %v1970
  %v2036 = vmax.f32 %v1972, 0.0
  %v2037 = vmax.f32 %v1973, 0.0
  %v2038 = vmax.f32 %v1974, 0.0
  %v2039 = vmax.f32 %v1975, 0.0
  %v2040 = vmax.f32 %v1976, 0.0
  %v2041 = vmax.f32 %v1977, 0.0
  %v2042 = vmax.f32 %v1978, 0.0
  %v2043 = vmax.f32 %v1979, 0.0
  %v2044 = vmax.f32 %v1980, 0.0
  %v2045 = vmax.f32 %v1981, 0.0
  %v2046 = vmax.f32 %v1982, 0.0
  %v2047 = vmax.f32 %v1983, 0.0
  %v2048 = vmax.f32 %v1984, 0.0
  %v2049 = vmax.f32 %v1985, 0.0
  %v2050 = vmax.f32 %v1986, 0.0
  %v2051 = vmax.f32 %v1987, 0.0
  %v2052 = vmax.f32 %v1988, 0.0
  %v2053 = vmax.f32 %v1989, 0.0
  %v2054 = vmax.f32 %v1990, 0.0
  %v2055 = vmax.f32 %v1991, 0.0
  %v2056 = vmax.f32 %v1992, 0.0
  %v2057 = vmax.f32 %v1993, 0.0
  %v2058 = vmax.f32 %v1994, 0.0
  %v2059 = vmax.f32 %v1995, 0.0
  %v2060 = vmax.f32 %v1996, 0.0
  %v2061 = vmax.f32 %v1997, 0.0
  %v2062 = vmax.f32 %v1998, 0.0
  %v2063 = vmax.f32 %v1999, 0.0
  %v2064 = vmax.f32 %v2000, 0.0
  %v2065 = vmax.f32 %v2001, 0.0
  %v2066 = vmax.f32 %v2002, 0.0
  %v2067 = vmax.f32 %v2003, 0.0
  %v2068 = vmax.f32 %v2004, 0.0
  %v2069 = vmax.f32 %v2005, 0.0
  %v2070 = vmax.f32 %v2006, 0.0
  %v2071 = vmax.f32 %v2007, 0.0
  %v2072 = vmax.f32 %v2008, 0.0
  %v2073 = vmax.f32 %v2009, 0.0
  %v2074 = vmax.f32 %v2010, 0.0
  %v2075 = vmax.f32 %v2011, 0.0
  %v2076 = vmax.f32 %v2012, 0.0
  %v2077 = vmax.f32 %v2013, 0.0
  %v2078 = vmax.f32 %v2014, 0.0
  %v2079 = vmax.f32 %v2015, 0.0
  %v2080 = vmax.f32 %v2016, 0.0
  %v2081 = vmax.f32 %v2017, 0.0
  %v2082 = vmax.f32 %v2018, 0.0
  %v2083 = vmax.f32 %v2019, 0.0
  %v2084 = vmax.f32 %v2020, 0.0
  %v2085 = vmax.f32 %v2021, 0.0
  %v2086 = vmax.f32 %v2022, 0.0
  %v2087 = vmax.f32 %v2023, 0.0
  %v2088 = vmax.f32 %v2024, 0.0
  %v2089 = vmax.f32 %v2025, 0.0
  %v2090 = vmax.f32 %v2026, 0.0
  %v2091 = vmax.f32 %v2027, 0.0
  %v2092 = vmax.f32 %v2028, 0.0
  %v2093 = vmax.f32 %v2029, 0.0
  %v2094 = vmax.f32 %v2030, 0.0
  %v2095 = vmax.f32 %v2031, 0.0
  %v2096 = vmax.f32 %v2032, 0.0
  %v2097 = vmax.f32 %v2033, 0.0
  %v2098 = vmax.f32 %v2034, 0.0
  %v2099 = vmax.f32 %v2035, 0.0
  %v2100 = vpack.c.bf16 %v2037, %v2036
  %v2101 = vpack.c.bf16 %v2039, %v2038
  %v2102 = vpack.c.bf16 %v2041, %v2040
  %v2103 = vpack.c.bf16 %v2043, %v2042
  %v2104 = vpack.c.bf16 %v2045, %v2044
  %v2105 = vpack.c.bf16 %v2047, %v2046
  %v2106 = vpack.c.bf16 %v2049, %v2048
  %v2107 = vpack.c.bf16 %v2051, %v2050
  %v2108 = vpack.c.bf16 %v2053, %v2052
  %v2109 = vpack.c.bf16 %v2055, %v2054
  %v2110 = vpack.c.bf16 %v2057, %v2056
  %v2111 = vpack.c.bf16 %v2059, %v2058
  %v2112 = vpack.c.bf16 %v2061, %v2060
  %v2113 = vpack.c.bf16 %v2063, %v2062
  %v2114 = vpack.c.bf16 %v2065, %v2064
  %v2115 = vpack.c.bf16 %v2067, %v2066
  %v2116 = vpack.c.bf16 %v2069, %v2068
  %v2117 = vpack.c.bf16 %v2071, %v2070
  %v2118 = vpack.c.bf16 %v2073, %v2072
  %v2119 = vpack.c.bf16 %v2075, %v2074
  %v2120 = vpack.c.bf16 %v2077, %v2076
  %v2121 = vpack.c.bf16 %v2079, %v2078
  %v2122 = vpack.c.bf16 %v2081, %v2080
  %v2123 = vpack.c.bf16 %v2083, %v2082
  %v2124 = vpack.c.bf16 %v2085, %v2084
  %v2125 = vpack.c.bf16 %v2087, %v2086
  %v2126 = vpack.c.bf16 %v2089, %v2088
  %v2127 = vpack.c.bf16 %v2091, %v2090
  %v2128 = vpack.c.bf16 %v2093, %v2092
  %v2129 = vpack.c.bf16 %v2095, %v2094
  %v2130 = vpack.c.bf16 %v2097, %v2096
  %v2131 = vpack.c.bf16 %v2099, %v2098
  %v2164 = vunpack.c.l.b16 %v2100
  %v2165 = vunpack.c.h.b16 %v2100
  %v2166 = vunpack.c.l.b16 %v2101
  %v2167 = vunpack.c.h.b16 %v2101
  %v2168 = vunpack.c.l.b16 %v2102
  %v2169 = vunpack.c.h.b16 %v2102
  %v2170 = vunpack.c.l.b16 %v2103
  %v2171 = vunpack.c.h.b16 %v2103
  %v2172 = vunpack.c.l.b16 %v2104
  %v2173 = vunpack.c.h.b16 %v2104
  %v2174 = vunpack.c.l.b16 %v2105
  %v2175 = vunpack.c.h.b16 %v2105
  %v2176 = vunpack.c.l.b16 %v2106
  %v2177 = vunpack.c.h.b16 %v2106
  %v2178 = vunpack.c.l.b16 %v2107
  %v2179 = vunpack.c.h.b16 %v2107
  %v2180 = vunpack.c.l.b16 %v2108
  %v2181 = vunpack.c.h.b16 %v2108
  %v2182 = vunpack.c.l.b16 %v2109
  %v2183 = vunpack.c.h.b16 %v2109
  %v2184 = vunpack.c.l.b16 %v2110
  %v2185 = vunpack.c.h.b16 %v2110
  %v2186 = vunpack.c.l.b16 %v2111
  %v2187 = vunpack.c.h.b16 %v2111
  %v2188 = vunpack.c.l.b16 %v2112
  %v2189 = vunpack.c.h.b16 %v2112
  %v2190 = vunpack.c.l.b16 %v2113
  %v2191 = vunpack.c.h.b16 %v2113
  %v2192 = vunpack.c.l.b16 %v2114
  %v2193 = vunpack.c.h.b16 %v2114
  %v2194 = vunpack.c.l.b16 %v2115
  %v2195 = vunpack.c.h.b16 %v2115
  %v2196 = vunpack.c.l.b16 %v2116
  %v2197 = vunpack.c.h.b16 %v2116
  %v2198 = vunpack.c.l.b16 %v2117
  %v2199 = vunpack.c.h.b16 %v2117
  %v2200 = vunpack.c.l.b16 %v2118
  %v2201 = vunpack.c.h.b16 %v2118
  %v2202 = vunpack.c.l.b16 %v2119
  %v2203 = vunpack.c.h.b16 %v2119
  %v2204 = vunpack.c.l.b16 %v2120
  %v2205 = vunpack.c.h.b16 %v2120
  %v2206 = vunpack.c.l.b16 %v2121
  %v2207 = vunpack.c.h.b16 %v2121
  %v2208 = vunpack.c.l.b16 %v2122
  %v2209 = vunpack.c.h.b16 %v2122
  %v2210 = vunpack.c.l.b16 %v2123
  %v2211 = vunpack.c.h.b16 %v2123
  %v2212 = vunpack.c.l.b16 %v2124
  %v2213 = vunpack.c.h.b16 %v2124
  %v2214 = vunpack.c.l.b16 %v2125
  %v2215 = vunpack.c.h.b16 %v2125
  %v2216 = vunpack.c.l.b16 %v2126
  %v2217 = vunpack.c.h.b16 %v2126
  %v2218 = vunpack.c.l.b16 %v2127
  %v2219 = vunpack.c.h.b16 %v2127
  %v2220 = vunpack.c.l.b16 %v2128
  %v2221 = vunpack.c.h.b16 %v2128
  %v2222 = vunpack.c.l.b16 %v2129
  %v2223 = vunpack.c.h.b16 %v2129
  %v2224 = vunpack.c.l.b16 %v2130
  %v2225 = vunpack.c.h.b16 %v2130
  %v2226 = vunpack.c.l.b16 %v2131
  %v2227 = vunpack.c.h.b16 %v2131
  %v2228 = vpack.c.b16 %v2164, %v2164
  %v2229 = vpack.c.b16 %v2165, %v2165
  %v2230 = vpack.c.b16 %v2166, %v2166
  %v2231 = vpack.c.b16 %v2167, %v2167
  %v2232 = vpack.c.b16 %v2168, %v2168
  %v2233 = vpack.c.b16 %v2169, %v2169
  %v2234 = vpack.c.b16 %v2170, %v2170
  %v2235 = vpack.c.b16 %v2171, %v2171
  %v2236 = vpack.c.b16 %v2172, %v2172
  %v2237 = vpack.c.b16 %v2173, %v2173
  %v2238 = vpack.c.b16 %v2174, %v2174
  %v2239 = vpack.c.b16 %v2175, %v2175
  %v2240 = vpack.c.b16 %v2176, %v2176
  %v2241 = vpack.c.b16 %v2177, %v2177
  %v2242 = vpack.c.b16 %v2178, %v2178
  %v2243 = vpack.c.b16 %v2179, %v2179
  %v2244 = vpack.c.b16 %v2180, %v2180
  %v2245 = vpack.c.b16 %v2181, %v2181
  %v2246 = vpack.c.b16 %v2182, %v2182
  %v2247 = vpack.c.b16 %v2183, %v2183
  %v2248 = vpack.c.b16 %v2184, %v2184
  %v2249 = vpack.c.b16 %v2185, %v2185
  %v2250 = vpack.c.b16 %v2186, %v2186
  %v2251 = vpack.c.b16 %v2187, %v2187
  %v2252 = vpack.c.b16 %v2188, %v2188
  %v2253 = vpack.c.b16 %v2189, %v2189
  %v2254 = vpack.c.b16 %v2190, %v2190
  %v2255 = vpack.c.b16 %v2191, %v2191
  %v2256 = vpack.c.b16 %v2192, %v2192
  %v2257 = vpack.c.b16 %v2193, %v2193
  %v2258 = vpack.c.b16 %v2194, %v2194
  %v2259 = vpack.c.b16 %v2195, %v2195
  %v2260 = vpack.c.b16 %v2196, %v2196
  %v2261 = vpack.c.b16 %v2197, %v2197
  %v2262 = vpack.c.b16 %v2198, %v2198
  %v2263 = vpack.c.b16 %v2199, %v2199
  %v2264 = vpack.c.b16 %v2200, %v2200
  %v2265 = vpack.c.b16 %v2201, %v2201
  %v2266 = vpack.c.b16 %v2202, %v2202
  %v2267 = vpack.c.b16 %v2203, %v2203
  %v2268 = vpack.c.b16 %v2204, %v2204
  %v2269 = vpack.c.b16 %v2205, %v2205
  %v2270 = vpack.c.b16 %v2206, %v2206
  %v2271 = vpack.c.b16 %v2207, %v2207
  %v2272 = vpack.c.b16 %v2208, %v2208
  %v2273 = vpack.c.b16 %v2209, %v2209
  %v2274 = vpack.c.b16 %v2210, %v2210
  %v2275 = vpack.c.b16 %v2211, %v2211
  %v2276 = vpack.c.b16 %v2212, %v2212
  %v2277 = vpack.c.b16 %v2213, %v2213
  %v2278 = vpack.c.b16 %v2214, %v2214
  %v2279 = vpack.c.b16 %v2215, %v2215
  %v2280 = vpack.c.b16 %v2216, %v2216
  %v2281 = vpack.c.b16 %v2217, %v2217
  %v2282 = vpack.c.b16 %v2218, %v2218
  %v2283 = vpack.c.b16 %v2219, %v2219
  %v2284 = vpack.c.b16 %v2220, %v2220
  %v2285 = vpack.c.b16 %v2221, %v2221
  %v2286 = vpack.c.b16 %v2222, %v2222
  %v2287 = vpack.c.b16 %v2223, %v2223
  %v2288 = vpack.c.b16 %v2224, %v2224
  %v2289 = vpack.c.b16 %v2225, %v2225
  %v2290 = vpack.c.b16 %v2226, %v2226
  %v2291 = vpack.c.b16 %v2227, %v2227
  %2356 = vst [vmem:[%s4] sm:$0xf] %v2228
  %2357 = vst [vmem:[%s4 + $0x4] sm:$0xf] %v2229
  %2358 = vst [vmem:[%s4 + $0x8] sm:$0xf] %v2230
  %2359 = vst [vmem:[%s4 + $0xc] sm:$0xf] %v2231
  %2360 = vst [vmem:[%s4 + $0x10] sm:$0xf] %v2232
  %2361 = vst [vmem:[%s4 + $0x14] sm:$0xf] %v2233
  %2362 = vst [vmem:[%s4 + $0x18] sm:$0xf] %v2234
  %2363 = vst [vmem:[%s4 + $0x1c] sm:$0xf] %v2235
  %2364 = vst [vmem:[%s4 + $0x20] sm:$0xf] %v2236
  %2365 = vst [vmem:[%s4 + $0x24] sm:$0xf] %v2237
  %2366 = vst [vmem:[%s4 + $0x28] sm:$0xf] %v2238
  %2367 = vst [vmem:[%s4 + $0x2c] sm:$0xf] %v2239
  %2368 = vst [vmem:[%s4 + $0x30] sm:$0xf] %v2240
  %2369 = vst [vmem:[%s4 + $0x34] sm:$0xf] %v2241
  %2370 = vst [vmem:[%s4 + $0x38] sm:$0xf] %v2242
  %2371 = vst [vmem:[%s4 + $0x3c] sm:$0xf] %v2243
  %2372 = vst [vmem:[%s4 + $0x40] sm:$0xf] %v2244
  %2373 = vst [vmem:[%s4 + $0x44] sm:$0xf] %v2245
  %2374 = vst [vmem:[%s4 + $0x48] sm:$0xf] %v2246
  %2375 = vst [vmem:[%s4 + $0x4c] sm:$0xf] %v2247
  %2376 = vst [vmem:[%s4 + $0x50] sm:$0xf] %v2248
  %2377 = vst [vmem:[%s4 + $0x54] sm:$0xf] %v2249
  %2378 = vst [vmem:[%s4 + $0x58] sm:$0xf] %v2250
  %2379 = vst [vmem:[%s4 + $0x5c] sm:$0xf] %v2251
  %2380 = vst [vmem:[%s4 + $0x60] sm:$0xf] %v2252
  %2381 = vst [vmem:[%s4 + $0x64] sm:$0xf] %v2253
  %2382 = vst [vmem:[%s4 + $0x68] sm:$0xf] %v2254
  %2383 = vst [vmem:[%s4 + $0x6c] sm:$0xf] %v2255
  %2384 = vst [vmem:[%s4 + $0x70] sm:$0xf] %v2256
  %2385 = vst [vmem:[%s4 + $0x74] sm:$0xf] %v2257
  %2386 = vst [vmem:[%s4 + $0x78] sm:$0xf] %v2258
  %2387 = vst [vmem:[%s4 + $0x7c] sm:$0xf] %v2259
  %2388 = vst [vmem:[%s4 + $0x80] sm:$0xf] %v2260
  %2389 = vst [vmem:[%s4 + $0x84] sm:$0xf] %v2261
  %2390 = vst [vmem:[%s4 + $0x88] sm:$0xf] %v2262
  %2391 = vst [vmem:[%s4 + $0x8c] sm:$0xf] %v2263
  %2392 = vst [vmem:[%s4 + $0x90] sm:$0xf] %v2264
  %2393 = vst [vmem:[%s4 + $0x94] sm:$0xf] %v2265
  %2394 = vst [vmem:[%s4 + $0x98] sm:$0xf] %v2266
  %2395 = vst [vmem:[%s4 + $0x9c] sm:$0xf] %v2267
  %2396 = vst [vmem:[%s4 + $0xa0] sm:$0xf] %v2268
  %2397 = vst [vmem:[%s4 + $0xa4] sm:$0xf] %v2269
  %2398 = vst [vmem:[%s4 + $0xa8] sm:$0xf] %v2270
  %2399 = vst [vmem:[%s4 + $0xac] sm:$0xf] %v2271
  %2400 = vst [vmem:[%s4 + $0xb0] sm:$0xf] %v2272
  %2401 = vst [vmem:[%s4 + $0xb4] sm:$0xf] %v2273
  %2402 = vst [vmem:[%s4 + $0xb8] sm:$0xf] %v2274
  %2403 = vst [vmem:[%s4 + $0xbc] sm:$0xf] %v2275
  %2404 = vst [vmem:[%s4 + $0xc0] sm:$0xf] %v2276
  %2405 = vst [vmem:[%s4 + $0xc4] sm:$0xf] %v2277
  %2406 = vst [vmem:[%s4 + $0xc8] sm:$0xf] %v2278
  %2407 = vst [vmem:[%s4 + $0xcc] sm:$0xf] %v2279
  %2408 = vst [vmem:[%s4 + $0xd0] sm:$0xf] %v2280
  %2409 = vst [vmem:[%s4 + $0xd4] sm:$0xf] %v2281
  %2410 = vst [vmem:[%s4 + $0xd8] sm:$0xf] %v2282
  %2411 = vst [vmem:[%s4 + $0xdc] sm:$0xf] %v2283
  %2412 = vst [vmem:[%s4 + $0xe0] sm:$0xf] %v2284
  %2413 = vst [vmem:[%s4 + $0xe4] sm:$0xf] %v2285
  %2414 = vst [vmem:[%s4 + $0xe8] sm:$0xf] %v2286
  %2415 = vst [vmem:[%s4 + $0xec] sm:$0xf] %v2287
  %2416 = vst [vmem:[%s4 + $0xf0] sm:$0xf] %v2288
  %2417 = vst [vmem:[%s4 + $0xf4] sm:$0xf] %v2289
  %2418 = vst [vmem:[%s4 + $0xf8] sm:$0xf] %v2290
  %2419 = vst [vmem:[%s4 + $0xfc] sm:$0xf] %v2291
  // Predicated region
  $region18: #{generator_forward.7} parent=0 // pred_check
    _
  $region19: #{generator_forward.7} parent=0 // pred_check_branch
    %2421 = sbr.rel (0) target = $region21
  $region20: #{generator_forward.7} parent=0 // pred_region
    _
  $region21: #{generator_forward.7} parent=0 // pred_fallthru
    _
  // Predicated region
  $region22: #{generator_forward.7} parent=0 // pred_check
    _
  $region23: #{generator_forward.7} parent=0 // pred_check_branch
    %2423 = sbr.rel (0) target = $region25
  $region24: #{generator_forward.7} parent=0 // pred_region
    _
  $region25: #{generator_forward.7} parent=0 // pred_fallthru
    _

// kernel: generator_forward.8
$region0: #{generator_forward.8}
  #allocation0 [shape = 'u32[]', space=smem, size = 0x4, offset = 0x4, fixed_abs, tag = 'smem constant byte address 0x4 - core index']
  #allocation1 [shape = 'u32[144,128]{1,0:T(1,128)}', space=vmem, size = 0x12000, scoped, tag = 'internal scratch']
  %s0 = inlined_call_operand.vmem [shape: bf16[2048,256], index: 0, kind: input, shape index: {}]
  %s1 = inlined_call_operand.vmem [shape: bf16[256,128], index: 1, kind: input, shape index: {}]
  %s2 = inlined_call_operand.vmem [shape: f32[1,128], index: 2, kind: input, shape index: {}]
  %s3 = inlined_call_operand.vmem [shape: f32[1,128], index: 3, kind: input, shape index: {}]
  %s4 = inlined_call_operand.vmem [shape: bf16[2048,128], index: 4, kind: output, shape index: {}]
  %s5 = sld [smem:[#allocation0]]
  $region26: #{generator_forward.8} parent=0
    _
  %s7 = ssub.s32 1, %s5
  %s8 = scalar_select 0, %s7, %s5
  // Predicated region
  $region2: #{generator_forward.8} parent=0 // pred_check
    _
  $region3: #{generator_forward.8} parent=0 // pred_check_branch
    %10 = sbr.rel (0) target = $region5
  $region4: #{generator_forward.8} parent=0 // pred_region
    _
  $region5: #{generator_forward.8} parent=0 // pred_fallthru
    _
  // Predicated region
  $region6: #{generator_forward.8} parent=0 // pred_check
    _
  $region7: #{generator_forward.8} parent=0 // pred_check_branch
    %12 = sbr.rel (0) target = $region9
  $region8: #{generator_forward.8} parent=0 // pred_region
    _
  $region9: #{generator_forward.8} parent=0 // pred_fallthru
    _
  // Predicated region
  $region10: #{generator_forward.8} parent=0 // pred_check
    _
  $region11: #{generator_forward.8} parent=0 // pred_check_branch
    %14 = sbr.rel (0) target = $region13
  $region12: #{generator_forward.8} parent=0 // pred_region
    _
  $region13: #{generator_forward.8} parent=0 // pred_fallthru
    _
  // Predicated region
  $region14: #{generator_forward.8} parent=0 // pred_check
    _
  $region15: #{generator_forward.8} parent=0 // pred_check_branch
    %16 = sbr.rel (0) target = $region17
  $region16: #{generator_forward.8} parent=0 // pred_region
    _
  $region17: #{generator_forward.8} parent=0 // pred_fallthru
    _
  %v18 = vld [vmem:[%s0] sm:$0xff]
  %v19 = vld [vmem:[%s0 + $0x8] sm:$0xff]
  %v20 = vld [vmem:[%s0 + $0x10] sm:$0xff]
  %v21 = vld [vmem:[%s0 + $0x18] sm:$0xff]
  %v22 = vld [vmem:[%s0 + $0x20] sm:$0xff]
  %v23 = vld [vmem:[%s0 + $0x28] sm:$0xff]
  %v24 = vld [vmem:[%s0 + $0x30] sm:$0xff]
  %v25 = vld [vmem:[%s0 + $0x38] sm:$0xff]
  %v26 = vld [vmem:[%s0 + $0x40] sm:$0xff]
  %v27 = vld [vmem:[%s0 + $0x48] sm:$0xff]
  %v28 = vld [vmem:[%s0 + $0x50] sm:$0xff]
  %v29 = vld [vmem:[%s0 + $0x58] sm:$0xff]
  %v30 = vld [vmem:[%s0 + $0x60] sm:$0xff]
  %v31 = vld [vmem:[%s0 + $0x68] sm:$0xff]
  %v32 = vld [vmem:[%s0 + $0x70] sm:$0xff]
  %v33 = vld [vmem:[%s0 + $0x78] sm:$0xff]
  %v34 = vld [vmem:[%s0 + $0x80] sm:$0xff]
  %v35 = vld [vmem:[%s0 + $0x88] sm:$0xff]
  %v36 = vld [vmem:[%s0 + $0x90] sm:$0xff]
  %v37 = vld [vmem:[%s0 + $0x98] sm:$0xff]
  %v38 = vld [vmem:[%s0 + $0xa0] sm:$0xff]
  %v39 = vld [vmem:[%s0 + $0xa8] sm:$0xff]
  %v40 = vld [vmem:[%s0 + $0xb0] sm:$0xff]
  %v41 = vld [vmem:[%s0 + $0xb8] sm:$0xff]
  %v42 = vld [vmem:[%s0 + $0xc0] sm:$0xff]
  %v43 = vld [vmem:[%s0 + $0xc8] sm:$0xff]
  %v44 = vld [vmem:[%s0 + $0xd0] sm:$0xff]
  %v45 = vld [vmem:[%s0 + $0xd8] sm:$0xff]
  %v46 = vld [vmem:[%s0 + $0xe0] sm:$0xff]
  %v47 = vld [vmem:[%s0 + $0xe8] sm:$0xff]
  %v48 = vld [vmem:[%s0 + $0xf0] sm:$0xff]
  %v49 = vld [vmem:[%s0 + $0xf8] sm:$0xff]
  %v50 = vld [vmem:[%s0 + $0x100] sm:$0xff]
  %v51 = vld [vmem:[%s0 + $0x108] sm:$0xff]
  %v52 = vld [vmem:[%s0 + $0x110] sm:$0xff]
  %v53 = vld [vmem:[%s0 + $0x118] sm:$0xff]
  %v54 = vld [vmem:[%s0 + $0x120] sm:$0xff]
  %v55 = vld [vmem:[%s0 + $0x128] sm:$0xff]
  %v56 = vld [vmem:[%s0 + $0x130] sm:$0xff]
  %v57 = vld [vmem:[%s0 + $0x138] sm:$0xff]
  %v58 = vld [vmem:[%s0 + $0x140] sm:$0xff]
  %v59 = vld [vmem:[%s0 + $0x148] sm:$0xff]
  %v60 = vld [vmem:[%s0 + $0x150] sm:$0xff]
  %v61 = vld [vmem:[%s0 + $0x158] sm:$0xff]
  %v62 = vld [vmem:[%s0 + $0x160] sm:$0xff]
  %v63 = vld [vmem:[%s0 + $0x168] sm:$0xff]
  %v64 = vld [vmem:[%s0 + $0x170] sm:$0xff]
  %v65 = vld [vmem:[%s0 + $0x178] sm:$0xff]
  %v66 = vld [vmem:[%s0 + $0x180] sm:$0xff]
  %v67 = vld [vmem:[%s0 + $0x188] sm:$0xff]
  %v68 = vld [vmem:[%s0 + $0x190] sm:$0xff]
  %v69 = vld [vmem:[%s0 + $0x198] sm:$0xff]
  %v70 = vld [vmem:[%s0 + $0x1a0] sm:$0xff]
  %v71 = vld [vmem:[%s0 + $0x1a8] sm:$0xff]
  %v72 = vld [vmem:[%s0 + $0x1b0] sm:$0xff]
  %v73 = vld [vmem:[%s0 + $0x1b8] sm:$0xff]
  %v74 = vld [vmem:[%s0 + $0x1c0] sm:$0xff]
  %v75 = vld [vmem:[%s0 + $0x1c8] sm:$0xff]
  %v76 = vld [vmem:[%s0 + $0x1d0] sm:$0xff]
  %v77 = vld [vmem:[%s0 + $0x1d8] sm:$0xff]
  %v78 = vld [vmem:[%s0 + $0x1e0] sm:$0xff]
  %v79 = vld [vmem:[%s0 + $0x1e8] sm:$0xff]
  %v80 = vld [vmem:[%s0 + $0x1f0] sm:$0xff]
  %v81 = vld [vmem:[%s0 + $0x1f8] sm:$0xff]
  %v82 = vld [vmem:[%s0 + $0x200] sm:$0xff]
  %v83 = vld [vmem:[%s0 + $0x208] sm:$0xff]
  %v84 = vld [vmem:[%s0 + $0x210] sm:$0xff]
  %v85 = vld [vmem:[%s0 + $0x218] sm:$0xff]
  %v86 = vld [vmem:[%s0 + $0x220] sm:$0xff]
  %v87 = vld [vmem:[%s0 + $0x228] sm:$0xff]
  %v88 = vld [vmem:[%s0 + $0x230] sm:$0xff]
  %v89 = vld [vmem:[%s0 + $0x238] sm:$0xff]
  %v90 = vld [vmem:[%s0 + $0x240] sm:$0xff]
  %v91 = vld [vmem:[%s0 + $0x248] sm:$0xff]
  %v92 = vld [vmem:[%s0 + $0x250] sm:$0xff]
  %v93 = vld [vmem:[%s0 + $0x258] sm:$0xff]
  %v94 = vld [vmem:[%s0 + $0x260] sm:$0xff]
  %v95 = vld [vmem:[%s0 + $0x268] sm:$0xff]
  %v96 = vld [vmem:[%s0 + $0x270] sm:$0xff]
  %v97 = vld [vmem:[%s0 + $0x278] sm:$0xff]
  %v98 = vld [vmem:[%s0 + $0x280] sm:$0xff]
  %v99 = vld [vmem:[%s0 + $0x288] sm:$0xff]
  %v100 = vld [vmem:[%s0 + $0x290] sm:$0xff]
  %v101 = vld [vmem:[%s0 + $0x298] sm:$0xff]
  %v102 = vld [vmem:[%s0 + $0x2a0] sm:$0xff]
  %v103 = vld [vmem:[%s0 + $0x2a8] sm:$0xff]
  %v104 = vld [vmem:[%s0 + $0x2b0] sm:$0xff]
  %v105 = vld [vmem:[%s0 + $0x2b8] sm:$0xff]
  %v106 = vld [vmem:[%s0 + $0x2c0] sm:$0xff]
  %v107 = vld [vmem:[%s0 + $0x2c8] sm:$0xff]
  %v108 = vld [vmem:[%s0 + $0x2d0] sm:$0xff]
  %v109 = vld [vmem:[%s0 + $0x2d8] sm:$0xff]
  %v110 = vld [vmem:[%s0 + $0x2e0] sm:$0xff]
  %v111 = vld [vmem:[%s0 + $0x2e8] sm:$0xff]
  %v112 = vld [vmem:[%s0 + $0x2f0] sm:$0xff]
  %v113 = vld [vmem:[%s0 + $0x2f8] sm:$0xff]
  %v114 = vld [vmem:[%s0 + $0x300] sm:$0xff]
  %v115 = vld [vmem:[%s0 + $0x308] sm:$0xff]
  %v116 = vld [vmem:[%s0 + $0x310] sm:$0xff]
  %v117 = vld [vmem:[%s0 + $0x318] sm:$0xff]
  %v118 = vld [vmem:[%s0 + $0x320] sm:$0xff]
  %v119 = vld [vmem:[%s0 + $0x328] sm:$0xff]
  %v120 = vld [vmem:[%s0 + $0x330] sm:$0xff]
  %v121 = vld [vmem:[%s0 + $0x338] sm:$0xff]
  %v122 = vld [vmem:[%s0 + $0x340] sm:$0xff]
  %v123 = vld [vmem:[%s0 + $0x348] sm:$0xff]
  %v124 = vld [vmem:[%s0 + $0x350] sm:$0xff]
  %v125 = vld [vmem:[%s0 + $0x358] sm:$0xff]
  %v126 = vld [vmem:[%s0 + $0x360] sm:$0xff]
  %v127 = vld [vmem:[%s0 + $0x368] sm:$0xff]
  %v128 = vld [vmem:[%s0 + $0x370] sm:$0xff]
  %v129 = vld [vmem:[%s0 + $0x378] sm:$0xff]
  %v130 = vld [vmem:[%s0 + $0x380] sm:$0xff]
  %v131 = vld [vmem:[%s0 + $0x388] sm:$0xff]
  %v132 = vld [vmem:[%s0 + $0x390] sm:$0xff]
  %v133 = vld [vmem:[%s0 + $0x398] sm:$0xff]
  %v134 = vld [vmem:[%s0 + $0x3a0] sm:$0xff]
  %v135 = vld [vmem:[%s0 + $0x3a8] sm:$0xff]
  %v136 = vld [vmem:[%s0 + $0x3b0] sm:$0xff]
  %v137 = vld [vmem:[%s0 + $0x3b8] sm:$0xff]
  %v138 = vld [vmem:[%s0 + $0x3c0] sm:$0xff]
  %v139 = vld [vmem:[%s0 + $0x3c8] sm:$0xff]
  %v140 = vld [vmem:[%s0 + $0x3d0] sm:$0xff]
  %v141 = vld [vmem:[%s0 + $0x3d8] sm:$0xff]
  %v142 = vld [vmem:[%s0 + $0x3e0] sm:$0xff]
  %v143 = vld [vmem:[%s0 + $0x3e8] sm:$0xff]
  %v144 = vld [vmem:[%s0 + $0x3f0] sm:$0xff]
  %v145 = vld [vmem:[%s0 + $0x3f8] sm:$0xff]
  %v146 = vld [vmem:[%s0 + $0x400] sm:$0xff]
  %v147 = vld [vmem:[%s0 + $0x408] sm:$0xff]
  %v148 = vld [vmem:[%s0 + $0x410] sm:$0xff]
  %v149 = vld [vmem:[%s0 + $0x418] sm:$0xff]
  %v150 = vld [vmem:[%s0 + $0x420] sm:$0xff]
  %v151 = vld [vmem:[%s0 + $0x428] sm:$0xff]
  %v152 = vld [vmem:[%s0 + $0x430] sm:$0xff]
  %v153 = vld [vmem:[%s0 + $0x438] sm:$0xff]
  %v154 = vld [vmem:[%s0 + $0x440] sm:$0xff]
  %v155 = vld [vmem:[%s0 + $0x448] sm:$0xff]
  %v156 = vld [vmem:[%s0 + $0x450] sm:$0xff]
  %v157 = vld [vmem:[%s0 + $0x458] sm:$0xff]
  %v158 = vld [vmem:[%s0 + $0x460] sm:$0xff]
  %v159 = vld [vmem:[%s0 + $0x468] sm:$0xff]
  %v160 = vld [vmem:[%s0 + $0x470] sm:$0xff]
  %v161 = vld [vmem:[%s0 + $0x478] sm:$0xff]
  %v162 = vld [vmem:[%s0 + $0x480] sm:$0xff]
  %v163 = vld [vmem:[%s0 + $0x488] sm:$0xff]
  %v164 = vld [vmem:[%s0 + $0x490] sm:$0xff]
  %v165 = vld [vmem:[%s0 + $0x498] sm:$0xff]
  %v166 = vld [vmem:[%s0 + $0x4a0] sm:$0xff]
  %v167 = vld [vmem:[%s0 + $0x4a8] sm:$0xff]
  %v168 = vld [vmem:[%s0 + $0x4b0] sm:$0xff]
  %v169 = vld [vmem:[%s0 + $0x4b8] sm:$0xff]
  %v170 = vld [vmem:[%s0 + $0x4c0] sm:$0xff]
  %v171 = vld [vmem:[%s0 + $0x4c8] sm:$0xff]
  %v172 = vld [vmem:[%s0 + $0x4d0] sm:$0xff]
  %v173 = vld [vmem:[%s0 + $0x4d8] sm:$0xff]
  %v174 = vld [vmem:[%s0 + $0x4e0] sm:$0xff]
  %v175 = vld [vmem:[%s0 + $0x4e8] sm:$0xff]
  %v176 = vld [vmem:[%s0 + $0x4f0] sm:$0xff]
  %v177 = vld [vmem:[%s0 + $0x4f8] sm:$0xff]
  %v178 = vld [vmem:[%s0 + $0x500] sm:$0xff]
  %v179 = vld [vmem:[%s0 + $0x508] sm:$0xff]
  %v180 = vld [vmem:[%s0 + $0x510] sm:$0xff]
  %v181 = vld [vmem:[%s0 + $0x518] sm:$0xff]
  %v182 = vld [vmem:[%s0 + $0x520] sm:$0xff]
  %v183 = vld [vmem:[%s0 + $0x528] sm:$0xff]
  %v184 = vld [vmem:[%s0 + $0x530] sm:$0xff]
  %v185 = vld [vmem:[%s0 + $0x538] sm:$0xff]
  %v186 = vld [vmem:[%s0 + $0x540] sm:$0xff]
  %v187 = vld [vmem:[%s0 + $0x548] sm:$0xff]
  %v188 = vld [vmem:[%s0 + $0x550] sm:$0xff]
  %v189 = vld [vmem:[%s0 + $0x558] sm:$0xff]
  %v190 = vld [vmem:[%s0 + $0x560] sm:$0xff]
  %v191 = vld [vmem:[%s0 + $0x568] sm:$0xff]
  %v192 = vld [vmem:[%s0 + $0x570] sm:$0xff]
  %v193 = vld [vmem:[%s0 + $0x578] sm:$0xff]
  %v194 = vld [vmem:[%s0 + $0x580] sm:$0xff]
  %v195 = vld [vmem:[%s0 + $0x588] sm:$0xff]
  %v196 = vld [vmem:[%s0 + $0x590] sm:$0xff]
  %v197 = vld [vmem:[%s0 + $0x598] sm:$0xff]
  %v198 = vld [vmem:[%s0 + $0x5a0] sm:$0xff]
  %v199 = vld [vmem:[%s0 + $0x5a8] sm:$0xff]
  %v200 = vld [vmem:[%s0 + $0x5b0] sm:$0xff]
  %v201 = vld [vmem:[%s0 + $0x5b8] sm:$0xff]
  %v202 = vld [vmem:[%s0 + $0x5c0] sm:$0xff]
  %v203 = vld [vmem:[%s0 + $0x5c8] sm:$0xff]
  %v204 = vld [vmem:[%s0 + $0x5d0] sm:$0xff]
  %v205 = vld [vmem:[%s0 + $0x5d8] sm:$0xff]
  %v206 = vld [vmem:[%s0 + $0x5e0] sm:$0xff]
  %v207 = vld [vmem:[%s0 + $0x5e8] sm:$0xff]
  %v208 = vld [vmem:[%s0 + $0x5f0] sm:$0xff]
  %v209 = vld [vmem:[%s0 + $0x5f8] sm:$0xff]
  %v210 = vld [vmem:[%s0 + $0x600] sm:$0xff]
  %v211 = vld [vmem:[%s0 + $0x608] sm:$0xff]
  %v212 = vld [vmem:[%s0 + $0x610] sm:$0xff]
  %v213 = vld [vmem:[%s0 + $0x618] sm:$0xff]
  %v214 = vld [vmem:[%s0 + $0x620] sm:$0xff]
  %v215 = vld [vmem:[%s0 + $0x628] sm:$0xff]
  %v216 = vld [vmem:[%s0 + $0x630] sm:$0xff]
  %v217 = vld [vmem:[%s0 + $0x638] sm:$0xff]
  %v218 = vld [vmem:[%s0 + $0x640] sm:$0xff]
  %v219 = vld [vmem:[%s0 + $0x648] sm:$0xff]
  %v220 = vld [vmem:[%s0 + $0x650] sm:$0xff]
  %v221 = vld [vmem:[%s0 + $0x658] sm:$0xff]
  %v222 = vld [vmem:[%s0 + $0x660] sm:$0xff]
  %v223 = vld [vmem:[%s0 + $0x668] sm:$0xff]
  %v224 = vld [vmem:[%s0 + $0x670] sm:$0xff]
  %v225 = vld [vmem:[%s0 + $0x678] sm:$0xff]
  %v226 = vld [vmem:[%s0 + $0x680] sm:$0xff]
  %v227 = vld [vmem:[%s0 + $0x688] sm:$0xff]
  %v228 = vld [vmem:[%s0 + $0x690] sm:$0xff]
  %v229 = vld [vmem:[%s0 + $0x698] sm:$0xff]
  %v230 = vld [vmem:[%s0 + $0x6a0] sm:$0xff]
  %v231 = vld [vmem:[%s0 + $0x6a8] sm:$0xff]
  %v232 = vld [vmem:[%s0 + $0x6b0] sm:$0xff]
  %v233 = vld [vmem:[%s0 + $0x6b8] sm:$0xff]
  %v234 = vld [vmem:[%s0 + $0x6c0] sm:$0xff]
  %v235 = vld [vmem:[%s0 + $0x6c8] sm:$0xff]
  %v236 = vld [vmem:[%s0 + $0x6d0] sm:$0xff]
  %v237 = vld [vmem:[%s0 + $0x6d8] sm:$0xff]
  %v238 = vld [vmem:[%s0 + $0x6e0] sm:$0xff]
  %v239 = vld [vmem:[%s0 + $0x6e8] sm:$0xff]
  %v240 = vld [vmem:[%s0 + $0x6f0] sm:$0xff]
  %v241 = vld [vmem:[%s0 + $0x6f8] sm:$0xff]
  %v242 = vld [vmem:[%s0 + $0x700] sm:$0xff]
  %v243 = vld [vmem:[%s0 + $0x708] sm:$0xff]
  %v244 = vld [vmem:[%s0 + $0x710] sm:$0xff]
  %v245 = vld [vmem:[%s0 + $0x718] sm:$0xff]
  %v246 = vld [vmem:[%s0 + $0x720] sm:$0xff]
  %v247 = vld [vmem:[%s0 + $0x728] sm:$0xff]
  %v248 = vld [vmem:[%s0 + $0x730] sm:$0xff]
  %v249 = vld [vmem:[%s0 + $0x738] sm:$0xff]
  %v250 = vld [vmem:[%s0 + $0x740] sm:$0xff]
  %v251 = vld [vmem:[%s0 + $0x748] sm:$0xff]
  %v252 = vld [vmem:[%s0 + $0x750] sm:$0xff]
  %v253 = vld [vmem:[%s0 + $0x758] sm:$0xff]
  %v254 = vld [vmem:[%s0 + $0x760] sm:$0xff]
  %v255 = vld [vmem:[%s0 + $0x768] sm:$0xff]
  %v256 = vld [vmem:[%s0 + $0x770] sm:$0xff]
  %v257 = vld [vmem:[%s0 + $0x778] sm:$0xff]
  %v258 = vld [vmem:[%s0 + $0x780] sm:$0xff]
  %v259 = vld [vmem:[%s0 + $0x788] sm:$0xff]
  %v260 = vld [vmem:[%s0 + $0x790] sm:$0xff]
  %v261 = vld [vmem:[%s0 + $0x798] sm:$0xff]
  %v262 = vld [vmem:[%s0 + $0x7a0] sm:$0xff]
  %v263 = vld [vmem:[%s0 + $0x7a8] sm:$0xff]
  %v264 = vld [vmem:[%s0 + $0x7b0] sm:$0xff]
  %v265 = vld [vmem:[%s0 + $0x7b8] sm:$0xff]
  %v266 = vld [vmem:[%s0 + $0x7c0] sm:$0xff]
  %v267 = vld [vmem:[%s0 + $0x7c8] sm:$0xff]
  %v268 = vld [vmem:[%s0 + $0x7d0] sm:$0xff]
  %v269 = vld [vmem:[%s0 + $0x7d8] sm:$0xff]
  %v270 = vld [vmem:[%s0 + $0x7e0] sm:$0xff]
  %v271 = vld [vmem:[%s0 + $0x7e8] sm:$0xff]
  %v272 = vld [vmem:[%s0 + $0x7f0] sm:$0xff]
  %v273 = vld [vmem:[%s0 + $0x7f8] sm:$0xff]
  %v274 = vld [vmem:[%s1] sm:$0xf]
  %v275 = vld [vmem:[%s1 + $0x4] sm:$0xf]
  %v276 = vld [vmem:[%s1 + $0x8] sm:$0xf]
  %v277 = vld [vmem:[%s1 + $0xc] sm:$0xf]
  %v278 = vld [vmem:[%s1 + $0x10] sm:$0xf]
  %v279 = vld [vmem:[%s1 + $0x14] sm:$0xf]
  %v280 = vld [vmem:[%s1 + $0x18] sm:$0xf]
  %v281 = vld [vmem:[%s1 + $0x1c] sm:$0xf]
  %v282 = vld [vmem:[%s1 + $0x20] sm:$0xf]
  %v283 = vld [vmem:[%s1 + $0x24] sm:$0xf]
  %v284 = vld [vmem:[%s1 + $0x28] sm:$0xf]
  %v285 = vld [vmem:[%s1 + $0x2c] sm:$0xf]
  %v286 = vld [vmem:[%s1 + $0x30] sm:$0xf]
  %v287 = vld [vmem:[%s1 + $0x34] sm:$0xf]
  %v288 = vld [vmem:[%s1 + $0x38] sm:$0xf]
  %v289 = vld [vmem:[%s1 + $0x3c] sm:$0xf]
  %v290 = vld [vmem:[%s1 + $0x40] sm:$0xf]
  %v291 = vld [vmem:[%s1 + $0x44] sm:$0xf]
  %v292 = vld [vmem:[%s1 + $0x48] sm:$0xf]
  %v293 = vld [vmem:[%s1 + $0x4c] sm:$0xf]
  %v294 = vld [vmem:[%s1 + $0x50] sm:$0xf]
  %v295 = vld [vmem:[%s1 + $0x54] sm:$0xf]
  %v296 = vld [vmem:[%s1 + $0x58] sm:$0xf]
  %v297 = vld [vmem:[%s1 + $0x5c] sm:$0xf]
  %v298 = vld [vmem:[%s1 + $0x60] sm:$0xf]
  %v299 = vld [vmem:[%s1 + $0x64] sm:$0xf]
  %v300 = vld [vmem:[%s1 + $0x68] sm:$0xf]
  %v301 = vld [vmem:[%s1 + $0x6c] sm:$0xf]
  %v302 = vld [vmem:[%s1 + $0x70] sm:$0xf]
  %v303 = vld [vmem:[%s1 + $0x74] sm:$0xf]
  %v304 = vld [vmem:[%s1 + $0x78] sm:$0xf]
  %v305 = vld [vmem:[%s1 + $0x7c] sm:$0xf]
  %v562 = vunpack.c.l.b16 %v18
  %v563 = vunpack.c.h.b16 %v18
  %v564 = vunpack.c.l.b16 %v19
  %v565 = vunpack.c.h.b16 %v19
  %v566 = vunpack.c.l.b16 %v20
  %v567 = vunpack.c.h.b16 %v20
  %v568 = vunpack.c.l.b16 %v21
  %v569 = vunpack.c.h.b16 %v21
  %v570 = vunpack.c.l.b16 %v22
  %v571 = vunpack.c.h.b16 %v22
  %v572 = vunpack.c.l.b16 %v23
  %v573 = vunpack.c.h.b16 %v23
  %v574 = vunpack.c.l.b16 %v24
  %v575 = vunpack.c.h.b16 %v24
  %v576 = vunpack.c.l.b16 %v25
  %v577 = vunpack.c.h.b16 %v25
  %v578 = vunpack.c.l.b16 %v26
  %v579 = vunpack.c.h.b16 %v26
  %v580 = vunpack.c.l.b16 %v27
  %v581 = vunpack.c.h.b16 %v27
  %v582 = vunpack.c.l.b16 %v28
  %v583 = vunpack.c.h.b16 %v28
  %v584 = vunpack.c.l.b16 %v29
  %v585 = vunpack.c.h.b16 %v29
  %v586 = vunpack.c.l.b16 %v30
  %v587 = vunpack.c.h.b16 %v30
  %v588 = vunpack.c.l.b16 %v31
  %v589 = vunpack.c.h.b16 %v31
  %v590 = vunpack.c.l.b16 %v32
  %v591 = vunpack.c.h.b16 %v32
  %v592 = vunpack.c.l.b16 %v33
  %v593 = vunpack.c.h.b16 %v33
  %v594 = vunpack.c.l.b16 %v34
  %v595 = vunpack.c.h.b16 %v34
  %v596 = vunpack.c.l.b16 %v35
  %v597 = vunpack.c.h.b16 %v35
  %v598 = vunpack.c.l.b16 %v36
  %v599 = vunpack.c.h.b16 %v36
  %v600 = vunpack.c.l.b16 %v37
  %v601 = vunpack.c.h.b16 %v37
  %v602 = vunpack.c.l.b16 %v38
  %v603 = vunpack.c.h.b16 %v38
  %v604 = vunpack.c.l.b16 %v39
  %v605 = vunpack.c.h.b16 %v39
  %v606 = vunpack.c.l.b16 %v40
  %v607 = vunpack.c.h.b16 %v40
  %v608 = vunpack.c.l.b16 %v41
  %v609 = vunpack.c.h.b16 %v41
  %v610 = vunpack.c.l.b16 %v42
  %v611 = vunpack.c.h.b16 %v42
  %v612 = vunpack.c.l.b16 %v43
  %v613 = vunpack.c.h.b16 %v43
  %v614 = vunpack.c.l.b16 %v44
  %v615 = vunpack.c.h.b16 %v44
  %v616 = vunpack.c.l.b16 %v45
  %v617 = vunpack.c.h.b16 %v45
  %v618 = vunpack.c.l.b16 %v46
  %v619 = vunpack.c.h.b16 %v46
  %v620 = vunpack.c.l.b16 %v47
  %v621 = vunpack.c.h.b16 %v47
  %v622 = vunpack.c.l.b16 %v48
  %v623 = vunpack.c.h.b16 %v48
  %v624 = vunpack.c.l.b16 %v49
  %v625 = vunpack.c.h.b16 %v49
  %v626 = vunpack.c.l.b16 %v50
  %v627 = vunpack.c.h.b16 %v50
  %v628 = vunpack.c.l.b16 %v51
  %v629 = vunpack.c.h.b16 %v51
  %v630 = vunpack.c.l.b16 %v52
  %v631 = vunpack.c.h.b16 %v52
  %v632 = vunpack.c.l.b16 %v53
  %v633 = vunpack.c.h.b16 %v53
  %v634 = vunpack.c.l.b16 %v54
  %v635 = vunpack.c.h.b16 %v54
  %v636 = vunpack.c.l.b16 %v55
  %v637 = vunpack.c.h.b16 %v55
  %v638 = vunpack.c.l.b16 %v56
  %v639 = vunpack.c.h.b16 %v56
  %v640 = vunpack.c.l.b16 %v57
  %v641 = vunpack.c.h.b16 %v57
  %v642 = vunpack.c.l.b16 %v58
  %v643 = vunpack.c.h.b16 %v58
  %v644 = vunpack.c.l.b16 %v59
  %v645 = vunpack.c.h.b16 %v59
  %v646 = vunpack.c.l.b16 %v60
  %v647 = vunpack.c.h.b16 %v60
  %v648 = vunpack.c.l.b16 %v61
  %v649 = vunpack.c.h.b16 %v61
  %v650 = vunpack.c.l.b16 %v62
  %v651 = vunpack.c.h.b16 %v62
  %v652 = vunpack.c.l.b16 %v63
  %v653 = vunpack.c.h.b16 %v63
  %v654 = vunpack.c.l.b16 %v64
  %v655 = vunpack.c.h.b16 %v64
  %v656 = vunpack.c.l.b16 %v65
  %v657 = vunpack.c.h.b16 %v65
  %v658 = vunpack.c.l.b16 %v66
  %v659 = vunpack.c.h.b16 %v66
  %v660 = vunpack.c.l.b16 %v67
  %v661 = vunpack.c.h.b16 %v67
  %v662 = vunpack.c.l.b16 %v68
  %v663 = vunpack.c.h.b16 %v68
  %v664 = vunpack.c.l.b16 %v69
  %v665 = vunpack.c.h.b16 %v69
  %v666 = vunpack.c.l.b16 %v70
  %v667 = vunpack.c.h.b16 %v70
  %v668 = vunpack.c.l.b16 %v71
  %v669 = vunpack.c.h.b16 %v71
  %v670 = vunpack.c.l.b16 %v72
  %v671 = vunpack.c.h.b16 %v72
  %v672 = vunpack.c.l.b16 %v73
  %v673 = vunpack.c.h.b16 %v73
  %v674 = vunpack.c.l.b16 %v74
  %v675 = vunpack.c.h.b16 %v74
  %v676 = vunpack.c.l.b16 %v75
  %v677 = vunpack.c.h.b16 %v75
  %v678 = vunpack.c.l.b16 %v76
  %v679 = vunpack.c.h.b16 %v76
  %v680 = vunpack.c.l.b16 %v77
  %v681 = vunpack.c.h.b16 %v77
  %v682 = vunpack.c.l.b16 %v78
  %v683 = vunpack.c.h.b16 %v78
  %v684 = vunpack.c.l.b16 %v79
  %v685 = vunpack.c.h.b16 %v79
  %v686 = vunpack.c.l.b16 %v80
  %v687 = vunpack.c.h.b16 %v80
  %v688 = vunpack.c.l.b16 %v81
  %v689 = vunpack.c.h.b16 %v81
  %v690 = vunpack.c.l.b16 %v82
  %v691 = vunpack.c.h.b16 %v82
  %v692 = vunpack.c.l.b16 %v83
  %v693 = vunpack.c.h.b16 %v83
  %v694 = vunpack.c.l.b16 %v84
  %v695 = vunpack.c.h.b16 %v84
  %v696 = vunpack.c.l.b16 %v85
  %v697 = vunpack.c.h.b16 %v85
  %v698 = vunpack.c.l.b16 %v86
  %v699 = vunpack.c.h.b16 %v86
  %v700 = vunpack.c.l.b16 %v87
  %v701 = vunpack.c.h.b16 %v87
  %v702 = vunpack.c.l.b16 %v88
  %v703 = vunpack.c.h.b16 %v88
  %v704 = vunpack.c.l.b16 %v89
  %v705 = vunpack.c.h.b16 %v89
  %v706 = vunpack.c.l.b16 %v90
  %v707 = vunpack.c.h.b16 %v90
  %v708 = vunpack.c.l.b16 %v91
  %v709 = vunpack.c.h.b16 %v91
  %v710 = vunpack.c.l.b16 %v92
  %v711 = vunpack.c.h.b16 %v92
  %v712 = vunpack.c.l.b16 %v93
  %v713 = vunpack.c.h.b16 %v93
  %v714 = vunpack.c.l.b16 %v94
  %v715 = vunpack.c.h.b16 %v94
  %v716 = vunpack.c.l.b16 %v95
  %v717 = vunpack.c.h.b16 %v95
  %v718 = vunpack.c.l.b16 %v96
  %v719 = vunpack.c.h.b16 %v96
  %v720 = vunpack.c.l.b16 %v97
  %v721 = vunpack.c.h.b16 %v97
  %v722 = vunpack.c.l.b16 %v98
  %v723 = vunpack.c.h.b16 %v98
  %v724 = vunpack.c.l.b16 %v99
  %v725 = vunpack.c.h.b16 %v99
  %v726 = vunpack.c.l.b16 %v100
  %v727 = vunpack.c.h.b16 %v100
  %v728 = vunpack.c.l.b16 %v101
  %v729 = vunpack.c.h.b16 %v101
  %v730 = vunpack.c.l.b16 %v102
  %v731 = vunpack.c.h.b16 %v102
  %v732 = vunpack.c.l.b16 %v103
  %v733 = vunpack.c.h.b16 %v103
  %v734 = vunpack.c.l.b16 %v104
  %v735 = vunpack.c.h.b16 %v104
  %v736 = vunpack.c.l.b16 %v105
  %v737 = vunpack.c.h.b16 %v105
  %v738 = vunpack.c.l.b16 %v106
  %v739 = vunpack.c.h.b16 %v106
  %v740 = vunpack.c.l.b16 %v107
  %v741 = vunpack.c.h.b16 %v107
  %v742 = vunpack.c.l.b16 %v108
  %v743 = vunpack.c.h.b16 %v108
  %v744 = vunpack.c.l.b16 %v109
  %v745 = vunpack.c.h.b16 %v109
  %v746 = vunpack.c.l.b16 %v110
  %v747 = vunpack.c.h.b16 %v110
  %v748 = vunpack.c.l.b16 %v111
  %v749 = vunpack.c.h.b16 %v111
  %v750 = vunpack.c.l.b16 %v112
  %v751 = vunpack.c.h.b16 %v112
  %v752 = vunpack.c.l.b16 %v113
  %v753 = vunpack.c.h.b16 %v113
  %v754 = vunpack.c.l.b16 %v114
  %v755 = vunpack.c.h.b16 %v114
  %v756 = vunpack.c.l.b16 %v115
  %v757 = vunpack.c.h.b16 %v115
  %v758 = vunpack.c.l.b16 %v116
  %v759 = vunpack.c.h.b16 %v116
  %v760 = vunpack.c.l.b16 %v117
  %v761 = vunpack.c.h.b16 %v117
  %v762 = vunpack.c.l.b16 %v118
  %v763 = vunpack.c.h.b16 %v118
  %v764 = vunpack.c.l.b16 %v119
  %v765 = vunpack.c.h.b16 %v119
  %v766 = vunpack.c.l.b16 %v120
  %v767 = vunpack.c.h.b16 %v120
  %v768 = vunpack.c.l.b16 %v121
  %v769 = vunpack.c.h.b16 %v121
  %v770 = vunpack.c.l.b16 %v122
  %v771 = vunpack.c.h.b16 %v122
  %v772 = vunpack.c.l.b16 %v123
  %v773 = vunpack.c.h.b16 %v123
  %v774 = vunpack.c.l.b16 %v124
  %v775 = vunpack.c.h.b16 %v124
  %v776 = vunpack.c.l.b16 %v125
  %v777 = vunpack.c.h.b16 %v125
  %v778 = vunpack.c.l.b16 %v126
  %v779 = vunpack.c.h.b16 %v126
  %v780 = vunpack.c.l.b16 %v127
  %v781 = vunpack.c.h.b16 %v127
  %v782 = vunpack.c.l.b16 %v128
  %v783 = vunpack.c.h.b16 %v128
  %v784 = vunpack.c.l.b16 %v129
  %v785 = vunpack.c.h.b16 %v129
  %v786 = vunpack.c.l.b16 %v130
  %v787 = vunpack.c.h.b16 %v130
  %v788 = vunpack.c.l.b16 %v131
  %v789 = vunpack.c.h.b16 %v131
  %v790 = vunpack.c.l.b16 %v132
  %v791 = vunpack.c.h.b16 %v132
  %v792 = vunpack.c.l.b16 %v133
  %v793 = vunpack.c.h.b16 %v133
  %v794 = vunpack.c.l.b16 %v134
  %v795 = vunpack.c.h.b16 %v134
  %v796 = vunpack.c.l.b16 %v135
  %v797 = vunpack.c.h.b16 %v135
  %v798 = vunpack.c.l.b16 %v136
  %v799 = vunpack.c.h.b16 %v136
  %v800 = vunpack.c.l.b16 %v137
  %v801 = vunpack.c.h.b16 %v137
  %v802 = vunpack.c.l.b16 %v138
  %v803 = vunpack.c.h.b16 %v138
  %v804 = vunpack.c.l.b16 %v139
  %v805 = vunpack.c.h.b16 %v139
  %v806 = vunpack.c.l.b16 %v140
  %v807 = vunpack.c.h.b16 %v140
  %v808 = vunpack.c.l.b16 %v141
  %v809 = vunpack.c.h.b16 %v141
  %v810 = vunpack.c.l.b16 %v142
  %v811 = vunpack.c.h.b16 %v142
  %v812 = vunpack.c.l.b16 %v143
  %v813 = vunpack.c.h.b16 %v143
  %v814 = vunpack.c.l.b16 %v144
  %v815 = vunpack.c.h.b16 %v144
  %v816 = vunpack.c.l.b16 %v145
  %v817 = vunpack.c.h.b16 %v145
  %v818 = vunpack.c.l.b16 %v146
  %v819 = vunpack.c.h.b16 %v146
  %v820 = vunpack.c.l.b16 %v147
  %v821 = vunpack.c.h.b16 %v147
  %v822 = vunpack.c.l.b16 %v148
  %v823 = vunpack.c.h.b16 %v148
  %v824 = vunpack.c.l.b16 %v149
  %v825 = vunpack.c.h.b16 %v149
  %v826 = vunpack.c.l.b16 %v150
  %v827 = vunpack.c.h.b16 %v150
  %v828 = vunpack.c.l.b16 %v151
  %v829 = vunpack.c.h.b16 %v151
  %v830 = vunpack.c.l.b16 %v152
  %v831 = vunpack.c.h.b16 %v152
  %v832 = vunpack.c.l.b16 %v153
  %v833 = vunpack.c.h.b16 %v153
  %v834 = vunpack.c.l.b16 %v154
  %v835 = vunpack.c.h.b16 %v154
  %v836 = vunpack.c.l.b16 %v155
  %v837 = vunpack.c.h.b16 %v155
  %v838 = vunpack.c.l.b16 %v156
  %v839 = vunpack.c.h.b16 %v156
  %v840 = vunpack.c.l.b16 %v157
  %v841 = vunpack.c.h.b16 %v157
  %v842 = vunpack.c.l.b16 %v158
  %v843 = vunpack.c.h.b16 %v158
  %v844 = vunpack.c.l.b16 %v159
  %v845 = vunpack.c.h.b16 %v159
  %v846 = vunpack.c.l.b16 %v160
  %v847 = vunpack.c.h.b16 %v160
  %v848 = vunpack.c.l.b16 %v161
  %v849 = vunpack.c.h.b16 %v161
  %v850 = vunpack.c.l.b16 %v162
  %v851 = vunpack.c.h.b16 %v162
  %v852 = vunpack.c.l.b16 %v163
  %v853 = vunpack.c.h.b16 %v163
  %v854 = vunpack.c.l.b16 %v164
  %v855 = vunpack.c.h.b16 %v164
  %v856 = vunpack.c.l.b16 %v165
  %v857 = vunpack.c.h.b16 %v165
  %v858 = vunpack.c.l.b16 %v166
  %v859 = vunpack.c.h.b16 %v166
  %v860 = vunpack.c.l.b16 %v167
  %v861 = vunpack.c.h.b16 %v167
  %v862 = vunpack.c.l.b16 %v168
  %v863 = vunpack.c.h.b16 %v168
  %v864 = vunpack.c.l.b16 %v169
  %v865 = vunpack.c.h.b16 %v169
  %v866 = vunpack.c.l.b16 %v170
  %v867 = vunpack.c.h.b16 %v170
  %v868 = vunpack.c.l.b16 %v171
  %v869 = vunpack.c.h.b16 %v171
  %v870 = vunpack.c.l.b16 %v172
  %v871 = vunpack.c.h.b16 %v172
  %v872 = vunpack.c.l.b16 %v173
  %v873 = vunpack.c.h.b16 %v173
  %v874 = vunpack.c.l.b16 %v174
  %v875 = vunpack.c.h.b16 %v174
  %v876 = vunpack.c.l.b16 %v175
  %v877 = vunpack.c.h.b16 %v175
  %v878 = vunpack.c.l.b16 %v176
  %v879 = vunpack.c.h.b16 %v176
  %v880 = vunpack.c.l.b16 %v177
  %v881 = vunpack.c.h.b16 %v177
  %v882 = vunpack.c.l.b16 %v178
  %v883 = vunpack.c.h.b16 %v178
  %v884 = vunpack.c.l.b16 %v179
  %v885 = vunpack.c.h.b16 %v179
  %v886 = vunpack.c.l.b16 %v180
  %v887 = vunpack.c.h.b16 %v180
  %v888 = vunpack.c.l.b16 %v181
  %v889 = vunpack.c.h.b16 %v181
  %v890 = vunpack.c.l.b16 %v182
  %v891 = vunpack.c.h.b16 %v182
  %v892 = vunpack.c.l.b16 %v183
  %v893 = vunpack.c.h.b16 %v183
  %v894 = vunpack.c.l.b16 %v184
  %v895 = vunpack.c.h.b16 %v184
  %v896 = vunpack.c.l.b16 %v185
  %v897 = vunpack.c.h.b16 %v185
  %v898 = vunpack.c.l.b16 %v186
  %v899 = vunpack.c.h.b16 %v186
  %v900 = vunpack.c.l.b16 %v187
  %v901 = vunpack.c.h.b16 %v187
  %v902 = vunpack.c.l.b16 %v188
  %v903 = vunpack.c.h.b16 %v188
  %v904 = vunpack.c.l.b16 %v189
  %v905 = vunpack.c.h.b16 %v189
  %v906 = vunpack.c.l.b16 %v190
  %v907 = vunpack.c.h.b16 %v190
  %v908 = vunpack.c.l.b16 %v191
  %v909 = vunpack.c.h.b16 %v191
  %v910 = vunpack.c.l.b16 %v192
  %v911 = vunpack.c.h.b16 %v192
  %v912 = vunpack.c.l.b16 %v193
  %v913 = vunpack.c.h.b16 %v193
  %v914 = vunpack.c.l.b16 %v194
  %v915 = vunpack.c.h.b16 %v194
  %v916 = vunpack.c.l.b16 %v195
  %v917 = vunpack.c.h.b16 %v195
  %v918 = vunpack.c.l.b16 %v196
  %v919 = vunpack.c.h.b16 %v196
  %v920 = vunpack.c.l.b16 %v197
  %v921 = vunpack.c.h.b16 %v197
  %v922 = vunpack.c.l.b16 %v198
  %v923 = vunpack.c.h.b16 %v198
  %v924 = vunpack.c.l.b16 %v199
  %v925 = vunpack.c.h.b16 %v199
  %v926 = vunpack.c.l.b16 %v200
  %v927 = vunpack.c.h.b16 %v200
  %v928 = vunpack.c.l.b16 %v201
  %v929 = vunpack.c.h.b16 %v201
  %v930 = vunpack.c.l.b16 %v202
  %v931 = vunpack.c.h.b16 %v202
  %v932 = vunpack.c.l.b16 %v203
  %v933 = vunpack.c.h.b16 %v203
  %v934 = vunpack.c.l.b16 %v204
  %v935 = vunpack.c.h.b16 %v204
  %v936 = vunpack.c.l.b16 %v205
  %v937 = vunpack.c.h.b16 %v205
  %v938 = vunpack.c.l.b16 %v206
  %v939 = vunpack.c.h.b16 %v206
  %v940 = vunpack.c.l.b16 %v207
  %v941 = vunpack.c.h.b16 %v207
  %v942 = vunpack.c.l.b16 %v208
  %v943 = vunpack.c.h.b16 %v208
  %v944 = vunpack.c.l.b16 %v209
  %v945 = vunpack.c.h.b16 %v209
  %v946 = vunpack.c.l.b16 %v210
  %v947 = vunpack.c.h.b16 %v210
  %v948 = vunpack.c.l.b16 %v211
  %v949 = vunpack.c.h.b16 %v211
  %v950 = vunpack.c.l.b16 %v212
  %v951 = vunpack.c.h.b16 %v212
  %v952 = vunpack.c.l.b16 %v213
  %v953 = vunpack.c.h.b16 %v213
  %v954 = vunpack.c.l.b16 %v214
  %v955 = vunpack.c.h.b16 %v214
  %v956 = vunpack.c.l.b16 %v215
  %v957 = vunpack.c.h.b16 %v215
  %v958 = vunpack.c.l.b16 %v216
  %v959 = vunpack.c.h.b16 %v216
  %v960 = vunpack.c.l.b16 %v217
  %v961 = vunpack.c.h.b16 %v217
  %v962 = vunpack.c.l.b16 %v218
  %v963 = vunpack.c.h.b16 %v218
  %v964 = vunpack.c.l.b16 %v219
  %v965 = vunpack.c.h.b16 %v219
  %v966 = vunpack.c.l.b16 %v220
  %v967 = vunpack.c.h.b16 %v220
  %v968 = vunpack.c.l.b16 %v221
  %v969 = vunpack.c.h.b16 %v221
  %v970 = vunpack.c.l.b16 %v222
  %v971 = vunpack.c.h.b16 %v222
  %v972 = vunpack.c.l.b16 %v223
  %v973 = vunpack.c.h.b16 %v223
  %v974 = vunpack.c.l.b16 %v224
  %v975 = vunpack.c.h.b16 %v224
  %v976 = vunpack.c.l.b16 %v225
  %v977 = vunpack.c.h.b16 %v225
  %v978 = vunpack.c.l.b16 %v226
  %v979 = vunpack.c.h.b16 %v226
  %v980 = vunpack.c.l.b16 %v227
  %v981 = vunpack.c.h.b16 %v227
  %v982 = vunpack.c.l.b16 %v228
  %v983 = vunpack.c.h.b16 %v228
  %v984 = vunpack.c.l.b16 %v229
  %v985 = vunpack.c.h.b16 %v229
  %v986 = vunpack.c.l.b16 %v230
  %v987 = vunpack.c.h.b16 %v230
  %v988 = vunpack.c.l.b16 %v231
  %v989 = vunpack.c.h.b16 %v231
  %v990 = vunpack.c.l.b16 %v232
  %v991 = vunpack.c.h.b16 %v232
  %v992 = vunpack.c.l.b16 %v233
  %v993 = vunpack.c.h.b16 %v233
  %v994 = vunpack.c.l.b16 %v234
  %v995 = vunpack.c.h.b16 %v234
  %v996 = vunpack.c.l.b16 %v235
  %v997 = vunpack.c.h.b16 %v235
  %v998 = vunpack.c.l.b16 %v236
  %v999 = vunpack.c.h.b16 %v236
  %v1000 = vunpack.c.l.b16 %v237
  %v1001 = vunpack.c.h.b16 %v237
  %v1002 = vunpack.c.l.b16 %v238
  %v1003 = vunpack.c.h.b16 %v238
  %v1004 = vunpack.c.l.b16 %v239
  %v1005 = vunpack.c.h.b16 %v239
  %v1006 = vunpack.c.l.b16 %v240
  %v1007 = vunpack.c.h.b16 %v240
  %v1008 = vunpack.c.l.b16 %v241
  %v1009 = vunpack.c.h.b16 %v241
  %v1010 = vunpack.c.l.b16 %v242
  %v1011 = vunpack.c.h.b16 %v242
  %v1012 = vunpack.c.l.b16 %v243
  %v1013 = vunpack.c.h.b16 %v243
  %v1014 = vunpack.c.l.b16 %v244
  %v1015 = vunpack.c.h.b16 %v244
  %v1016 = vunpack.c.l.b16 %v245
  %v1017 = vunpack.c.h.b16 %v245
  %v1018 = vunpack.c.l.b16 %v246
  %v1019 = vunpack.c.h.b16 %v246
  %v1020 = vunpack.c.l.b16 %v247
  %v1021 = vunpack.c.h.b16 %v247
  %v1022 = vunpack.c.l.b16 %v248
  %v1023 = vunpack.c.h.b16 %v248
  %v1024 = vunpack.c.l.b16 %v249
  %v1025 = vunpack.c.h.b16 %v249
  %v1026 = vunpack.c.l.b16 %v250
  %v1027 = vunpack.c.h.b16 %v250
  %v1028 = vunpack.c.l.b16 %v251
  %v1029 = vunpack.c.h.b16 %v251
  %v1030 = vunpack.c.l.b16 %v252
  %v1031 = vunpack.c.h.b16 %v252
  %v1032 = vunpack.c.l.b16 %v253
  %v1033 = vunpack.c.h.b16 %v253
  %v1034 = vunpack.c.l.b16 %v254
  %v1035 = vunpack.c.h.b16 %v254
  %v1036 = vunpack.c.l.b16 %v255
  %v1037 = vunpack.c.h.b16 %v255
  %v1038 = vunpack.c.l.b16 %v256
  %v1039 = vunpack.c.h.b16 %v256
  %v1040 = vunpack.c.l.b16 %v257
  %v1041 = vunpack.c.h.b16 %v257
  %v1042 = vunpack.c.l.b16 %v258
  %v1043 = vunpack.c.h.b16 %v258
  %v1044 = vunpack.c.l.b16 %v259
  %v1045 = vunpack.c.h.b16 %v259
  %v1046 = vunpack.c.l.b16 %v260
  %v1047 = vunpack.c.h.b16 %v260
  %v1048 = vunpack.c.l.b16 %v261
  %v1049 = vunpack.c.h.b16 %v261
  %v1050 = vunpack.c.l.b16 %v262
  %v1051 = vunpack.c.h.b16 %v262
  %v1052 = vunpack.c.l.b16 %v263
  %v1053 = vunpack.c.h.b16 %v263
  %v1054 = vunpack.c.l.b16 %v264
  %v1055 = vunpack.c.h.b16 %v264
  %v1056 = vunpack.c.l.b16 %v265
  %v1057 = vunpack.c.h.b16 %v265
  %v1058 = vunpack.c.l.b16 %v266
  %v1059 = vunpack.c.h.b16 %v266
  %v1060 = vunpack.c.l.b16 %v267
  %v1061 = vunpack.c.h.b16 %v267
  %v1062 = vunpack.c.l.b16 %v268
  %v1063 = vunpack.c.h.b16 %v268
  %v1064 = vunpack.c.l.b16 %v269
  %v1065 = vunpack.c.h.b16 %v269
  %v1066 = vunpack.c.l.b16 %v270
  %v1067 = vunpack.c.h.b16 %v270
  %v1068 = vunpack.c.l.b16 %v271
  %v1069 = vunpack.c.h.b16 %v271
  %v1070 = vunpack.c.l.b16 %v272
  %v1071 = vunpack.c.h.b16 %v272
  %v1072 = vunpack.c.l.b16 %v273
  %v1073 = vunpack.c.h.b16 %v273
  %v1074 = vpack.c.b16 %v564, %v562
  %v1075 = vpack.c.b16 %v565, %v563
  %v1076 = vpack.c.b16 %v568, %v566
  %v1077 = vpack.c.b16 %v569, %v567
  %v1078 = vpack.c.b16 %v572, %v570
  %v1079 = vpack.c.b16 %v573, %v571
  %v1080 = vpack.c.b16 %v576, %v574
  %v1081 = vpack.c.b16 %v577, %v575
  %v1082 = vpack.c.b16 %v580, %v578
  %v1083 = vpack.c.b16 %v581, %v579
  %v1084 = vpack.c.b16 %v584, %v582
  %v1085 = vpack.c.b16 %v585, %v583
  %v1086 = vpack.c.b16 %v588, %v586
  %v1087 = vpack.c.b16 %v589, %v587
  %v1088 = vpack.c.b16 %v592, %v590
  %v1089 = vpack.c.b16 %v593, %v591
  %v1090 = vpack.c.b16 %v596, %v594
  %v1091 = vpack.c.b16 %v597, %v595
  %v1092 = vpack.c.b16 %v600, %v598
  %v1093 = vpack.c.b16 %v601, %v599
  %v1094 = vpack.c.b16 %v604, %v602
  %v1095 = vpack.c.b16 %v605, %v603
  %v1096 = vpack.c.b16 %v608, %v606
  %v1097 = vpack.c.b16 %v609, %v607
  %v1098 = vpack.c.b16 %v612, %v610
  %v1099 = vpack.c.b16 %v613, %v611
  %v1100 = vpack.c.b16 %v616, %v614
  %v1101 = vpack.c.b16 %v617, %v615
  %v1102 = vpack.c.b16 %v620, %v618
  %v1103 = vpack.c.b16 %v621, %v619
  %v1104 = vpack.c.b16 %v624, %v622
  %v1105 = vpack.c.b16 %v625, %v623
  %v1106 = vpack.c.b16 %v628, %v626
  %v1107 = vpack.c.b16 %v629, %v627
  %v1108 = vpack.c.b16 %v632, %v630
  %v1109 = vpack.c.b16 %v633, %v631
  %v1110 = vpack.c.b16 %v636, %v634
  %v1111 = vpack.c.b16 %v637, %v635
  %v1112 = vpack.c.b16 %v640, %v638
  %v1113 = vpack.c.b16 %v641, %v639
  %v1114 = vpack.c.b16 %v644, %v642
  %v1115 = vpack.c.b16 %v645, %v643
  %v1116 = vpack.c.b16 %v648, %v646
  %v1117 = vpack.c.b16 %v649, %v647
  %v1118 = vpack.c.b16 %v652, %v650
  %v1119 = vpack.c.b16 %v653, %v651
  %v1120 = vpack.c.b16 %v656, %v654
  %v1121 = vpack.c.b16 %v657, %v655
  %v1122 = vpack.c.b16 %v660, %v658
  %v1123 = vpack.c.b16 %v661, %v659
  %v1124 = vpack.c.b16 %v664, %v662
  %v1125 = vpack.c.b16 %v665, %v663
  %v1126 = vpack.c.b16 %v668, %v666
  %v1127 = vpack.c.b16 %v669, %v667
  %v1128 = vpack.c.b16 %v672, %v670
  %v1129 = vpack.c.b16 %v673, %v671
  %v1130 = vpack.c.b16 %v676, %v674
  %v1131 = vpack.c.b16 %v677, %v675
  %v1132 = vpack.c.b16 %v680, %v678
  %v1133 = vpack.c.b16 %v681, %v679
  %v1134 = vpack.c.b16 %v684, %v682
  %v1135 = vpack.c.b16 %v685, %v683
  %v1136 = vpack.c.b16 %v688, %v686
  %v1137 = vpack.c.b16 %v689, %v687
  %v1138 = vpack.c.b16 %v692, %v690
  %v1139 = vpack.c.b16 %v693, %v691
  %v1140 = vpack.c.b16 %v696, %v694
  %v1141 = vpack.c.b16 %v697, %v695
  %v1142 = vpack.c.b16 %v700, %v698
  %v1143 = vpack.c.b16 %v701, %v699
  %v1144 = vpack.c.b16 %v704, %v702
  %v1145 = vpack.c.b16 %v705, %v703
  %v1146 = vpack.c.b16 %v708, %v706
  %v1147 = vpack.c.b16 %v709, %v707
  %v1148 = vpack.c.b16 %v712, %v710
  %v1149 = vpack.c.b16 %v713, %v711
  %v1150 = vpack.c.b16 %v716, %v714
  %v1151 = vpack.c.b16 %v717, %v715
  %v1152 = vpack.c.b16 %v720, %v718
  %v1153 = vpack.c.b16 %v721, %v719
  %v1154 = vpack.c.b16 %v724, %v722
  %v1155 = vpack.c.b16 %v725, %v723
  %v1156 = vpack.c.b16 %v728, %v726
  %v1157 = vpack.c.b16 %v729, %v727
  %v1158 = vpack.c.b16 %v732, %v730
  %v1159 = vpack.c.b16 %v733, %v731
  %v1160 = vpack.c.b16 %v736, %v734
  %v1161 = vpack.c.b16 %v737, %v735
  %v1162 = vpack.c.b16 %v740, %v738
  %v1163 = vpack.c.b16 %v741, %v739
  %v1164 = vpack.c.b16 %v744, %v742
  %v1165 = vpack.c.b16 %v745, %v743
  %v1166 = vpack.c.b16 %v748, %v746
  %v1167 = vpack.c.b16 %v749, %v747
  %v1168 = vpack.c.b16 %v752, %v750
  %v1169 = vpack.c.b16 %v753, %v751
  %v1170 = vpack.c.b16 %v756, %v754
  %v1171 = vpack.c.b16 %v757, %v755
  %v1172 = vpack.c.b16 %v760, %v758
  %v1173 = vpack.c.b16 %v761, %v759
  %v1174 = vpack.c.b16 %v764, %v762
  %v1175 = vpack.c.b16 %v765, %v763
  %v1176 = vpack.c.b16 %v768, %v766
  %v1177 = vpack.c.b16 %v769, %v767
  %v1178 = vpack.c.b16 %v772, %v770
  %v1179 = vpack.c.b16 %v773, %v771
  %v1180 = vpack.c.b16 %v776, %v774
  %v1181 = vpack.c.b16 %v777, %v775
  %v1182 = vpack.c.b16 %v780, %v778
  %v1183 = vpack.c.b16 %v781, %v779
  %v1184 = vpack.c.b16 %v784, %v782
  %v1185 = vpack.c.b16 %v785, %v783
  %v1186 = vpack.c.b16 %v788, %v786
  %v1187 = vpack.c.b16 %v789, %v787
  %v1188 = vpack.c.b16 %v792, %v790
  %v1189 = vpack.c.b16 %v793, %v791
  %v1190 = vpack.c.b16 %v796, %v794
  %v1191 = vpack.c.b16 %v797, %v795
  %v1192 = vpack.c.b16 %v800, %v798
  %v1193 = vpack.c.b16 %v801, %v799
  %v1194 = vpack.c.b16 %v804, %v802
  %v1195 = vpack.c.b16 %v805, %v803
  %v1196 = vpack.c.b16 %v808, %v806
  %v1197 = vpack.c.b16 %v809, %v807
  %v1198 = vpack.c.b16 %v812, %v810
  %v1199 = vpack.c.b16 %v813, %v811
  %v1200 = vpack.c.b16 %v816, %v814
  %v1201 = vpack.c.b16 %v817, %v815
  %v1202 = vpack.c.b16 %v820, %v818
  %v1203 = vpack.c.b16 %v821, %v819
  %v1204 = vpack.c.b16 %v824, %v822
  %v1205 = vpack.c.b16 %v825, %v823
  %v1206 = vpack.c.b16 %v828, %v826
  %v1207 = vpack.c.b16 %v829, %v827
  %v1208 = vpack.c.b16 %v832, %v830
  %v1209 = vpack.c.b16 %v833, %v831
  %v1210 = vpack.c.b16 %v836, %v834
  %v1211 = vpack.c.b16 %v837, %v835
  %v1212 = vpack.c.b16 %v840, %v838
  %v1213 = vpack.c.b16 %v841, %v839
  %v1214 = vpack.c.b16 %v844, %v842
  %v1215 = vpack.c.b16 %v845, %v843
  %v1216 = vpack.c.b16 %v848, %v846
  %v1217 = vpack.c.b16 %v849, %v847
  %v1218 = vpack.c.b16 %v852, %v850
  %v1219 = vpack.c.b16 %v853, %v851
  %v1220 = vpack.c.b16 %v856, %v854
  %v1221 = vpack.c.b16 %v857, %v855
  %v1222 = vpack.c.b16 %v860, %v858
  %v1223 = vpack.c.b16 %v861, %v859
  %v1224 = vpack.c.b16 %v864, %v862
  %v1225 = vpack.c.b16 %v865, %v863
  %v1226 = vpack.c.b16 %v868, %v866
  %v1227 = vpack.c.b16 %v869, %v867
  %v1228 = vpack.c.b16 %v872, %v870
  %v1229 = vpack.c.b16 %v873, %v871
  %v1230 = vpack.c.b16 %v876, %v874
  %v1231 = vpack.c.b16 %v877, %v875
  %v1232 = vpack.c.b16 %v880, %v878
  %v1233 = vpack.c.b16 %v881, %v879
  %v1234 = vpack.c.b16 %v884, %v882
  %v1235 = vpack.c.b16 %v885, %v883
  %v1236 = vpack.c.b16 %v888, %v886
  %v1237 = vpack.c.b16 %v889, %v887
  %v1238 = vpack.c.b16 %v892, %v890
  %v1239 = vpack.c.b16 %v893, %v891
  %v1240 = vpack.c.b16 %v896, %v894
  %v1241 = vpack.c.b16 %v897, %v895
  %v1242 = vpack.c.b16 %v900, %v898
  %v1243 = vpack.c.b16 %v901, %v899
  %v1244 = vpack.c.b16 %v904, %v902
  %v1245 = vpack.c.b16 %v905, %v903
  %v1246 = vpack.c.b16 %v908, %v906
  %v1247 = vpack.c.b16 %v909, %v907
  %v1248 = vpack.c.b16 %v912, %v910
  %v1249 = vpack.c.b16 %v913, %v911
  %v1250 = vpack.c.b16 %v916, %v914
  %v1251 = vpack.c.b16 %v917, %v915
  %v1252 = vpack.c.b16 %v920, %v918
  %v1253 = vpack.c.b16 %v921, %v919
  %v1254 = vpack.c.b16 %v924, %v922
  %v1255 = vpack.c.b16 %v925, %v923
  %v1256 = vpack.c.b16 %v928, %v926
  %v1257 = vpack.c.b16 %v929, %v927
  %v1258 = vpack.c.b16 %v932, %v930
  %v1259 = vpack.c.b16 %v933, %v931
  %v1260 = vpack.c.b16 %v936, %v934
  %v1261 = vpack.c.b16 %v937, %v935
  %v1262 = vpack.c.b16 %v940, %v938
  %v1263 = vpack.c.b16 %v941, %v939
  %v1264 = vpack.c.b16 %v944, %v942
  %v1265 = vpack.c.b16 %v945, %v943
  %v1266 = vpack.c.b16 %v948, %v946
  %v1267 = vpack.c.b16 %v949, %v947
  %v1268 = vpack.c.b16 %v952, %v950
  %v1269 = vpack.c.b16 %v953, %v951
  %v1270 = vpack.c.b16 %v956, %v954
  %v1271 = vpack.c.b16 %v957, %v955
  %v1272 = vpack.c.b16 %v960, %v958
  %v1273 = vpack.c.b16 %v961, %v959
  %v1274 = vpack.c.b16 %v964, %v962
  %v1275 = vpack.c.b16 %v965, %v963
  %v1276 = vpack.c.b16 %v968, %v966
  %v1277 = vpack.c.b16 %v969, %v967
  %v1278 = vpack.c.b16 %v972, %v970
  %v1279 = vpack.c.b16 %v973, %v971
  %v1280 = vpack.c.b16 %v976, %v974
  %v1281 = vpack.c.b16 %v977, %v975
  %v1282 = vpack.c.b16 %v980, %v978
  %v1283 = vpack.c.b16 %v981, %v979
  %v1284 = vpack.c.b16 %v984, %v982
  %v1285 = vpack.c.b16 %v985, %v983
  %v1286 = vpack.c.b16 %v988, %v986
  %v1287 = vpack.c.b16 %v989, %v987
  %v1288 = vpack.c.b16 %v992, %v990
  %v1289 = vpack.c.b16 %v993, %v991
  %v1290 = vpack.c.b16 %v996, %v994
  %v1291 = vpack.c.b16 %v997, %v995
  %v1292 = vpack.c.b16 %v1000, %v998
  %v1293 = vpack.c.b16 %v1001, %v999
  %v1294 = vpack.c.b16 %v1004, %v1002
  %v1295 = vpack.c.b16 %v1005, %v1003
  %v1296 = vpack.c.b16 %v1008, %v1006
  %v1297 = vpack.c.b16 %v1009, %v1007
  %v1298 = vpack.c.b16 %v1012, %v1010
  %v1299 = vpack.c.b16 %v1013, %v1011
  %v1300 = vpack.c.b16 %v1016, %v1014
  %v1301 = vpack.c.b16 %v1017, %v1015
  %v1302 = vpack.c.b16 %v1020, %v1018
  %v1303 = vpack.c.b16 %v1021, %v1019
  %v1304 = vpack.c.b16 %v1024, %v1022
  %v1305 = vpack.c.b16 %v1025, %v1023
  %v1306 = vpack.c.b16 %v1028, %v1026
  %v1307 = vpack.c.b16 %v1029, %v1027
  %v1308 = vpack.c.b16 %v1032, %v1030
  %v1309 = vpack.c.b16 %v1033, %v1031
  %v1310 = vpack.c.b16 %v1036, %v1034
  %v1311 = vpack.c.b16 %v1037, %v1035
  %v1312 = vpack.c.b16 %v1040, %v1038
  %v1313 = vpack.c.b16 %v1041, %v1039
  %v1314 = vpack.c.b16 %v1044, %v1042
  %v1315 = vpack.c.b16 %v1045, %v1043
  %v1316 = vpack.c.b16 %v1048, %v1046
  %v1317 = vpack.c.b16 %v1049, %v1047
  %v1318 = vpack.c.b16 %v1052, %v1050
  %v1319 = vpack.c.b16 %v1053, %v1051
  %v1320 = vpack.c.b16 %v1056, %v1054
  %v1321 = vpack.c.b16 %v1057, %v1055
  %v1322 = vpack.c.b16 %v1060, %v1058
  %v1323 = vpack.c.b16 %v1061, %v1059
  %v1324 = vpack.c.b16 %v1064, %v1062
  %v1325 = vpack.c.b16 %v1065, %v1063
  %v1326 = vpack.c.b16 %v1068, %v1066
  %v1327 = vpack.c.b16 %v1069, %v1067
  %v1328 = vpack.c.b16 %v1072, %v1070
  %v1329 = vpack.c.b16 %v1073, %v1071
  %v1618 = vunpack.c.l.b16 %v274
  %v1619 = vunpack.c.l.b16 %v275
  %v1620 = vunpack.c.l.b16 %v276
  %v1621 = vunpack.c.l.b16 %v277
  %v1622 = vunpack.c.l.b16 %v278
  %v1623 = vunpack.c.l.b16 %v279
  %v1624 = vunpack.c.l.b16 %v280
  %v1625 = vunpack.c.l.b16 %v281
  %v1626 = vunpack.c.l.b16 %v282
  %v1627 = vunpack.c.l.b16 %v283
  %v1628 = vunpack.c.l.b16 %v284
  %v1629 = vunpack.c.l.b16 %v285
  %v1630 = vunpack.c.l.b16 %v286
  %v1631 = vunpack.c.l.b16 %v287
  %v1632 = vunpack.c.l.b16 %v288
  %v1633 = vunpack.c.l.b16 %v289
  %v1634 = vunpack.c.l.b16 %v290
  %v1635 = vunpack.c.l.b16 %v291
  %v1636 = vunpack.c.l.b16 %v292
  %v1637 = vunpack.c.l.b16 %v293
  %v1638 = vunpack.c.l.b16 %v294
  %v1639 = vunpack.c.l.b16 %v295
  %v1640 = vunpack.c.l.b16 %v296
  %v1641 = vunpack.c.l.b16 %v297
  %v1642 = vunpack.c.l.b16 %v298
  %v1643 = vunpack.c.l.b16 %v299
  %v1644 = vunpack.c.l.b16 %v300
  %v1645 = vunpack.c.l.b16 %v301
  %v1646 = vunpack.c.l.b16 %v302
  %v1647 = vunpack.c.l.b16 %v303
  %v1648 = vunpack.c.l.b16 %v304
  %v1649 = vunpack.c.l.b16 %v305
  %v1650 = vpack.c.b16 %v1619, %v1618
  %v1651 = vpack.c.b16 %v1621, %v1620
  %v1652 = vpack.c.b16 %v1623, %v1622
  %v1653 = vpack.c.b16 %v1625, %v1624
  %v1654 = vpack.c.b16 %v1627, %v1626
  %v1655 = vpack.c.b16 %v1629, %v1628
  %v1656 = vpack.c.b16 %v1631, %v1630
  %v1657 = vpack.c.b16 %v1633, %v1632
  %v1658 = vpack.c.b16 %v1635, %v1634
  %v1659 = vpack.c.b16 %v1637, %v1636
  %v1660 = vpack.c.b16 %v1639, %v1638
  %v1661 = vpack.c.b16 %v1641, %v1640
  %v1662 = vpack.c.b16 %v1643, %v1642
  %v1663 = vpack.c.b16 %v1645, %v1644
  %v1664 = vpack.c.b16 %v1647, %v1646
  %v1665 = vpack.c.b16 %v1649, %v1648
  %1682 = vmatprep.subr.bf16.mxu0 0
  %1683 = vmatpush1.bf16.msra.mxu0 %v1650
  %1684 = vmatprep.subr.bf16.mxu0 0
  %1685 = vmatpush1.bf16.msra.mxu0 %v1651
  %1686 = vmatprep.subr.bf16.mxu0 0
  %1687 = vmatpush1.bf16.msra.mxu0 %v1652
  %1688 = vmatprep.subr.bf16.mxu0 0
  %1689 = vmatpush1.bf16.msra.mxu0 %v1653
  %1690 = vmatprep.subr.bf16.mxu0 0
  %1691 = vmatpush1.bf16.msra.mxu0 %v1654
  %1692 = vmatprep.subr.bf16.mxu0 0
  %1693 = vmatpush1.bf16.msra.mxu0 %v1655
  %1694 = vmatprep.subr.bf16.mxu0 0
  %1695 = vmatpush1.bf16.msra.mxu0 %v1656
  %1696 = vmatprep.subr.bf16.mxu0 0
  %1697 = vmatpush1.bf16.msra.mxu0 %v1657
  %1698 = vmatprep.subr.bf16.mxu0 0
  %1699 = vmatpush1.bf16.msra.mxu0 %v1658
  %1700 = vmatprep.subr.bf16.mxu0 0
  %1701 = vmatpush1.bf16.msra.mxu0 %v1659
  %1702 = vmatprep.subr.bf16.mxu0 0
  %1703 = vmatpush1.bf16.msra.mxu0 %v1660
  %1704 = vmatprep.subr.bf16.mxu0 0
  %1705 = vmatpush1.bf16.msra.mxu0 %v1661
  %1706 = vmatprep.subr.bf16.mxu0 0
  %1707 = vmatpush1.bf16.msra.mxu0 %v1662
  %1708 = vmatprep.subr.bf16.mxu0 0
  %1709 = vmatpush1.bf16.msra.mxu0 %v1663
  %1710 = vmatprep.subr.bf16.mxu0 0
  %1711 = vmatpush1.bf16.msra.mxu0 %v1664
  %1712 = vmatprep.subr.bf16.mxu0 0
  %1713 = vmatpush1.bf16.msra.mxu0 %v1665
  %1714 = vmatprep.mubr.bf16.mxu0 %v1075
  %1715 = vmatmul.mubr.bf16.gmra.mrb[0].mxu0 %v1074
  %v1716 = vpop.f32.mrb[0].mxu0
  %v1717 = vadd.f32 0.0, %v1716
  %v1718 = vpop.f32.mrb[0].mxu0
  %v1719 = vpop.f32.mrb[0].mxu0
  %v1720 = vadd.f32 0.0, %v1719
  %v1721 = vpop.f32.mrb[0].mxu0
  %1722 = vmatprep.mubr.bf16.mxu0 %v1077
  %1723 = vmatmul.mubr.bf16.gmra.mrb[0].mxu0 %v1076
  %v1724 = vpop.f32.mrb[0].mxu0
  %v1725 = vadd.f32 0.0, %v1724
  %v1726 = vpop.f32.mrb[0].mxu0
  %v1727 = vpop.f32.mrb[0].mxu0
  %v1728 = vadd.f32 0.0, %v1727
  %v1729 = vpop.f32.mrb[0].mxu0
  %1730 = vmatprep.mubr.bf16.mxu0 %v1079
  %1731 = vmatmul.mubr.bf16.gmra.mrb[0].mxu0 %v1078
  %v1732 = vpop.f32.mrb[0].mxu0
  %v1733 = vadd.f32 0.0, %v1732
  %v1734 = vpop.f32.mrb[0].mxu0
  %v1735 = vpop.f32.mrb[0].mxu0
  %v1736 = vadd.f32 0.0, %v1735
  %v1737 = vpop.f32.mrb[0].mxu0
  %1738 = vmatprep.mubr.bf16.mxu0 %v1081
  %1739 = vmatmul.mubr.bf16.gmra.mrb[0].mxu0 %v1080
  %v1740 = vpop.f32.mrb[0].mxu0
  %v1741 = vadd.f32 0.0, %v1740
  %v1742 = vpop.f32.mrb[0].mxu0
  %v1743 = vpop.f32.mrb[0].mxu0
  %v1744 = vadd.f32 0.0, %v1743
  %v1745 = vpop.f32.mrb[0].mxu0
  %1746 = vmatprep.mubr.bf16.mxu0 %v1083
  %1747 = vmatmul.mubr.bf16.gmra.mrb[0].mxu0 %v1082
  %v1748 = vpop.f32.mrb[0].mxu0
  %v1749 = vadd.f32 0.0, %v1748
  %v1750 = vpop.f32.mrb[0].mxu0
  %v1751 = vpop.f32.mrb[0].mxu0
  %v1752 = vadd.f32 0.0, %v1751
  %v1753 = vpop.f32.mrb[0].mxu0
  %1754 = vmatprep.mubr.bf16.mxu0 %v1085
  %1755 = vmatmul.mubr.bf16.gmra.mrb[0].mxu0 %v1084
  %v1756 = vpop.f32.mrb[0].mxu0
  %v1757 = vadd.f32 0.0, %v1756
  %v1758 = vpop.f32.mrb[0].mxu0
  %v1759 = vpop.f32.mrb[0].mxu0
  %v1760 = vadd.f32 0.0, %v1759
  %v1761 = vpop.f32.mrb[0].mxu0
  %1762 = vmatprep.mubr.bf16.mxu0 %v1087
  %1763 = vmatmul.mubr.bf16.gmra.mrb[0].mxu0 %v1086
  %v1764 = vpop.f32.mrb[0].mxu0
  %v1765 = vadd.f32 0.0, %v1764
  %v1766 = vpop.f32.mrb[0].mxu0
  %v1767 = vpop.f32.mrb[0].mxu0
  %v1768 = vadd.f32 0.0, %v1767
  %v1769 = vpop.f32.mrb[0].mxu0
  %1770 = vmatprep.mubr.bf16.mxu0 %v1089
  %1771 = vmatmul.mubr.bf16.gmra.mrb[0].mxu0 %v1088
  %v1772 = vpop.f32.mrb[0].mxu0
  %v1773 = vadd.f32 0.0, %v1772
  %v1774 = vpop.f32.mrb[0].mxu0
  %v1775 = vpop.f32.mrb[0].mxu0
  %v1776 = vadd.f32 0.0, %v1775
  %v1777 = vpop.f32.mrb[0].mxu0
  %1778 = vmatprep.mubr.bf16.mxu0 %v1091
  %1779 = vmatmul.mubr.bf16.gmra.mrb[0].mxu0 %v1090
  %v1780 = vpop.f32.mrb[0].mxu0
  %v1781 = vadd.f32 0.0, %v1780
  %v1782 = vpop.f32.mrb[0].mxu0
  %v1783 = vpop.f32.mrb[0].mxu0
  %v1784 = vadd.f32 0.0, %v1783
  %v1785 = vpop.f32.mrb[0].mxu0
  %1786 = vmatprep.mubr.bf16.mxu0 %v1093
  %1787 = vmatmul.mubr.bf16.gmra.mrb[0].mxu0 %v1092
  %v1788 = vpop.f32.mrb[0].mxu0
  %v1789 = vadd.f32 0.0, %v1788
  %v1790 = vpop.f32.mrb[0].mxu0
  %v1791 = vpop.f32.mrb[0].mxu0
  %v1792 = vadd.f32 0.0, %v1791
  %v1793 = vpop.f32.mrb[0].mxu0
  %1794 = vmatprep.mubr.bf16.mxu0 %v1095
  %1795 = vmatmul.mubr.bf16.gmra.mrb[0].mxu0 %v1094
  %v1796 = vpop.f32.mrb[0].mxu0
  %v1797 = vadd.f32 0.0, %v1796
  %v1798 = vpop.f32.mrb[0].mxu0
  %v1799 = vpop.f32.mrb[0].mxu0
  %v1800 = vadd.f32 0.0, %v1799
  %v1801 = vpop.f32.mrb[0].mxu0
  %1802 = vmatprep.mubr.bf16.mxu0 %v1097
  %1803 = vmatmul.mubr.bf16.gmra.mrb[0].mxu0 %v1096
  %v1804 = vpop.f32.mrb[0].mxu0
  %v1805 = vadd.f32 0.0, %v1804
  %v1806 = vpop.f32.mrb[0].mxu0
  %v1807 = vpop.f32.mrb[0].mxu0
  %v1808 = vadd.f32 0.0, %v1807
  %v1809 = vpop.f32.mrb[0].mxu0
  %1810 = vmatprep.mubr.bf16.mxu0 %v1099
  %1811 = vmatmul.mubr.bf16.gmra.mrb[0].mxu0 %v1098
  %v1812 = vpop.f32.mrb[0].mxu0
  %v1813 = vadd.f32 0.0, %v1812
  %v1814 = vpop.f32.mrb[0].mxu0
  %v1815 = vpop.f32.mrb[0].mxu0
  %v1816 = vadd.f32 0.0, %v1815
  %v1817 = vpop.f32.mrb[0].mxu0
  %1818 = vmatprep.mubr.bf16.mxu0 %v1101
  %1819 = vmatmul.mubr.bf16.gmra.mrb[0].mxu0 %v1100
  %v1820 = vpop.f32.mrb[0].mxu0
  %v1821 = vadd.f32 0.0, %v1820
  %v1822 = vpop.f32.mrb[0].mxu0
  %v1823 = vpop.f32.mrb[0].mxu0
  %v1824 = vadd.f32 0.0, %v1823
  %v1825 = vpop.f32.mrb[0].mxu0
  %1826 = vmatprep.mubr.bf16.mxu0 %v1103
  %1827 = vmatmul.mubr.bf16.gmra.mrb[0].mxu0 %v1102
  %v1828 = vpop.f32.mrb[0].mxu0
  %v1829 = vadd.f32 0.0, %v1828
  %v1830 = vpop.f32.mrb[0].mxu0
  %v1831 = vpop.f32.mrb[0].mxu0
  %v1832 = vadd.f32 0.0, %v1831
  %v1833 = vpop.f32.mrb[0].mxu0
  %1834 = vmatprep.mubr.bf16.mxu0 %v1105
  %1835 = vmatmul.mubr.bf16.gmra.mrb[0].mxu0 %v1104
  %v1836 = vpop.f32.mrb[0].mxu0
  %v1837 = vadd.f32 0.0, %v1836
  %v1838 = vpop.f32.mrb[0].mxu0
  %v1839 = vpop.f32.mrb[0].mxu0
  %v1840 = vadd.f32 0.0, %v1839
  %v1841 = vpop.f32.mrb[0].mxu0
  %1842 = vmatprep.mubr.bf16.mxu0 %v1107
  %1843 = vmatmul.mubr.bf16.gmra.mrb[0].mxu0 %v1106
  %v1844 = vpop.f32.mrb[0].mxu0
  %v1845 = vadd.f32 0.0, %v1844
  %v1846 = vpop.f32.mrb[0].mxu0
  %v1847 = vpop.f32.mrb[0].mxu0
  %v1848 = vadd.f32 0.0, %v1847
  %v1849 = vpop.f32.mrb[0].mxu0
  %1850 = vmatprep.mubr.bf16.mxu0 %v1109
  %1851 = vmatmul.mubr.bf16.gmra.mrb[0].mxu0 %v1108
  %v1852 = vpop.f32.mrb[0].mxu0
  %v1853 = vadd.f32 0.0, %v1852
  %v1854 = vpop.f32.mrb[0].mxu0
  %v1855 = vpop.f32.mrb[0].mxu0
  %v1856 = vadd.f32 0.0, %v1855
  %v1857 = vpop.f32.mrb[0].mxu0
  %1858 = vmatprep.mubr.bf16.mxu0 %v1111
  %1859 = vmatmul.mubr.bf16.gmra.mrb[0].mxu0 %v1110
  %v1860 = vpop.f32.mrb[0].mxu0
  %v1861 = vadd.f32 0.0, %v1860
  %v1862 = vpop.f32.mrb[0].mxu0
  %v1863 = vpop.f32.mrb[0].mxu0
  %v1864 = vadd.f32 0.0, %v1863
  %v1865 = vpop.f32.mrb[0].mxu0
  %1866 = vmatprep.mubr.bf16.mxu0 %v1113
  %1867 = vmatmul.mubr.bf16.gmra.mrb[0].mxu0 %v1112
  %v1868 = vpop.f32.mrb[0].mxu0
  %v1869 = vadd.f32 0.0, %v1868
  %v1870 = vpop.f32.mrb[0].mxu0
  %v1871 = vpop.f32.mrb[0].mxu0
  %v1872 = vadd.f32 0.0, %v1871
  %v1873 = vpop.f32.mrb[0].mxu0
  %1874 = vmatprep.mubr.bf16.mxu0 %v1115
  %1875 = vmatmul.mubr.bf16.gmra.mrb[0].mxu0 %v1114
  %v1876 = vpop.f32.mrb[0].mxu0
  %v1877 = vadd.f32 0.0, %v1876
  %v1878 = vpop.f32.mrb[0].mxu0
  %v1879 = vpop.f32.mrb[0].mxu0
  %v1880 = vadd.f32 0.0, %v1879
  %v1881 = vpop.f32.mrb[0].mxu0
  %1882 = vmatprep.mubr.bf16.mxu0 %v1117
  %1883 = vmatmul.mubr.bf16.gmra.mrb[0].mxu0 %v1116
  %v1884 = vpop.f32.mrb[0].mxu0
  %v1885 = vadd.f32 0.0, %v1884
  %v1886 = vpop.f32.mrb[0].mxu0
  %v1887 = vpop.f32.mrb[0].mxu0
  %v1888 = vadd.f32 0.0, %v1887
  %v1889 = vpop.f32.mrb[0].mxu0
  %1890 = vmatprep.mubr.bf16.mxu0 %v1119
  %1891 = vmatmul.mubr.bf16.gmra.mrb[0].mxu0 %v1118
  %v1892 = vpop.f32.mrb[0].mxu0
  %v1893 = vadd.f32 0.0, %v1892
  %v1894 = vpop.f32.mrb[0].mxu0
  %v1895 = vpop.f32.mrb[0].mxu0
  %v1896 = vadd.f32 0.0, %v1895
  %v1897 = vpop.f32.mrb[0].mxu0
  %1898 = vmatprep.mubr.bf16.mxu0 %v1121
  %1899 = vmatmul.mubr.bf16.gmra.mrb[0].mxu0 %v1120
  %v1900 = vpop.f32.mrb[0].mxu0
  %v1901 = vadd.f32 0.0, %v1900
  %v1902 = vpop.f32.mrb[0].mxu0
  %v1903 = vpop.f32.mrb[0].mxu0
  %v1904 = vadd.f32 0.0, %v1903
  %v1905 = vpop.f32.mrb[0].mxu0
  %1906 = vmatprep.mubr.bf16.mxu0 %v1123
  %1907 = vmatmul.mubr.bf16.gmra.mrb[0].mxu0 %v1122
  %v1908 = vpop.f32.mrb[0].mxu0
  %v1909 = vadd.f32 0.0, %v1908
  %v1910 = vpop.f32.mrb[0].mxu0
  %v1911 = vpop.f32.mrb[0].mxu0
  %v1912 = vadd.f32 0.0, %v1911
  %v1913 = vpop.f32.mrb[0].mxu0
  %1914 = vmatprep.mubr.bf16.mxu0 %v1125
  %1915 = vmatmul.mubr.bf16.gmra.mrb[0].mxu0 %v1124
  %v1916 = vpop.f32.mrb[0].mxu0
  %v1917 = vadd.f32 0.0, %v1916
  %v1918 = vpop.f32.mrb[0].mxu0
  %v1919 = vpop.f32.mrb[0].mxu0
  %v1920 = vadd.f32 0.0, %v1919
  %v1921 = vpop.f32.mrb[0].mxu0
  %1922 = vmatprep.mubr.bf16.mxu0 %v1127
  %1923 = vmatmul.mubr.bf16.gmra.mrb[0].mxu0 %v1126
  %v1924 = vpop.f32.mrb[0].mxu0
  %v1925 = vadd.f32 0.0, %v1924
  %v1926 = vpop.f32.mrb[0].mxu0
  %v1927 = vpop.f32.mrb[0].mxu0
  %v1928 = vadd.f32 0.0, %v1927
  %v1929 = vpop.f32.mrb[0].mxu0
  %1930 = vmatprep.mubr.bf16.mxu0 %v1129
  %1931 = vmatmul.mubr.bf16.gmra.mrb[0].mxu0 %v1128
  %v1932 = vpop.f32.mrb[0].mxu0
  %v1933 = vadd.f32 0.0, %v1932
  %v1934 = vpop.f32.mrb[0].mxu0
  %v1935 = vpop.f32.mrb[0].mxu0
  %v1936 = vadd.f32 0.0, %v1935
  %v1937 = vpop.f32.mrb[0].mxu0
  %1938 = vmatprep.mubr.bf16.mxu0 %v1131
  %1939 = vmatmul.mubr.bf16.gmra.mrb[0].mxu0 %v1130
  %v1940 = vpop.f32.mrb[0].mxu0
  %v1941 = vadd.f32 0.0, %v1940
  %v1942 = vpop.f32.mrb[0].mxu0
  %v1943 = vpop.f32.mrb[0].mxu0
  %v1944 = vadd.f32 0.0, %v1943
  %v1945 = vpop.f32.mrb[0].mxu0
  %1946 = vmatprep.mubr.bf16.mxu0 %v1133
  %1947 = vmatmul.mubr.bf16.gmra.mrb[0].mxu0 %v1132
  %v1948 = vpop.f32.mrb[0].mxu0
  %v1949 = vadd.f32 0.0, %v1948
  %v1950 = vpop.f32.mrb[0].mxu0
  %v1951 = vpop.f32.mrb[0].mxu0
  %v1952 = vadd.f32 0.0, %v1951
  %v1953 = vpop.f32.mrb[0].mxu0
  %1954 = vmatprep.mubr.bf16.mxu0 %v1135
  %1955 = vmatmul.mubr.bf16.gmra.mrb[0].mxu0 %v1134
  %v1956 = vpop.f32.mrb[0].mxu0
  %v1957 = vadd.f32 0.0, %v1956
  %v1958 = vpop.f32.mrb[0].mxu0
  %v1959 = vpop.f32.mrb[0].mxu0
  %v1960 = vadd.f32 0.0, %v1959
  %v1961 = vpop.f32.mrb[0].mxu0
  %1962 = vmatprep.mubr.bf16.mxu0 %v1137
  %1963 = vmatmul.mubr.bf16.gmra.mrb[0].mxu0 %v1136
  %v1964 = vpop.f32.mrb[0].mxu0
  %v1965 = vadd.f32 0.0, %v1964
  %v1966 = vpop.f32.mrb[0].mxu0
  %v1967 = vpop.f32.mrb[0].mxu0
  %v1968 = vadd.f32 0.0, %v1967
  %v1969 = vpop.f32.mrb[0].mxu0
  %1970 = vmatprep.mubr.bf16.mxu0 %v1139
  %1971 = vmatmul.mubr.bf16.gmra.mrb[0].mxu0 %v1138
  %v1972 = vpop.f32.mrb[0].mxu0
  %v1973 = vadd.f32 0.0, %v1972
  %v1974 = vpop.f32.mrb[0].mxu0
  %v1975 = vpop.f32.mrb[0].mxu0
  %v1976 = vadd.f32 0.0, %v1975
  %v1977 = vpop.f32.mrb[0].mxu0
  %1978 = vmatprep.mubr.bf16.mxu0 %v1141
  %1979 = vmatmul.mubr.bf16.gmra.mrb[0].mxu0 %v1140
  %v1980 = vpop.f32.mrb[0].mxu0
  %v1981 = vadd.f32 0.0, %v1980
  %v1982 = vpop.f32.mrb[0].mxu0
  %v1983 = vpop.f32.mrb[0].mxu0
  %v1984 = vadd.f32 0.0, %v1983
  %v1985 = vpop.f32.mrb[0].mxu0
  %1986 = vmatprep.mubr.bf16.mxu0 %v1143
  %1987 = vmatmul.mubr.bf16.gmra.mrb[0].mxu0 %v1142
  %v1988 = vpop.f32.mrb[0].mxu0
  %v1989 = vadd.f32 0.0, %v1988
  %v1990 = vpop.f32.mrb[0].mxu0
  %v1991 = vpop.f32.mrb[0].mxu0
  %v1992 = vadd.f32 0.0, %v1991
  %v1993 = vpop.f32.mrb[0].mxu0
  %1994 = vmatprep.mubr.bf16.mxu0 %v1145
  %1995 = vmatmul.mubr.bf16.gmra.mrb[0].mxu0 %v1144
  %v1996 = vpop.f32.mrb[0].mxu0
  %v1997 = vadd.f32 0.0, %v1996
  %v1998 = vpop.f32.mrb[0].mxu0
  %v1999 = vpop.f32.mrb[0].mxu0
  %v2000 = vadd.f32 0.0, %v1999
  %v2001 = vpop.f32.mrb[0].mxu0
  %2002 = vmatprep.mubr.bf16.mxu0 %v1147
  %2003 = vmatmul.mubr.bf16.gmra.mrb[0].mxu0 %v1146
  %v2004 = vpop.f32.mrb[0].mxu0
  %v2005 = vadd.f32 0.0, %v2004
  %v2006 = vpop.f32.mrb[0].mxu0
  %v2007 = vpop.f32.mrb[0].mxu0
  %v2008 = vadd.f32 0.0, %v2007
  %v2009 = vpop.f32.mrb[0].mxu0
  %2010 = vmatprep.mubr.bf16.mxu0 %v1149
  %2011 = vmatmul.mubr.bf16.gmra.mrb[0].mxu0 %v1148
  %v2012 = vpop.f32.mrb[0].mxu0
  %v2013 = vadd.f32 0.0, %v2012
  %v2014 = vpop.f32.mrb[0].mxu0
  %v2015 = vpop.f32.mrb[0].mxu0
  %v2016 = vadd.f32 0.0, %v2015
  %v2017 = vpop.f32.mrb[0].mxu0
  %2018 = vmatprep.mubr.bf16.mxu0 %v1151
  %2019 = vmatmul.mubr.bf16.gmra.mrb[0].mxu0 %v1150
  %v2020 = vpop.f32.mrb[0].mxu0
  %v2021 = vadd.f32 0.0, %v2020
  %v2022 = vpop.f32.mrb[0].mxu0
  %v2023 = vpop.f32.mrb[0].mxu0
  %v2024 = vadd.f32 0.0, %v2023
  %v2025 = vpop.f32.mrb[0].mxu0
  %2026 = vmatprep.mubr.bf16.mxu0 %v1153
  %2027 = vmatmul.mubr.bf16.gmra.mrb[0].mxu0 %v1152
  %v2028 = vpop.f32.mrb[0].mxu0
  %v2029 = vadd.f32 0.0, %v2028
  %v2030 = vpop.f32.mrb[0].mxu0
  %v2031 = vpop.f32.mrb[0].mxu0
  %v2032 = vadd.f32 0.0, %v2031
  %v2033 = vpop.f32.mrb[0].mxu0
  %2034 = vmatprep.mubr.bf16.mxu0 %v1155
  %2035 = vmatmul.mubr.bf16.gmra.mrb[0].mxu0 %v1154
  %v2036 = vpop.f32.mrb[0].mxu0
  %v2037 = vadd.f32 0.0, %v2036
  %v2038 = vpop.f32.mrb[0].mxu0
  %v2039 = vpop.f32.mrb[0].mxu0
  %v2040 = vadd.f32 0.0, %v2039
  %v2041 = vpop.f32.mrb[0].mxu0
  %2042 = vmatprep.mubr.bf16.mxu0 %v1157
  %2043 = vmatmul.mubr.bf16.gmra.mrb[0].mxu0 %v1156
  %v2044 = vpop.f32.mrb[0].mxu0
  %v2045 = vadd.f32 0.0, %v2044
  %v2046 = vpop.f32.mrb[0].mxu0
  %v2047 = vpop.f32.mrb[0].mxu0
  %v2048 = vadd.f32 0.0, %v2047
  %v2049 = vpop.f32.mrb[0].mxu0
  %2050 = vmatprep.mubr.bf16.mxu0 %v1159
  %2051 = vmatmul.mubr.bf16.gmra.mrb[0].mxu0 %v1158
  %v2052 = vpop.f32.mrb[0].mxu0
  %v2053 = vadd.f32 0.0, %v2052
  %v2054 = vpop.f32.mrb[0].mxu0
  %v2055 = vpop.f32.mrb[0].mxu0
  %v2056 = vadd.f32 0.0, %v2055
  %v2057 = vpop.f32.mrb[0].mxu0
  %2058 = vmatprep.mubr.bf16.mxu0 %v1161
  %2059 = vmatmul.mubr.bf16.gmra.mrb[0].mxu0 %v1160
  %v2060 = vpop.f32.mrb[0].mxu0
  %v2061 = vadd.f32 0.0, %v2060
  %v2062 = vpop.f32.mrb[0].mxu0
  %v2063 = vpop.f32.mrb[0].mxu0
  %v2064 = vadd.f32 0.0, %v2063
  %v2065 = vpop.f32.mrb[0].mxu0
  %2066 = vmatprep.mubr.bf16.mxu0 %v1163
  %2067 = vmatmul.mubr.bf16.gmra.mrb[0].mxu0 %v1162
  %v2068 = vpop.f32.mrb[0].mxu0
  %v2069 = vadd.f32 0.0, %v2068
  %v2070 = vpop.f32.mrb[0].mxu0
  %v2071 = vpop.f32.mrb[0].mxu0
  %v2072 = vadd.f32 0.0, %v2071
  %v2073 = vpop.f32.mrb[0].mxu0
  %2074 = vmatprep.mubr.bf16.mxu0 %v1165
  %2075 = vmatmul.mubr.bf16.gmra.mrb[0].mxu0 %v1164
  %v2076 = vpop.f32.mrb[0].mxu0
  %v2077 = vadd.f32 0.0, %v2076
  %v2078 = vpop.f32.mrb[0].mxu0
  %v2079 = vpop.f32.mrb[0].mxu0
  %v2080 = vadd.f32 0.0, %v2079
  %v2081 = vpop.f32.mrb[0].mxu0
  %2082 = vmatprep.mubr.bf16.mxu0 %v1167
  %2083 = vmatmul.mubr.bf16.gmra.mrb[0].mxu0 %v1166
  %v2084 = vpop.f32.mrb[0].mxu0
  %v2085 = vadd.f32 0.0, %v2084
  %v2086 = vpop.f32.mrb[0].mxu0
  %v2087 = vpop.f32.mrb[0].mxu0
  %v2088 = vadd.f32 0.0, %v2087
  %v2089 = vpop.f32.mrb[0].mxu0
  %2090 = vmatprep.mubr.bf16.mxu0 %v1169
  %2091 = vmatmul.mubr.bf16.gmra.mrb[0].mxu0 %v1168
  %v2092 = vpop.f32.mrb[0].mxu0
  %v2093 = vadd.f32 0.0, %v2092
  %v2094 = vpop.f32.mrb[0].mxu0
  %v2095 = vpop.f32.mrb[0].mxu0
  %v2096 = vadd.f32 0.0, %v2095
  %v2097 = vpop.f32.mrb[0].mxu0
  %2098 = vmatprep.mubr.bf16.mxu0 %v1171
  %2099 = vmatmul.mubr.bf16.gmra.mrb[0].mxu0 %v1170
  %v2100 = vpop.f32.mrb[0].mxu0
  %v2101 = vadd.f32 0.0, %v2100
  %v2102 = vpop.f32.mrb[0].mxu0
  %v2103 = vpop.f32.mrb[0].mxu0
  %v2104 = vadd.f32 0.0, %v2103
  %v2105 = vpop.f32.mrb[0].mxu0
  %2106 = vmatprep.mubr.bf16.mxu0 %v1173
  %2107 = vmatmul.mubr.bf16.gmra.mrb[0].mxu0 %v1172
  %v2108 = vpop.f32.mrb[0].mxu0
  %v2109 = vadd.f32 0.0, %v2108
  %v2110 = vpop.f32.mrb[0].mxu0
  %v2111 = vpop.f32.mrb[0].mxu0
  %v2112 = vadd.f32 0.0, %v2111
  %v2113 = vpop.f32.mrb[0].mxu0
  %2114 = vmatprep.mubr.bf16.mxu0 %v1175
  %2115 = vmatmul.mubr.bf16.gmra.mrb[0].mxu0 %v1174
  %v2116 = vpop.f32.mrb[0].mxu0
  %v2117 = vadd.f32 0.0, %v2116
  %v2118 = vpop.f32.mrb[0].mxu0
  %v2119 = vpop.f32.mrb[0].mxu0
  %v2120 = vadd.f32 0.0, %v2119
  %v2121 = vpop.f32.mrb[0].mxu0
  %2122 = vmatprep.mubr.bf16.mxu0 %v1177
  %2123 = vmatmul.mubr.bf16.gmra.mrb[0].mxu0 %v1176
  %v2124 = vpop.f32.mrb[0].mxu0
  %v2125 = vadd.f32 0.0, %v2124
  %v2126 = vpop.f32.mrb[0].mxu0
  %v2127 = vpop.f32.mrb[0].mxu0
  %v2128 = vadd.f32 0.0, %v2127
  %v2129 = vpop.f32.mrb[0].mxu0
  %2130 = vmatprep.mubr.bf16.mxu0 %v1179
  %2131 = vmatmul.mubr.bf16.gmra.mrb[0].mxu0 %v1178
  %v2132 = vpop.f32.mrb[0].mxu0
  %v2133 = vadd.f32 0.0, %v2132
  %v2134 = vpop.f32.mrb[0].mxu0
  %v2135 = vpop.f32.mrb[0].mxu0
  %v2136 = vadd.f32 0.0, %v2135
  %v2137 = vpop.f32.mrb[0].mxu0
  %2138 = vmatprep.mubr.bf16.mxu0 %v1181
  %2139 = vmatmul.mubr.bf16.gmra.mrb[0].mxu0 %v1180
  %v2140 = vpop.f32.mrb[0].mxu0
  %v2141 = vadd.f32 0.0, %v2140
  %v2142 = vpop.f32.mrb[0].mxu0
  %v2143 = vpop.f32.mrb[0].mxu0
  %v2144 = vadd.f32 0.0, %v2143
  %v2145 = vpop.f32.mrb[0].mxu0
  %2146 = vmatprep.mubr.bf16.mxu0 %v1183
  %2147 = vmatmul.mubr.bf16.gmra.mrb[0].mxu0 %v1182
  %v2148 = vpop.f32.mrb[0].mxu0
  %v2149 = vadd.f32 0.0, %v2148
  %v2150 = vpop.f32.mrb[0].mxu0
  %v2151 = vpop.f32.mrb[0].mxu0
  %v2152 = vadd.f32 0.0, %v2151
  %v2153 = vpop.f32.mrb[0].mxu0
  %2154 = vmatprep.mubr.bf16.mxu0 %v1185
  %2155 = vmatmul.mubr.bf16.gmra.mrb[0].mxu0 %v1184
  %v2156 = vpop.f32.mrb[0].mxu0
  %v2157 = vadd.f32 0.0, %v2156
  %v2158 = vpop.f32.mrb[0].mxu0
  %v2159 = vpop.f32.mrb[0].mxu0
  %v2160 = vadd.f32 0.0, %v2159
  %v2161 = vpop.f32.mrb[0].mxu0
  %2162 = vmatprep.mubr.bf16.mxu0 %v1187
  %2163 = vmatmul.mubr.bf16.gmra.mrb[0].mxu0 %v1186
  %v2164 = vpop.f32.mrb[0].mxu0
  %v2165 = vadd.f32 0.0, %v2164
  %v2166 = vpop.f32.mrb[0].mxu0
  %v2167 = vpop.f32.mrb[0].mxu0
  %v2168 = vadd.f32 0.0, %v2167
  %v2169 = vpop.f32.mrb[0].mxu0
  %2170 = vmatprep.mubr.bf16.mxu0 %v1189
  %2171 = vmatmul.mubr.bf16.gmra.mrb[0].mxu0 %v1188
  %v2172 = vpop.f32.mrb[0].mxu0
  %v2173 = vadd.f32 0.0, %v2172
  %v2174 = vpop.f32.mrb[0].mxu0
  %v2175 = vpop.f32.mrb[0].mxu0
  %v2176 = vadd.f32 0.0, %v2175
  %v2177 = vpop.f32.mrb[0].mxu0
  %2178 = vmatprep.mubr.bf16.mxu0 %v1191
  %2179 = vmatmul.mubr.bf16.gmra.mrb[0].mxu0 %v1190
  %v2180 = vpop.f32.mrb[0].mxu0
  %v2181 = vadd.f32 0.0, %v2180
  %v2182 = vpop.f32.mrb[0].mxu0
  %v2183 = vpop.f32.mrb[0].mxu0
  %v2184 = vadd.f32 0.0, %v2183
  %v2185 = vpop.f32.mrb[0].mxu0
  %2186 = vmatprep.mubr.bf16.mxu0 %v1193
  %2187 = vmatmul.mubr.bf16.gmra.mrb[0].mxu0 %v1192
  %v2188 = vpop.f32.mrb[0].mxu0
  %v2189 = vadd.f32 0.0, %v2188
  %v2190 = vpop.f32.mrb[0].mxu0
  %v2191 = vpop.f32.mrb[0].mxu0
  %v2192 = vadd.f32 0.0, %v2191
  %v2193 = vpop.f32.mrb[0].mxu0
  %2194 = vmatprep.mubr.bf16.mxu0 %v1195
  %2195 = vmatmul.mubr.bf16.gmra.mrb[0].mxu0 %v1194
  %v2196 = vpop.f32.mrb[0].mxu0
  %v2197 = vadd.f32 0.0, %v2196
  %v2198 = vpop.f32.mrb[0].mxu0
  %v2199 = vpop.f32.mrb[0].mxu0
  %v2200 = vadd.f32 0.0, %v2199
  %v2201 = vpop.f32.mrb[0].mxu0
  %2202 = vmatprep.mubr.bf16.mxu0 %v1197
  %2203 = vmatmul.mubr.bf16.gmra.mrb[0].mxu0 %v1196
  %v2204 = vpop.f32.mrb[0].mxu0
  %v2205 = vadd.f32 0.0, %v2204
  %v2206 = vpop.f32.mrb[0].mxu0
  %v2207 = vpop.f32.mrb[0].mxu0
  %v2208 = vadd.f32 0.0, %v2207
  %v2209 = vpop.f32.mrb[0].mxu0
  %2210 = vmatprep.mubr.bf16.mxu0 %v1199
  %2211 = vmatmul.mubr.bf16.gmra.mrb[0].mxu0 %v1198
  %v2212 = vpop.f32.mrb[0].mxu0
  %v2213 = vadd.f32 0.0, %v2212
  %v2214 = vpop.f32.mrb[0].mxu0
  %v2215 = vpop.f32.mrb[0].mxu0
  %v2216 = vadd.f32 0.0, %v2215
  %v2217 = vpop.f32.mrb[0].mxu0
  %2218 = vmatprep.mubr.bf16.mxu0 %v1201
  %2219 = vmatmul.mubr.bf16.gmra.mrb[0].mxu0 %v1200
  %v2220 = vpop.f32.mrb[0].mxu0
  %v2221 = vadd.f32 0.0, %v2220
  %v2222 = vpop.f32.mrb[0].mxu0
  %v2223 = vpop.f32.mrb[0].mxu0
  %v2224 = vadd.f32 0.0, %v2223
  %v2225 = vpop.f32.mrb[0].mxu0
  %2226 = vmatprep.mubr.bf16.mxu0 %v1203
  %2227 = vmatmul.mubr.bf16.gmra.mrb[0].mxu0 %v1202
  %v2228 = vpop.f32.mrb[0].mxu0
  %v2229 = vadd.f32 0.0, %v2228
  %v2230 = vpop.f32.mrb[0].mxu0
  %v2231 = vpop.f32.mrb[0].mxu0
  %v2232 = vadd.f32 0.0, %v2231
  %v2233 = vpop.f32.mrb[0].mxu0
  %2234 = vmatprep.mubr.bf16.mxu0 %v1205
  %2235 = vmatmul.mubr.bf16.gmra.mrb[0].mxu0 %v1204
  %v2236 = vpop.f32.mrb[0].mxu0
  %v2237 = vadd.f32 0.0, %v2236
  %v2238 = vpop.f32.mrb[0].mxu0
  %v2239 = vpop.f32.mrb[0].mxu0
  %v2240 = vadd.f32 0.0, %v2239
  %v2241 = vpop.f32.mrb[0].mxu0
  %2242 = vmatprep.mubr.bf16.mxu0 %v1207
  %2243 = vmatmul.mubr.bf16.gmra.mrb[0].mxu0 %v1206
  %v2244 = vpop.f32.mrb[0].mxu0
  %v2245 = vadd.f32 0.0, %v2244
  %v2246 = vpop.f32.mrb[0].mxu0
  %v2247 = vpop.f32.mrb[0].mxu0
  %v2248 = vadd.f32 0.0, %v2247
  %v2249 = vpop.f32.mrb[0].mxu0
  %2250 = vmatprep.mubr.bf16.mxu0 %v1209
  %2251 = vmatmul.mubr.bf16.gmra.mrb[0].mxu0 %v1208
  %v2252 = vpop.f32.mrb[0].mxu0
  %v2253 = vadd.f32 0.0, %v2252
  %v2254 = vpop.f32.mrb[0].mxu0
  %v2255 = vpop.f32.mrb[0].mxu0
  %v2256 = vadd.f32 0.0, %v2255
  %v2257 = vpop.f32.mrb[0].mxu0
  %2258 = vmatprep.mubr.bf16.mxu0 %v1211
  %2259 = vmatmul.mubr.bf16.gmra.mrb[0].mxu0 %v1210
  %v2260 = vpop.f32.mrb[0].mxu0
  %v2261 = vadd.f32 0.0, %v2260
  %v2262 = vpop.f32.mrb[0].mxu0
  %v2263 = vpop.f32.mrb[0].mxu0
  %v2264 = vadd.f32 0.0, %v2263
  %v2265 = vpop.f32.mrb[0].mxu0
  %2266 = vmatprep.mubr.bf16.mxu0 %v1213
  %2267 = vmatmul.mubr.bf16.gmra.mrb[0].mxu0 %v1212
  %v2268 = vpop.f32.mrb[0].mxu0
  %v2269 = vadd.f32 0.0, %v2268
  %v2270 = vpop.f32.mrb[0].mxu0
  %v2271 = vpop.f32.mrb[0].mxu0
  %v2272 = vadd.f32 0.0, %v2271
  %v2273 = vpop.f32.mrb[0].mxu0
  %2274 = vmatprep.mubr.bf16.mxu0 %v1215
  %2275 = vmatmul.mubr.bf16.gmra.mrb[0].mxu0 %v1214
  %v2276 = vpop.f32.mrb[0].mxu0
  %v2277 = vadd.f32 0.0, %v2276
  %v2278 = vpop.f32.mrb[0].mxu0
  %v2279 = vpop.f32.mrb[0].mxu0
  %v2280 = vadd.f32 0.0, %v2279
  %v2281 = vpop.f32.mrb[0].mxu0
  %2282 = vmatprep.mubr.bf16.mxu0 %v1217
  %2283 = vmatmul.mubr.bf16.gmra.mrb[0].mxu0 %v1216
  %v2284 = vpop.f32.mrb[0].mxu0
  %v2285 = vadd.f32 0.0, %v2284
  %v2286 = vpop.f32.mrb[0].mxu0
  %v2287 = vpop.f32.mrb[0].mxu0
  %v2288 = vadd.f32 0.0, %v2287
  %v2289 = vpop.f32.mrb[0].mxu0
  %2290 = vmatprep.mubr.bf16.mxu0 %v1219
  %2291 = vmatmul.mubr.bf16.gmra.mrb[0].mxu0 %v1218
  %v2292 = vpop.f32.mrb[0].mxu0
  %v2293 = vadd.f32 0.0, %v2292
  %v2294 = vpop.f32.mrb[0].mxu0
  %v2295 = vpop.f32.mrb[0].mxu0
  %v2296 = vadd.f32 0.0, %v2295
  %v2297 = vpop.f32.mrb[0].mxu0
  %2298 = vmatprep.mubr.bf16.mxu0 %v1221
  %2299 = vmatmul.mubr.bf16.gmra.mrb[0].mxu0 %v1220
  %v2300 = vpop.f32.mrb[0].mxu0
  %v2301 = vadd.f32 0.0, %v2300
  %v2302 = vpop.f32.mrb[0].mxu0
  %v2303 = vpop.f32.mrb[0].mxu0
  %v2304 = vadd.f32 0.0, %v2303
  %v2305 = vpop.f32.mrb[0].mxu0
  %2306 = vmatprep.mubr.bf16.mxu0 %v1223
  %2307 = vmatmul.mubr.bf16.gmra.mrb[0].mxu0 %v1222
  %v2308 = vpop.f32.mrb[0].mxu0
  %v2309 = vadd.f32 0.0, %v2308
  %v2310 = vpop.f32.mrb[0].mxu0
  %v2311 = vpop.f32.mrb[0].mxu0
  %v2312 = vadd.f32 0.0, %v2311
  %v2313 = vpop.f32.mrb[0].mxu0
  %2314 = vmatprep.mubr.bf16.mxu0 %v1225
  %2315 = vmatmul.mubr.bf16.gmra.mrb[0].mxu0 %v1224
  %v2316 = vpop.f32.mrb[0].mxu0
  %v2317 = vadd.f32 0.0, %v2316
  %v2318 = vpop.f32.mrb[0].mxu0
  %v2319 = vpop.f32.mrb[0].mxu0
  %v2320 = vadd.f32 0.0, %v2319
  %v2321 = vpop.f32.mrb[0].mxu0
  %2322 = vmatprep.mubr.bf16.mxu0 %v1227
  %2323 = vmatmul.mubr.bf16.gmra.mrb[0].mxu0 %v1226
  %v2324 = vpop.f32.mrb[0].mxu0
  %v2325 = vadd.f32 0.0, %v2324
  %v2326 = vpop.f32.mrb[0].mxu0
  %v2327 = vpop.f32.mrb[0].mxu0
  %v2328 = vadd.f32 0.0, %v2327
  %v2329 = vpop.f32.mrb[0].mxu0
  %2330 = vmatprep.mubr.bf16.mxu0 %v1229
  %2331 = vmatmul.mubr.bf16.gmra.mrb[0].mxu0 %v1228
  %v2332 = vpop.f32.mrb[0].mxu0
  %v2333 = vadd.f32 0.0, %v2332
  %v2334 = vpop.f32.mrb[0].mxu0
  %v2335 = vpop.f32.mrb[0].mxu0
  %v2336 = vadd.f32 0.0, %v2335
  %v2337 = vpop.f32.mrb[0].mxu0
  %2338 = vmatprep.mubr.bf16.mxu0 %v1231
  %2339 = vmatmul.mubr.bf16.gmra.mrb[0].mxu0 %v1230
  %v2340 = vpop.f32.mrb[0].mxu0
  %v2341 = vadd.f32 0.0, %v2340
  %v2342 = vpop.f32.mrb[0].mxu0
  %v2343 = vpop.f32.mrb[0].mxu0
  %v2344 = vadd.f32 0.0, %v2343
  %v2345 = vpop.f32.mrb[0].mxu0
  %2346 = vmatprep.mubr.bf16.mxu0 %v1233
  %2347 = vmatmul.mubr.bf16.gmra.mrb[0].mxu0 %v1232
  %v2348 = vpop.f32.mrb[0].mxu0
  %v2349 = vadd.f32 0.0, %v2348
  %v2350 = vpop.f32.mrb[0].mxu0
  %v2351 = vpop.f32.mrb[0].mxu0
  %v2352 = vadd.f32 0.0, %v2351
  %v2353 = vpop.f32.mrb[0].mxu0
  %2354 = vmatprep.mubr.bf16.mxu0 %v1235
  %2355 = vmatmul.mubr.bf16.gmra.mrb[0].mxu0 %v1234
  %v2356 = vpop.f32.mrb[0].mxu0
  %v2357 = vadd.f32 0.0, %v2356
  %v2358 = vpop.f32.mrb[0].mxu0
  %v2359 = vpop.f32.mrb[0].mxu0
  %v2360 = vadd.f32 0.0, %v2359
  %v2361 = vpop.f32.mrb[0].mxu0
  %2362 = vmatprep.mubr.bf16.mxu0 %v1237
  %2363 = vmatmul.mubr.bf16.gmra.mrb[0].mxu0 %v1236
  %v2364 = vpop.f32.mrb[0].mxu0
  %v2365 = vadd.f32 0.0, %v2364
  %v2366 = vpop.f32.mrb[0].mxu0
  %v2367 = vpop.f32.mrb[0].mxu0
  %v2368 = vadd.f32 0.0, %v2367
  %v2369 = vpop.f32.mrb[0].mxu0
  %2370 = vmatprep.mubr.bf16.mxu0 %v1239
  %2371 = vmatmul.mubr.bf16.gmra.mrb[0].mxu0 %v1238
  %v2372 = vpop.f32.mrb[0].mxu0
  %v2373 = vadd.f32 0.0, %v2372
  %v2374 = vpop.f32.mrb[0].mxu0
  %v2375 = vpop.f32.mrb[0].mxu0
  %v2376 = vadd.f32 0.0, %v2375
  %v2377 = vpop.f32.mrb[0].mxu0
  %2378 = vmatprep.mubr.bf16.mxu0 %v1241
  %2379 = vmatmul.mubr.bf16.gmra.mrb[0].mxu0 %v1240
  %v2380 = vpop.f32.mrb[0].mxu0
  %v2381 = vadd.f32 0.0, %v2380
  %v2382 = vpop.f32.mrb[0].mxu0
  %v2383 = vpop.f32.mrb[0].mxu0
  %v2384 = vadd.f32 0.0, %v2383
  %v2385 = vpop.f32.mrb[0].mxu0
  %2386 = vmatprep.mubr.bf16.mxu0 %v1243
  %2387 = vmatmul.mubr.bf16.gmra.mrb[0].mxu0 %v1242
  %v2388 = vpop.f32.mrb[0].mxu0
  %v2389 = vadd.f32 0.0, %v2388
  %v2390 = vpop.f32.mrb[0].mxu0
  %v2391 = vpop.f32.mrb[0].mxu0
  %v2392 = vadd.f32 0.0, %v2391
  %v2393 = vpop.f32.mrb[0].mxu0
  %2394 = vmatprep.mubr.bf16.mxu0 %v1245
  %2395 = vmatmul.mubr.bf16.gmra.mrb[0].mxu0 %v1244
  %v2396 = vpop.f32.mrb[0].mxu0
  %v2397 = vadd.f32 0.0, %v2396
  %v2398 = vpop.f32.mrb[0].mxu0
  %v2399 = vpop.f32.mrb[0].mxu0
  %v2400 = vadd.f32 0.0, %v2399
  %v2401 = vpop.f32.mrb[0].mxu0
  %2402 = vmatprep.mubr.bf16.mxu0 %v1247
  %2403 = vmatmul.mubr.bf16.gmra.mrb[0].mxu0 %v1246
  %v2404 = vpop.f32.mrb[0].mxu0
  %v2405 = vadd.f32 0.0, %v2404
  %v2406 = vpop.f32.mrb[0].mxu0
  %v2407 = vpop.f32.mrb[0].mxu0
  %v2408 = vadd.f32 0.0, %v2407
  %v2409 = vpop.f32.mrb[0].mxu0
  %2410 = vmatprep.mubr.bf16.mxu0 %v1249
  %2411 = vmatmul.mubr.bf16.gmra.mrb[0].mxu0 %v1248
  %v2412 = vpop.f32.mrb[0].mxu0
  %v2413 = vadd.f32 0.0, %v2412
  %v2414 = vpop.f32.mrb[0].mxu0
  %v2415 = vpop.f32.mrb[0].mxu0
  %v2416 = vadd.f32 0.0, %v2415
  %v2417 = vpop.f32.mrb[0].mxu0
  %2418 = vmatprep.mubr.bf16.mxu0 %v1251
  %2419 = vmatmul.mubr.bf16.gmra.mrb[0].mxu0 %v1250
  %v2420 = vpop.f32.mrb[0].mxu0
  %v2421 = vadd.f32 0.0, %v2420
  %v2422 = vpop.f32.mrb[0].mxu0
  %v2423 = vpop.f32.mrb[0].mxu0
  %v2424 = vadd.f32 0.0, %v2423
  %v2425 = vpop.f32.mrb[0].mxu0
  %2426 = vmatprep.mubr.bf16.mxu0 %v1253
  %2427 = vmatmul.mubr.bf16.gmra.mrb[0].mxu0 %v1252
  %v2428 = vpop.f32.mrb[0].mxu0
  %v2429 = vadd.f32 0.0, %v2428
  %v2430 = vpop.f32.mrb[0].mxu0
  %v2431 = vpop.f32.mrb[0].mxu0
  %v2432 = vadd.f32 0.0, %v2431
  %v2433 = vpop.f32.mrb[0].mxu0
  %2434 = vmatprep.mubr.bf16.mxu0 %v1255
  %2435 = vmatmul.mubr.bf16.gmra.mrb[0].mxu0 %v1254
  %v2436 = vpop.f32.mrb[0].mxu0
  %v2437 = vadd.f32 0.0, %v2436
  %v2438 = vpop.f32.mrb[0].mxu0
  %v2439 = vpop.f32.mrb[0].mxu0
  %v2440 = vadd.f32 0.0, %v2439
  %v2441 = vpop.f32.mrb[0].mxu0
  %2442 = vmatprep.mubr.bf16.mxu0 %v1257
  %2443 = vmatmul.mubr.bf16.gmra.mrb[0].mxu0 %v1256
  %v2444 = vpop.f32.mrb[0].mxu0
  %v2445 = vadd.f32 0.0, %v2444
  %v2446 = vpop.f32.mrb[0].mxu0
  %v2447 = vpop.f32.mrb[0].mxu0
  %v2448 = vadd.f32 0.0, %v2447
  %v2449 = vpop.f32.mrb[0].mxu0
  %2450 = vmatprep.mubr.bf16.mxu0 %v1259
  %2451 = vmatmul.mubr.bf16.gmra.mrb[0].mxu0 %v1258
  %v2452 = vpop.f32.mrb[0].mxu0
  %v2453 = vadd.f32 0.0, %v2452
  %v2454 = vpop.f32.mrb[0].mxu0
  %v2455 = vpop.f32.mrb[0].mxu0
  %v2456 = vadd.f32 0.0, %v2455
  %v2457 = vpop.f32.mrb[0].mxu0
  %2458 = vmatprep.mubr.bf16.mxu0 %v1261
  %2459 = vmatmul.mubr.bf16.gmra.mrb[0].mxu0 %v1260
  %v2460 = vpop.f32.mrb[0].mxu0
  %v2461 = vadd.f32 0.0, %v2460
  %v2462 = vpop.f32.mrb[0].mxu0
  %v2463 = vpop.f32.mrb[0].mxu0
  %v2464 = vadd.f32 0.0, %v2463
  %v2465 = vpop.f32.mrb[0].mxu0
  %2466 = vmatprep.mubr.bf16.mxu0 %v1263
  %2467 = vmatmul.mubr.bf16.gmra.mrb[0].mxu0 %v1262
  %v2468 = vpop.f32.mrb[0].mxu0
  %v2469 = vadd.f32 0.0, %v2468
  %v2470 = vpop.f32.mrb[0].mxu0
  %v2471 = vpop.f32.mrb[0].mxu0
  %v2472 = vadd.f32 0.0, %v2471
  %v2473 = vpop.f32.mrb[0].mxu0
  %2474 = vmatprep.mubr.bf16.mxu0 %v1265
  %2475 = vmatmul.mubr.bf16.gmra.mrb[0].mxu0 %v1264
  %v2476 = vpop.f32.mrb[0].mxu0
  %v2477 = vadd.f32 0.0, %v2476
  %v2478 = vpop.f32.mrb[0].mxu0
  %v2479 = vpop.f32.mrb[0].mxu0
  %v2480 = vadd.f32 0.0, %v2479
  %v2481 = vpop.f32.mrb[0].mxu0
  %2482 = vmatprep.mubr.bf16.mxu0 %v1267
  %2483 = vmatmul.mubr.bf16.gmra.mrb[0].mxu0 %v1266
  %v2484 = vpop.f32.mrb[0].mxu0
  %v2485 = vadd.f32 0.0, %v2484
  %v2486 = vpop.f32.mrb[0].mxu0
  %v2487 = vpop.f32.mrb[0].mxu0
  %v2488 = vadd.f32 0.0, %v2487
  %v2489 = vpop.f32.mrb[0].mxu0
  %2490 = vmatprep.mubr.bf16.mxu0 %v1269
  %2491 = vmatmul.mubr.bf16.gmra.mrb[0].mxu0 %v1268
  %v2492 = vpop.f32.mrb[0].mxu0
  %v2493 = vadd.f32 0.0, %v2492
  %v2494 = vpop.f32.mrb[0].mxu0
  %v2495 = vpop.f32.mrb[0].mxu0
  %v2496 = vadd.f32 0.0, %v2495
  %v2497 = vpop.f32.mrb[0].mxu0
  %2498 = vmatprep.mubr.bf16.mxu0 %v1271
  %2499 = vmatmul.mubr.bf16.gmra.mrb[0].mxu0 %v1270
  %v2500 = vpop.f32.mrb[0].mxu0
  %v2501 = vadd.f32 0.0, %v2500
  %v2502 = vpop.f32.mrb[0].mxu0
  %v2503 = vpop.f32.mrb[0].mxu0
  %v2504 = vadd.f32 0.0, %v2503
  %v2505 = vpop.f32.mrb[0].mxu0
  %2506 = vmatprep.mubr.bf16.mxu0 %v1273
  %2507 = vmatmul.mubr.bf16.gmra.mrb[0].mxu0 %v1272
  %v2508 = vpop.f32.mrb[0].mxu0
  %v2509 = vadd.f32 0.0, %v2508
  %v2510 = vpop.f32.mrb[0].mxu0
  %v2511 = vpop.f32.mrb[0].mxu0
  %v2512 = vadd.f32 0.0, %v2511
  %v2513 = vpop.f32.mrb[0].mxu0
  %2514 = vmatprep.mubr.bf16.mxu0 %v1275
  %2515 = vmatmul.mubr.bf16.gmra.mrb[0].mxu0 %v1274
  %v2516 = vpop.f32.mrb[0].mxu0
  %v2517 = vadd.f32 0.0, %v2516
  %v2518 = vpop.f32.mrb[0].mxu0
  %v2519 = vpop.f32.mrb[0].mxu0
  %v2520 = vadd.f32 0.0, %v2519
  %v2521 = vpop.f32.mrb[0].mxu0
  %2522 = vmatprep.mubr.bf16.mxu0 %v1277
  %2523 = vmatmul.mubr.bf16.gmra.mrb[0].mxu0 %v1276
  %v2524 = vpop.f32.mrb[0].mxu0
  %v2525 = vadd.f32 0.0, %v2524
  %v2526 = vpop.f32.mrb[0].mxu0
  %v2527 = vpop.f32.mrb[0].mxu0
  %v2528 = vadd.f32 0.0, %v2527
  %v2529 = vpop.f32.mrb[0].mxu0
  %2530 = vmatprep.mubr.bf16.mxu0 %v1279
  %2531 = vmatmul.mubr.bf16.gmra.mrb[0].mxu0 %v1278
  %v2532 = vpop.f32.mrb[0].mxu0
  %v2533 = vadd.f32 0.0, %v2532
  %v2534 = vpop.f32.mrb[0].mxu0
  %v2535 = vpop.f32.mrb[0].mxu0
  %v2536 = vadd.f32 0.0, %v2535
  %v2537 = vpop.f32.mrb[0].mxu0
  %2538 = vmatprep.mubr.bf16.mxu0 %v1281
  %2539 = vmatmul.mubr.bf16.gmra.mrb[0].mxu0 %v1280
  %v2540 = vpop.f32.mrb[0].mxu0
  %v2541 = vadd.f32 0.0, %v2540
  %v2542 = vpop.f32.mrb[0].mxu0
  %v2543 = vpop.f32.mrb[0].mxu0
  %v2544 = vadd.f32 0.0, %v2543
  %v2545 = vpop.f32.mrb[0].mxu0
  %2546 = vmatprep.mubr.bf16.mxu0 %v1283
  %2547 = vmatmul.mubr.bf16.gmra.mrb[0].mxu0 %v1282
  %v2548 = vpop.f32.mrb[0].mxu0
  %v2549 = vadd.f32 0.0, %v2548
  %v2550 = vpop.f32.mrb[0].mxu0
  %v2551 = vpop.f32.mrb[0].mxu0
  %v2552 = vadd.f32 0.0, %v2551
  %v2553 = vpop.f32.mrb[0].mxu0
  %2554 = vmatprep.mubr.bf16.mxu0 %v1285
  %2555 = vmatmul.mubr.bf16.gmra.mrb[0].mxu0 %v1284
  %v2556 = vpop.f32.mrb[0].mxu0
  %v2557 = vadd.f32 0.0, %v2556
  %v2558 = vpop.f32.mrb[0].mxu0
  %v2559 = vpop.f32.mrb[0].mxu0
  %v2560 = vadd.f32 0.0, %v2559
  %v2561 = vpop.f32.mrb[0].mxu0
  %2562 = vmatprep.mubr.bf16.mxu0 %v1287
  %2563 = vmatmul.mubr.bf16.gmra.mrb[0].mxu0 %v1286
  %v2564 = vpop.f32.mrb[0].mxu0
  %v2565 = vadd.f32 0.0, %v2564
  %v2566 = vpop.f32.mrb[0].mxu0
  %v2567 = vpop.f32.mrb[0].mxu0
  %v2568 = vadd.f32 0.0, %v2567
  %v2569 = vpop.f32.mrb[0].mxu0
  %2570 = vmatprep.mubr.bf16.mxu0 %v1289
  %2571 = vmatmul.mubr.bf16.gmra.mrb[0].mxu0 %v1288
  %v2572 = vpop.f32.mrb[0].mxu0
  %v2573 = vadd.f32 0.0, %v2572
  %v2574 = vpop.f32.mrb[0].mxu0
  %v2575 = vpop.f32.mrb[0].mxu0
  %v2576 = vadd.f32 0.0, %v2575
  %v2577 = vpop.f32.mrb[0].mxu0
  %2578 = vmatprep.mubr.bf16.mxu0 %v1291
  %2579 = vmatmul.mubr.bf16.gmra.mrb[0].mxu0 %v1290
  %v2580 = vpop.f32.mrb[0].mxu0
  %v2581 = vadd.f32 0.0, %v2580
  %v2582 = vpop.f32.mrb[0].mxu0
  %v2583 = vpop.f32.mrb[0].mxu0
  %v2584 = vadd.f32 0.0, %v2583
  %v2585 = vpop.f32.mrb[0].mxu0
  %2586 = vmatprep.mubr.bf16.mxu0 %v1293
  %2587 = vmatmul.mubr.bf16.gmra.mrb[0].mxu0 %v1292
  %v2588 = vpop.f32.mrb[0].mxu0
  %v2589 = vadd.f32 0.0, %v2588
  %v2590 = vpop.f32.mrb[0].mxu0
  %v2591 = vpop.f32.mrb[0].mxu0
  %v2592 = vadd.f32 0.0, %v2591
  %v2593 = vpop.f32.mrb[0].mxu0
  %2594 = vmatprep.mubr.bf16.mxu0 %v1295
  %2595 = vmatmul.mubr.bf16.gmra.mrb[0].mxu0 %v1294
  %v2596 = vpop.f32.mrb[0].mxu0
  %v2597 = vadd.f32 0.0, %v2596
  %v2598 = vpop.f32.mrb[0].mxu0
  %v2599 = vpop.f32.mrb[0].mxu0
  %v2600 = vadd.f32 0.0, %v2599
  %v2601 = vpop.f32.mrb[0].mxu0
  %2602 = vmatprep.mubr.bf16.mxu0 %v1297
  %2603 = vmatmul.mubr.bf16.gmra.mrb[0].mxu0 %v1296
  %v2604 = vpop.f32.mrb[0].mxu0
  %v2605 = vadd.f32 0.0, %v2604
  %v2606 = vpop.f32.mrb[0].mxu0
  %v2607 = vpop.f32.mrb[0].mxu0
  %v2608 = vadd.f32 0.0, %v2607
  %v2609 = vpop.f32.mrb[0].mxu0
  %2610 = vmatprep.mubr.bf16.mxu0 %v1299
  %2611 = vmatmul.mubr.bf16.gmra.mrb[0].mxu0 %v1298
  %v2612 = vpop.f32.mrb[0].mxu0
  %v2613 = vadd.f32 0.0, %v2612
  %v2614 = vpop.f32.mrb[0].mxu0
  %v2615 = vpop.f32.mrb[0].mxu0
  %v2616 = vadd.f32 0.0, %v2615
  %v2617 = vpop.f32.mrb[0].mxu0
  %2618 = vmatprep.mubr.bf16.mxu0 %v1301
  %2619 = vmatmul.mubr.bf16.gmra.mrb[0].mxu0 %v1300
  %v2620 = vpop.f32.mrb[0].mxu0
  %v2621 = vadd.f32 0.0, %v2620
  %v2622 = vpop.f32.mrb[0].mxu0
  %v2623 = vpop.f32.mrb[0].mxu0
  %v2624 = vadd.f32 0.0, %v2623
  %v2625 = vpop.f32.mrb[0].mxu0
  %2626 = vmatprep.mubr.bf16.mxu0 %v1303
  %2627 = vmatmul.mubr.bf16.gmra.mrb[0].mxu0 %v1302
  %v2628 = vpop.f32.mrb[0].mxu0
  %v2629 = vadd.f32 0.0, %v2628
  %v2630 = vpop.f32.mrb[0].mxu0
  %v2631 = vpop.f32.mrb[0].mxu0
  %v2632 = vadd.f32 0.0, %v2631
  %v2633 = vpop.f32.mrb[0].mxu0
  %2634 = vmatprep.mubr.bf16.mxu0 %v1305
  %2635 = vmatmul.mubr.bf16.gmra.mrb[0].mxu0 %v1304
  %v2636 = vpop.f32.mrb[0].mxu0
  %v2637 = vadd.f32 0.0, %v2636
  %v2638 = vpop.f32.mrb[0].mxu0
  %v2639 = vpop.f32.mrb[0].mxu0
  %v2640 = vadd.f32 0.0, %v2639
  %v2641 = vpop.f32.mrb[0].mxu0
  %2642 = vmatprep.mubr.bf16.mxu0 %v1307
  %2643 = vmatmul.mubr.bf16.gmra.mrb[0].mxu0 %v1306
  %v2644 = vpop.f32.mrb[0].mxu0
  %v2645 = vadd.f32 0.0, %v2644
  %v2646 = vpop.f32.mrb[0].mxu0
  %v2647 = vpop.f32.mrb[0].mxu0
  %v2648 = vadd.f32 0.0, %v2647
  %v2649 = vpop.f32.mrb[0].mxu0
  %2650 = vmatprep.mubr.bf16.mxu0 %v1309
  %2651 = vmatmul.mubr.bf16.gmra.mrb[0].mxu0 %v1308
  %v2652 = vpop.f32.mrb[0].mxu0
  %v2653 = vadd.f32 0.0, %v2652
  %v2654 = vpop.f32.mrb[0].mxu0
  %v2655 = vpop.f32.mrb[0].mxu0
  %v2656 = vadd.f32 0.0, %v2655
  %v2657 = vpop.f32.mrb[0].mxu0
  %2658 = vmatprep.mubr.bf16.mxu0 %v1311
  %2659 = vmatmul.mubr.bf16.gmra.mrb[0].mxu0 %v1310
  %v2660 = vpop.f32.mrb[0].mxu0
  %v2661 = vadd.f32 0.0, %v2660
  %v2662 = vpop.f32.mrb[0].mxu0
  %v2663 = vpop.f32.mrb[0].mxu0
  %v2664 = vadd.f32 0.0, %v2663
  %v2665 = vpop.f32.mrb[0].mxu0
  %2666 = vmatprep.mubr.bf16.mxu0 %v1313
  %2667 = vmatmul.mubr.bf16.gmra.mrb[0].mxu0 %v1312
  %v2668 = vpop.f32.mrb[0].mxu0
  %v2669 = vadd.f32 0.0, %v2668
  %v2670 = vpop.f32.mrb[0].mxu0
  %v2671 = vpop.f32.mrb[0].mxu0
  %v2672 = vadd.f32 0.0, %v2671
  %v2673 = vpop.f32.mrb[0].mxu0
  %2674 = vmatprep.mubr.bf16.mxu0 %v1315
  %2675 = vmatmul.mubr.bf16.gmra.mrb[0].mxu0 %v1314
  %v2676 = vpop.f32.mrb[0].mxu0
  %v2677 = vadd.f32 0.0, %v2676
  %v2678 = vpop.f32.mrb[0].mxu0
  %v2679 = vpop.f32.mrb[0].mxu0
  %v2680 = vadd.f32 0.0, %v2679
  %v2681 = vpop.f32.mrb[0].mxu0
  %2682 = vmatprep.mubr.bf16.mxu0 %v1317
  %2683 = vmatmul.mubr.bf16.gmra.mrb[0].mxu0 %v1316
  %v2684 = vpop.f32.mrb[0].mxu0
  %v2685 = vadd.f32 0.0, %v2684
  %v2686 = vpop.f32.mrb[0].mxu0
  %v2687 = vpop.f32.mrb[0].mxu0
  %v2688 = vadd.f32 0.0, %v2687
  %v2689 = vpop.f32.mrb[0].mxu0
  %2690 = vmatprep.mubr.bf16.mxu0 %v1319
  %2691 = vmatmul.mubr.bf16.gmra.mrb[0].mxu0 %v1318
  %v2692 = vpop.f32.mrb[0].mxu0
  %v2693 = vadd.f32 0.0, %v2692
  %v2694 = vpop.f32.mrb[0].mxu0
  %v2695 = vpop.f32.mrb[0].mxu0
  %v2696 = vadd.f32 0.0, %v2695
  %v2697 = vpop.f32.mrb[0].mxu0
  %2698 = vmatprep.mubr.bf16.mxu0 %v1321
  %2699 = vmatmul.mubr.bf16.gmra.mrb[0].mxu0 %v1320
  %v2700 = vpop.f32.mrb[0].mxu0
  %v2701 = vadd.f32 0.0, %v2700
  %v2702 = vpop.f32.mrb[0].mxu0
  %v2703 = vpop.f32.mrb[0].mxu0
  %v2704 = vadd.f32 0.0, %v2703
  %v2705 = vpop.f32.mrb[0].mxu0
  %2706 = vmatprep.mubr.bf16.mxu0 %v1323
  %2707 = vmatmul.mubr.bf16.gmra.mrb[0].mxu0 %v1322
  %v2708 = vpop.f32.mrb[0].mxu0
  %v2709 = vadd.f32 0.0, %v2708
  %v2710 = vpop.f32.mrb[0].mxu0
  %v2711 = vpop.f32.mrb[0].mxu0
  %v2712 = vadd.f32 0.0, %v2711
  %v2713 = vpop.f32.mrb[0].mxu0
  %2714 = vmatprep.mubr.bf16.mxu0 %v1325
  %2715 = vmatmul.mubr.bf16.gmra.mrb[0].mxu0 %v1324
  %v2716 = vpop.f32.mrb[0].mxu0
  %v2717 = vadd.f32 0.0, %v2716
  %v2718 = vpop.f32.mrb[0].mxu0
  %v2719 = vpop.f32.mrb[0].mxu0
  %v2720 = vadd.f32 0.0, %v2719
  %v2721 = vpop.f32.mrb[0].mxu0
  %2722 = vmatprep.mubr.bf16.mxu0 %v1327
  %2723 = vmatmul.mubr.bf16.gmra.mrb[0].mxu0 %v1326
  %v2724 = vpop.f32.mrb[0].mxu0
  %v2725 = vadd.f32 0.0, %v2724
  %v2726 = vpop.f32.mrb[0].mxu0
  %v2727 = vpop.f32.mrb[0].mxu0
  %v2728 = vadd.f32 0.0, %v2727
  %v2729 = vpop.f32.mrb[0].mxu0
  %2730 = vmatprep.mubr.bf16.mxu0 %v1329
  %2731 = vmatmul.mubr.bf16.gmra.mrb[0].mxu0 %v1328
  %v2732 = vpop.f32.mrb[0].mxu0
  %v2733 = vadd.f32 0.0, %v2732
  %v2734 = vpop.f32.mrb[0].mxu0
  %v2735 = vpop.f32.mrb[0].mxu0
  %v2736 = vadd.f32 0.0, %v2735
  %v2737 = vpop.f32.mrb[0].mxu0
  %2738 = vdwg.mxu0
  %v2739 = vadd.f32 %v1717, %v1720
  %v2740 = vadd.f32 %v2739, %v1725
  %v2741 = vadd.f32 %v2740, %v1728
  %v2742 = vadd.f32 %v2741, %v1733
  %v2743 = vadd.f32 %v2742, %v1736
  %v2744 = vadd.f32 %v2743, %v1741
  %v2745 = vadd.f32 %v2744, %v1744
  %v2746 = vadd.f32 %v2745, %v1749
  %v2747 = vadd.f32 %v2746, %v1752
  %v2748 = vadd.f32 %v2747, %v1757
  %v2749 = vadd.f32 %v2748, %v1760
  %v2750 = vadd.f32 %v2749, %v1765
  %v2751 = vadd.f32 %v2750, %v1768
  %v2752 = vadd.f32 %v2751, %v1773
  %v2753 = vadd.f32 %v2752, %v1776
  %v2754 = vadd.f32 %v2753, %v1781
  %v2755 = vadd.f32 %v2754, %v1784
  %v2756 = vadd.f32 %v2755, %v1789
  %v2757 = vadd.f32 %v2756, %v1792
  %v2758 = vadd.f32 %v2757, %v1797
  %v2759 = vadd.f32 %v2758, %v1800
  %v2760 = vadd.f32 %v2759, %v1805
  %v2761 = vadd.f32 %v2760, %v1808
  %v2762 = vadd.f32 %v2761, %v1813
  %v2763 = vadd.f32 %v2762, %v1816
  %v2764 = vadd.f32 %v2763, %v1821
  %v2765 = vadd.f32 %v2764, %v1824
  %v2766 = vadd.f32 %v2765, %v1829
  %v2767 = vadd.f32 %v2766, %v1832
  %v2768 = vadd.f32 %v2767, %v1837
  %v2769 = vadd.f32 %v2768, %v1840
  %v2770 = vadd.f32 %v2769, %v1845
  %v2771 = vadd.f32 %v2770, %v1848
  %v2772 = vadd.f32 %v2771, %v1853
  %v2773 = vadd.f32 %v2772, %v1856
  %v2774 = vadd.f32 %v2773, %v1861
  %v2775 = vadd.f32 %v2774, %v1864
  %v2776 = vadd.f32 %v2775, %v1869
  %v2777 = vadd.f32 %v2776, %v1872
  %v2778 = vadd.f32 %v2777, %v1877
  %v2779 = vadd.f32 %v2778, %v1880
  %v2780 = vadd.f32 %v2779, %v1885
  %v2781 = vadd.f32 %v2780, %v1888
  %v2782 = vadd.f32 %v2781, %v1893
  %v2783 = vadd.f32 %v2782, %v1896
  %v2784 = vadd.f32 %v2783, %v1901
  %v2785 = vadd.f32 %v2784, %v1904
  %v2786 = vadd.f32 %v2785, %v1909
  %v2787 = vadd.f32 %v2786, %v1912
  %v2788 = vadd.f32 %v2787, %v1917
  %v2789 = vadd.f32 %v2788, %v1920
  %v2790 = vadd.f32 %v2789, %v1925
  %v2791 = vadd.f32 %v2790, %v1928
  %v2792 = vadd.f32 %v2791, %v1933
  %v2793 = vadd.f32 %v2792, %v1936
  %v2794 = vadd.f32 %v2793, %v1941
  %v2795 = vadd.f32 %v2794, %v1944
  %v2796 = vadd.f32 %v2795, %v1949
  %v2797 = vadd.f32 %v2796, %v1952
  %v2798 = vadd.f32 %v2797, %v1957
  %v2799 = vadd.f32 %v2798, %v1960
  %v2800 = vadd.f32 %v2799, %v1965
  %v2801 = vadd.f32 %v2800, %v1968
  %v2802 = vadd.f32 %v2801, %v1973
  %v2803 = vadd.f32 %v2802, %v1976
  %v2804 = vadd.f32 %v2803, %v1981
  %v2805 = vadd.f32 %v2804, %v1984
  %v2806 = vadd.f32 %v2805, %v1989
  %v2807 = vadd.f32 %v2806, %v1992
  %v2808 = vadd.f32 %v2807, %v1997
  %v2809 = vadd.f32 %v2808, %v2000
  %v2810 = vadd.f32 %v2809, %v2005
  %v2811 = vadd.f32 %v2810, %v2008
  %v2812 = vadd.f32 %v2811, %v2013
  %v2813 = vadd.f32 %v2812, %v2016
  %v2814 = vadd.f32 %v2813, %v2021
  %v2815 = vadd.f32 %v2814, %v2024
  %v2816 = vadd.f32 %v2815, %v2029
  %v2817 = vadd.f32 %v2816, %v2032
  %v2818 = vadd.f32 %v2817, %v2037
  %v2819 = vadd.f32 %v2818, %v2040
  %v2820 = vadd.f32 %v2819, %v2045
  %v2821 = vadd.f32 %v2820, %v2048
  %v2822 = vadd.f32 %v2821, %v2053
  %v2823 = vadd.f32 %v2822, %v2056
  %v2824 = vadd.f32 %v2823, %v2061
  %v2825 = vadd.f32 %v2824, %v2064
  %v2826 = vadd.f32 %v2825, %v2069
  %v2827 = vadd.f32 %v2826, %v2072
  %v2828 = vadd.f32 %v2827, %v2077
  %v2829 = vadd.f32 %v2828, %v2080
  %v2830 = vadd.f32 %v2829, %v2085
  %v2831 = vadd.f32 %v2830, %v2088
  %v2832 = vadd.f32 %v2831, %v2093
  %v2833 = vadd.f32 %v2832, %v2096
  %v2834 = vadd.f32 %v2833, %v2101
  %v2835 = vadd.f32 %v2834, %v2104
  %v2836 = vadd.f32 %v2835, %v2109
  %v2837 = vadd.f32 %v2836, %v2112
  %v2838 = vadd.f32 %v2837, %v2117
  %v2839 = vadd.f32 %v2838, %v2120
  %v2840 = vadd.f32 %v2839, %v2125
  %v2841 = vadd.f32 %v2840, %v2128
  %v2842 = vadd.f32 %v2841, %v2133
  %v2843 = vadd.f32 %v2842, %v2136
  %v2844 = vadd.f32 %v2843, %v2141
  %v2845 = vadd.f32 %v2844, %v2144
  %v2846 = vadd.f32 %v2845, %v2149
  %v2847 = vadd.f32 %v2846, %v2152
  %v2848 = vadd.f32 %v2847, %v2157
  %v2849 = vadd.f32 %v2848, %v2160
  %v2850 = vadd.f32 %v2849, %v2165
  %v2851 = vadd.f32 %v2850, %v2168
  %v2852 = vadd.f32 %v2851, %v2173
  %v2853 = vadd.f32 %v2852, %v2176
  %v2854 = vadd.f32 %v2853, %v2181
  %v2855 = vadd.f32 %v2854, %v2184
  %v2856 = vadd.f32 %v2855, %v2189
  %v2857 = vadd.f32 %v2856, %v2192
  %v2858 = vadd.f32 %v2857, %v2197
  %v2859 = vadd.f32 %v2858, %v2200
  %v2860 = vadd.f32 %v2859, %v2205
  %v2861 = vadd.f32 %v2860, %v2208
  %v2862 = vadd.f32 %v2861, %v2213
  %v2863 = vadd.f32 %v2862, %v2216
  %v2864 = vadd.f32 %v2863, %v2221
  %v2865 = vadd.f32 %v2864, %v2224
  %v2866 = vadd.f32 %v2865, %v2229
  %v2867 = vadd.f32 %v2866, %v2232
  %v2868 = vadd.f32 %v2867, %v2237
  %v2869 = vadd.f32 %v2868, %v2240
  %v2870 = vadd.f32 %v2869, %v2245
  %v2871 = vadd.f32 %v2870, %v2248
  %v2872 = vadd.f32 %v2871, %v2253
  %v2873 = vadd.f32 %v2872, %v2256
  %v2874 = vadd.f32 %v2873, %v2261
  %v2875 = vadd.f32 %v2874, %v2264
  %v2876 = vadd.f32 %v2875, %v2269
  %v2877 = vadd.f32 %v2876, %v2272
  %v2878 = vadd.f32 %v2877, %v2277
  %v2879 = vadd.f32 %v2878, %v2280
  %v2880 = vadd.f32 %v2879, %v2285
  %v2881 = vadd.f32 %v2880, %v2288
  %v2882 = vadd.f32 %v2881, %v2293
  %v2883 = vadd.f32 %v2882, %v2296
  %v2884 = vadd.f32 %v2883, %v2301
  %v2885 = vadd.f32 %v2884, %v2304
  %v2886 = vadd.f32 %v2885, %v2309
  %v2887 = vadd.f32 %v2886, %v2312
  %v2888 = vadd.f32 %v2887, %v2317
  %v2889 = vadd.f32 %v2888, %v2320
  %v2890 = vadd.f32 %v2889, %v2325
  %v2891 = vadd.f32 %v2890, %v2328
  %v2892 = vadd.f32 %v2891, %v2333
  %v2893 = vadd.f32 %v2892, %v2336
  %v2894 = vadd.f32 %v2893, %v2341
  %v2895 = vadd.f32 %v2894, %v2344
  %v2896 = vadd.f32 %v2895, %v2349
  %v2897 = vadd.f32 %v2896, %v2352
  %v2898 = vadd.f32 %v2897, %v2357
  %v2899 = vadd.f32 %v2898, %v2360
  %v2900 = vadd.f32 %v2899, %v2365
  %v2901 = vadd.f32 %v2900, %v2368
  %v2902 = vadd.f32 %v2901, %v2373
  %v2903 = vadd.f32 %v2902, %v2376
  %v2904 = vadd.f32 %v2903, %v2381
  %v2905 = vadd.f32 %v2904, %v2384
  %v2906 = vadd.f32 %v2905, %v2389
  %v2907 = vadd.f32 %v2906, %v2392
  %v2908 = vadd.f32 %v2907, %v2397
  %v2909 = vadd.f32 %v2908, %v2400
  %v2910 = vadd.f32 %v2909, %v2405
  %v2911 = vadd.f32 %v2910, %v2408
  %v2912 = vadd.f32 %v2911, %v2413
  %v2913 = vadd.f32 %v2912, %v2416
  %v2914 = vadd.f32 %v2913, %v2421
  %v2915 = vadd.f32 %v2914, %v2424
  %v2916 = vadd.f32 %v2915, %v2429
  %v2917 = vadd.f32 %v2916, %v2432
  %v2918 = vadd.f32 %v2917, %v2437
  %v2919 = vadd.f32 %v2918, %v2440
  %v2920 = vadd.f32 %v2919, %v2445
  %v2921 = vadd.f32 %v2920, %v2448
  %v2922 = vadd.f32 %v2921, %v2453
  %v2923 = vadd.f32 %v2922, %v2456
  %v2924 = vadd.f32 %v2923, %v2461
  %v2925 = vadd.f32 %v2924, %v2464
  %v2926 = vadd.f32 %v2925, %v2469
  %v2927 = vadd.f32 %v2926, %v2472
  %v2928 = vadd.f32 %v2927, %v2477
  %v2929 = vadd.f32 %v2928, %v2480
  %v2930 = vadd.f32 %v2929, %v2485
  %v2931 = vadd.f32 %v2930, %v2488
  %v2932 = vadd.f32 %v2931, %v2493
  %v2933 = vadd.f32 %v2932, %v2496
  %v2934 = vadd.f32 %v2933, %v2501
  %v2935 = vadd.f32 %v2934, %v2504
  %v2936 = vadd.f32 %v2935, %v2509
  %v2937 = vadd.f32 %v2936, %v2512
  %v2938 = vadd.f32 %v2937, %v2517
  %v2939 = vadd.f32 %v2938, %v2520
  %v2940 = vadd.f32 %v2939, %v2525
  %v2941 = vadd.f32 %v2940, %v2528
  %v2942 = vadd.f32 %v2941, %v2533
  %v2943 = vadd.f32 %v2942, %v2536
  %v2944 = vadd.f32 %v2943, %v2541
  %v2945 = vadd.f32 %v2944, %v2544
  %v2946 = vadd.f32 %v2945, %v2549
  %v2947 = vadd.f32 %v2946, %v2552
  %v2948 = vadd.f32 %v2947, %v2557
  %v2949 = vadd.f32 %v2948, %v2560
  %v2950 = vadd.f32 %v2949, %v2565
  %v2951 = vadd.f32 %v2950, %v2568
  %v2952 = vadd.f32 %v2951, %v2573
  %v2953 = vadd.f32 %v2952, %v2576
  %v2954 = vadd.f32 %v2953, %v2581
  %v2955 = vadd.f32 %v2954, %v2584
  %v2956 = vadd.f32 %v2955, %v2589
  %v2957 = vadd.f32 %v2956, %v2592
  %v2958 = vadd.f32 %v2957, %v2597
  %v2959 = vadd.f32 %v2958, %v2600
  %v2960 = vadd.f32 %v2959, %v2605
  %v2961 = vadd.f32 %v2960, %v2608
  %v2962 = vadd.f32 %v2961, %v2613
  %v2963 = vadd.f32 %v2962, %v2616
  %v2964 = vadd.f32 %v2963, %v2621
  %v2965 = vadd.f32 %v2964, %v2624
  %v2966 = vadd.f32 %v2965, %v2629
  %v2967 = vadd.f32 %v2966, %v2632
  %v2968 = vadd.f32 %v2967, %v2637
  %v2969 = vadd.f32 %v2968, %v2640
  %v2970 = vadd.f32 %v2969, %v2645
  %v2971 = vadd.f32 %v2970, %v2648
  %v2972 = vadd.f32 %v2971, %v2653
  %v2973 = vadd.f32 %v2972, %v2656
  %v2974 = vadd.f32 %v2973, %v2661
  %v2975 = vadd.f32 %v2974, %v2664
  %v2976 = vadd.f32 %v2975, %v2669
  %v2977 = vadd.f32 %v2976, %v2672
  %v2978 = vadd.f32 %v2977, %v2677
  %v2979 = vadd.f32 %v2978, %v2680
  %v2980 = vadd.f32 %v2979, %v2685
  %v2981 = vadd.f32 %v2980, %v2688
  %v2982 = vadd.f32 %v2981, %v2693
  %v2983 = vadd.f32 %v2982, %v2696
  %v2984 = vadd.f32 %v2983, %v2701
  %v2985 = vadd.f32 %v2984, %v2704
  %v2986 = vadd.f32 %v2985, %v2709
  %v2987 = vadd.f32 %v2986, %v2712
  %v2988 = vadd.f32 %v2987, %v2717
  %v2989 = vadd.f32 %v2988, %v2720
  %v2990 = vadd.f32 %v2989, %v2725
  %v2991 = vadd.f32 %v2990, %v2728
  %v2992 = vadd.f32 %v2991, %v2733
  %v2993 = vadd.f32 %v2992, %v2736
  %v2994 = vrot.slane %v2993, 4
  %v2995 = vadd.f32 %v2993, %v2994
  %v2996 = vrot.slane %v2995, 2
  %v2997 = vadd.f32 %v2995, %v2996
  %v2998 = vrot.slane %v2997, 1
  %v2999 = vadd.f32 %v2997, %v2998
  %v3000 = vrcp.pop 2048.0
  %v3001 = vmul.f32 %v2999, %v3000
  %v3002 = vsub.f32 %v1717, %v3001
  %v3003 = vsub.f32 %v1720, %v3001
  %v3004 = vsub.f32 %v1725, %v3001
  %v3005 = vsub.f32 %v1728, %v3001
  %v3006 = vsub.f32 %v1733, %v3001
  %v3007 = vsub.f32 %v1736, %v3001
  %v3008 = vsub.f32 %v1741, %v3001
  %v3009 = vsub.f32 %v1744, %v3001
  %v3010 = vsub.f32 %v1749, %v3001
  %v3011 = vsub.f32 %v1752, %v3001
  %v3012 = vsub.f32 %v1757, %v3001
  %v3013 = vsub.f32 %v1760, %v3001
  %v3014 = vsub.f32 %v1765, %v3001
  %v3015 = vsub.f32 %v1768, %v3001
  %v3016 = vsub.f32 %v1773, %v3001
  %v3017 = vsub.f32 %v1776, %v3001
  %v3018 = vsub.f32 %v1781, %v3001
  %v3019 = vsub.f32 %v1784, %v3001
  %v3020 = vsub.f32 %v1789, %v3001
  %v3021 = vsub.f32 %v1792, %v3001
  %v3022 = vsub.f32 %v1797, %v3001
  %v3023 = vsub.f32 %v1800, %v3001
  %v3024 = vsub.f32 %v1805, %v3001
  %v3025 = vsub.f32 %v1808, %v3001
  %v3026 = vsub.f32 %v1813, %v3001
  %v3027 = vsub.f32 %v1816, %v3001
  %v3028 = vsub.f32 %v1821, %v3001
  %v3029 = vsub.f32 %v1824, %v3001
  %v3030 = vsub.f32 %v1829, %v3001
  %v3031 = vsub.f32 %v1832, %v3001
  %v3032 = vsub.f32 %v1837, %v3001
  %v3033 = vsub.f32 %v1840, %v3001
  %v3034 = vsub.f32 %v1845, %v3001
  %v3035 = vsub.f32 %v1848, %v3001
  %v3036 = vsub.f32 %v1853, %v3001
  %v3037 = vsub.f32 %v1856, %v3001
  %v3038 = vsub.f32 %v1861, %v3001
  %v3039 = vsub.f32 %v1864, %v3001
  %v3040 = vsub.f32 %v1869, %v3001
  %v3041 = vsub.f32 %v1872, %v3001
  %v3042 = vsub.f32 %v1877, %v3001
  %v3043 = vsub.f32 %v1880, %v3001
  %v3044 = vsub.f32 %v1885, %v3001
  %v3045 = vsub.f32 %v1888, %v3001
  %v3046 = vsub.f32 %v1893, %v3001
  %v3047 = vsub.f32 %v1896, %v3001
  %v3048 = vsub.f32 %v1901, %v3001
  %v3049 = vsub.f32 %v1904, %v3001
  %v3050 = vsub.f32 %v1909, %v3001
  %v3051 = vsub.f32 %v1912, %v3001
  %v3052 = vsub.f32 %v1917, %v3001
  %v3053 = vsub.f32 %v1920, %v3001
  %v3054 = vsub.f32 %v1925, %v3001
  %v3055 = vsub.f32 %v1928, %v3001
  %v3056 = vsub.f32 %v1933, %v3001
  %v3057 = vsub.f32 %v1936, %v3001
  %v3058 = vsub.f32 %v1941, %v3001
  %v3059 = vsub.f32 %v1944, %v3001
  %v3060 = vsub.f32 %v1949, %v3001
  %v3061 = vsub.f32 %v1952, %v3001
  %v3062 = vsub.f32 %v1957, %v3001
  %v3063 = vsub.f32 %v1960, %v3001
  %v3064 = vsub.f32 %v1965, %v3001
  %v3065 = vsub.f32 %v1968, %v3001
  %v3066 = vsub.f32 %v1973, %v3001
  %v3067 = vsub.f32 %v1976, %v3001
  %v3068 = vsub.f32 %v1981, %v3001
  %v3069 = vsub.f32 %v1984, %v3001
  %v3070 = vsub.f32 %v1989, %v3001
  %v3071 = vsub.f32 %v1992, %v3001
  %v3072 = vsub.f32 %v1997, %v3001
  %v3073 = vsub.f32 %v2000, %v3001
  %v3074 = vsub.f32 %v2005, %v3001
  %v3075 = vsub.f32 %v2008, %v3001
  %v3076 = vsub.f32 %v2013, %v3001
  %v3077 = vsub.f32 %v2016, %v3001
  %v3078 = vsub.f32 %v2021, %v3001
  %v3079 = vsub.f32 %v2024, %v3001
  %v3080 = vsub.f32 %v2029, %v3001
  %v3081 = vsub.f32 %v2032, %v3001
  %v3082 = vsub.f32 %v2037, %v3001
  %v3083 = vsub.f32 %v2040, %v3001
  %v3084 = vsub.f32 %v2045, %v3001
  %v3085 = vsub.f32 %v2048, %v3001
  %v3086 = vsub.f32 %v2053, %v3001
  %v3087 = vsub.f32 %v2056, %v3001
  %v3088 = vsub.f32 %v2061, %v3001
  %v3089 = vsub.f32 %v2064, %v3001
  %v3090 = vsub.f32 %v2069, %v3001
  %v3091 = vsub.f32 %v2072, %v3001
  %v3092 = vsub.f32 %v2077, %v3001
  %v3093 = vsub.f32 %v2080, %v3001
  %v3094 = vsub.f32 %v2085, %v3001
  %v3095 = vsub.f32 %v2088, %v3001
  %v3096 = vsub.f32 %v2093, %v3001
  %v3097 = vsub.f32 %v2096, %v3001
  %v3098 = vsub.f32 %v2101, %v3001
  %v3099 = vsub.f32 %v2104, %v3001
  %v3100 = vsub.f32 %v2109, %v3001
  %v3101 = vsub.f32 %v2112, %v3001
  %v3102 = vsub.f32 %v2117, %v3001
  %v3103 = vsub.f32 %v2120, %v3001
  %v3104 = vsub.f32 %v2125, %v3001
  %v3105 = vsub.f32 %v2128, %v3001
  %v3106 = vsub.f32 %v2133, %v3001
  %v3107 = vsub.f32 %v2136, %v3001
  %v3108 = vsub.f32 %v2141, %v3001
  %v3109 = vsub.f32 %v2144, %v3001
  %v3110 = vsub.f32 %v2149, %v3001
  %v3111 = vsub.f32 %v2152, %v3001
  %v3112 = vsub.f32 %v2157, %v3001
  %v3113 = vsub.f32 %v2160, %v3001
  %v3114 = vsub.f32 %v2165, %v3001
  %v3115 = vsub.f32 %v2168, %v3001
  %v3116 = vsub.f32 %v2173, %v3001
  %v3117 = vsub.f32 %v2176, %v3001
  %v3118 = vsub.f32 %v2181, %v3001
  %v3119 = vsub.f32 %v2184, %v3001
  %v3120 = vsub.f32 %v2189, %v3001
  %v3121 = vsub.f32 %v2192, %v3001
  %v3122 = vsub.f32 %v2197, %v3001
  %v3123 = vsub.f32 %v2200, %v3001
  %v3124 = vsub.f32 %v2205, %v3001
  %v3125 = vsub.f32 %v2208, %v3001
  %v3126 = vsub.f32 %v2213, %v3001
  %v3127 = vsub.f32 %v2216, %v3001
  %v3128 = vsub.f32 %v2221, %v3001
  %v3129 = vsub.f32 %v2224, %v3001
  %v3130 = vsub.f32 %v2229, %v3001
  %v3131 = vsub.f32 %v2232, %v3001
  %v3132 = vsub.f32 %v2237, %v3001
  %v3133 = vsub.f32 %v2240, %v3001
  %v3134 = vsub.f32 %v2245, %v3001
  %v3135 = vsub.f32 %v2248, %v3001
  %v3136 = vsub.f32 %v2253, %v3001
  %v3137 = vsub.f32 %v2256, %v3001
  %v3138 = vsub.f32 %v2261, %v3001
  %v3139 = vsub.f32 %v2264, %v3001
  %v3140 = vsub.f32 %v2269, %v3001
  %v3141 = vsub.f32 %v2272, %v3001
  %v3142 = vsub.f32 %v2277, %v3001
  %v3143 = vsub.f32 %v2280, %v3001
  %v3144 = vsub.f32 %v2285, %v3001
  %v3145 = vsub.f32 %v2288, %v3001
  %v3146 = vsub.f32 %v2293, %v3001
  %v3147 = vsub.f32 %v2296, %v3001
  %v3148 = vsub.f32 %v2301, %v3001
  %v3149 = vsub.f32 %v2304, %v3001
  %v3150 = vsub.f32 %v2309, %v3001
  %v3151 = vsub.f32 %v2312, %v3001
  %v3152 = vsub.f32 %v2317, %v3001
  %v3153 = vsub.f32 %v2320, %v3001
  %v3154 = vsub.f32 %v2325, %v3001
  %v3155 = vsub.f32 %v2328, %v3001
  %v3156 = vsub.f32 %v2333, %v3001
  %v3157 = vsub.f32 %v2336, %v3001
  %v3158 = vsub.f32 %v2341, %v3001
  %v3159 = vsub.f32 %v2344, %v3001
  %v3160 = vsub.f32 %v2349, %v3001
  %v3161 = vsub.f32 %v2352, %v3001
  %v3162 = vsub.f32 %v2357, %v3001
  %v3163 = vsub.f32 %v2360, %v3001
  %v3164 = vsub.f32 %v2365, %v3001
  %v3165 = vsub.f32 %v2368, %v3001
  %v3166 = vsub.f32 %v2373, %v3001
  %v3167 = vsub.f32 %v2376, %v3001
  %v3168 = vsub.f32 %v2381, %v3001
  %v3169 = vsub.f32 %v2384, %v3001
  %v3170 = vsub.f32 %v2389, %v3001
  %v3171 = vsub.f32 %v2392, %v3001
  %v3172 = vsub.f32 %v2397, %v3001
  %v3173 = vsub.f32 %v2400, %v3001
  %v3174 = vsub.f32 %v2405, %v3001
  %v3175 = vsub.f32 %v2408, %v3001
  %v3176 = vsub.f32 %v2413, %v3001
  %v3177 = vsub.f32 %v2416, %v3001
  %v3178 = vsub.f32 %v2421, %v3001
  %v3179 = vsub.f32 %v2424, %v3001
  %v3180 = vsub.f32 %v2429, %v3001
  %v3181 = vsub.f32 %v2432, %v3001
  %v3182 = vsub.f32 %v2437, %v3001
  %v3183 = vsub.f32 %v2440, %v3001
  %v3184 = vsub.f32 %v2445, %v3001
  %v3185 = vsub.f32 %v2448, %v3001
  %v3186 = vsub.f32 %v2453, %v3001
  %v3187 = vsub.f32 %v2456, %v3001
  %v3188 = vsub.f32 %v2461, %v3001
  %v3189 = vsub.f32 %v2464, %v3001
  %v3190 = vsub.f32 %v2469, %v3001
  %v3191 = vsub.f32 %v2472, %v3001
  %v3192 = vsub.f32 %v2477, %v3001
  %v3193 = vsub.f32 %v2480, %v3001
  %v3194 = vsub.f32 %v2485, %v3001
  %v3195 = vsub.f32 %v2488, %v3001
  %v3196 = vsub.f32 %v2493, %v3001
  %v3197 = vsub.f32 %v2496, %v3001
  %v3198 = vsub.f32 %v2501, %v3001
  %v3199 = vsub.f32 %v2504, %v3001
  %v3200 = vsub.f32 %v2509, %v3001
  %v3201 = vsub.f32 %v2512, %v3001
  %v3202 = vsub.f32 %v2517, %v3001
  %v3203 = vsub.f32 %v2520, %v3001
  %v3204 = vsub.f32 %v2525, %v3001
  %v3205 = vsub.f32 %v2528, %v3001
  %v3206 = vsub.f32 %v2533, %v3001
  %v3207 = vsub.f32 %v2536, %v3001
  %v3208 = vsub.f32 %v2541, %v3001
  %v3209 = vsub.f32 %v2544, %v3001
  %v3210 = vsub.f32 %v2549, %v3001
  %v3211 = vsub.f32 %v2552, %v3001
  %v3212 = vsub.f32 %v2557, %v3001
  %v3213 = vsub.f32 %v2560, %v3001
  %v3214 = vsub.f32 %v2565, %v3001
  %v3215 = vsub.f32 %v2568, %v3001
  %v3216 = vsub.f32 %v2573, %v3001
  %v3217 = vsub.f32 %v2576, %v3001
  %v3218 = vsub.f32 %v2581, %v3001
  %v3219 = vsub.f32 %v2584, %v3001
  %v3220 = vsub.f32 %v2589, %v3001
  %v3221 = vsub.f32 %v2592, %v3001
  %v3222 = vsub.f32 %v2597, %v3001
  %v3223 = vsub.f32 %v2600, %v3001
  %v3224 = vsub.f32 %v2605, %v3001
  %v3225 = vsub.f32 %v2608, %v3001
  %v3226 = vsub.f32 %v2613, %v3001
  %v3227 = vsub.f32 %v2616, %v3001
  %v3228 = vsub.f32 %v2621, %v3001
  %v3229 = vsub.f32 %v2624, %v3001
  %v3230 = vsub.f32 %v2629, %v3001
  %v3231 = vsub.f32 %v2632, %v3001
  %v3232 = vsub.f32 %v2637, %v3001
  %v3233 = vsub.f32 %v2640, %v3001
  %v3234 = vsub.f32 %v2645, %v3001
  %v3235 = vsub.f32 %v2648, %v3001
  %v3236 = vsub.f32 %v2653, %v3001
  %v3237 = vsub.f32 %v2656, %v3001
  %v3238 = vsub.f32 %v2661, %v3001
  %v3239 = vsub.f32 %v2664, %v3001
  %v3240 = vsub.f32 %v2669, %v3001
  %v3241 = vsub.f32 %v2672, %v3001
  %v3242 = vsub.f32 %v2677, %v3001
  %v3243 = vsub.f32 %v2680, %v3001
  %v3244 = vsub.f32 %v2685, %v3001
  %v3245 = vsub.f32 %v2688, %v3001
  %v3246 = vsub.f32 %v2693, %v3001
  %v3247 = vsub.f32 %v2696, %v3001
  %v3248 = vsub.f32 %v2701, %v3001
  %v3249 = vsub.f32 %v2704, %v3001
  %v3250 = vsub.f32 %v2709, %v3001
  %v3251 = vsub.f32 %v2712, %v3001
  %v3252 = vsub.f32 %v2717, %v3001
  %v3253 = vsub.f32 %v2720, %v3001
  %v3254 = vsub.f32 %v2725, %v3001
  %v3255 = vsub.f32 %v2728, %v3001
  %v3256 = vsub.f32 %v2733, %v3001
  %v3257 = vsub.f32 %v2736, %v3001
  %v3258 = vmul.f32 %v3002, %v3002
  %v3259 = vmul.f32 %v3003, %v3003
  %v3260 = vmul.f32 %v3004, %v3004
  %v3261 = vmul.f32 %v3005, %v3005
  %v3262 = vmul.f32 %v3006, %v3006
  %v3263 = vmul.f32 %v3007, %v3007
  %v3264 = vmul.f32 %v3008, %v3008
  %v3265 = vmul.f32 %v3009, %v3009
  %v3266 = vmul.f32 %v3010, %v3010
  %v3267 = vmul.f32 %v3011, %v3011
  %v3268 = vmul.f32 %v3012, %v3012
  %v3269 = vmul.f32 %v3013, %v3013
  %v3270 = vmul.f32 %v3014, %v3014
  %v3271 = vmul.f32 %v3015, %v3015
  %v3272 = vmul.f32 %v3016, %v3016
  %v3273 = vmul.f32 %v3017, %v3017
  %v3274 = vmul.f32 %v3018, %v3018
  %v3275 = vmul.f32 %v3019, %v3019
  %v3276 = vmul.f32 %v3020, %v3020
  %v3277 = vmul.f32 %v3021, %v3021
  %v3278 = vmul.f32 %v3022, %v3022
  %v3279 = vmul.f32 %v3023, %v3023
  %v3280 = vmul.f32 %v3024, %v3024
  %v3281 = vmul.f32 %v3025, %v3025
  %v3282 = vmul.f32 %v3026, %v3026
  %v3283 = vmul.f32 %v3027, %v3027
  %v3284 = vmul.f32 %v3028, %v3028
  %v3285 = vmul.f32 %v3029, %v3029
  %v3286 = vmul.f32 %v3030, %v3030
  %v3287 = vmul.f32 %v3031, %v3031
  %v3288 = vmul.f32 %v3032, %v3032
  %v3289 = vmul.f32 %v3033, %v3033
  %v3290 = vmul.f32 %v3034, %v3034
  %v3291 = vmul.f32 %v3035, %v3035
  %v3292 = vmul.f32 %v3036, %v3036
  %v3293 = vmul.f32 %v3037, %v3037
  %v3294 = vmul.f32 %v3038, %v3038
  %v3295 = vmul.f32 %v3039, %v3039
  %v3296 = vmul.f32 %v3040, %v3040
  %v3297 = vmul.f32 %v3041, %v3041
  %v3298 = vmul.f32 %v3042, %v3042
  %v3299 = vmul.f32 %v3043, %v3043
  %v3300 = vmul.f32 %v3044, %v3044
  %v3301 = vmul.f32 %v3045, %v3045
  %v3302 = vmul.f32 %v3046, %v3046
  %v3303 = vmul.f32 %v3047, %v3047
  %v3304 = vmul.f32 %v3048, %v3048
  %v3305 = vmul.f32 %v3049, %v3049
  %v3306 = vmul.f32 %v3050, %v3050
  %v3307 = vmul.f32 %v3051, %v3051
  %v3308 = vmul.f32 %v3052, %v3052
  %v3309 = vmul.f32 %v3053, %v3053
  %v3310 = vmul.f32 %v3054, %v3054
  %v3311 = vmul.f32 %v3055, %v3055
  %v3312 = vmul.f32 %v3056, %v3056
  %v3313 = vmul.f32 %v3057, %v3057
  %v3314 = vmul.f32 %v3058, %v3058
  %v3315 = vmul.f32 %v3059, %v3059
  %v3316 = vmul.f32 %v3060, %v3060
  %v3317 = vmul.f32 %v3061, %v3061
  %v3318 = vmul.f32 %v3062, %v3062
  %v3319 = vmul.f32 %v3063, %v3063
  %v3320 = vmul.f32 %v3064, %v3064
  %v3321 = vmul.f32 %v3065, %v3065
  %v3322 = vmul.f32 %v3066, %v3066
  %v3323 = vmul.f32 %v3067, %v3067
  %v3324 = vmul.f32 %v3068, %v3068
  %v3325 = vmul.f32 %v3069, %v3069
  %v3326 = vmul.f32 %v3070, %v3070
  %v3327 = vmul.f32 %v3071, %v3071
  %v3328 = vmul.f32 %v3072, %v3072
  %v3329 = vmul.f32 %v3073, %v3073
  %v3330 = vmul.f32 %v3074, %v3074
  %v3331 = vmul.f32 %v3075, %v3075
  %v3332 = vmul.f32 %v3076, %v3076
  %v3333 = vmul.f32 %v3077, %v3077
  %v3334 = vmul.f32 %v3078, %v3078
  %v3335 = vmul.f32 %v3079, %v3079
  %v3336 = vmul.f32 %v3080, %v3080
  %v3337 = vmul.f32 %v3081, %v3081
  %v3338 = vmul.f32 %v3082, %v3082
  %v3339 = vmul.f32 %v3083, %v3083
  %v3340 = vmul.f32 %v3084, %v3084
  %v3341 = vmul.f32 %v3085, %v3085
  %v3342 = vmul.f32 %v3086, %v3086
  %v3343 = vmul.f32 %v3087, %v3087
  %v3344 = vmul.f32 %v3088, %v3088
  %v3345 = vmul.f32 %v3089, %v3089
  %v3346 = vmul.f32 %v3090, %v3090
  %v3347 = vmul.f32 %v3091, %v3091
  %v3348 = vmul.f32 %v3092, %v3092
  %v3349 = vmul.f32 %v3093, %v3093
  %v3350 = vmul.f32 %v3094, %v3094
  %v3351 = vmul.f32 %v3095, %v3095
  %v3352 = vmul.f32 %v3096, %v3096
  %v3353 = vmul.f32 %v3097, %v3097
  %v3354 = vmul.f32 %v3098, %v3098
  %v3355 = vmul.f32 %v3099, %v3099
  %v3356 = vmul.f32 %v3100, %v3100
  %v3357 = vmul.f32 %v3101, %v3101
  %v3358 = vmul.f32 %v3102, %v3102
  %v3359 = vmul.f32 %v3103, %v3103
  %v3360 = vmul.f32 %v3104, %v3104
  %v3361 = vmul.f32 %v3105, %v3105
  %v3362 = vmul.f32 %v3106, %v3106
  %v3363 = vmul.f32 %v3107, %v3107
  %v3364 = vmul.f32 %v3108, %v3108
  %v3365 = vmul.f32 %v3109, %v3109
  %v3366 = vmul.f32 %v3110, %v3110
  %v3367 = vmul.f32 %v3111, %v3111
  %v3368 = vmul.f32 %v3112, %v3112
  %v3369 = vmul.f32 %v3113, %v3113
  %v3370 = vmul.f32 %v3114, %v3114
  %v3371 = vmul.f32 %v3115, %v3115
  %v3372 = vmul.f32 %v3116, %v3116
  %v3373 = vmul.f32 %v3117, %v3117
  %v3374 = vmul.f32 %v3118, %v3118
  %v3375 = vmul.f32 %v3119, %v3119
  %v3376 = vmul.f32 %v3120, %v3120
  %v3377 = vmul.f32 %v3121, %v3121
  %v3378 = vmul.f32 %v3122, %v3122
  %v3379 = vmul.f32 %v3123, %v3123
  %v3380 = vmul.f32 %v3124, %v3124
  %v3381 = vmul.f32 %v3125, %v3125
  %v3382 = vmul.f32 %v3126, %v3126
  %v3383 = vmul.f32 %v3127, %v3127
  %v3384 = vmul.f32 %v3128, %v3128
  %v3385 = vmul.f32 %v3129, %v3129
  %v3386 = vmul.f32 %v3130, %v3130
  %v3387 = vmul.f32 %v3131, %v3131
  %v3388 = vmul.f32 %v3132, %v3132
  %v3389 = vmul.f32 %v3133, %v3133
  %v3390 = vmul.f32 %v3134, %v3134
  %v3391 = vmul.f32 %v3135, %v3135
  %v3392 = vmul.f32 %v3136, %v3136
  %v3393 = vmul.f32 %v3137, %v3137
  %v3394 = vmul.f32 %v3138, %v3138
  %v3395 = vmul.f32 %v3139, %v3139
  %v3396 = vmul.f32 %v3140, %v3140
  %v3397 = vmul.f32 %v3141, %v3141
  %v3398 = vmul.f32 %v3142, %v3142
  %v3399 = vmul.f32 %v3143, %v3143
  %v3400 = vmul.f32 %v3144, %v3144
  %v3401 = vmul.f32 %v3145, %v3145
  %v3402 = vmul.f32 %v3146, %v3146
  %v3403 = vmul.f32 %v3147, %v3147
  %v3404 = vmul.f32 %v3148, %v3148
  %v3405 = vmul.f32 %v3149, %v3149
  %v3406 = vmul.f32 %v3150, %v3150
  %v3407 = vmul.f32 %v3151, %v3151
  %v3408 = vmul.f32 %v3152, %v3152
  %v3409 = vmul.f32 %v3153, %v3153
  %v3410 = vmul.f32 %v3154, %v3154
  %v3411 = vmul.f32 %v3155, %v3155
  %v3412 = vmul.f32 %v3156, %v3156
  %v3413 = vmul.f32 %v3157, %v3157
  %v3414 = vmul.f32 %v3158, %v3158
  %v3415 = vmul.f32 %v3159, %v3159
  %v3416 = vmul.f32 %v3160, %v3160
  %v3417 = vmul.f32 %v3161, %v3161
  %v3418 = vmul.f32 %v3162, %v3162
  %v3419 = vmul.f32 %v3163, %v3163
  %v3420 = vmul.f32 %v3164, %v3164
  %v3421 = vmul.f32 %v3165, %v3165
  %v3422 = vmul.f32 %v3166, %v3166
  %v3423 = vmul.f32 %v3167, %v3167
  %v3424 = vmul.f32 %v3168, %v3168
  %v3425 = vmul.f32 %v3169, %v3169
  %v3426 = vmul.f32 %v3170, %v3170
  %v3427 = vmul.f32 %v3171, %v3171
  %v3428 = vmul.f32 %v3172, %v3172
  %v3429 = vmul.f32 %v3173, %v3173
  %v3430 = vmul.f32 %v3174, %v3174
  %v3431 = vmul.f32 %v3175, %v3175
  %v3432 = vmul.f32 %v3176, %v3176
  %v3433 = vmul.f32 %v3177, %v3177
  %v3434 = vmul.f32 %v3178, %v3178
  %v3435 = vmul.f32 %v3179, %v3179
  %v3436 = vmul.f32 %v3180, %v3180
  %v3437 = vmul.f32 %v3181, %v3181
  %v3438 = vmul.f32 %v3182, %v3182
  %v3439 = vmul.f32 %v3183, %v3183
  %v3440 = vmul.f32 %v3184, %v3184
  %v3441 = vmul.f32 %v3185, %v3185
  %v3442 = vmul.f32 %v3186, %v3186
  %v3443 = vmul.f32 %v3187, %v3187
  %v3444 = vmul.f32 %v3188, %v3188
  %v3445 = vmul.f32 %v3189, %v3189
  %v3446 = vmul.f32 %v3190, %v3190
  %v3447 = vmul.f32 %v3191, %v3191
  %v3448 = vmul.f32 %v3192, %v3192
  %v3449 = vmul.f32 %v3193, %v3193
  %v3450 = vmul.f32 %v3194, %v3194
  %v3451 = vmul.f32 %v3195, %v3195
  %v3452 = vmul.f32 %v3196, %v3196
  %v3453 = vmul.f32 %v3197, %v3197
  %v3454 = vmul.f32 %v3198, %v3198
  %v3455 = vmul.f32 %v3199, %v3199
  %v3456 = vmul.f32 %v3200, %v3200
  %v3457 = vmul.f32 %v3201, %v3201
  %v3458 = vmul.f32 %v3202, %v3202
  %v3459 = vmul.f32 %v3203, %v3203
  %v3460 = vmul.f32 %v3204, %v3204
  %v3461 = vmul.f32 %v3205, %v3205
  %v3462 = vmul.f32 %v3206, %v3206
  %v3463 = vmul.f32 %v3207, %v3207
  %v3464 = vmul.f32 %v3208, %v3208
  %v3465 = vmul.f32 %v3209, %v3209
  %v3466 = vmul.f32 %v3210, %v3210
  %v3467 = vmul.f32 %v3211, %v3211
  %v3468 = vmul.f32 %v3212, %v3212
  %v3469 = vmul.f32 %v3213, %v3213
  %v3470 = vmul.f32 %v3214, %v3214
  %v3471 = vmul.f32 %v3215, %v3215
  %v3472 = vmul.f32 %v3216, %v3216
  %v3473 = vmul.f32 %v3217, %v3217
  %v3474 = vmul.f32 %v3218, %v3218
  %v3475 = vmul.f32 %v3219, %v3219
  %v3476 = vmul.f32 %v3220, %v3220
  %v3477 = vmul.f32 %v3221, %v3221
  %v3478 = vmul.f32 %v3222, %v3222
  %v3479 = vmul.f32 %v3223, %v3223
  %v3480 = vmul.f32 %v3224, %v3224
  %v3481 = vmul.f32 %v3225, %v3225
  %v3482 = vmul.f32 %v3226, %v3226
  %v3483 = vmul.f32 %v3227, %v3227
  %v3484 = vmul.f32 %v3228, %v3228
  %v3485 = vmul.f32 %v3229, %v3229
  %v3486 = vmul.f32 %v3230, %v3230
  %v3487 = vmul.f32 %v3231, %v3231
  %v3488 = vmul.f32 %v3232, %v3232
  %v3489 = vmul.f32 %v3233, %v3233
  %v3490 = vmul.f32 %v3234, %v3234
  %v3491 = vmul.f32 %v3235, %v3235
  %v3492 = vmul.f32 %v3236, %v3236
  %v3493 = vmul.f32 %v3237, %v3237
  %v3494 = vmul.f32 %v3238, %v3238
  %v3495 = vmul.f32 %v3239, %v3239
  %v3496 = vmul.f32 %v3240, %v3240
  %v3497 = vmul.f32 %v3241, %v3241
  %v3498 = vmul.f32 %v3242, %v3242
  %v3499 = vmul.f32 %v3243, %v3243
  %v3500 = vmul.f32 %v3244, %v3244
  %v3501 = vmul.f32 %v3245, %v3245
  %v3502 = vmul.f32 %v3246, %v3246
  %v3503 = vmul.f32 %v3247, %v3247
  %v3504 = vmul.f32 %v3248, %v3248
  %v3505 = vmul.f32 %v3249, %v3249
  %v3506 = vmul.f32 %v3250, %v3250
  %v3507 = vmul.f32 %v3251, %v3251
  %v3508 = vmul.f32 %v3252, %v3252
  %v3509 = vmul.f32 %v3253, %v3253
  %v3510 = vmul.f32 %v3254, %v3254
  %v3511 = vmul.f32 %v3255, %v3255
  %v3512 = vmul.f32 %v3256, %v3256
  %v3513 = vmul.f32 %v3257, %v3257
  %v3514 = vadd.f32 %v3258, %v3259
  %v3515 = vadd.f32 %v3514, %v3260
  %v3516 = vadd.f32 %v3515, %v3261
  %v3517 = vadd.f32 %v3516, %v3262
  %v3518 = vadd.f32 %v3517, %v3263
  %v3519 = vadd.f32 %v3518, %v3264
  %v3520 = vadd.f32 %v3519, %v3265
  %v3521 = vadd.f32 %v3520, %v3266
  %v3522 = vadd.f32 %v3521, %v3267
  %v3523 = vadd.f32 %v3522, %v3268
  %v3524 = vadd.f32 %v3523, %v3269
  %v3525 = vadd.f32 %v3524, %v3270
  %v3526 = vadd.f32 %v3525, %v3271
  %v3527 = vadd.f32 %v3526, %v3272
  %v3528 = vadd.f32 %v3527, %v3273
  %v3529 = vadd.f32 %v3528, %v3274
  %v3530 = vadd.f32 %v3529, %v3275
  %v3531 = vadd.f32 %v3530, %v3276
  %v3532 = vadd.f32 %v3531, %v3277
  %v3533 = vadd.f32 %v3532, %v3278
  %v3534 = vadd.f32 %v3533, %v3279
  %v3535 = vadd.f32 %v3534, %v3280
  %v3536 = vadd.f32 %v3535, %v3281
  %v3537 = vadd.f32 %v3536, %v3282
  %v3538 = vadd.f32 %v3537, %v3283
  %v3539 = vadd.f32 %v3538, %v3284
  %v3540 = vadd.f32 %v3539, %v3285
  %v3541 = vadd.f32 %v3540, %v3286
  %v3542 = vadd.f32 %v3541, %v3287
  %v3543 = vadd.f32 %v3542, %v3288
  %v3544 = vadd.f32 %v3543, %v3289
  %v3545 = vadd.f32 %v3544, %v3290
  %v3546 = vadd.f32 %v3545, %v3291
  %v3547 = vadd.f32 %v3546, %v3292
  %v3548 = vadd.f32 %v3547, %v3293
  %v3549 = vadd.f32 %v3548, %v3294
  %v3550 = vadd.f32 %v3549, %v3295
  %v3551 = vadd.f32 %v3550, %v3296
  %v3552 = vadd.f32 %v3551, %v3297
  %v3553 = vadd.f32 %v3552, %v3298
  %v3554 = vadd.f32 %v3553, %v3299
  %v3555 = vadd.f32 %v3554, %v3300
  %v3556 = vadd.f32 %v3555, %v3301
  %v3557 = vadd.f32 %v3556, %v3302
  %v3558 = vadd.f32 %v3557, %v3303
  %v3559 = vadd.f32 %v3558, %v3304
  %v3560 = vadd.f32 %v3559, %v3305
  %v3561 = vadd.f32 %v3560, %v3306
  %v3562 = vadd.f32 %v3561, %v3307
  %v3563 = vadd.f32 %v3562, %v3308
  %v3564 = vadd.f32 %v3563, %v3309
  %v3565 = vadd.f32 %v3564, %v3310
  %v3566 = vadd.f32 %v3565, %v3311
  %v3567 = vadd.f32 %v3566, %v3312
  %v3568 = vadd.f32 %v3567, %v3313
  %v3569 = vadd.f32 %v3568, %v3314
  %v3570 = vadd.f32 %v3569, %v3315
  %v3571 = vadd.f32 %v3570, %v3316
  %v3572 = vadd.f32 %v3571, %v3317
  %v3573 = vadd.f32 %v3572, %v3318
  %v3574 = vadd.f32 %v3573, %v3319
  %v3575 = vadd.f32 %v3574, %v3320
  %v3576 = vadd.f32 %v3575, %v3321
  %v3577 = vadd.f32 %v3576, %v3322
  %v3578 = vadd.f32 %v3577, %v3323
  %v3579 = vadd.f32 %v3578, %v3324
  %v3580 = vadd.f32 %v3579, %v3325
  %v3581 = vadd.f32 %v3580, %v3326
  %v3582 = vadd.f32 %v3581, %v3327
  %v3583 = vadd.f32 %v3582, %v3328
  %v3584 = vadd.f32 %v3583, %v3329
  %v3585 = vadd.f32 %v3584, %v3330
  %v3586 = vadd.f32 %v3585, %v3331
  %v3587 = vadd.f32 %v3586, %v3332
  %v3588 = vadd.f32 %v3587, %v3333
  %v3589 = vadd.f32 %v3588, %v3334
  %v3590 = vadd.f32 %v3589, %v3335
  %v3591 = vadd.f32 %v3590, %v3336
  %v3592 = vadd.f32 %v3591, %v3337
  %v3593 = vadd.f32 %v3592, %v3338
  %v3594 = vadd.f32 %v3593, %v3339
  %v3595 = vadd.f32 %v3594, %v3340
  %v3596 = vadd.f32 %v3595, %v3341
  %v3597 = vadd.f32 %v3596, %v3342
  %v3598 = vadd.f32 %v3597, %v3343
  %v3599 = vadd.f32 %v3598, %v3344
  %v3600 = vadd.f32 %v3599, %v3345
  %v3601 = vadd.f32 %v3600, %v3346
  %v3602 = vadd.f32 %v3601, %v3347
  %v3603 = vadd.f32 %v3602, %v3348
  %v3604 = vadd.f32 %v3603, %v3349
  %v3605 = vadd.f32 %v3604, %v3350
  %v3606 = vadd.f32 %v3605, %v3351
  %v3607 = vadd.f32 %v3606, %v3352
  %v3608 = vadd.f32 %v3607, %v3353
  %v3609 = vadd.f32 %v3608, %v3354
  %v3610 = vadd.f32 %v3609, %v3355
  %v3611 = vadd.f32 %v3610, %v3356
  %v3612 = vadd.f32 %v3611, %v3357
  %v3613 = vadd.f32 %v3612, %v3358
  %v3614 = vadd.f32 %v3613, %v3359
  %v3615 = vadd.f32 %v3614, %v3360
  %v3616 = vadd.f32 %v3615, %v3361
  %v3617 = vadd.f32 %v3616, %v3362
  %v3618 = vadd.f32 %v3617, %v3363
  %v3619 = vadd.f32 %v3618, %v3364
  %v3620 = vadd.f32 %v3619, %v3365
  %v3621 = vadd.f32 %v3620, %v3366
  %v3622 = vadd.f32 %v3621, %v3367
  %v3623 = vadd.f32 %v3622, %v3368
  %v3624 = vadd.f32 %v3623, %v3369
  %v3625 = vadd.f32 %v3624, %v3370
  %v3626 = vadd.f32 %v3625, %v3371
  %v3627 = vadd.f32 %v3626, %v3372
  %v3628 = vadd.f32 %v3627, %v3373
  %v3629 = vadd.f32 %v3628, %v3374
  %v3630 = vadd.f32 %v3629, %v3375
  %v3631 = vadd.f32 %v3630, %v3376
  %v3632 = vadd.f32 %v3631, %v3377
  %v3633 = vadd.f32 %v3632, %v3378
  %v3634 = vadd.f32 %v3633, %v3379
  %v3635 = vadd.f32 %v3634, %v3380
  %v3636 = vadd.f32 %v3635, %v3381
  %v3637 = vadd.f32 %v3636, %v3382
  %v3638 = vadd.f32 %v3637, %v3383
  %v3639 = vadd.f32 %v3638, %v3384
  %v3640 = vadd.f32 %v3639, %v3385
  %v3641 = vadd.f32 %v3640, %v3386
  %v3642 = vadd.f32 %v3641, %v3387
  %v3643 = vadd.f32 %v3642, %v3388
  %v3644 = vadd.f32 %v3643, %v3389
  %v3645 = vadd.f32 %v3644, %v3390
  %v3646 = vadd.f32 %v3645, %v3391
  %v3647 = vadd.f32 %v3646, %v3392
  %v3648 = vadd.f32 %v3647, %v3393
  %v3649 = vadd.f32 %v3648, %v3394
  %v3650 = vadd.f32 %v3649, %v3395
  %v3651 = vadd.f32 %v3650, %v3396
  %v3652 = vadd.f32 %v3651, %v3397
  %v3653 = vadd.f32 %v3652, %v3398
  %v3654 = vadd.f32 %v3653, %v3399
  %v3655 = vadd.f32 %v3654, %v3400
  %v3656 = vadd.f32 %v3655, %v3401
  %v3657 = vadd.f32 %v3656, %v3402
  %v3658 = vadd.f32 %v3657, %v3403
  %v3659 = vadd.f32 %v3658, %v3404
  %v3660 = vadd.f32 %v3659, %v3405
  %v3661 = vadd.f32 %v3660, %v3406
  %v3662 = vadd.f32 %v3661, %v3407
  %v3663 = vadd.f32 %v3662, %v3408
  %v3664 = vadd.f32 %v3663, %v3409
  %v3665 = vadd.f32 %v3664, %v3410
  %v3666 = vadd.f32 %v3665, %v3411
  %v3667 = vadd.f32 %v3666, %v3412
  %v3668 = vadd.f32 %v3667, %v3413
  %v3669 = vadd.f32 %v3668, %v3414
  %v3670 = vadd.f32 %v3669, %v3415
  %v3671 = vadd.f32 %v3670, %v3416
  %v3672 = vadd.f32 %v3671, %v3417
  %v3673 = vadd.f32 %v3672, %v3418
  %v3674 = vadd.f32 %v3673, %v3419
  %v3675 = vadd.f32 %v3674, %v3420
  %v3676 = vadd.f32 %v3675, %v3421
  %v3677 = vadd.f32 %v3676, %v3422
  %v3678 = vadd.f32 %v3677, %v3423
  %v3679 = vadd.f32 %v3678, %v3424
  %v3680 = vadd.f32 %v3679, %v3425
  %v3681 = vadd.f32 %v3680, %v3426
  %v3682 = vadd.f32 %v3681, %v3427
  %v3683 = vadd.f32 %v3682, %v3428
  %v3684 = vadd.f32 %v3683, %v3429
  %v3685 = vadd.f32 %v3684, %v3430
  %v3686 = vadd.f32 %v3685, %v3431
  %v3687 = vadd.f32 %v3686, %v3432
  %v3688 = vadd.f32 %v3687, %v3433
  %v3689 = vadd.f32 %v3688, %v3434
  %v3690 = vadd.f32 %v3689, %v3435
  %v3691 = vadd.f32 %v3690, %v3436
  %v3692 = vadd.f32 %v3691, %v3437
  %v3693 = vadd.f32 %v3692, %v3438
  %v3694 = vadd.f32 %v3693, %v3439
  %v3695 = vadd.f32 %v3694, %v3440
  %v3696 = vadd.f32 %v3695, %v3441
  %v3697 = vadd.f32 %v3696, %v3442
  %v3698 = vadd.f32 %v3697, %v3443
  %v3699 = vadd.f32 %v3698, %v3444
  %v3700 = vadd.f32 %v3699, %v3445
  %v3701 = vadd.f32 %v3700, %v3446
  %v3702 = vadd.f32 %v3701, %v3447
  %v3703 = vadd.f32 %v3702, %v3448
  %v3704 = vadd.f32 %v3703, %v3449
  %v3705 = vadd.f32 %v3704, %v3450
  %v3706 = vadd.f32 %v3705, %v3451
  %v3707 = vadd.f32 %v3706, %v3452
  %v3708 = vadd.f32 %v3707, %v3453
  %v3709 = vadd.f32 %v3708, %v3454
  %v3710 = vadd.f32 %v3709, %v3455
  %v3711 = vadd.f32 %v3710, %v3456
  %v3712 = vadd.f32 %v3711, %v3457
  %v3713 = vadd.f32 %v3712, %v3458
  %v3714 = vadd.f32 %v3713, %v3459
  %v3715 = vadd.f32 %v3714, %v3460
  %v3716 = vadd.f32 %v3715, %v3461
  %v3717 = vadd.f32 %v3716, %v3462
  %v3718 = vadd.f32 %v3717, %v3463
  %v3719 = vadd.f32 %v3718, %v3464
  %v3720 = vadd.f32 %v3719, %v3465
  %v3721 = vadd.f32 %v3720, %v3466
  %v3722 = vadd.f32 %v3721, %v3467
  %v3723 = vadd.f32 %v3722, %v3468
  %v3724 = vadd.f32 %v3723, %v3469
  %v3725 = vadd.f32 %v3724, %v3470
  %v3726 = vadd.f32 %v3725, %v3471
  %v3727 = vadd.f32 %v3726, %v3472
  %v3728 = vadd.f32 %v3727, %v3473
  %v3729 = vadd.f32 %v3728, %v3474
  %v3730 = vadd.f32 %v3729, %v3475
  %v3731 = vadd.f32 %v3730, %v3476
  %v3732 = vadd.f32 %v3731, %v3477
  %v3733 = vadd.f32 %v3732, %v3478
  %v3734 = vadd.f32 %v3733, %v3479
  %v3735 = vadd.f32 %v3734, %v3480
  %v3736 = vadd.f32 %v3735, %v3481
  %v3737 = vadd.f32 %v3736, %v3482
  %v3738 = vadd.f32 %v3737, %v3483
  %v3739 = vadd.f32 %v3738, %v3484
  %v3740 = vadd.f32 %v3739, %v3485
  %v3741 = vadd.f32 %v3740, %v3486
  %v3742 = vadd.f32 %v3741, %v3487
  %v3743 = vadd.f32 %v3742, %v3488
  %v3744 = vadd.f32 %v3743, %v3489
  %v3745 = vadd.f32 %v3744, %v3490
  %v3746 = vadd.f32 %v3745, %v3491
  %v3747 = vadd.f32 %v3746, %v3492
  %v3748 = vadd.f32 %v3747, %v3493
  %v3749 = vadd.f32 %v3748, %v3494
  %v3750 = vadd.f32 %v3749, %v3495
  %v3751 = vadd.f32 %v3750, %v3496
  %v3752 = vadd.f32 %v3751, %v3497
  %v3753 = vadd.f32 %v3752, %v3498
  %v3754 = vadd.f32 %v3753, %v3499
  %v3755 = vadd.f32 %v3754, %v3500
  %v3756 = vadd.f32 %v3755, %v3501
  %v3757 = vadd.f32 %v3756, %v3502
  %v3758 = vadd.f32 %v3757, %v3503
  %v3759 = vadd.f32 %v3758, %v3504
  %v3760 = vadd.f32 %v3759, %v3505
  %v3761 = vadd.f32 %v3760, %v3506
  %v3762 = vadd.f32 %v3761, %v3507
  %v3763 = vadd.f32 %v3762, %v3508
  %v3764 = vadd.f32 %v3763, %v3509
  %v3765 = vadd.f32 %v3764, %v3510
  %v3766 = vadd.f32 %v3765, %v3511
  %v3767 = vadd.f32 %v3766, %v3512
  %v3768 = vadd.f32 %v3767, %v3513
  %v3769 = vrot.slane %v3768, 4
  %v3770 = vadd.f32 %v3768, %v3769
  %v3771 = vrot.slane %v3770, 2
  %v3772 = vadd.f32 %v3770, %v3771
  %v3773 = vrot.slane %v3772, 1
  %v3774 = vadd.f32 %v3772, %v3773
  %v3775 = vmul.f32 %v3774, %v3000
  %v3776 = vld [vmem:[%s2] sm:$0x1]
  %v3777 = vadd.f32 %v3775, 1e-05
  %v3778 = vrsqrt.pop %v3777
  %v3779 = vmul.f32 %v3776, %v3778
  %v3780 = vld [vmem:[%s3] sm:$0x1]
  %v3781 = vmul.f32 %v3001, %v3779
  %v3782 = vsub.f32 %v3780, %v3781
  %v3784 = vlaneseq
  %v3785 = vshrl.u32 %v3784, 7
  %v3786 = vsub.s32 0, %v3785
  %v3787 = vrot.slane %v3779, %v3786
  %v3789 = vmul.f32 %v1717, %v3787
  %v3790 = vmul.f32 %v1720, %v3787
  %v3791 = vmul.f32 %v1725, %v3787
  %v3792 = vmul.f32 %v1728, %v3787
  %v3793 = vmul.f32 %v1733, %v3787
  %v3794 = vmul.f32 %v1736, %v3787
  %v3795 = vmul.f32 %v1741, %v3787
  %v3796 = vmul.f32 %v1744, %v3787
  %v3797 = vmul.f32 %v1749, %v3787
  %v3798 = vmul.f32 %v1752, %v3787
  %v3799 = vmul.f32 %v1757, %v3787
  %v3800 = vmul.f32 %v1760, %v3787
  %v3801 = vmul.f32 %v1765, %v3787
  %v3802 = vmul.f32 %v1768, %v3787
  %v3803 = vmul.f32 %v1773, %v3787
  %v3804 = vmul.f32 %v1776, %v3787
  %v3805 = vmul.f32 %v1781, %v3787
  %v3806 = vmul.f32 %v1784, %v3787
  %v3807 = vmul.f32 %v1789, %v3787
  %v3808 = vmul.f32 %v1792, %v3787
  %v3809 = vmul.f32 %v1797, %v3787
  %v3810 = vmul.f32 %v1800, %v3787
  %v3811 = vmul.f32 %v1805, %v3787
  %v3812 = vmul.f32 %v1808, %v3787
  %v3813 = vmul.f32 %v1813, %v3787
  %v3814 = vmul.f32 %v1816, %v3787
  %v3815 = vmul.f32 %v1821, %v3787
  %v3816 = vmul.f32 %v1824, %v3787
  %v3817 = vmul.f32 %v1829, %v3787
  %v3818 = vmul.f32 %v1832, %v3787
  %v3819 = vmul.f32 %v1837, %v3787
  %v3820 = vmul.f32 %v1840, %v3787
  %v3821 = vmul.f32 %v1845, %v3787
  %v3822 = vmul.f32 %v1848, %v3787
  %v3823 = vmul.f32 %v1853, %v3787
  %v3824 = vmul.f32 %v1856, %v3787
  %v3825 = vmul.f32 %v1861, %v3787
  %v3826 = vmul.f32 %v1864, %v3787
  %v3827 = vmul.f32 %v1869, %v3787
  %v3828 = vmul.f32 %v1872, %v3787
  %v3829 = vmul.f32 %v1877, %v3787
  %v3830 = vmul.f32 %v1880, %v3787
  %v3831 = vmul.f32 %v1885, %v3787
  %v3832 = vmul.f32 %v1888, %v3787
  %v3833 = vmul.f32 %v1893, %v3787
  %v3834 = vmul.f32 %v1896, %v3787
  %v3835 = vmul.f32 %v1901, %v3787
  %v3836 = vmul.f32 %v1904, %v3787
  %v3837 = vmul.f32 %v1909, %v3787
  %v3838 = vmul.f32 %v1912, %v3787
  %v3839 = vmul.f32 %v1917, %v3787
  %v3840 = vmul.f32 %v1920, %v3787
  %v3841 = vmul.f32 %v1925, %v3787
  %v3842 = vmul.f32 %v1928, %v3787
  %v3843 = vmul.f32 %v1933, %v3787
  %v3844 = vmul.f32 %v1936, %v3787
  %v3845 = vmul.f32 %v1941, %v3787
  %v3846 = vmul.f32 %v1944, %v3787
  %v3847 = vmul.f32 %v1949, %v3787
  %v3848 = vmul.f32 %v1952, %v3787
  %v3849 = vmul.f32 %v1957, %v3787
  %v3850 = vmul.f32 %v1960, %v3787
  %v3851 = vmul.f32 %v1965, %v3787
  %v3852 = vmul.f32 %v1968, %v3787
  %v3853 = vmul.f32 %v1973, %v3787
  %v3854 = vmul.f32 %v1976, %v3787
  %v3855 = vmul.f32 %v1981, %v3787
  %v3856 = vmul.f32 %v1984, %v3787
  %v3857 = vmul.f32 %v1989, %v3787
  %v3858 = vmul.f32 %v1992, %v3787
  %v3859 = vmul.f32 %v1997, %v3787
  %v3860 = vmul.f32 %v2000, %v3787
  %v3861 = vmul.f32 %v2005, %v3787
  %v3862 = vmul.f32 %v2008, %v3787
  %v3863 = vmul.f32 %v2013, %v3787
  %v3864 = vmul.f32 %v2016, %v3787
  %v3865 = vmul.f32 %v2021, %v3787
  %v3866 = vmul.f32 %v2024, %v3787
  %v3867 = vmul.f32 %v2029, %v3787
  %v3868 = vmul.f32 %v2032, %v3787
  %v3869 = vmul.f32 %v2037, %v3787
  %v3870 = vmul.f32 %v2040, %v3787
  %v3871 = vmul.f32 %v2045, %v3787
  %v3872 = vmul.f32 %v2048, %v3787
  %v3873 = vmul.f32 %v2053, %v3787
  %v3874 = vmul.f32 %v2056, %v3787
  %v3875 = vmul.f32 %v2061, %v3787
  %v3876 = vmul.f32 %v2064, %v3787
  %v3877 = vmul.f32 %v2069, %v3787
  %v3878 = vmul.f32 %v2072, %v3787
  %v3879 = vmul.f32 %v2077, %v3787
  %v3880 = vmul.f32 %v2080, %v3787
  %v3881 = vmul.f32 %v2085, %v3787
  %v3882 = vmul.f32 %v2088, %v3787
  %v3883 = vmul.f32 %v2093, %v3787
  %v3884 = vmul.f32 %v2096, %v3787
  %v3885 = vmul.f32 %v2101, %v3787
  %v3886 = vmul.f32 %v2104, %v3787
  %v3887 = vmul.f32 %v2109, %v3787
  %v3888 = vmul.f32 %v2112, %v3787
  %v3889 = vmul.f32 %v2117, %v3787
  %v3890 = vmul.f32 %v2120, %v3787
  %v3891 = vmul.f32 %v2125, %v3787
  %v3892 = vmul.f32 %v2128, %v3787
  %v3893 = vmul.f32 %v2133, %v3787
  %v3894 = vmul.f32 %v2136, %v3787
  %v3895 = vmul.f32 %v2141, %v3787
  %v3896 = vmul.f32 %v2144, %v3787
  %v3897 = vmul.f32 %v2149, %v3787
  %v3898 = vmul.f32 %v2152, %v3787
  %v3899 = vmul.f32 %v2157, %v3787
  %v3900 = vmul.f32 %v2160, %v3787
  %v3901 = vmul.f32 %v2165, %v3787
  %v3902 = vmul.f32 %v2168, %v3787
  %v3903 = vmul.f32 %v2173, %v3787
  %v3904 = vmul.f32 %v2176, %v3787
  %v3905 = vmul.f32 %v2181, %v3787
  %v3906 = vmul.f32 %v2184, %v3787
  %v3907 = vmul.f32 %v2189, %v3787
  %v3908 = vmul.f32 %v2192, %v3787
  %v3909 = vmul.f32 %v2197, %v3787
  %v3910 = vmul.f32 %v2200, %v3787
  %v3911 = vmul.f32 %v2205, %v3787
  %v3912 = vmul.f32 %v2208, %v3787
  %v3913 = vmul.f32 %v2213, %v3787
  %v3914 = vmul.f32 %v2216, %v3787
  %v3915 = vmul.f32 %v2221, %v3787
  %v3916 = vmul.f32 %v2224, %v3787
  %v3917 = vmul.f32 %v2229, %v3787
  %v3918 = vmul.f32 %v2232, %v3787
  %v3919 = vmul.f32 %v2237, %v3787
  %v3920 = vmul.f32 %v2240, %v3787
  %v3921 = vmul.f32 %v2245, %v3787
  %v3922 = vmul.f32 %v2248, %v3787
  %v3923 = vmul.f32 %v2253, %v3787
  %v3924 = vmul.f32 %v2256, %v3787
  %v3925 = vmul.f32 %v2261, %v3787
  %v3926 = vmul.f32 %v2264, %v3787
  %v3927 = vmul.f32 %v2269, %v3787
  %v3928 = vmul.f32 %v2272, %v3787
  %v3929 = vmul.f32 %v2277, %v3787
  %v3930 = vmul.f32 %v2280, %v3787
  %v3931 = vmul.f32 %v2285, %v3787
  %v3932 = vmul.f32 %v2288, %v3787
  %v3933 = vmul.f32 %v2293, %v3787
  %v3934 = vmul.f32 %v2296, %v3787
  %v3935 = vmul.f32 %v2301, %v3787
  %v3936 = vmul.f32 %v2304, %v3787
  %v3937 = vmul.f32 %v2309, %v3787
  %v3938 = vmul.f32 %v2312, %v3787
  %v3939 = vmul.f32 %v2317, %v3787
  %v3940 = vmul.f32 %v2320, %v3787
  %v3941 = vmul.f32 %v2325, %v3787
  %v3942 = vmul.f32 %v2328, %v3787
  %v3943 = vmul.f32 %v2333, %v3787
  %v3944 = vmul.f32 %v2336, %v3787
  %v3945 = vmul.f32 %v2341, %v3787
  %v3946 = vmul.f32 %v2344, %v3787
  %v3947 = vmul.f32 %v2349, %v3787
  %v3948 = vmul.f32 %v2352, %v3787
  %v3949 = vmul.f32 %v2357, %v3787
  %v3950 = vmul.f32 %v2360, %v3787
  %v3951 = vmul.f32 %v2365, %v3787
  %v3952 = vmul.f32 %v2368, %v3787
  %v3953 = vmul.f32 %v2373, %v3787
  %v3954 = vmul.f32 %v2376, %v3787
  %v3955 = vmul.f32 %v2381, %v3787
  %v3956 = vmul.f32 %v2384, %v3787
  %v3957 = vmul.f32 %v2389, %v3787
  %v3958 = vmul.f32 %v2392, %v3787
  %v3959 = vmul.f32 %v2397, %v3787
  %v3960 = vmul.f32 %v2400, %v3787
  %v3961 = vmul.f32 %v2405, %v3787
  %v3962 = vmul.f32 %v2408, %v3787
  %v3963 = vmul.f32 %v2413, %v3787
  %v3964 = vmul.f32 %v2416, %v3787
  %v3965 = vmul.f32 %v2421, %v3787
  %v3966 = vmul.f32 %v2424, %v3787
  %v3967 = vmul.f32 %v2429, %v3787
  %v3968 = vmul.f32 %v2432, %v3787
  %v3969 = vmul.f32 %v2437, %v3787
  %v3970 = vmul.f32 %v2440, %v3787
  %v3971 = vmul.f32 %v2445, %v3787
  %v3972 = vmul.f32 %v2448, %v3787
  %v3973 = vmul.f32 %v2453, %v3787
  %v3974 = vmul.f32 %v2456, %v3787
  %v3975 = vmul.f32 %v2461, %v3787
  %v3976 = vmul.f32 %v2464, %v3787
  %v3977 = vmul.f32 %v2469, %v3787
  %v3978 = vmul.f32 %v2472, %v3787
  %v3979 = vmul.f32 %v2477, %v3787
  %v3980 = vmul.f32 %v2480, %v3787
  %v3981 = vmul.f32 %v2485, %v3787
  %v3982 = vmul.f32 %v2488, %v3787
  %v3983 = vmul.f32 %v2493, %v3787
  %v3984 = vmul.f32 %v2496, %v3787
  %v3985 = vmul.f32 %v2501, %v3787
  %v3986 = vmul.f32 %v2504, %v3787
  %v3987 = vmul.f32 %v2509, %v3787
  %v3988 = vmul.f32 %v2512, %v3787
  %v3989 = vmul.f32 %v2517, %v3787
  %v3990 = vmul.f32 %v2520, %v3787
  %v3991 = vmul.f32 %v2525, %v3787
  %v3992 = vmul.f32 %v2528, %v3787
  %v3993 = vmul.f32 %v2533, %v3787
  %v3994 = vmul.f32 %v2536, %v3787
  %v3995 = vmul.f32 %v2541, %v3787
  %v3996 = vmul.f32 %v2544, %v3787
  %v3997 = vmul.f32 %v2549, %v3787
  %v3998 = vmul.f32 %v2552, %v3787
  %v3999 = vmul.f32 %v2557, %v3787
  %v4000 = vmul.f32 %v2560, %v3787
  %v4001 = vmul.f32 %v2565, %v3787
  %v4002 = vmul.f32 %v2568, %v3787
  %v4003 = vmul.f32 %v2573, %v3787
  %v4004 = vmul.f32 %v2576, %v3787
  %v4005 = vmul.f32 %v2581, %v3787
  %v4006 = vmul.f32 %v2584, %v3787
  %v4007 = vmul.f32 %v2589, %v3787
  %v4008 = vmul.f32 %v2592, %v3787
  %v4009 = vmul.f32 %v2597, %v3787
  %v4010 = vmul.f32 %v2600, %v3787
  %v4011 = vmul.f32 %v2605, %v3787
  %v4012 = vmul.f32 %v2608, %v3787
  %v4013 = vmul.f32 %v2613, %v3787
  %v4014 = vmul.f32 %v2616, %v3787
  %v4015 = vmul.f32 %v2621, %v3787
  %v4016 = vmul.f32 %v2624, %v3787
  %v4017 = vmul.f32 %v2629, %v3787
  %v4018 = vmul.f32 %v2632, %v3787
  %v4019 = vmul.f32 %v2637, %v3787
  %v4020 = vmul.f32 %v2640, %v3787
  %v4021 = vmul.f32 %v2645, %v3787
  %v4022 = vmul.f32 %v2648, %v3787
  %v4023 = vmul.f32 %v2653, %v3787
  %v4024 = vmul.f32 %v2656, %v3787
  %v4025 = vmul.f32 %v2661, %v3787
  %v4026 = vmul.f32 %v2664, %v3787
  %v4027 = vmul.f32 %v2669, %v3787
  %v4028 = vmul.f32 %v2672, %v3787
  %v4029 = vmul.f32 %v2677, %v3787
  %v4030 = vmul.f32 %v2680, %v3787
  %v4031 = vmul.f32 %v2685, %v3787
  %v4032 = vmul.f32 %v2688, %v3787
  %v4033 = vmul.f32 %v2693, %v3787
  %v4034 = vmul.f32 %v2696, %v3787
  %v4035 = vmul.f32 %v2701, %v3787
  %v4036 = vmul.f32 %v2704, %v3787
  %v4037 = vmul.f32 %v2709, %v3787
  %v4038 = vmul.f32 %v2712, %v3787
  %v4039 = vmul.f32 %v2717, %v3787
  %v4040 = vmul.f32 %v2720, %v3787
  %v4041 = vmul.f32 %v2725, %v3787
  %v4042 = vmul.f32 %v2728, %v3787
  %v4043 = vmul.f32 %v2733, %v3787
  %v4044 = vmul.f32 %v2736, %v3787
  %v4046 = vlaneseq
  %v4047 = vshrl.u32 %v4046, 7
  %v4048 = vsub.s32 0, %v4047
  %v4049 = vrot.slane %v3782, %v4048
  %v4051 = vadd.f32 %v3789, %v4049
  %v4052 = vadd.f32 %v3790, %v4049
  %v4053 = vadd.f32 %v3791, %v4049
  %v4054 = vadd.f32 %v3792, %v4049
  %v4055 = vadd.f32 %v3793, %v4049
  %v4056 = vadd.f32 %v3794, %v4049
  %v4057 = vadd.f32 %v3795, %v4049
  %v4058 = vadd.f32 %v3796, %v4049
  %v4059 = vadd.f32 %v3797, %v4049
  %v4060 = vadd.f32 %v3798, %v4049
  %v4061 = vadd.f32 %v3799, %v4049
  %v4062 = vadd.f32 %v3800, %v4049
  %v4063 = vadd.f32 %v3801, %v4049
  %v4064 = vadd.f32 %v3802, %v4049
  %v4065 = vadd.f32 %v3803, %v4049
  %v4066 = vadd.f32 %v3804, %v4049
  %v4067 = vadd.f32 %v3805, %v4049
  %v4068 = vadd.f32 %v3806, %v4049
  %v4069 = vadd.f32 %v3807, %v4049
  %v4070 = vadd.f32 %v3808, %v4049
  %v4071 = vadd.f32 %v3809, %v4049
  %v4072 = vadd.f32 %v3810, %v4049
  %v4073 = vadd.f32 %v3811, %v4049
  %v4074 = vadd.f32 %v3812, %v4049
  %v4075 = vadd.f32 %v3813, %v4049
  %v4076 = vadd.f32 %v3814, %v4049
  %v4077 = vadd.f32 %v3815, %v4049
  %v4078 = vadd.f32 %v3816, %v4049
  %v4079 = vadd.f32 %v3817, %v4049
  %v4080 = vadd.f32 %v3818, %v4049
  %v4081 = vadd.f32 %v3819, %v4049
  %v4082 = vadd.f32 %v3820, %v4049
  %v4083 = vadd.f32 %v3821, %v4049
  %v4084 = vadd.f32 %v3822, %v4049
  %v4085 = vadd.f32 %v3823, %v4049
  %v4086 = vadd.f32 %v3824, %v4049
  %v4087 = vadd.f32 %v3825, %v4049
  %v4088 = vadd.f32 %v3826, %v4049
  %v4089 = vadd.f32 %v3827, %v4049
  %v4090 = vadd.f32 %v3828, %v4049
  %v4091 = vadd.f32 %v3829, %v4049
  %v4092 = vadd.f32 %v3830, %v4049
  %v4093 = vadd.f32 %v3831, %v4049
  %v4094 = vadd.f32 %v3832, %v4049
  %v4095 = vadd.f32 %v3833, %v4049
  %v4096 = vadd.f32 %v3834, %v4049
  %v4097 = vadd.f32 %v3835, %v4049
  %v4098 = vadd.f32 %v3836, %v4049
  %v4099 = vadd.f32 %v3837, %v4049
  %v4100 = vadd.f32 %v3838, %v4049
  %v4101 = vadd.f32 %v3839, %v4049
  %v4102 = vadd.f32 %v3840, %v4049
  %v4103 = vadd.f32 %v3841, %v4049
  %v4104 = vadd.f32 %v3842, %v4049
  %v4105 = vadd.f32 %v3843, %v4049
  %v4106 = vadd.f32 %v3844, %v4049
  %v4107 = vadd.f32 %v3845, %v4049
  %v4108 = vadd.f32 %v3846, %v4049
  %v4109 = vadd.f32 %v3847, %v4049
  %v4110 = vadd.f32 %v3848, %v4049
  %v4111 = vadd.f32 %v3849, %v4049
  %v4112 = vadd.f32 %v3850, %v4049
  %v4113 = vadd.f32 %v3851, %v4049
  %v4114 = vadd.f32 %v3852, %v4049
  %v4115 = vadd.f32 %v3853, %v4049
  %v4116 = vadd.f32 %v3854, %v4049
  %v4117 = vadd.f32 %v3855, %v4049
  %v4118 = vadd.f32 %v3856, %v4049
  %v4119 = vadd.f32 %v3857, %v4049
  %v4120 = vadd.f32 %v3858, %v4049
  %v4121 = vadd.f32 %v3859, %v4049
  %v4122 = vadd.f32 %v3860, %v4049
  %v4123 = vadd.f32 %v3861, %v4049
  %v4124 = vadd.f32 %v3862, %v4049
  %v4125 = vadd.f32 %v3863, %v4049
  %v4126 = vadd.f32 %v3864, %v4049
  %v4127 = vadd.f32 %v3865, %v4049
  %v4128 = vadd.f32 %v3866, %v4049
  %v4129 = vadd.f32 %v3867, %v4049
  %v4130 = vadd.f32 %v3868, %v4049
  %v4131 = vadd.f32 %v3869, %v4049
  %v4132 = vadd.f32 %v3870, %v4049
  %v4133 = vadd.f32 %v3871, %v4049
  %v4134 = vadd.f32 %v3872, %v4049
  %v4135 = vadd.f32 %v3873, %v4049
  %v4136 = vadd.f32 %v3874, %v4049
  %v4137 = vadd.f32 %v3875, %v4049
  %v4138 = vadd.f32 %v3876, %v4049
  %v4139 = vadd.f32 %v3877, %v4049
  %v4140 = vadd.f32 %v3878, %v4049
  %v4141 = vadd.f32 %v3879, %v4049
  %v4142 = vadd.f32 %v3880, %v4049
  %v4143 = vadd.f32 %v3881, %v4049
  %v4144 = vadd.f32 %v3882, %v4049
  %v4145 = vadd.f32 %v3883, %v4049
  %v4146 = vadd.f32 %v3884, %v4049
  %v4147 = vadd.f32 %v3885, %v4049
  %v4148 = vadd.f32 %v3886, %v4049
  %v4149 = vadd.f32 %v3887, %v4049
  %v4150 = vadd.f32 %v3888, %v4049
  %v4151 = vadd.f32 %v3889, %v4049
  %v4152 = vadd.f32 %v3890, %v4049
  %v4153 = vadd.f32 %v3891, %v4049
  %v4154 = vadd.f32 %v3892, %v4049
  %v4155 = vadd.f32 %v3893, %v4049
  %v4156 = vadd.f32 %v3894, %v4049
  %v4157 = vadd.f32 %v3895, %v4049
  %v4158 = vadd.f32 %v3896, %v4049
  %v4159 = vadd.f32 %v3897, %v4049
  %v4160 = vadd.f32 %v3898, %v4049
  %v4161 = vadd.f32 %v3899, %v4049
  %v4162 = vadd.f32 %v3900, %v4049
  %v4163 = vadd.f32 %v3901, %v4049
  %v4164 = vadd.f32 %v3902, %v4049
  %v4165 = vadd.f32 %v3903, %v4049
  %v4166 = vadd.f32 %v3904, %v4049
  %v4167 = vadd.f32 %v3905, %v4049
  %v4168 = vadd.f32 %v3906, %v4049
  %v4169 = vadd.f32 %v3907, %v4049
  %v4170 = vadd.f32 %v3908, %v4049
  %v4171 = vadd.f32 %v3909, %v4049
  %v4172 = vadd.f32 %v3910, %v4049
  %v4173 = vadd.f32 %v3911, %v4049
  %v4174 = vadd.f32 %v3912, %v4049
  %v4175 = vadd.f32 %v3913, %v4049
  %v4176 = vadd.f32 %v3914, %v4049
  %v4177 = vadd.f32 %v3915, %v4049
  %v4178 = vadd.f32 %v3916, %v4049
  %v4179 = vadd.f32 %v3917, %v4049
  %v4180 = vadd.f32 %v3918, %v4049
  %v4181 = vadd.f32 %v3919, %v4049
  %v4182 = vadd.f32 %v3920, %v4049
  %v4183 = vadd.f32 %v3921, %v4049
  %v4184 = vadd.f32 %v3922, %v4049
  %v4185 = vadd.f32 %v3923, %v4049
  %v4186 = vadd.f32 %v3924, %v4049
  %v4187 = vadd.f32 %v3925, %v4049
  %v4188 = vadd.f32 %v3926, %v4049
  %v4189 = vadd.f32 %v3927, %v4049
  %v4190 = vadd.f32 %v3928, %v4049
  %v4191 = vadd.f32 %v3929, %v4049
  %v4192 = vadd.f32 %v3930, %v4049
  %v4193 = vadd.f32 %v3931, %v4049
  %v4194 = vadd.f32 %v3932, %v4049
  %v4195 = vadd.f32 %v3933, %v4049
  %v4196 = vadd.f32 %v3934, %v4049
  %v4197 = vadd.f32 %v3935, %v4049
  %v4198 = vadd.f32 %v3936, %v4049
  %v4199 = vadd.f32 %v3937, %v4049
  %v4200 = vadd.f32 %v3938, %v4049
  %v4201 = vadd.f32 %v3939, %v4049
  %v4202 = vadd.f32 %v3940, %v4049
  %v4203 = vadd.f32 %v3941, %v4049
  %v4204 = vadd.f32 %v3942, %v4049
  %v4205 = vadd.f32 %v3943, %v4049
  %v4206 = vadd.f32 %v3944, %v4049
  %v4207 = vadd.f32 %v3945, %v4049
  %v4208 = vadd.f32 %v3946, %v4049
  %v4209 = vadd.f32 %v3947, %v4049
  %v4210 = vadd.f32 %v3948, %v4049
  %v4211 = vadd.f32 %v3949, %v4049
  %v4212 = vadd.f32 %v3950, %v4049
  %v4213 = vadd.f32 %v3951, %v4049
  %v4214 = vadd.f32 %v3952, %v4049
  %v4215 = vadd.f32 %v3953, %v4049
  %v4216 = vadd.f32 %v3954, %v4049
  %v4217 = vadd.f32 %v3955, %v4049
  %v4218 = vadd.f32 %v3956, %v4049
  %v4219 = vadd.f32 %v3957, %v4049
  %v4220 = vadd.f32 %v3958, %v4049
  %v4221 = vadd.f32 %v3959, %v4049
  %v4222 = vadd.f32 %v3960, %v4049
  %v4223 = vadd.f32 %v3961, %v4049
  %v4224 = vadd.f32 %v3962, %v4049
  %v4225 = vadd.f32 %v3963, %v4049
  %v4226 = vadd.f32 %v3964, %v4049
  %v4227 = vadd.f32 %v3965, %v4049
  %v4228 = vadd.f32 %v3966, %v4049
  %v4229 = vadd.f32 %v3967, %v4049
  %v4230 = vadd.f32 %v3968, %v4049
  %v4231 = vadd.f32 %v3969, %v4049
  %v4232 = vadd.f32 %v3970, %v4049
  %v4233 = vadd.f32 %v3971, %v4049
  %v4234 = vadd.f32 %v3972, %v4049
  %v4235 = vadd.f32 %v3973, %v4049
  %v4236 = vadd.f32 %v3974, %v4049
  %v4237 = vadd.f32 %v3975, %v4049
  %v4238 = vadd.f32 %v3976, %v4049
  %v4239 = vadd.f32 %v3977, %v4049
  %v4240 = vadd.f32 %v3978, %v4049
  %v4241 = vadd.f32 %v3979, %v4049
  %v4242 = vadd.f32 %v3980, %v4049
  %v4243 = vadd.f32 %v3981, %v4049
  %v4244 = vadd.f32 %v3982, %v4049
  %v4245 = vadd.f32 %v3983, %v4049
  %v4246 = vadd.f32 %v3984, %v4049
  %v4247 = vadd.f32 %v3985, %v4049
  %v4248 = vadd.f32 %v3986, %v4049
  %v4249 = vadd.f32 %v3987, %v4049
  %v4250 = vadd.f32 %v3988, %v4049
  %v4251 = vadd.f32 %v3989, %v4049
  %v4252 = vadd.f32 %v3990, %v4049
  %v4253 = vadd.f32 %v3991, %v4049
  %v4254 = vadd.f32 %v3992, %v4049
  %v4255 = vadd.f32 %v3993, %v4049
  %v4256 = vadd.f32 %v3994, %v4049
  %v4257 = vadd.f32 %v3995, %v4049
  %v4258 = vadd.f32 %v3996, %v4049
  %v4259 = vadd.f32 %v3997, %v4049
  %v4260 = vadd.f32 %v3998, %v4049
  %v4261 = vadd.f32 %v3999, %v4049
  %v4262 = vadd.f32 %v4000, %v4049
  %v4263 = vadd.f32 %v4001, %v4049
  %v4264 = vadd.f32 %v4002, %v4049
  %v4265 = vadd.f32 %v4003, %v4049
  %v4266 = vadd.f32 %v4004, %v4049
  %v4267 = vadd.f32 %v4005, %v4049
  %v4268 = vadd.f32 %v4006, %v4049
  %v4269 = vadd.f32 %v4007, %v4049
  %v4270 = vadd.f32 %v4008, %v4049
  %v4271 = vadd.f32 %v4009, %v4049
  %v4272 = vadd.f32 %v4010, %v4049
  %v4273 = vadd.f32 %v4011, %v4049
  %v4274 = vadd.f32 %v4012, %v4049
  %v4275 = vadd.f32 %v4013, %v4049
  %v4276 = vadd.f32 %v4014, %v4049
  %v4277 = vadd.f32 %v4015, %v4049
  %v4278 = vadd.f32 %v4016, %v4049
  %v4279 = vadd.f32 %v4017, %v4049
  %v4280 = vadd.f32 %v4018, %v4049
  %v4281 = vadd.f32 %v4019, %v4049
  %v4282 = vadd.f32 %v4020, %v4049
  %v4283 = vadd.f32 %v4021, %v4049
  %v4284 = vadd.f32 %v4022, %v4049
  %v4285 = vadd.f32 %v4023, %v4049
  %v4286 = vadd.f32 %v4024, %v4049
  %v4287 = vadd.f32 %v4025, %v4049
  %v4288 = vadd.f32 %v4026, %v4049
  %v4289 = vadd.f32 %v4027, %v4049
  %v4290 = vadd.f32 %v4028, %v4049
  %v4291 = vadd.f32 %v4029, %v4049
  %v4292 = vadd.f32 %v4030, %v4049
  %v4293 = vadd.f32 %v4031, %v4049
  %v4294 = vadd.f32 %v4032, %v4049
  %v4295 = vadd.f32 %v4033, %v4049
  %v4296 = vadd.f32 %v4034, %v4049
  %v4297 = vadd.f32 %v4035, %v4049
  %v4298 = vadd.f32 %v4036, %v4049
  %v4299 = vadd.f32 %v4037, %v4049
  %v4300 = vadd.f32 %v4038, %v4049
  %v4301 = vadd.f32 %v4039, %v4049
  %v4302 = vadd.f32 %v4040, %v4049
  %v4303 = vadd.f32 %v4041, %v4049
  %v4304 = vadd.f32 %v4042, %v4049
  %v4305 = vadd.f32 %v4043, %v4049
  %v4306 = vadd.f32 %v4044, %v4049
  %v4307 = vmax.f32 %v4051, 0.0
  %v4308 = vmax.f32 %v4052, 0.0
  %v4309 = vmax.f32 %v4053, 0.0
  %v4310 = vmax.f32 %v4054, 0.0
  %v4311 = vmax.f32 %v4055, 0.0
  %v4312 = vmax.f32 %v4056, 0.0
  %v4313 = vmax.f32 %v4057, 0.0
  %v4314 = vmax.f32 %v4058, 0.0
  %v4315 = vmax.f32 %v4059, 0.0
  %v4316 = vmax.f32 %v4060, 0.0
  %v4317 = vmax.f32 %v4061, 0.0
  %v4318 = vmax.f32 %v4062, 0.0
  %v4319 = vmax.f32 %v4063, 0.0
  %v4320 = vmax.f32 %v4064, 0.0
  %v4321 = vmax.f32 %v4065, 0.0
  %v4322 = vmax.f32 %v4066, 0.0
  %v4323 = vmax.f32 %v4067, 0.0
  %v4324 = vmax.f32 %v4068, 0.0
  %v4325 = vmax.f32 %v4069, 0.0
  %v4326 = vmax.f32 %v4070, 0.0
  %v4327 = vmax.f32 %v4071, 0.0
  %v4328 = vmax.f32 %v4072, 0.0
  %v4329 = vmax.f32 %v4073, 0.0
  %v4330 = vmax.f32 %v4074, 0.0
  %v4331 = vmax.f32 %v4075, 0.0
  %v4332 = vmax.f32 %v4076, 0.0
  %v4333 = vmax.f32 %v4077, 0.0
  %v4334 = vmax.f32 %v4078, 0.0
  %v4335 = vmax.f32 %v4079, 0.0
  %v4336 = vmax.f32 %v4080, 0.0
  %v4337 = vmax.f32 %v4081, 0.0
  %v4338 = vmax.f32 %v4082, 0.0
  %v4339 = vmax.f32 %v4083, 0.0
  %v4340 = vmax.f32 %v4084, 0.0
  %v4341 = vmax.f32 %v4085, 0.0
  %v4342 = vmax.f32 %v4086, 0.0
  %v4343 = vmax.f32 %v4087, 0.0
  %v4344 = vmax.f32 %v4088, 0.0
  %v4345 = vmax.f32 %v4089, 0.0
  %v4346 = vmax.f32 %v4090, 0.0
  %v4347 = vmax.f32 %v4091, 0.0
  %v4348 = vmax.f32 %v4092, 0.0
  %v4349 = vmax.f32 %v4093, 0.0
  %v4350 = vmax.f32 %v4094, 0.0
  %v4351 = vmax.f32 %v4095, 0.0
  %v4352 = vmax.f32 %v4096, 0.0
  %v4353 = vmax.f32 %v4097, 0.0
  %v4354 = vmax.f32 %v4098, 0.0
  %v4355 = vmax.f32 %v4099, 0.0
  %v4356 = vmax.f32 %v4100, 0.0
  %v4357 = vmax.f32 %v4101, 0.0
  %v4358 = vmax.f32 %v4102, 0.0
  %v4359 = vmax.f32 %v4103, 0.0
  %v4360 = vmax.f32 %v4104, 0.0
  %v4361 = vmax.f32 %v4105, 0.0
  %v4362 = vmax.f32 %v4106, 0.0
  %v4363 = vmax.f32 %v4107, 0.0
  %v4364 = vmax.f32 %v4108, 0.0
  %v4365 = vmax.f32 %v4109, 0.0
  %v4366 = vmax.f32 %v4110, 0.0
  %v4367 = vmax.f32 %v4111, 0.0
  %v4368 = vmax.f32 %v4112, 0.0
  %v4369 = vmax.f32 %v4113, 0.0
  %v4370 = vmax.f32 %v4114, 0.0
  %v4371 = vmax.f32 %v4115, 0.0
  %v4372 = vmax.f32 %v4116, 0.0
  %v4373 = vmax.f32 %v4117, 0.0
  %v4374 = vmax.f32 %v4118, 0.0
  %v4375 = vmax.f32 %v4119, 0.0
  %v4376 = vmax.f32 %v4120, 0.0
  %v4377 = vmax.f32 %v4121, 0.0
  %v4378 = vmax.f32 %v4122, 0.0
  %v4379 = vmax.f32 %v4123, 0.0
  %v4380 = vmax.f32 %v4124, 0.0
  %v4381 = vmax.f32 %v4125, 0.0
  %v4382 = vmax.f32 %v4126, 0.0
  %v4383 = vmax.f32 %v4127, 0.0
  %v4384 = vmax.f32 %v4128, 0.0
  %v4385 = vmax.f32 %v4129, 0.0
  %v4386 = vmax.f32 %v4130, 0.0
  %v4387 = vmax.f32 %v4131, 0.0
  %v4388 = vmax.f32 %v4132, 0.0
  %v4389 = vmax.f32 %v4133, 0.0
  %v4390 = vmax.f32 %v4134, 0.0
  %v4391 = vmax.f32 %v4135, 0.0
  %v4392 = vmax.f32 %v4136, 0.0
  %v4393 = vmax.f32 %v4137, 0.0
  %v4394 = vmax.f32 %v4138, 0.0
  %v4395 = vmax.f32 %v4139, 0.0
  %v4396 = vmax.f32 %v4140, 0.0
  %v4397 = vmax.f32 %v4141, 0.0
  %v4398 = vmax.f32 %v4142, 0.0
  %v4399 = vmax.f32 %v4143, 0.0
  %v4400 = vmax.f32 %v4144, 0.0
  %v4401 = vmax.f32 %v4145, 0.0
  %v4402 = vmax.f32 %v4146, 0.0
  %v4403 = vmax.f32 %v4147, 0.0
  %v4404 = vmax.f32 %v4148, 0.0
  %v4405 = vmax.f32 %v4149, 0.0
  %v4406 = vmax.f32 %v4150, 0.0
  %v4407 = vmax.f32 %v4151, 0.0
  %v4408 = vmax.f32 %v4152, 0.0
  %v4409 = vmax.f32 %v4153, 0.0
  %v4410 = vmax.f32 %v4154, 0.0
  %v4411 = vmax.f32 %v4155, 0.0
  %v4412 = vmax.f32 %v4156, 0.0
  %v4413 = vmax.f32 %v4157, 0.0
  %v4414 = vmax.f32 %v4158, 0.0
  %v4415 = vmax.f32 %v4159, 0.0
  %v4416 = vmax.f32 %v4160, 0.0
  %v4417 = vmax.f32 %v4161, 0.0
  %v4418 = vmax.f32 %v4162, 0.0
  %v4419 = vmax.f32 %v4163, 0.0
  %v4420 = vmax.f32 %v4164, 0.0
  %v4421 = vmax.f32 %v4165, 0.0
  %v4422 = vmax.f32 %v4166, 0.0
  %v4423 = vmax.f32 %v4167, 0.0
  %v4424 = vmax.f32 %v4168, 0.0
  %v4425 = vmax.f32 %v4169, 0.0
  %v4426 = vmax.f32 %v4170, 0.0
  %v4427 = vmax.f32 %v4171, 0.0
  %v4428 = vmax.f32 %v4172, 0.0
  %v4429 = vmax.f32 %v4173, 0.0
  %v4430 = vmax.f32 %v4174, 0.0
  %v4431 = vmax.f32 %v4175, 0.0
  %v4432 = vmax.f32 %v4176, 0.0
  %v4433 = vmax.f32 %v4177, 0.0
  %v4434 = vmax.f32 %v4178, 0.0
  %v4435 = vmax.f32 %v4179, 0.0
  %v4436 = vmax.f32 %v4180, 0.0
  %v4437 = vmax.f32 %v4181, 0.0
  %v4438 = vmax.f32 %v4182, 0.0
  %v4439 = vmax.f32 %v4183, 0.0
  %v4440 = vmax.f32 %v4184, 0.0
  %v4441 = vmax.f32 %v4185, 0.0
  %v4442 = vmax.f32 %v4186, 0.0
  %v4443 = vmax.f32 %v4187, 0.0
  %v4444 = vmax.f32 %v4188, 0.0
  %v4445 = vmax.f32 %v4189, 0.0
  %v4446 = vmax.f32 %v4190, 0.0
  %v4447 = vmax.f32 %v4191, 0.0
  %v4448 = vmax.f32 %v4192, 0.0
  %v4449 = vmax.f32 %v4193, 0.0
  %v4450 = vmax.f32 %v4194, 0.0
  %v4451 = vmax.f32 %v4195, 0.0
  %v4452 = vmax.f32 %v4196, 0.0
  %v4453 = vmax.f32 %v4197, 0.0
  %v4454 = vmax.f32 %v4198, 0.0
  %v4455 = vmax.f32 %v4199, 0.0
  %v4456 = vmax.f32 %v4200, 0.0
  %v4457 = vmax.f32 %v4201, 0.0
  %v4458 = vmax.f32 %v4202, 0.0
  %v4459 = vmax.f32 %v4203, 0.0
  %v4460 = vmax.f32 %v4204, 0.0
  %v4461 = vmax.f32 %v4205, 0.0
  %v4462 = vmax.f32 %v4206, 0.0
  %v4463 = vmax.f32 %v4207, 0.0
  %v4464 = vmax.f32 %v4208, 0.0
  %v4465 = vmax.f32 %v4209, 0.0
  %v4466 = vmax.f32 %v4210, 0.0
  %v4467 = vmax.f32 %v4211, 0.0
  %v4468 = vmax.f32 %v4212, 0.0
  %v4469 = vmax.f32 %v4213, 0.0
  %v4470 = vmax.f32 %v4214, 0.0
  %v4471 = vmax.f32 %v4215, 0.0
  %v4472 = vmax.f32 %v4216, 0.0
  %v4473 = vmax.f32 %v4217, 0.0
  %v4474 = vmax.f32 %v4218, 0.0
  %v4475 = vmax.f32 %v4219, 0.0
  %v4476 = vmax.f32 %v4220, 0.0
  %v4477 = vmax.f32 %v4221, 0.0
  %v4478 = vmax.f32 %v4222, 0.0
  %v4479 = vmax.f32 %v4223, 0.0
  %v4480 = vmax.f32 %v4224, 0.0
  %v4481 = vmax.f32 %v4225, 0.0
  %v4482 = vmax.f32 %v4226, 0.0
  %v4483 = vmax.f32 %v4227, 0.0
  %v4484 = vmax.f32 %v4228, 0.0
  %v4485 = vmax.f32 %v4229, 0.0
  %v4486 = vmax.f32 %v4230, 0.0
  %v4487 = vmax.f32 %v4231, 0.0
  %v4488 = vmax.f32 %v4232, 0.0
  %v4489 = vmax.f32 %v4233, 0.0
  %v4490 = vmax.f32 %v4234, 0.0
  %v4491 = vmax.f32 %v4235, 0.0
  %v4492 = vmax.f32 %v4236, 0.0
  %v4493 = vmax.f32 %v4237, 0.0
  %v4494 = vmax.f32 %v4238, 0.0
  %v4495 = vmax.f32 %v4239, 0.0
  %v4496 = vmax.f32 %v4240, 0.0
  %v4497 = vmax.f32 %v4241, 0.0
  %v4498 = vmax.f32 %v4242, 0.0
  %v4499 = vmax.f32 %v4243, 0.0
  %v4500 = vmax.f32 %v4244, 0.0
  %v4501 = vmax.f32 %v4245, 0.0
  %v4502 = vmax.f32 %v4246, 0.0
  %v4503 = vmax.f32 %v4247, 0.0
  %v4504 = vmax.f32 %v4248, 0.0
  %v4505 = vmax.f32 %v4249, 0.0
  %v4506 = vmax.f32 %v4250, 0.0
  %v4507 = vmax.f32 %v4251, 0.0
  %v4508 = vmax.f32 %v4252, 0.0
  %v4509 = vmax.f32 %v4253, 0.0
  %v4510 = vmax.f32 %v4254, 0.0
  %v4511 = vmax.f32 %v4255, 0.0
  %v4512 = vmax.f32 %v4256, 0.0
  %v4513 = vmax.f32 %v4257, 0.0
  %v4514 = vmax.f32 %v4258, 0.0
  %v4515 = vmax.f32 %v4259, 0.0
  %v4516 = vmax.f32 %v4260, 0.0
  %v4517 = vmax.f32 %v4261, 0.0
  %v4518 = vmax.f32 %v4262, 0.0
  %v4519 = vmax.f32 %v4263, 0.0
  %v4520 = vmax.f32 %v4264, 0.0
  %v4521 = vmax.f32 %v4265, 0.0
  %v4522 = vmax.f32 %v4266, 0.0
  %v4523 = vmax.f32 %v4267, 0.0
  %v4524 = vmax.f32 %v4268, 0.0
  %v4525 = vmax.f32 %v4269, 0.0
  %v4526 = vmax.f32 %v4270, 0.0
  %v4527 = vmax.f32 %v4271, 0.0
  %v4528 = vmax.f32 %v4272, 0.0
  %v4529 = vmax.f32 %v4273, 0.0
  %v4530 = vmax.f32 %v4274, 0.0
  %v4531 = vmax.f32 %v4275, 0.0
  %v4532 = vmax.f32 %v4276, 0.0
  %v4533 = vmax.f32 %v4277, 0.0
  %v4534 = vmax.f32 %v4278, 0.0
  %v4535 = vmax.f32 %v4279, 0.0
  %v4536 = vmax.f32 %v4280, 0.0
  %v4537 = vmax.f32 %v4281, 0.0
  %v4538 = vmax.f32 %v4282, 0.0
  %v4539 = vmax.f32 %v4283, 0.0
  %v4540 = vmax.f32 %v4284, 0.0
  %v4541 = vmax.f32 %v4285, 0.0
  %v4542 = vmax.f32 %v4286, 0.0
  %v4543 = vmax.f32 %v4287, 0.0
  %v4544 = vmax.f32 %v4288, 0.0
  %v4545 = vmax.f32 %v4289, 0.0
  %v4546 = vmax.f32 %v4290, 0.0
  %v4547 = vmax.f32 %v4291, 0.0
  %v4548 = vmax.f32 %v4292, 0.0
  %v4549 = vmax.f32 %v4293, 0.0
  %v4550 = vmax.f32 %v4294, 0.0
  %v4551 = vmax.f32 %v4295, 0.0
  %v4552 = vmax.f32 %v4296, 0.0
  %v4553 = vmax.f32 %v4297, 0.0
  %v4554 = vmax.f32 %v4298, 0.0
  %v4555 = vmax.f32 %v4299, 0.0
  %v4556 = vmax.f32 %v4300, 0.0
  %v4557 = vmax.f32 %v4301, 0.0
  %v4558 = vmax.f32 %v4302, 0.0
  %v4559 = vmax.f32 %v4303, 0.0
  %v4560 = vmax.f32 %v4304, 0.0
  %v4561 = vmax.f32 %v4305, 0.0
  %v4562 = vmax.f32 %v4306, 0.0
  %v4563 = vpack.c.bf16 %v4308, %v4307
  %v4564 = vpack.c.bf16 %v4310, %v4309
  %v4565 = vpack.c.bf16 %v4312, %v4311
  %v4566 = vpack.c.bf16 %v4314, %v4313
  %v4567 = vpack.c.bf16 %v4316, %v4315
  %v4568 = vpack.c.bf16 %v4318, %v4317
  %v4569 = vpack.c.bf16 %v4320, %v4319
  %v4570 = vpack.c.bf16 %v4322, %v4321
  %v4571 = vpack.c.bf16 %v4324, %v4323
  %v4572 = vpack.c.bf16 %v4326, %v4325
  %v4573 = vpack.c.bf16 %v4328, %v4327
  %v4574 = vpack.c.bf16 %v4330, %v4329
  %v4575 = vpack.c.bf16 %v4332, %v4331
  %v4576 = vpack.c.bf16 %v4334, %v4333
  %v4577 = vpack.c.bf16 %v4336, %v4335
  %v4578 = vpack.c.bf16 %v4338, %v4337
  %v4579 = vpack.c.bf16 %v4340, %v4339
  %v4580 = vpack.c.bf16 %v4342, %v4341
  %v4581 = vpack.c.bf16 %v4344, %v4343
  %v4582 = vpack.c.bf16 %v4346, %v4345
  %v4583 = vpack.c.bf16 %v4348, %v4347
  %v4584 = vpack.c.bf16 %v4350, %v4349
  %v4585 = vpack.c.bf16 %v4352, %v4351
  %v4586 = vpack.c.bf16 %v4354, %v4353
  %v4587 = vpack.c.bf16 %v4356, %v4355
  %v4588 = vpack.c.bf16 %v4358, %v4357
  %v4589 = vpack.c.bf16 %v4360, %v4359
  %v4590 = vpack.c.bf16 %v4362, %v4361
  %v4591 = vpack.c.bf16 %v4364, %v4363
  %v4592 = vpack.c.bf16 %v4366, %v4365
  %v4593 = vpack.c.bf16 %v4368, %v4367
  %v4594 = vpack.c.bf16 %v4370, %v4369
  %v4595 = vpack.c.bf16 %v4372, %v4371
  %v4596 = vpack.c.bf16 %v4374, %v4373
  %v4597 = vpack.c.bf16 %v4376, %v4375
  %v4598 = vpack.c.bf16 %v4378, %v4377
  %v4599 = vpack.c.bf16 %v4380, %v4379
  %v4600 = vpack.c.bf16 %v4382, %v4381
  %v4601 = vpack.c.bf16 %v4384, %v4383
  %v4602 = vpack.c.bf16 %v4386, %v4385
  %v4603 = vpack.c.bf16 %v4388, %v4387
  %v4604 = vpack.c.bf16 %v4390, %v4389
  %v4605 = vpack.c.bf16 %v4392, %v4391
  %v4606 = vpack.c.bf16 %v4394, %v4393
  %v4607 = vpack.c.bf16 %v4396, %v4395
  %v4608 = vpack.c.bf16 %v4398, %v4397
  %v4609 = vpack.c.bf16 %v4400, %v4399
  %v4610 = vpack.c.bf16 %v4402, %v4401
  %v4611 = vpack.c.bf16 %v4404, %v4403
  %v4612 = vpack.c.bf16 %v4406, %v4405
  %v4613 = vpack.c.bf16 %v4408, %v4407
  %v4614 = vpack.c.bf16 %v4410, %v4409
  %v4615 = vpack.c.bf16 %v4412, %v4411
  %v4616 = vpack.c.bf16 %v4414, %v4413
  %v4617 = vpack.c.bf16 %v4416, %v4415
  %v4618 = vpack.c.bf16 %v4418, %v4417
  %v4619 = vpack.c.bf16 %v4420, %v4419
  %v4620 = vpack.c.bf16 %v4422, %v4421
  %v4621 = vpack.c.bf16 %v4424, %v4423
  %v4622 = vpack.c.bf16 %v4426, %v4425
  %v4623 = vpack.c.bf16 %v4428, %v4427
  %v4624 = vpack.c.bf16 %v4430, %v4429
  %v4625 = vpack.c.bf16 %v4432, %v4431
  %v4626 = vpack.c.bf16 %v4434, %v4433
  %v4627 = vpack.c.bf16 %v4436, %v4435
  %v4628 = vpack.c.bf16 %v4438, %v4437
  %v4629 = vpack.c.bf16 %v4440, %v4439
  %v4630 = vpack.c.bf16 %v4442, %v4441
  %v4631 = vpack.c.bf16 %v4444, %v4443
  %v4632 = vpack.c.bf16 %v4446, %v4445
  %v4633 = vpack.c.bf16 %v4448, %v4447
  %v4634 = vpack.c.bf16 %v4450, %v4449
  %v4635 = vpack.c.bf16 %v4452, %v4451
  %v4636 = vpack.c.bf16 %v4454, %v4453
  %v4637 = vpack.c.bf16 %v4456, %v4455
  %v4638 = vpack.c.bf16 %v4458, %v4457
  %v4639 = vpack.c.bf16 %v4460, %v4459
  %v4640 = vpack.c.bf16 %v4462, %v4461
  %v4641 = vpack.c.bf16 %v4464, %v4463
  %v4642 = vpack.c.bf16 %v4466, %v4465
  %v4643 = vpack.c.bf16 %v4468, %v4467
  %v4644 = vpack.c.bf16 %v4470, %v4469
  %v4645 = vpack.c.bf16 %v4472, %v4471
  %v4646 = vpack.c.bf16 %v4474, %v4473
  %v4647 = vpack.c.bf16 %v4476, %v4475
  %v4648 = vpack.c.bf16 %v4478, %v4477
  %v4649 = vpack.c.bf16 %v4480, %v4479
  %v4650 = vpack.c.bf16 %v4482, %v4481
  %v4651 = vpack.c.bf16 %v4484, %v4483
  %v4652 = vpack.c.bf16 %v4486, %v4485
  %v4653 = vpack.c.bf16 %v4488, %v4487
  %v4654 = vpack.c.bf16 %v4490, %v4489
  %v4655 = vpack.c.bf16 %v4492, %v4491
  %v4656 = vpack.c.bf16 %v4494, %v4493
  %v4657 = vpack.c.bf16 %v4496, %v4495
  %v4658 = vpack.c.bf16 %v4498, %v4497
  %v4659 = vpack.c.bf16 %v4500, %v4499
  %v4660 = vpack.c.bf16 %v4502, %v4501
  %v4661 = vpack.c.bf16 %v4504, %v4503
  %v4662 = vpack.c.bf16 %v4506, %v4505
  %v4663 = vpack.c.bf16 %v4508, %v4507
  %v4664 = vpack.c.bf16 %v4510, %v4509
  %v4665 = vpack.c.bf16 %v4512, %v4511
  %v4666 = vpack.c.bf16 %v4514, %v4513
  %v4667 = vpack.c.bf16 %v4516, %v4515
  %v4668 = vpack.c.bf16 %v4518, %v4517
  %v4669 = vpack.c.bf16 %v4520, %v4519
  %v4670 = vpack.c.bf16 %v4522, %v4521
  %v4671 = vpack.c.bf16 %v4524, %v4523
  %v4672 = vpack.c.bf16 %v4526, %v4525
  %v4673 = vpack.c.bf16 %v4528, %v4527
  %v4674 = vpack.c.bf16 %v4530, %v4529
  %v4675 = vpack.c.bf16 %v4532, %v4531
  %v4676 = vpack.c.bf16 %v4534, %v4533
  %v4677 = vpack.c.bf16 %v4536, %v4535
  %v4678 = vpack.c.bf16 %v4538, %v4537
  %v4679 = vpack.c.bf16 %v4540, %v4539
  %v4680 = vpack.c.bf16 %v4542, %v4541
  %v4681 = vpack.c.bf16 %v4544, %v4543
  %v4682 = vpack.c.bf16 %v4546, %v4545
  %v4683 = vpack.c.bf16 %v4548, %v4547
  %v4684 = vpack.c.bf16 %v4550, %v4549
  %v4685 = vpack.c.bf16 %v4552, %v4551
  %v4686 = vpack.c.bf16 %v4554, %v4553
  %v4687 = vpack.c.bf16 %v4556, %v4555
  %v4688 = vpack.c.bf16 %v4558, %v4557
  %v4689 = vpack.c.bf16 %v4560, %v4559
  %v4690 = vpack.c.bf16 %v4562, %v4561
  %v4819 = vunpack.c.l.b16 %v4563
  %v4820 = vunpack.c.h.b16 %v4563
  %v4821 = vunpack.c.l.b16 %v4564
  %v4822 = vunpack.c.h.b16 %v4564
  %v4823 = vunpack.c.l.b16 %v4565
  %v4824 = vunpack.c.h.b16 %v4565
  %v4825 = vunpack.c.l.b16 %v4566
  %v4826 = vunpack.c.h.b16 %v4566
  %v4827 = vunpack.c.l.b16 %v4567
  %v4828 = vunpack.c.h.b16 %v4567
  %v4829 = vunpack.c.l.b16 %v4568
  %v4830 = vunpack.c.h.b16 %v4568
  %v4831 = vunpack.c.l.b16 %v4569
  %v4832 = vunpack.c.h.b16 %v4569
  %v4833 = vunpack.c.l.b16 %v4570
  %v4834 = vunpack.c.h.b16 %v4570
  %v4835 = vunpack.c.l.b16 %v4571
  %v4836 = vunpack.c.h.b16 %v4571
  %v4837 = vunpack.c.l.b16 %v4572
  %v4838 = vunpack.c.h.b16 %v4572
  %v4839 = vunpack.c.l.b16 %v4573
  %v4840 = vunpack.c.h.b16 %v4573
  %v4841 = vunpack.c.l.b16 %v4574
  %v4842 = vunpack.c.h.b16 %v4574
  %v4843 = vunpack.c.l.b16 %v4575
  %v4844 = vunpack.c.h.b16 %v4575
  %v4845 = vunpack.c.l.b16 %v4576
  %v4846 = vunpack.c.h.b16 %v4576
  %v4847 = vunpack.c.l.b16 %v4577
  %v4848 = vunpack.c.h.b16 %v4577
  %v4849 = vunpack.c.l.b16 %v4578
  %v4850 = vunpack.c.h.b16 %v4578
  %v4851 = vunpack.c.l.b16 %v4579
  %v4852 = vunpack.c.h.b16 %v4579
  %v4853 = vunpack.c.l.b16 %v4580
  %v4854 = vunpack.c.h.b16 %v4580
  %v4855 = vunpack.c.l.b16 %v4581
  %v4856 = vunpack.c.h.b16 %v4581
  %v4857 = vunpack.c.l.b16 %v4582
  %v4858 = vunpack.c.h.b16 %v4582
  %v4859 = vunpack.c.l.b16 %v4583
  %v4860 = vunpack.c.h.b16 %v4583
  %v4861 = vunpack.c.l.b16 %v4584
  %v4862 = vunpack.c.h.b16 %v4584
  %v4863 = vunpack.c.l.b16 %v4585
  %v4864 = vunpack.c.h.b16 %v4585
  %v4865 = vunpack.c.l.b16 %v4586
  %v4866 = vunpack.c.h.b16 %v4586
  %v4867 = vunpack.c.l.b16 %v4587
  %v4868 = vunpack.c.h.b16 %v4587
  %v4869 = vunpack.c.l.b16 %v4588
  %v4870 = vunpack.c.h.b16 %v4588
  %v4871 = vunpack.c.l.b16 %v4589
  %v4872 = vunpack.c.h.b16 %v4589
  %v4873 = vunpack.c.l.b16 %v4590
  %v4874 = vunpack.c.h.b16 %v4590
  %v4875 = vunpack.c.l.b16 %v4591
  %v4876 = vunpack.c.h.b16 %v4591
  %v4877 = vunpack.c.l.b16 %v4592
  %v4878 = vunpack.c.h.b16 %v4592
  %v4879 = vunpack.c.l.b16 %v4593
  %v4880 = vunpack.c.h.b16 %v4593
  %v4881 = vunpack.c.l.b16 %v4594
  %v4882 = vunpack.c.h.b16 %v4594
  %v4883 = vunpack.c.l.b16 %v4595
  %v4884 = vunpack.c.h.b16 %v4595
  %v4885 = vunpack.c.l.b16 %v4596
  %v4886 = vunpack.c.h.b16 %v4596
  %v4887 = vunpack.c.l.b16 %v4597
  %v4888 = vunpack.c.h.b16 %v4597
  %v4889 = vunpack.c.l.b16 %v4598
  %v4890 = vunpack.c.h.b16 %v4598
  %v4891 = vunpack.c.l.b16 %v4599
  %v4892 = vunpack.c.h.b16 %v4599
  %v4893 = vunpack.c.l.b16 %v4600
  %v4894 = vunpack.c.h.b16 %v4600
  %v4895 = vunpack.c.l.b16 %v4601
  %v4896 = vunpack.c.h.b16 %v4601
  %v4897 = vunpack.c.l.b16 %v4602
  %v4898 = vunpack.c.h.b16 %v4602
  %v4899 = vunpack.c.l.b16 %v4603
  %v4900 = vunpack.c.h.b16 %v4603
  %v4901 = vunpack.c.l.b16 %v4604
  %v4902 = vunpack.c.h.b16 %v4604
  %v4903 = vunpack.c.l.b16 %v4605
  %v4904 = vunpack.c.h.b16 %v4605
  %v4905 = vunpack.c.l.b16 %v4606
  %v4906 = vunpack.c.h.b16 %v4606
  %v4907 = vunpack.c.l.b16 %v4607
  %v4908 = vunpack.c.h.b16 %v4607
  %v4909 = vunpack.c.l.b16 %v4608
  %v4910 = vunpack.c.h.b16 %v4608
  %v4911 = vunpack.c.l.b16 %v4609
  %v4912 = vunpack.c.h.b16 %v4609
  %v4913 = vunpack.c.l.b16 %v4610
  %v4914 = vunpack.c.h.b16 %v4610
  %v4915 = vunpack.c.l.b16 %v4611
  %v4916 = vunpack.c.h.b16 %v4611
  %v4917 = vunpack.c.l.b16 %v4612
  %v4918 = vunpack.c.h.b16 %v4612
  %v4919 = vunpack.c.l.b16 %v4613
  %v4920 = vunpack.c.h.b16 %v4613
  %v4921 = vunpack.c.l.b16 %v4614
  %v4922 = vunpack.c.h.b16 %v4614
  %v4923 = vunpack.c.l.b16 %v4615
  %v4924 = vunpack.c.h.b16 %v4615
  %v4925 = vunpack.c.l.b16 %v4616
  %v4926 = vunpack.c.h.b16 %v4616
  %v4927 = vunpack.c.l.b16 %v4617
  %v4928 = vunpack.c.h.b16 %v4617
  %v4929 = vunpack.c.l.b16 %v4618
  %v4930 = vunpack.c.h.b16 %v4618
  %v4931 = vunpack.c.l.b16 %v4619
  %v4932 = vunpack.c.h.b16 %v4619
  %v4933 = vunpack.c.l.b16 %v4620
  %v4934 = vunpack.c.h.b16 %v4620
  %v4935 = vunpack.c.l.b16 %v4621
  %v4936 = vunpack.c.h.b16 %v4621
  %v4937 = vunpack.c.l.b16 %v4622
  %v4938 = vunpack.c.h.b16 %v4622
  %v4939 = vunpack.c.l.b16 %v4623
  %v4940 = vunpack.c.h.b16 %v4623
  %v4941 = vunpack.c.l.b16 %v4624
  %v4942 = vunpack.c.h.b16 %v4624
  %v4943 = vunpack.c.l.b16 %v4625
  %v4944 = vunpack.c.h.b16 %v4625
  %v4945 = vunpack.c.l.b16 %v4626
  %v4946 = vunpack.c.h.b16 %v4626
  %v4947 = vunpack.c.l.b16 %v4627
  %v4948 = vunpack.c.h.b16 %v4627
  %v4949 = vunpack.c.l.b16 %v4628
  %v4950 = vunpack.c.h.b16 %v4628
  %v4951 = vunpack.c.l.b16 %v4629
  %v4952 = vunpack.c.h.b16 %v4629
  %v4953 = vunpack.c.l.b16 %v4630
  %v4954 = vunpack.c.h.b16 %v4630
  %v4955 = vunpack.c.l.b16 %v4631
  %v4956 = vunpack.c.h.b16 %v4631
  %v4957 = vunpack.c.l.b16 %v4632
  %v4958 = vunpack.c.h.b16 %v4632
  %v4959 = vunpack.c.l.b16 %v4633
  %v4960 = vunpack.c.h.b16 %v4633
  %v4961 = vunpack.c.l.b16 %v4634
  %v4962 = vunpack.c.h.b16 %v4634
  %v4963 = vunpack.c.l.b16 %v4635
  %v4964 = vunpack.c.h.b16 %v4635
  %v4965 = vunpack.c.l.b16 %v4636
  %v4966 = vunpack.c.h.b16 %v4636
  %v4967 = vunpack.c.l.b16 %v4637
  %v4968 = vunpack.c.h.b16 %v4637
  %v4969 = vunpack.c.l.b16 %v4638
  %v4970 = vunpack.c.h.b16 %v4638
  %v4971 = vunpack.c.l.b16 %v4639
  %v4972 = vunpack.c.h.b16 %v4639
  %v4973 = vunpack.c.l.b16 %v4640
  %v4974 = vunpack.c.h.b16 %v4640
  %v4975 = vunpack.c.l.b16 %v4641
  %v4976 = vunpack.c.h.b16 %v4641
  %v4977 = vunpack.c.l.b16 %v4642
  %v4978 = vunpack.c.h.b16 %v4642
  %v4979 = vunpack.c.l.b16 %v4643
  %v4980 = vunpack.c.h.b16 %v4643
  %v4981 = vunpack.c.l.b16 %v4644
  %v4982 = vunpack.c.h.b16 %v4644
  %v4983 = vunpack.c.l.b16 %v4645
  %v4984 = vunpack.c.h.b16 %v4645
  %v4985 = vunpack.c.l.b16 %v4646
  %v4986 = vunpack.c.h.b16 %v4646
  %v4987 = vunpack.c.l.b16 %v4647
  %v4988 = vunpack.c.h.b16 %v4647
  %v4989 = vunpack.c.l.b16 %v4648
  %v4990 = vunpack.c.h.b16 %v4648
  %v4991 = vunpack.c.l.b16 %v4649
  %v4992 = vunpack.c.h.b16 %v4649
  %v4993 = vunpack.c.l.b16 %v4650
  %v4994 = vunpack.c.h.b16 %v4650
  %v4995 = vunpack.c.l.b16 %v4651
  %v4996 = vunpack.c.h.b16 %v4651
  %v4997 = vunpack.c.l.b16 %v4652
  %v4998 = vunpack.c.h.b16 %v4652
  %v4999 = vunpack.c.l.b16 %v4653
  %v5000 = vunpack.c.h.b16 %v4653
  %v5001 = vunpack.c.l.b16 %v4654
  %v5002 = vunpack.c.h.b16 %v4654
  %v5003 = vunpack.c.l.b16 %v4655
  %v5004 = vunpack.c.h.b16 %v4655
  %v5005 = vunpack.c.l.b16 %v4656
  %v5006 = vunpack.c.h.b16 %v4656
  %v5007 = vunpack.c.l.b16 %v4657
  %v5008 = vunpack.c.h.b16 %v4657
  %v5009 = vunpack.c.l.b16 %v4658
  %v5010 = vunpack.c.h.b16 %v4658
  %v5011 = vunpack.c.l.b16 %v4659
  %v5012 = vunpack.c.h.b16 %v4659
  %v5013 = vunpack.c.l.b16 %v4660
  %v5014 = vunpack.c.h.b16 %v4660
  %v5015 = vunpack.c.l.b16 %v4661
  %v5016 = vunpack.c.h.b16 %v4661
  %v5017 = vunpack.c.l.b16 %v4662
  %v5018 = vunpack.c.h.b16 %v4662
  %v5019 = vunpack.c.l.b16 %v4663
  %v5020 = vunpack.c.h.b16 %v4663
  %v5021 = vunpack.c.l.b16 %v4664
  %v5022 = vunpack.c.h.b16 %v4664
  %v5023 = vunpack.c.l.b16 %v4665
  %v5024 = vunpack.c.h.b16 %v4665
  %v5025 = vunpack.c.l.b16 %v4666
  %v5026 = vunpack.c.h.b16 %v4666
  %v5027 = vunpack.c.l.b16 %v4667
  %v5028 = vunpack.c.h.b16 %v4667
  %v5029 = vunpack.c.l.b16 %v4668
  %v5030 = vunpack.c.h.b16 %v4668
  %v5031 = vunpack.c.l.b16 %v4669
  %v5032 = vunpack.c.h.b16 %v4669
  %v5033 = vunpack.c.l.b16 %v4670
  %v5034 = vunpack.c.h.b16 %v4670
  %v5035 = vunpack.c.l.b16 %v4671
  %v5036 = vunpack.c.h.b16 %v4671
  %v5037 = vunpack.c.l.b16 %v4672
  %v5038 = vunpack.c.h.b16 %v4672
  %v5039 = vunpack.c.l.b16 %v4673
  %v5040 = vunpack.c.h.b16 %v4673
  %v5041 = vunpack.c.l.b16 %v4674
  %v5042 = vunpack.c.h.b16 %v4674
  %v5043 = vunpack.c.l.b16 %v4675
  %v5044 = vunpack.c.h.b16 %v4675
  %v5045 = vunpack.c.l.b16 %v4676
  %v5046 = vunpack.c.h.b16 %v4676
  %v5047 = vunpack.c.l.b16 %v4677
  %v5048 = vunpack.c.h.b16 %v4677
  %v5049 = vunpack.c.l.b16 %v4678
  %v5050 = vunpack.c.h.b16 %v4678
  %v5051 = vunpack.c.l.b16 %v4679
  %v5052 = vunpack.c.h.b16 %v4679
  %v5053 = vunpack.c.l.b16 %v4680
  %v5054 = vunpack.c.h.b16 %v4680
  %v5055 = vunpack.c.l.b16 %v4681
  %v5056 = vunpack.c.h.b16 %v4681
  %v5057 = vunpack.c.l.b16 %v4682
  %v5058 = vunpack.c.h.b16 %v4682
  %v5059 = vunpack.c.l.b16 %v4683
  %v5060 = vunpack.c.h.b16 %v4683
  %v5061 = vunpack.c.l.b16 %v4684
  %v5062 = vunpack.c.h.b16 %v4684
  %v5063 = vunpack.c.l.b16 %v4685
  %v5064 = vunpack.c.h.b16 %v4685
  %v5065 = vunpack.c.l.b16 %v4686
  %v5066 = vunpack.c.h.b16 %v4686
  %v5067 = vunpack.c.l.b16 %v4687
  %v5068 = vunpack.c.h.b16 %v4687
  %v5069 = vunpack.c.l.b16 %v4688
  %v5070 = vunpack.c.h.b16 %v4688
  %v5071 = vunpack.c.l.b16 %v4689
  %v5072 = vunpack.c.h.b16 %v4689
  %v5073 = vunpack.c.l.b16 %v4690
  %v5074 = vunpack.c.h.b16 %v4690
  %v5075 = vpack.c.b16 %v4819, %v4819
  %v5076 = vpack.c.b16 %v4820, %v4820
  %v5077 = vpack.c.b16 %v4821, %v4821
  %v5078 = vpack.c.b16 %v4822, %v4822
  %v5079 = vpack.c.b16 %v4823, %v4823
  %v5080 = vpack.c.b16 %v4824, %v4824
  %v5081 = vpack.c.b16 %v4825, %v4825
  %v5082 = vpack.c.b16 %v4826, %v4826
  %v5083 = vpack.c.b16 %v4827, %v4827
  %v5084 = vpack.c.b16 %v4828, %v4828
  %v5085 = vpack.c.b16 %v4829, %v4829
  %v5086 = vpack.c.b16 %v4830, %v4830
  %v5087 = vpack.c.b16 %v4831, %v4831
  %v5088 = vpack.c.b16 %v4832, %v4832
  %v5089 = vpack.c.b16 %v4833, %v4833
  %v5090 = vpack.c.b16 %v4834, %v4834
  %v5091 = vpack.c.b16 %v4835, %v4835
  %v5092 = vpack.c.b16 %v4836, %v4836
  %v5093 = vpack.c.b16 %v4837, %v4837
  %v5094 = vpack.c.b16 %v4838, %v4838
  %v5095 = vpack.c.b16 %v4839, %v4839
  %v5096 = vpack.c.b16 %v4840, %v4840
  %v5097 = vpack.c.b16 %v4841, %v4841
  %v5098 = vpack.c.b16 %v4842, %v4842
  %v5099 = vpack.c.b16 %v4843, %v4843
  %v5100 = vpack.c.b16 %v4844, %v4844
  %v5101 = vpack.c.b16 %v4845, %v4845
  %v5102 = vpack.c.b16 %v4846, %v4846
  %v5103 = vpack.c.b16 %v4847, %v4847
  %v5104 = vpack.c.b16 %v4848, %v4848
  %v5105 = vpack.c.b16 %v4849, %v4849
  %v5106 = vpack.c.b16 %v4850, %v4850
  %v5107 = vpack.c.b16 %v4851, %v4851
  %v5108 = vpack.c.b16 %v4852, %v4852
  %v5109 = vpack.c.b16 %v4853, %v4853
  %v5110 = vpack.c.b16 %v4854, %v4854
  %v5111 = vpack.c.b16 %v4855, %v4855
  %v5112 = vpack.c.b16 %v4856, %v4856
  %v5113 = vpack.c.b16 %v4857, %v4857
  %v5114 = vpack.c.b16 %v4858, %v4858
  %v5115 = vpack.c.b16 %v4859, %v4859
  %v5116 = vpack.c.b16 %v4860, %v4860
  %v5117 = vpack.c.b16 %v4861, %v4861
  %v5118 = vpack.c.b16 %v4862, %v4862
  %v5119 = vpack.c.b16 %v4863, %v4863
  %v5120 = vpack.c.b16 %v4864, %v4864
  %v5121 = vpack.c.b16 %v4865, %v4865
  %v5122 = vpack.c.b16 %v4866, %v4866
  %v5123 = vpack.c.b16 %v4867, %v4867
  %v5124 = vpack.c.b16 %v4868, %v4868
  %v5125 = vpack.c.b16 %v4869, %v4869
  %v5126 = vpack.c.b16 %v4870, %v4870
  %v5127 = vpack.c.b16 %v4871, %v4871
  %v5128 = vpack.c.b16 %v4872, %v4872
  %v5129 = vpack.c.b16 %v4873, %v4873
  %v5130 = vpack.c.b16 %v4874, %v4874
  %v5131 = vpack.c.b16 %v4875, %v4875
  %v5132 = vpack.c.b16 %v4876, %v4876
  %v5133 = vpack.c.b16 %v4877, %v4877
  %v5134 = vpack.c.b16 %v4878, %v4878
  %v5135 = vpack.c.b16 %v4879, %v4879
  %v5136 = vpack.c.b16 %v4880, %v4880
  %v5137 = vpack.c.b16 %v4881, %v4881
  %v5138 = vpack.c.b16 %v4882, %v4882
  %v5139 = vpack.c.b16 %v4883, %v4883
  %v5140 = vpack.c.b16 %v4884, %v4884
  %v5141 = vpack.c.b16 %v4885, %v4885
  %v5142 = vpack.c.b16 %v4886, %v4886
  %v5143 = vpack.c.b16 %v4887, %v4887
  %v5144 = vpack.c.b16 %v4888, %v4888
  %v5145 = vpack.c.b16 %v4889, %v4889
  %v5146 = vpack.c.b16 %v4890, %v4890
  %v5147 = vpack.c.b16 %v4891, %v4891
  %v5148 = vpack.c.b16 %v4892, %v4892
  %v5149 = vpack.c.b16 %v4893, %v4893
  %v5150 = vpack.c.b16 %v4894, %v4894
  %v5151 = vpack.c.b16 %v4895, %v4895
  %v5152 = vpack.c.b16 %v4896, %v4896
  %v5153 = vpack.c.b16 %v4897, %v4897
  %v5154 = vpack.c.b16 %v4898, %v4898
  %v5155 = vpack.c.b16 %v4899, %v4899
  %v5156 = vpack.c.b16 %v4900, %v4900
  %v5157 = vpack.c.b16 %v4901, %v4901
  %v5158 = vpack.c.b16 %v4902, %v4902
  %v5159 = vpack.c.b16 %v4903, %v4903
  %v5160 = vpack.c.b16 %v4904, %v4904
  %v5161 = vpack.c.b16 %v4905, %v4905
  %v5162 = vpack.c.b16 %v4906, %v4906
  %v5163 = vpack.c.b16 %v4907, %v4907
  %v5164 = vpack.c.b16 %v4908, %v4908
  %v5165 = vpack.c.b16 %v4909, %v4909
  %v5166 = vpack.c.b16 %v4910, %v4910
  %v5167 = vpack.c.b16 %v4911, %v4911
  %v5168 = vpack.c.b16 %v4912, %v4912
  %v5169 = vpack.c.b16 %v4913, %v4913
  %v5170 = vpack.c.b16 %v4914, %v4914
  %v5171 = vpack.c.b16 %v4915, %v4915
  %v5172 = vpack.c.b16 %v4916, %v4916
  %v5173 = vpack.c.b16 %v4917, %v4917
  %v5174 = vpack.c.b16 %v4918, %v4918
  %v5175 = vpack.c.b16 %v4919, %v4919
  %v5176 = vpack.c.b16 %v4920, %v4920
  %v5177 = vpack.c.b16 %v4921, %v4921
  %v5178 = vpack.c.b16 %v4922, %v4922
  %v5179 = vpack.c.b16 %v4923, %v4923
  %v5180 = vpack.c.b16 %v4924, %v4924
  %v5181 = vpack.c.b16 %v4925, %v4925
  %v5182 = vpack.c.b16 %v4926, %v4926
  %v5183 = vpack.c.b16 %v4927, %v4927
  %v5184 = vpack.c.b16 %v4928, %v4928
  %v5185 = vpack.c.b16 %v4929, %v4929
  %v5186 = vpack.c.b16 %v4930, %v4930
  %v5187 = vpack.c.b16 %v4931, %v4931
  %v5188 = vpack.c.b16 %v4932, %v4932
  %v5189 = vpack.c.b16 %v4933, %v4933
  %v5190 = vpack.c.b16 %v4934, %v4934
  %v5191 = vpack.c.b16 %v4935, %v4935
  %v5192 = vpack.c.b16 %v4936, %v4936
  %v5193 = vpack.c.b16 %v4937, %v4937
  %v5194 = vpack.c.b16 %v4938, %v4938
  %v5195 = vpack.c.b16 %v4939, %v4939
  %v5196 = vpack.c.b16 %v4940, %v4940
  %v5197 = vpack.c.b16 %v4941, %v4941
  %v5198 = vpack.c.b16 %v4942, %v4942
  %v5199 = vpack.c.b16 %v4943, %v4943
  %v5200 = vpack.c.b16 %v4944, %v4944
  %v5201 = vpack.c.b16 %v4945, %v4945
  %v5202 = vpack.c.b16 %v4946, %v4946
  %v5203 = vpack.c.b16 %v4947, %v4947
  %v5204 = vpack.c.b16 %v4948, %v4948
  %v5205 = vpack.c.b16 %v4949, %v4949
  %v5206 = vpack.c.b16 %v4950, %v4950
  %v5207 = vpack.c.b16 %v4951, %v4951
  %v5208 = vpack.c.b16 %v4952, %v4952
  %v5209 = vpack.c.b16 %v4953, %v4953
  %v5210 = vpack.c.b16 %v4954, %v4954
  %v5211 = vpack.c.b16 %v4955, %v4955
  %v5212 = vpack.c.b16 %v4956, %v4956
  %v5213 = vpack.c.b16 %v4957, %v4957
  %v5214 = vpack.c.b16 %v4958, %v4958
  %v5215 = vpack.c.b16 %v4959, %v4959
  %v5216 = vpack.c.b16 %v4960, %v4960
  %v5217 = vpack.c.b16 %v4961, %v4961
  %v5218 = vpack.c.b16 %v4962, %v4962
  %v5219 = vpack.c.b16 %v4963, %v4963
  %v5220 = vpack.c.b16 %v4964, %v4964
  %v5221 = vpack.c.b16 %v4965, %v4965
  %v5222 = vpack.c.b16 %v4966, %v4966
  %v5223 = vpack.c.b16 %v4967, %v4967
  %v5224 = vpack.c.b16 %v4968, %v4968
  %v5225 = vpack.c.b16 %v4969, %v4969
  %v5226 = vpack.c.b16 %v4970, %v4970
  %v5227 = vpack.c.b16 %v4971, %v4971
  %v5228 = vpack.c.b16 %v4972, %v4972
  %v5229 = vpack.c.b16 %v4973, %v4973
  %v5230 = vpack.c.b16 %v4974, %v4974
  %v5231 = vpack.c.b16 %v4975, %v4975
  %v5232 = vpack.c.b16 %v4976, %v4976
  %v5233 = vpack.c.b16 %v4977, %v4977
  %v5234 = vpack.c.b16 %v4978, %v4978
  %v5235 = vpack.c.b16 %v4979, %v4979
  %v5236 = vpack.c.b16 %v4980, %v4980
  %v5237 = vpack.c.b16 %v4981, %v4981
  %v5238 = vpack.c.b16 %v4982, %v4982
  %v5239 = vpack.c.b16 %v4983, %v4983
  %v5240 = vpack.c.b16 %v4984, %v4984
  %v5241 = vpack.c.b16 %v4985, %v4985
  %v5242 = vpack.c.b16 %v4986, %v4986
  %v5243 = vpack.c.b16 %v4987, %v4987
  %v5244 = vpack.c.b16 %v4988, %v4988
  %v5245 = vpack.c.b16 %v4989, %v4989
  %v5246 = vpack.c.b16 %v4990, %v4990
  %v5247 = vpack.c.b16 %v4991, %v4991
  %v5248 = vpack.c.b16 %v4992, %v4992
  %v5249 = vpack.c.b16 %v4993, %v4993
  %v5250 = vpack.c.b16 %v4994, %v4994
  %v5251 = vpack.c.b16 %v4995, %v4995
  %v5252 = vpack.c.b16 %v4996, %v4996
  %v5253 = vpack.c.b16 %v4997, %v4997
  %v5254 = vpack.c.b16 %v4998, %v4998
  %v5255 = vpack.c.b16 %v4999, %v4999
  %v5256 = vpack.c.b16 %v5000, %v5000
  %v5257 = vpack.c.b16 %v5001, %v5001
  %v5258 = vpack.c.b16 %v5002, %v5002
  %v5259 = vpack.c.b16 %v5003, %v5003
  %v5260 = vpack.c.b16 %v5004, %v5004
  %v5261 = vpack.c.b16 %v5005, %v5005
  %v5262 = vpack.c.b16 %v5006, %v5006
  %v5263 = vpack.c.b16 %v5007, %v5007
  %v5264 = vpack.c.b16 %v5008, %v5008
  %v5265 = vpack.c.b16 %v5009, %v5009
  %v5266 = vpack.c.b16 %v5010, %v5010
  %v5267 = vpack.c.b16 %v5011, %v5011
  %v5268 = vpack.c.b16 %v5012, %v5012
  %v5269 = vpack.c.b16 %v5013, %v5013
  %v5270 = vpack.c.b16 %v5014, %v5014
  %v5271 = vpack.c.b16 %v5015, %v5015
  %v5272 = vpack.c.b16 %v5016, %v5016
  %v5273 = vpack.c.b16 %v5017, %v5017
  %v5274 = vpack.c.b16 %v5018, %v5018
  %v5275 = vpack.c.b16 %v5019, %v5019
  %v5276 = vpack.c.b16 %v5020, %v5020
  %v5277 = vpack.c.b16 %v5021, %v5021
  %v5278 = vpack.c.b16 %v5022, %v5022
  %v5279 = vpack.c.b16 %v5023, %v5023
  %v5280 = vpack.c.b16 %v5024, %v5024
  %v5281 = vpack.c.b16 %v5025, %v5025
  %v5282 = vpack.c.b16 %v5026, %v5026
  %v5283 = vpack.c.b16 %v5027, %v5027
  %v5284 = vpack.c.b16 %v5028, %v5028
  %v5285 = vpack.c.b16 %v5029, %v5029
  %v5286 = vpack.c.b16 %v5030, %v5030
  %v5287 = vpack.c.b16 %v5031, %v5031
  %v5288 = vpack.c.b16 %v5032, %v5032
  %v5289 = vpack.c.b16 %v5033, %v5033
  %v5290 = vpack.c.b16 %v5034, %v5034
  %v5291 = vpack.c.b16 %v5035, %v5035
  %v5292 = vpack.c.b16 %v5036, %v5036
  %v5293 = vpack.c.b16 %v5037, %v5037
  %v5294 = vpack.c.b16 %v5038, %v5038
  %v5295 = vpack.c.b16 %v5039, %v5039
  %v5296 = vpack.c.b16 %v5040, %v5040
  %v5297 = vpack.c.b16 %v5041, %v5041
  %v5298 = vpack.c.b16 %v5042, %v5042
  %v5299 = vpack.c.b16 %v5043, %v5043
  %v5300 = vpack.c.b16 %v5044, %v5044
  %v5301 = vpack.c.b16 %v5045, %v5045
  %v5302 = vpack.c.b16 %v5046, %v5046
  %v5303 = vpack.c.b16 %v5047, %v5047
  %v5304 = vpack.c.b16 %v5048, %v5048
  %v5305 = vpack.c.b16 %v5049, %v5049
  %v5306 = vpack.c.b16 %v5050, %v5050
  %v5307 = vpack.c.b16 %v5051, %v5051
  %v5308 = vpack.c.b16 %v5052, %v5052
  %v5309 = vpack.c.b16 %v5053, %v5053
  %v5310 = vpack.c.b16 %v5054, %v5054
  %v5311 = vpack.c.b16 %v5055, %v5055
  %v5312 = vpack.c.b16 %v5056, %v5056
  %v5313 = vpack.c.b16 %v5057, %v5057
  %v5314 = vpack.c.b16 %v5058, %v5058
  %v5315 = vpack.c.b16 %v5059, %v5059
  %v5316 = vpack.c.b16 %v5060, %v5060
  %v5317 = vpack.c.b16 %v5061, %v5061
  %v5318 = vpack.c.b16 %v5062, %v5062
  %v5319 = vpack.c.b16 %v5063, %v5063
  %v5320 = vpack.c.b16 %v5064, %v5064
  %v5321 = vpack.c.b16 %v5065, %v5065
  %v5322 = vpack.c.b16 %v5066, %v5066
  %v5323 = vpack.c.b16 %v5067, %v5067
  %v5324 = vpack.c.b16 %v5068, %v5068
  %v5325 = vpack.c.b16 %v5069, %v5069
  %v5326 = vpack.c.b16 %v5070, %v5070
  %v5327 = vpack.c.b16 %v5071, %v5071
  %v5328 = vpack.c.b16 %v5072, %v5072
  %v5329 = vpack.c.b16 %v5073, %v5073
  %v5330 = vpack.c.b16 %v5074, %v5074
  %5587 = vst [vmem:[%s4] sm:$0xf] %v5075
  %5588 = vst [vmem:[%s4 + $0x4] sm:$0xf] %v5076
  %5589 = vst [vmem:[%s4 + $0x8] sm:$0xf] %v5077
  %5590 = vst [vmem:[%s4 + $0xc] sm:$0xf] %v5078
  %5591 = vst [vmem:[%s4 + $0x10] sm:$0xf] %v5079
  %5592 = vst [vmem:[%s4 + $0x14] sm:$0xf] %v5080
  %5593 = vst [vmem:[%s4 + $0x18] sm:$0xf] %v5081
  %5594 = vst [vmem:[%s4 + $0x1c] sm:$0xf] %v5082
  %5595 = vst [vmem:[%s4 + $0x20] sm:$0xf] %v5083
  %5596 = vst [vmem:[%s4 + $0x24] sm:$0xf] %v5084
  %5597 = vst [vmem:[%s4 + $0x28] sm:$0xf] %v5085
  %5598 = vst [vmem:[%s4 + $0x2c] sm:$0xf] %v5086
  %5599 = vst [vmem:[%s4 + $0x30] sm:$0xf] %v5087
  %5600 = vst [vmem:[%s4 + $0x34] sm:$0xf] %v5088
  %5601 = vst [vmem:[%s4 + $0x38] sm:$0xf] %v5089
  %5602 = vst [vmem:[%s4 + $0x3c] sm:$0xf] %v5090
  %5603 = vst [vmem:[%s4 + $0x40] sm:$0xf] %v5091
  %5604 = vst [vmem:[%s4 + $0x44] sm:$0xf] %v5092
  %5605 = vst [vmem:[%s4 + $0x48] sm:$0xf] %v5093
  %5606 = vst [vmem:[%s4 + $0x4c] sm:$0xf] %v5094
  %5607 = vst [vmem:[%s4 + $0x50] sm:$0xf] %v5095
  %5608 = vst [vmem:[%s4 + $0x54] sm:$0xf] %v5096
  %5609 = vst [vmem:[%s4 + $0x58] sm:$0xf] %v5097
  %5610 = vst [vmem:[%s4 + $0x5c] sm:$0xf] %v5098
  %5611 = vst [vmem:[%s4 + $0x60] sm:$0xf] %v5099
  %5612 = vst [vmem:[%s4 + $0x64] sm:$0xf] %v5100
  %5613 = vst [vmem:[%s4 + $0x68] sm:$0xf] %v5101
  %5614 = vst [vmem:[%s4 + $0x6c] sm:$0xf] %v5102
  %5615 = vst [vmem:[%s4 + $0x70] sm:$0xf] %v5103
  %5616 = vst [vmem:[%s4 + $0x74] sm:$0xf] %v5104
  %5617 = vst [vmem:[%s4 + $0x78] sm:$0xf] %v5105
  %5618 = vst [vmem:[%s4 + $0x7c] sm:$0xf] %v5106
  %5619 = vst [vmem:[%s4 + $0x80] sm:$0xf] %v5107
  %5620 = vst [vmem:[%s4 + $0x84] sm:$0xf] %v5108
  %5621 = vst [vmem:[%s4 + $0x88] sm:$0xf] %v5109
  %5622 = vst [vmem:[%s4 + $0x8c] sm:$0xf] %v5110
  %5623 = vst [vmem:[%s4 + $0x90] sm:$0xf] %v5111
  %5624 = vst [vmem:[%s4 + $0x94] sm:$0xf] %v5112
  %5625 = vst [vmem:[%s4 + $0x98] sm:$0xf] %v5113
  %5626 = vst [vmem:[%s4 + $0x9c] sm:$0xf] %v5114
  %5627 = vst [vmem:[%s4 + $0xa0] sm:$0xf] %v5115
  %5628 = vst [vmem:[%s4 + $0xa4] sm:$0xf] %v5116
  %5629 = vst [vmem:[%s4 + $0xa8] sm:$0xf] %v5117
  %5630 = vst [vmem:[%s4 + $0xac] sm:$0xf] %v5118
  %5631 = vst [vmem:[%s4 + $0xb0] sm:$0xf] %v5119
  %5632 = vst [vmem:[%s4 + $0xb4] sm:$0xf] %v5120
  %5633 = vst [vmem:[%s4 + $0xb8] sm:$0xf] %v5121
  %5634 = vst [vmem:[%s4 + $0xbc] sm:$0xf] %v5122
  %5635 = vst [vmem:[%s4 + $0xc0] sm:$0xf] %v5123
  %5636 = vst [vmem:[%s4 + $0xc4] sm:$0xf] %v5124
  %5637 = vst [vmem:[%s4 + $0xc8] sm:$0xf] %v5125
  %5638 = vst [vmem:[%s4 + $0xcc] sm:$0xf] %v5126
  %5639 = vst [vmem:[%s4 + $0xd0] sm:$0xf] %v5127
  %5640 = vst [vmem:[%s4 + $0xd4] sm:$0xf] %v5128
  %5641 = vst [vmem:[%s4 + $0xd8] sm:$0xf] %v5129
  %5642 = vst [vmem:[%s4 + $0xdc] sm:$0xf] %v5130
  %5643 = vst [vmem:[%s4 + $0xe0] sm:$0xf] %v5131
  %5644 = vst [vmem:[%s4 + $0xe4] sm:$0xf] %v5132
  %5645 = vst [vmem:[%s4 + $0xe8] sm:$0xf] %v5133
  %5646 = vst [vmem:[%s4 + $0xec] sm:$0xf] %v5134
  %5647 = vst [vmem:[%s4 + $0xf0] sm:$0xf] %v5135
  %5648 = vst [vmem:[%s4 + $0xf4] sm:$0xf] %v5136
  %5649 = vst [vmem:[%s4 + $0xf8] sm:$0xf] %v5137
  %5650 = vst [vmem:[%s4 + $0xfc] sm:$0xf] %v5138
  %5651 = vst [vmem:[%s4 + $0x100] sm:$0xf] %v5139
  %5652 = vst [vmem:[%s4 + $0x104] sm:$0xf] %v5140
  %5653 = vst [vmem:[%s4 + $0x108] sm:$0xf] %v5141
  %5654 = vst [vmem:[%s4 + $0x10c] sm:$0xf] %v5142
  %5655 = vst [vmem:[%s4 + $0x110] sm:$0xf] %v5143
  %5656 = vst [vmem:[%s4 + $0x114] sm:$0xf] %v5144
  %5657 = vst [vmem:[%s4 + $0x118] sm:$0xf] %v5145
  %5658 = vst [vmem:[%s4 + $0x11c] sm:$0xf] %v5146
  %5659 = vst [vmem:[%s4 + $0x120] sm:$0xf] %v5147
  %5660 = vst [vmem:[%s4 + $0x124] sm:$0xf] %v5148
  %5661 = vst [vmem:[%s4 + $0x128] sm:$0xf] %v5149
  %5662 = vst [vmem:[%s4 + $0x12c] sm:$0xf] %v5150
  %5663 = vst [vmem:[%s4 + $0x130] sm:$0xf] %v5151
  %5664 = vst [vmem:[%s4 + $0x134] sm:$0xf] %v5152
  %5665 = vst [vmem:[%s4 + $0x138] sm:$0xf] %v5153
  %5666 = vst [vmem:[%s4 + $0x13c] sm:$0xf] %v5154
  %5667 = vst [vmem:[%s4 + $0x140] sm:$0xf] %v5155
  %5668 = vst [vmem:[%s4 + $0x144] sm:$0xf] %v5156
  %5669 = vst [vmem:[%s4 + $0x148] sm:$0xf] %v5157
  %5670 = vst [vmem:[%s4 + $0x14c] sm:$0xf] %v5158
  %5671 = vst [vmem:[%s4 + $0x150] sm:$0xf] %v5159
  %5672 = vst [vmem:[%s4 + $0x154] sm:$0xf] %v5160
  %5673 = vst [vmem:[%s4 + $0x158] sm:$0xf] %v5161
  %5674 = vst [vmem:[%s4 + $0x15c] sm:$0xf] %v5162
  %5675 = vst [vmem:[%s4 + $0x160] sm:$0xf] %v5163
  %5676 = vst [vmem:[%s4 + $0x164] sm:$0xf] %v5164
  %5677 = vst [vmem:[%s4 + $0x168] sm:$0xf] %v5165
  %5678 = vst [vmem:[%s4 + $0x16c] sm:$0xf] %v5166
  %5679 = vst [vmem:[%s4 + $0x170] sm:$0xf] %v5167
  %5680 = vst [vmem:[%s4 + $0x174] sm:$0xf] %v5168
  %5681 = vst [vmem:[%s4 + $0x178] sm:$0xf] %v5169
  %5682 = vst [vmem:[%s4 + $0x17c] sm:$0xf] %v5170
  %5683 = vst [vmem:[%s4 + $0x180] sm:$0xf] %v5171
  %5684 = vst [vmem:[%s4 + $0x184] sm:$0xf] %v5172
  %5685 = vst [vmem:[%s4 + $0x188] sm:$0xf] %v5173
  %5686 = vst [vmem:[%s4 + $0x18c] sm:$0xf] %v5174
  %5687 = vst [vmem:[%s4 + $0x190] sm:$0xf] %v5175
  %5688 = vst [vmem:[%s4 + $0x194] sm:$0xf] %v5176
  %5689 = vst [vmem:[%s4 + $0x198] sm:$0xf] %v5177
  %5690 = vst [vmem:[%s4 + $0x19c] sm:$0xf] %v5178
  %5691 = vst [vmem:[%s4 + $0x1a0] sm:$0xf] %v5179
  %5692 = vst [vmem:[%s4 + $0x1a4] sm:$0xf] %v5180
  %5693 = vst [vmem:[%s4 + $0x1a8] sm:$0xf] %v5181
  %5694 = vst [vmem:[%s4 + $0x1ac] sm:$0xf] %v5182
  %5695 = vst [vmem:[%s4 + $0x1b0] sm:$0xf] %v5183
  %5696 = vst [vmem:[%s4 + $0x1b4] sm:$0xf] %v5184
  %5697 = vst [vmem:[%s4 + $0x1b8] sm:$0xf] %v5185
  %5698 = vst [vmem:[%s4 + $0x1bc] sm:$0xf] %v5186
  %5699 = vst [vmem:[%s4 + $0x1c0] sm:$0xf] %v5187
  %5700 = vst [vmem:[%s4 + $0x1c4] sm:$0xf] %v5188
  %5701 = vst [vmem:[%s4 + $0x1c8] sm:$0xf] %v5189
  %5702 = vst [vmem:[%s4 + $0x1cc] sm:$0xf] %v5190
  %5703 = vst [vmem:[%s4 + $0x1d0] sm:$0xf] %v5191
  %5704 = vst [vmem:[%s4 + $0x1d4] sm:$0xf] %v5192
  %5705 = vst [vmem:[%s4 + $0x1d8] sm:$0xf] %v5193
  %5706 = vst [vmem:[%s4 + $0x1dc] sm:$0xf] %v5194
  %5707 = vst [vmem:[%s4 + $0x1e0] sm:$0xf] %v5195
  %5708 = vst [vmem:[%s4 + $0x1e4] sm:$0xf] %v5196
  %5709 = vst [vmem:[%s4 + $0x1e8] sm:$0xf] %v5197
  %5710 = vst [vmem:[%s4 + $0x1ec] sm:$0xf] %v5198
  %5711 = vst [vmem:[%s4 + $0x1f0] sm:$0xf] %v5199
  %5712 = vst [vmem:[%s4 + $0x1f4] sm:$0xf] %v5200
  %5713 = vst [vmem:[%s4 + $0x1f8] sm:$0xf] %v5201
  %5714 = vst [vmem:[%s4 + $0x1fc] sm:$0xf] %v5202
  %5715 = vst [vmem:[%s4 + $0x200] sm:$0xf] %v5203
  %5716 = vst [vmem:[%s4 + $0x204] sm:$0xf] %v5204
  %5717 = vst [vmem:[%s4 + $0x208] sm:$0xf] %v5205
  %5718 = vst [vmem:[%s4 + $0x20c] sm:$0xf] %v5206
  %5719 = vst [vmem:[%s4 + $0x210] sm:$0xf] %v5207
  %5720 = vst [vmem:[%s4 + $0x214] sm:$0xf] %v5208
  %5721 = vst [vmem:[%s4 + $0x218] sm:$0xf] %v5209
  %5722 = vst [vmem:[%s4 + $0x21c] sm:$0xf] %v5210
  %5723 = vst [vmem:[%s4 + $0x220] sm:$0xf] %v5211
  %5724 = vst [vmem:[%s4 + $0x224] sm:$0xf] %v5212
  %5725 = vst [vmem:[%s4 + $0x228] sm:$0xf] %v5213
  %5726 = vst [vmem:[%s4 + $0x22c] sm:$0xf] %v5214
  %5727 = vst [vmem:[%s4 + $0x230] sm:$0xf] %v5215
  %5728 = vst [vmem:[%s4 + $0x234] sm:$0xf] %v5216
  %5729 = vst [vmem:[%s4 + $0x238] sm:$0xf] %v5217
  %5730 = vst [vmem:[%s4 + $0x23c] sm:$0xf] %v5218
  %5731 = vst [vmem:[%s4 + $0x240] sm:$0xf] %v5219
  %5732 = vst [vmem:[%s4 + $0x244] sm:$0xf] %v5220
  %5733 = vst [vmem:[%s4 + $0x248] sm:$0xf] %v5221
  %5734 = vst [vmem:[%s4 + $0x24c] sm:$0xf] %v5222
  %5735 = vst [vmem:[%s4 + $0x250] sm:$0xf] %v5223
  %5736 = vst [vmem:[%s4 + $0x254] sm:$0xf] %v5224
  %5737 = vst [vmem:[%s4 + $0x258] sm:$0xf] %v5225
  %5738 = vst [vmem:[%s4 + $0x25c] sm:$0xf] %v5226
  %5739 = vst [vmem:[%s4 + $0x260] sm:$0xf] %v5227
  %5740 = vst [vmem:[%s4 + $0x264] sm:$0xf] %v5228
  %5741 = vst [vmem:[%s4 + $0x268] sm:$0xf] %v5229
  %5742 = vst [vmem:[%s4 + $0x26c] sm:$0xf] %v5230
  %5743 = vst [vmem:[%s4 + $0x270] sm:$0xf] %v5231
  %5744 = vst [vmem:[%s4 + $0x274] sm:$0xf] %v5232
  %5745 = vst [vmem:[%s4 + $0x278] sm:$0xf] %v5233
  %5746 = vst [vmem:[%s4 + $0x27c] sm:$0xf] %v5234
  %5747 = vst [vmem:[%s4 + $0x280] sm:$0xf] %v5235
  %5748 = vst [vmem:[%s4 + $0x284] sm:$0xf] %v5236
  %5749 = vst [vmem:[%s4 + $0x288] sm:$0xf] %v5237
  %5750 = vst [vmem:[%s4 + $0x28c] sm:$0xf] %v5238
  %5751 = vst [vmem:[%s4 + $0x290] sm:$0xf] %v5239
  %5752 = vst [vmem:[%s4 + $0x294] sm:$0xf] %v5240
  %5753 = vst [vmem:[%s4 + $0x298] sm:$0xf] %v5241
  %5754 = vst [vmem:[%s4 + $0x29c] sm:$0xf] %v5242
  %5755 = vst [vmem:[%s4 + $0x2a0] sm:$0xf] %v5243
  %5756 = vst [vmem:[%s4 + $0x2a4] sm:$0xf] %v5244
  %5757 = vst [vmem:[%s4 + $0x2a8] sm:$0xf] %v5245
  %5758 = vst [vmem:[%s4 + $0x2ac] sm:$0xf] %v5246
  %5759 = vst [vmem:[%s4 + $0x2b0] sm:$0xf] %v5247
  %5760 = vst [vmem:[%s4 + $0x2b4] sm:$0xf] %v5248
  %5761 = vst [vmem:[%s4 + $0x2b8] sm:$0xf] %v5249
  %5762 = vst [vmem:[%s4 + $0x2bc] sm:$0xf] %v5250
  %5763 = vst [vmem:[%s4 + $0x2c0] sm:$0xf] %v5251
  %5764 = vst [vmem:[%s4 + $0x2c4] sm:$0xf] %v5252
  %5765 = vst [vmem:[%s4 + $0x2c8] sm:$0xf] %v5253
  %5766 = vst [vmem:[%s4 + $0x2cc] sm:$0xf] %v5254
  %5767 = vst [vmem:[%s4 + $0x2d0] sm:$0xf] %v5255
  %5768 = vst [vmem:[%s4 + $0x2d4] sm:$0xf] %v5256
  %5769 = vst [vmem:[%s4 + $0x2d8] sm:$0xf] %v5257
  %5770 = vst [vmem:[%s4 + $0x2dc] sm:$0xf] %v5258
  %5771 = vst [vmem:[%s4 + $0x2e0] sm:$0xf] %v5259
  %5772 = vst [vmem:[%s4 + $0x2e4] sm:$0xf] %v5260
  %5773 = vst [vmem:[%s4 + $0x2e8] sm:$0xf] %v5261
  %5774 = vst [vmem:[%s4 + $0x2ec] sm:$0xf] %v5262
  %5775 = vst [vmem:[%s4 + $0x2f0] sm:$0xf] %v5263
  %5776 = vst [vmem:[%s4 + $0x2f4] sm:$0xf] %v5264
  %5777 = vst [vmem:[%s4 + $0x2f8] sm:$0xf] %v5265
  %5778 = vst [vmem:[%s4 + $0x2fc] sm:$0xf] %v5266
  %5779 = vst [vmem:[%s4 + $0x300] sm:$0xf] %v5267
  %5780 = vst [vmem:[%s4 + $0x304] sm:$0xf] %v5268
  %5781 = vst [vmem:[%s4 + $0x308] sm:$0xf] %v5269
  %5782 = vst [vmem:[%s4 + $0x30c] sm:$0xf] %v5270
  %5783 = vst [vmem:[%s4 + $0x310] sm:$0xf] %v5271
  %5784 = vst [vmem:[%s4 + $0x314] sm:$0xf] %v5272
  %5785 = vst [vmem:[%s4 + $0x318] sm:$0xf] %v5273
  %5786 = vst [vmem:[%s4 + $0x31c] sm:$0xf] %v5274
  %5787 = vst [vmem:[%s4 + $0x320] sm:$0xf] %v5275
  %5788 = vst [vmem:[%s4 + $0x324] sm:$0xf] %v5276
  %5789 = vst [vmem:[%s4 + $0x328] sm:$0xf] %v5277
  %5790 = vst [vmem:[%s4 + $0x32c] sm:$0xf] %v5278
  %5791 = vst [vmem:[%s4 + $0x330] sm:$0xf] %v5279
  %5792 = vst [vmem:[%s4 + $0x334] sm:$0xf] %v5280
  %5793 = vst [vmem:[%s4 + $0x338] sm:$0xf] %v5281
  %5794 = vst [vmem:[%s4 + $0x33c] sm:$0xf] %v5282
  %5795 = vst [vmem:[%s4 + $0x340] sm:$0xf] %v5283
  %5796 = vst [vmem:[%s4 + $0x344] sm:$0xf] %v5284
  %5797 = vst [vmem:[%s4 + $0x348] sm:$0xf] %v5285
  %5798 = vst [vmem:[%s4 + $0x34c] sm:$0xf] %v5286
  %5799 = vst [vmem:[%s4 + $0x350] sm:$0xf] %v5287
  %5800 = vst [vmem:[%s4 + $0x354] sm:$0xf] %v5288
  %5801 = vst [vmem:[%s4 + $0x358] sm:$0xf] %v5289
  %5802 = vst [vmem:[%s4 + $0x35c] sm:$0xf] %v5290
  %5803 = vst [vmem:[%s4 + $0x360] sm:$0xf] %v5291
  %5804 = vst [vmem:[%s4 + $0x364] sm:$0xf] %v5292
  %5805 = vst [vmem:[%s4 + $0x368] sm:$0xf] %v5293
  %5806 = vst [vmem:[%s4 + $0x36c] sm:$0xf] %v5294
  %5807 = vst [vmem:[%s4 + $0x370] sm:$0xf] %v5295
  %5808 = vst [vmem:[%s4 + $0x374] sm:$0xf] %v5296
  %5809 = vst [vmem:[%s4 + $0x378] sm:$0xf] %v5297
  %5810 = vst [vmem:[%s4 + $0x37c] sm:$0xf] %v5298
  %5811 = vst [vmem:[%s4 + $0x380] sm:$0xf] %v5299
  %5812 = vst [vmem:[%s4 + $0x384] sm:$0xf] %v5300
  %5813 = vst [vmem:[%s4 + $0x388] sm:$0xf] %v5301
  %5814 = vst [vmem:[%s4 + $0x38c] sm:$0xf] %v5302
  %5815 = vst [vmem:[%s4 + $0x390] sm:$0xf] %v5303
  %5816 = vst [vmem:[%s4 + $0x394] sm:$0xf] %v5304
  %5817 = vst [vmem:[%s4 + $0x398] sm:$0xf] %v5305
  %5818 = vst [vmem:[%s4 + $0x39c] sm:$0xf] %v5306
  %5819 = vst [vmem:[%s4 + $0x3a0] sm:$0xf] %v5307
  %5820 = vst [vmem:[%s4 + $0x3a4] sm:$0xf] %v5308
  %5821 = vst [vmem:[%s4 + $0x3a8] sm:$0xf] %v5309
  %5822 = vst [vmem:[%s4 + $0x3ac] sm:$0xf] %v5310
  %5823 = vst [vmem:[%s4 + $0x3b0] sm:$0xf] %v5311
  %5824 = vst [vmem:[%s4 + $0x3b4] sm:$0xf] %v5312
  %5825 = vst [vmem:[%s4 + $0x3b8] sm:$0xf] %v5313
  %5826 = vst [vmem:[%s4 + $0x3bc] sm:$0xf] %v5314
  %5827 = vst [vmem:[%s4 + $0x3c0] sm:$0xf] %v5315
  %5828 = vst [vmem:[%s4 + $0x3c4] sm:$0xf] %v5316
  %5829 = vst [vmem:[%s4 + $0x3c8] sm:$0xf] %v5317
  %5830 = vst [vmem:[%s4 + $0x3cc] sm:$0xf] %v5318
  %5831 = vst [vmem:[%s4 + $0x3d0] sm:$0xf] %v5319
  %5832 = vst [vmem:[%s4 + $0x3d4] sm:$0xf] %v5320
  %5833 = vst [vmem:[%s4 + $0x3d8] sm:$0xf] %v5321
  %5834 = vst [vmem:[%s4 + $0x3dc] sm:$0xf] %v5322
  %5835 = vst [vmem:[%s4 + $0x3e0] sm:$0xf] %v5323
  %5836 = vst [vmem:[%s4 + $0x3e4] sm:$0xf] %v5324
  %5837 = vst [vmem:[%s4 + $0x3e8] sm:$0xf] %v5325
  %5838 = vst [vmem:[%s4 + $0x3ec] sm:$0xf] %v5326
  %5839 = vst [vmem:[%s4 + $0x3f0] sm:$0xf] %v5327
  %5840 = vst [vmem:[%s4 + $0x3f4] sm:$0xf] %v5328
  %5841 = vst [vmem:[%s4 + $0x3f8] sm:$0xf] %v5329
  %5842 = vst [vmem:[%s4 + $0x3fc] sm:$0xf] %v5330
  // Predicated region
  $region18: #{generator_forward.8} parent=0 // pred_check
    _
  $region19: #{generator_forward.8} parent=0 // pred_check_branch
    %5844 = sbr.rel (0) target = $region21
  $region20: #{generator_forward.8} parent=0 // pred_region
    _
  $region21: #{generator_forward.8} parent=0 // pred_fallthru
    _
  // Predicated region
  $region22: #{generator_forward.8} parent=0 // pred_check
    _
  $region23: #{generator_forward.8} parent=0 // pred_check_branch
    %5846 = sbr.rel (0) target = $region25
  $region24: #{generator_forward.8} parent=0 // pred_region
    _
  $region25: #{generator_forward.8} parent=0 // pred_fallthru
    _

// kernel: generator_forward.9
$region0: #{generator_forward.9}
  #allocation0 [shape = 'u32[]', space=smem, size = 0x4, offset = 0x4, fixed_abs, tag = 'smem constant byte address 0x4 - core index']
  #allocation1 [shape = 'u32[144,128]{1,0:T(1,128)}', space=vmem, size = 0x12000, scoped, tag = 'internal scratch']
  %s0 = inlined_call_operand.vmem [shape: bf16[2048,128], index: 0, kind: input, shape index: {}]
  %s1 = inlined_call_operand.vmem [shape: bf16[128,128], index: 1, kind: input, shape index: {}]
  %s2 = inlined_call_operand.vmem [shape: f32[2048,128], index: 2, kind: output, shape index: {}]
  %s3 = sld [smem:[#allocation0]]
  $region18: #{generator_forward.9} parent=0
    _
  %s5 = ssub.s32 1, %s3
  %s6 = scalar_select 0, %s5, %s3
  // Predicated region
  $region2: #{generator_forward.9} parent=0 // pred_check
    _
  $region3: #{generator_forward.9} parent=0 // pred_check_branch
    %8 = sbr.rel (0) target = $region5
  $region4: #{generator_forward.9} parent=0 // pred_region
    _
  $region5: #{generator_forward.9} parent=0 // pred_fallthru
    _
  // Predicated region
  $region6: #{generator_forward.9} parent=0 // pred_check
    _
  $region7: #{generator_forward.9} parent=0 // pred_check_branch
    %10 = sbr.rel (0) target = $region9
  $region8: #{generator_forward.9} parent=0 // pred_region
    _
  $region9: #{generator_forward.9} parent=0 // pred_fallthru
    _
  %v12 = vld [vmem:[%s0] sm:$0xf]
  %v13 = vld [vmem:[%s0 + $0x4] sm:$0xf]
  %v14 = vld [vmem:[%s0 + $0x8] sm:$0xf]
  %v15 = vld [vmem:[%s0 + $0xc] sm:$0xf]
  %v16 = vld [vmem:[%s0 + $0x10] sm:$0xf]
  %v17 = vld [vmem:[%s0 + $0x14] sm:$0xf]
  %v18 = vld [vmem:[%s0 + $0x18] sm:$0xf]
  %v19 = vld [vmem:[%s0 + $0x1c] sm:$0xf]
  %v20 = vld [vmem:[%s0 + $0x20] sm:$0xf]
  %v21 = vld [vmem:[%s0 + $0x24] sm:$0xf]
  %v22 = vld [vmem:[%s0 + $0x28] sm:$0xf]
  %v23 = vld [vmem:[%s0 + $0x2c] sm:$0xf]
  %v24 = vld [vmem:[%s0 + $0x30] sm:$0xf]
  %v25 = vld [vmem:[%s0 + $0x34] sm:$0xf]
  %v26 = vld [vmem:[%s0 + $0x38] sm:$0xf]
  %v27 = vld [vmem:[%s0 + $0x3c] sm:$0xf]
  %v28 = vld [vmem:[%s0 + $0x40] sm:$0xf]
  %v29 = vld [vmem:[%s0 + $0x44] sm:$0xf]
  %v30 = vld [vmem:[%s0 + $0x48] sm:$0xf]
  %v31 = vld [vmem:[%s0 + $0x4c] sm:$0xf]
  %v32 = vld [vmem:[%s0 + $0x50] sm:$0xf]
  %v33 = vld [vmem:[%s0 + $0x54] sm:$0xf]
  %v34 = vld [vmem:[%s0 + $0x58] sm:$0xf]
  %v35 = vld [vmem:[%s0 + $0x5c] sm:$0xf]
  %v36 = vld [vmem:[%s0 + $0x60] sm:$0xf]
  %v37 = vld [vmem:[%s0 + $0x64] sm:$0xf]
  %v38 = vld [vmem:[%s0 + $0x68] sm:$0xf]
  %v39 = vld [vmem:[%s0 + $0x6c] sm:$0xf]
  %v40 = vld [vmem:[%s0 + $0x70] sm:$0xf]
  %v41 = vld [vmem:[%s0 + $0x74] sm:$0xf]
  %v42 = vld [vmem:[%s0 + $0x78] sm:$0xf]
  %v43 = vld [vmem:[%s0 + $0x7c] sm:$0xf]
  %v44 = vld [vmem:[%s0 + $0x80] sm:$0xf]
  %v45 = vld [vmem:[%s0 + $0x84] sm:$0xf]
  %v46 = vld [vmem:[%s0 + $0x88] sm:$0xf]
  %v47 = vld [vmem:[%s0 + $0x8c] sm:$0xf]
  %v48 = vld [vmem:[%s0 + $0x90] sm:$0xf]
  %v49 = vld [vmem:[%s0 + $0x94] sm:$0xf]
  %v50 = vld [vmem:[%s0 + $0x98] sm:$0xf]
  %v51 = vld [vmem:[%s0 + $0x9c] sm:$0xf]
  %v52 = vld [vmem:[%s0 + $0xa0] sm:$0xf]
  %v53 = vld [vmem:[%s0 + $0xa4] sm:$0xf]
  %v54 = vld [vmem:[%s0 + $0xa8] sm:$0xf]
  %v55 = vld [vmem:[%s0 + $0xac] sm:$0xf]
  %v56 = vld [vmem:[%s0 + $0xb0] sm:$0xf]
  %v57 = vld [vmem:[%s0 + $0xb4] sm:$0xf]
  %v58 = vld [vmem:[%s0 + $0xb8] sm:$0xf]
  %v59 = vld [vmem:[%s0 + $0xbc] sm:$0xf]
  %v60 = vld [vmem:[%s0 + $0xc0] sm:$0xf]
  %v61 = vld [vmem:[%s0 + $0xc4] sm:$0xf]
  %v62 = vld [vmem:[%s0 + $0xc8] sm:$0xf]
  %v63 = vld [vmem:[%s0 + $0xcc] sm:$0xf]
  %v64 = vld [vmem:[%s0 + $0xd0] sm:$0xf]
  %v65 = vld [vmem:[%s0 + $0xd4] sm:$0xf]
  %v66 = vld [vmem:[%s0 + $0xd8] sm:$0xf]
  %v67 = vld [vmem:[%s0 + $0xdc] sm:$0xf]
  %v68 = vld [vmem:[%s0 + $0xe0] sm:$0xf]
  %v69 = vld [vmem:[%s0 + $0xe4] sm:$0xf]
  %v70 = vld [vmem:[%s0 + $0xe8] sm:$0xf]
  %v71 = vld [vmem:[%s0 + $0xec] sm:$0xf]
  %v72 = vld [vmem:[%s0 + $0xf0] sm:$0xf]
  %v73 = vld [vmem:[%s0 + $0xf4] sm:$0xf]
  %v74 = vld [vmem:[%s0 + $0xf8] sm:$0xf]
  %v75 = vld [vmem:[%s0 + $0xfc] sm:$0xf]
  %v76 = vld [vmem:[%s0 + $0x100] sm:$0xf]
  %v77 = vld [vmem:[%s0 + $0x104] sm:$0xf]
  %v78 = vld [vmem:[%s0 + $0x108] sm:$0xf]
  %v79 = vld [vmem:[%s0 + $0x10c] sm:$0xf]
  %v80 = vld [vmem:[%s0 + $0x110] sm:$0xf]
  %v81 = vld [vmem:[%s0 + $0x114] sm:$0xf]
  %v82 = vld [vmem:[%s0 + $0x118] sm:$0xf]
  %v83 = vld [vmem:[%s0 + $0x11c] sm:$0xf]
  %v84 = vld [vmem:[%s0 + $0x120] sm:$0xf]
  %v85 = vld [vmem:[%s0 + $0x124] sm:$0xf]
  %v86 = vld [vmem:[%s0 + $0x128] sm:$0xf]
  %v87 = vld [vmem:[%s0 + $0x12c] sm:$0xf]
  %v88 = vld [vmem:[%s0 + $0x130] sm:$0xf]
  %v89 = vld [vmem:[%s0 + $0x134] sm:$0xf]
  %v90 = vld [vmem:[%s0 + $0x138] sm:$0xf]
  %v91 = vld [vmem:[%s0 + $0x13c] sm:$0xf]
  %v92 = vld [vmem:[%s0 + $0x140] sm:$0xf]
  %v93 = vld [vmem:[%s0 + $0x144] sm:$0xf]
  %v94 = vld [vmem:[%s0 + $0x148] sm:$0xf]
  %v95 = vld [vmem:[%s0 + $0x14c] sm:$0xf]
  %v96 = vld [vmem:[%s0 + $0x150] sm:$0xf]
  %v97 = vld [vmem:[%s0 + $0x154] sm:$0xf]
  %v98 = vld [vmem:[%s0 + $0x158] sm:$0xf]
  %v99 = vld [vmem:[%s0 + $0x15c] sm:$0xf]
  %v100 = vld [vmem:[%s0 + $0x160] sm:$0xf]
  %v101 = vld [vmem:[%s0 + $0x164] sm:$0xf]
  %v102 = vld [vmem:[%s0 + $0x168] sm:$0xf]
  %v103 = vld [vmem:[%s0 + $0x16c] sm:$0xf]
  %v104 = vld [vmem:[%s0 + $0x170] sm:$0xf]
  %v105 = vld [vmem:[%s0 + $0x174] sm:$0xf]
  %v106 = vld [vmem:[%s0 + $0x178] sm:$0xf]
  %v107 = vld [vmem:[%s0 + $0x17c] sm:$0xf]
  %v108 = vld [vmem:[%s0 + $0x180] sm:$0xf]
  %v109 = vld [vmem:[%s0 + $0x184] sm:$0xf]
  %v110 = vld [vmem:[%s0 + $0x188] sm:$0xf]
  %v111 = vld [vmem:[%s0 + $0x18c] sm:$0xf]
  %v112 = vld [vmem:[%s0 + $0x190] sm:$0xf]
  %v113 = vld [vmem:[%s0 + $0x194] sm:$0xf]
  %v114 = vld [vmem:[%s0 + $0x198] sm:$0xf]
  %v115 = vld [vmem:[%s0 + $0x19c] sm:$0xf]
  %v116 = vld [vmem:[%s0 + $0x1a0] sm:$0xf]
  %v117 = vld [vmem:[%s0 + $0x1a4] sm:$0xf]
  %v118 = vld [vmem:[%s0 + $0x1a8] sm:$0xf]
  %v119 = vld [vmem:[%s0 + $0x1ac] sm:$0xf]
  %v120 = vld [vmem:[%s0 + $0x1b0] sm:$0xf]
  %v121 = vld [vmem:[%s0 + $0x1b4] sm:$0xf]
  %v122 = vld [vmem:[%s0 + $0x1b8] sm:$0xf]
  %v123 = vld [vmem:[%s0 + $0x1bc] sm:$0xf]
  %v124 = vld [vmem:[%s0 + $0x1c0] sm:$0xf]
  %v125 = vld [vmem:[%s0 + $0x1c4] sm:$0xf]
  %v126 = vld [vmem:[%s0 + $0x1c8] sm:$0xf]
  %v127 = vld [vmem:[%s0 + $0x1cc] sm:$0xf]
  %v128 = vld [vmem:[%s0 + $0x1d0] sm:$0xf]
  %v129 = vld [vmem:[%s0 + $0x1d4] sm:$0xf]
  %v130 = vld [vmem:[%s0 + $0x1d8] sm:$0xf]
  %v131 = vld [vmem:[%s0 + $0x1dc] sm:$0xf]
  %v132 = vld [vmem:[%s0 + $0x1e0] sm:$0xf]
  %v133 = vld [vmem:[%s0 + $0x1e4] sm:$0xf]
  %v134 = vld [vmem:[%s0 + $0x1e8] sm:$0xf]
  %v135 = vld [vmem:[%s0 + $0x1ec] sm:$0xf]
  %v136 = vld [vmem:[%s0 + $0x1f0] sm:$0xf]
  %v137 = vld [vmem:[%s0 + $0x1f4] sm:$0xf]
  %v138 = vld [vmem:[%s0 + $0x1f8] sm:$0xf]
  %v139 = vld [vmem:[%s0 + $0x1fc] sm:$0xf]
  %v140 = vld [vmem:[%s0 + $0x200] sm:$0xf]
  %v141 = vld [vmem:[%s0 + $0x204] sm:$0xf]
  %v142 = vld [vmem:[%s0 + $0x208] sm:$0xf]
  %v143 = vld [vmem:[%s0 + $0x20c] sm:$0xf]
  %v144 = vld [vmem:[%s0 + $0x210] sm:$0xf]
  %v145 = vld [vmem:[%s0 + $0x214] sm:$0xf]
  %v146 = vld [vmem:[%s0 + $0x218] sm:$0xf]
  %v147 = vld [vmem:[%s0 + $0x21c] sm:$0xf]
  %v148 = vld [vmem:[%s0 + $0x220] sm:$0xf]
  %v149 = vld [vmem:[%s0 + $0x224] sm:$0xf]
  %v150 = vld [vmem:[%s0 + $0x228] sm:$0xf]
  %v151 = vld [vmem:[%s0 + $0x22c] sm:$0xf]
  %v152 = vld [vmem:[%s0 + $0x230] sm:$0xf]
  %v153 = vld [vmem:[%s0 + $0x234] sm:$0xf]
  %v154 = vld [vmem:[%s0 + $0x238] sm:$0xf]
  %v155 = vld [vmem:[%s0 + $0x23c] sm:$0xf]
  %v156 = vld [vmem:[%s0 + $0x240] sm:$0xf]
  %v157 = vld [vmem:[%s0 + $0x244] sm:$0xf]
  %v158 = vld [vmem:[%s0 + $0x248] sm:$0xf]
  %v159 = vld [vmem:[%s0 + $0x24c] sm:$0xf]
  %v160 = vld [vmem:[%s0 + $0x250] sm:$0xf]
  %v161 = vld [vmem:[%s0 + $0x254] sm:$0xf]
  %v162 = vld [vmem:[%s0 + $0x258] sm:$0xf]
  %v163 = vld [vmem:[%s0 + $0x25c] sm:$0xf]
  %v164 = vld [vmem:[%s0 + $0x260] sm:$0xf]
  %v165 = vld [vmem:[%s0 + $0x264] sm:$0xf]
  %v166 = vld [vmem:[%s0 + $0x268] sm:$0xf]
  %v167 = vld [vmem:[%s0 + $0x26c] sm:$0xf]
  %v168 = vld [vmem:[%s0 + $0x270] sm:$0xf]
  %v169 = vld [vmem:[%s0 + $0x274] sm:$0xf]
  %v170 = vld [vmem:[%s0 + $0x278] sm:$0xf]
  %v171 = vld [vmem:[%s0 + $0x27c] sm:$0xf]
  %v172 = vld [vmem:[%s0 + $0x280] sm:$0xf]
  %v173 = vld [vmem:[%s0 + $0x284] sm:$0xf]
  %v174 = vld [vmem:[%s0 + $0x288] sm:$0xf]
  %v175 = vld [vmem:[%s0 + $0x28c] sm:$0xf]
  %v176 = vld [vmem:[%s0 + $0x290] sm:$0xf]
  %v177 = vld [vmem:[%s0 + $0x294] sm:$0xf]
  %v178 = vld [vmem:[%s0 + $0x298] sm:$0xf]
  %v179 = vld [vmem:[%s0 + $0x29c] sm:$0xf]
  %v180 = vld [vmem:[%s0 + $0x2a0] sm:$0xf]
  %v181 = vld [vmem:[%s0 + $0x2a4] sm:$0xf]
  %v182 = vld [vmem:[%s0 + $0x2a8] sm:$0xf]
  %v183 = vld [vmem:[%s0 + $0x2ac] sm:$0xf]
  %v184 = vld [vmem:[%s0 + $0x2b0] sm:$0xf]
  %v185 = vld [vmem:[%s0 + $0x2b4] sm:$0xf]
  %v186 = vld [vmem:[%s0 + $0x2b8] sm:$0xf]
  %v187 = vld [vmem:[%s0 + $0x2bc] sm:$0xf]
  %v188 = vld [vmem:[%s0 + $0x2c0] sm:$0xf]
  %v189 = vld [vmem:[%s0 + $0x2c4] sm:$0xf]
  %v190 = vld [vmem:[%s0 + $0x2c8] sm:$0xf]
  %v191 = vld [vmem:[%s0 + $0x2cc] sm:$0xf]
  %v192 = vld [vmem:[%s0 + $0x2d0] sm:$0xf]
  %v193 = vld [vmem:[%s0 + $0x2d4] sm:$0xf]
  %v194 = vld [vmem:[%s0 + $0x2d8] sm:$0xf]
  %v195 = vld [vmem:[%s0 + $0x2dc] sm:$0xf]
  %v196 = vld [vmem:[%s0 + $0x2e0] sm:$0xf]
  %v197 = vld [vmem:[%s0 + $0x2e4] sm:$0xf]
  %v198 = vld [vmem:[%s0 + $0x2e8] sm:$0xf]
  %v199 = vld [vmem:[%s0 + $0x2ec] sm:$0xf]
  %v200 = vld [vmem:[%s0 + $0x2f0] sm:$0xf]
  %v201 = vld [vmem:[%s0 + $0x2f4] sm:$0xf]
  %v202 = vld [vmem:[%s0 + $0x2f8] sm:$0xf]
  %v203 = vld [vmem:[%s0 + $0x2fc] sm:$0xf]
  %v204 = vld [vmem:[%s0 + $0x300] sm:$0xf]
  %v205 = vld [vmem:[%s0 + $0x304] sm:$0xf]
  %v206 = vld [vmem:[%s0 + $0x308] sm:$0xf]
  %v207 = vld [vmem:[%s0 + $0x30c] sm:$0xf]
  %v208 = vld [vmem:[%s0 + $0x310] sm:$0xf]
  %v209 = vld [vmem:[%s0 + $0x314] sm:$0xf]
  %v210 = vld [vmem:[%s0 + $0x318] sm:$0xf]
  %v211 = vld [vmem:[%s0 + $0x31c] sm:$0xf]
  %v212 = vld [vmem:[%s0 + $0x320] sm:$0xf]
  %v213 = vld [vmem:[%s0 + $0x324] sm:$0xf]
  %v214 = vld [vmem:[%s0 + $0x328] sm:$0xf]
  %v215 = vld [vmem:[%s0 + $0x32c] sm:$0xf]
  %v216 = vld [vmem:[%s0 + $0x330] sm:$0xf]
  %v217 = vld [vmem:[%s0 + $0x334] sm:$0xf]
  %v218 = vld [vmem:[%s0 + $0x338] sm:$0xf]
  %v219 = vld [vmem:[%s0 + $0x33c] sm:$0xf]
  %v220 = vld [vmem:[%s0 + $0x340] sm:$0xf]
  %v221 = vld [vmem:[%s0 + $0x344] sm:$0xf]
  %v222 = vld [vmem:[%s0 + $0x348] sm:$0xf]
  %v223 = vld [vmem:[%s0 + $0x34c] sm:$0xf]
  %v224 = vld [vmem:[%s0 + $0x350] sm:$0xf]
  %v225 = vld [vmem:[%s0 + $0x354] sm:$0xf]
  %v226 = vld [vmem:[%s0 + $0x358] sm:$0xf]
  %v227 = vld [vmem:[%s0 + $0x35c] sm:$0xf]
  %v228 = vld [vmem:[%s0 + $0x360] sm:$0xf]
  %v229 = vld [vmem:[%s0 + $0x364] sm:$0xf]
  %v230 = vld [vmem:[%s0 + $0x368] sm:$0xf]
  %v231 = vld [vmem:[%s0 + $0x36c] sm:$0xf]
  %v232 = vld [vmem:[%s0 + $0x370] sm:$0xf]
  %v233 = vld [vmem:[%s0 + $0x374] sm:$0xf]
  %v234 = vld [vmem:[%s0 + $0x378] sm:$0xf]
  %v235 = vld [vmem:[%s0 + $0x37c] sm:$0xf]
  %v236 = vld [vmem:[%s0 + $0x380] sm:$0xf]
  %v237 = vld [vmem:[%s0 + $0x384] sm:$0xf]
  %v238 = vld [vmem:[%s0 + $0x388] sm:$0xf]
  %v239 = vld [vmem:[%s0 + $0x38c] sm:$0xf]
  %v240 = vld [vmem:[%s0 + $0x390] sm:$0xf]
  %v241 = vld [vmem:[%s0 + $0x394] sm:$0xf]
  %v242 = vld [vmem:[%s0 + $0x398] sm:$0xf]
  %v243 = vld [vmem:[%s0 + $0x39c] sm:$0xf]
  %v244 = vld [vmem:[%s0 + $0x3a0] sm:$0xf]
  %v245 = vld [vmem:[%s0 + $0x3a4] sm:$0xf]
  %v246 = vld [vmem:[%s0 + $0x3a8] sm:$0xf]
  %v247 = vld [vmem:[%s0 + $0x3ac] sm:$0xf]
  %v248 = vld [vmem:[%s0 + $0x3b0] sm:$0xf]
  %v249 = vld [vmem:[%s0 + $0x3b4] sm:$0xf]
  %v250 = vld [vmem:[%s0 + $0x3b8] sm:$0xf]
  %v251 = vld [vmem:[%s0 + $0x3bc] sm:$0xf]
  %v252 = vld [vmem:[%s0 + $0x3c0] sm:$0xf]
  %v253 = vld [vmem:[%s0 + $0x3c4] sm:$0xf]
  %v254 = vld [vmem:[%s0 + $0x3c8] sm:$0xf]
  %v255 = vld [vmem:[%s0 + $0x3cc] sm:$0xf]
  %v256 = vld [vmem:[%s0 + $0x3d0] sm:$0xf]
  %v257 = vld [vmem:[%s0 + $0x3d4] sm:$0xf]
  %v258 = vld [vmem:[%s0 + $0x3d8] sm:$0xf]
  %v259 = vld [vmem:[%s0 + $0x3dc] sm:$0xf]
  %v260 = vld [vmem:[%s0 + $0x3e0] sm:$0xf]
  %v261 = vld [vmem:[%s0 + $0x3e4] sm:$0xf]
  %v262 = vld [vmem:[%s0 + $0x3e8] sm:$0xf]
  %v263 = vld [vmem:[%s0 + $0x3ec] sm:$0xf]
  %v264 = vld [vmem:[%s0 + $0x3f0] sm:$0xf]
  %v265 = vld [vmem:[%s0 + $0x3f4] sm:$0xf]
  %v266 = vld [vmem:[%s0 + $0x3f8] sm:$0xf]
  %v267 = vld [vmem:[%s0 + $0x3fc] sm:$0xf]
  %v268 = vld [vmem:[%s1] sm:$0xf]
  %v269 = vld [vmem:[%s1 + $0x4] sm:$0xf]
  %v270 = vld [vmem:[%s1 + $0x8] sm:$0xf]
  %v271 = vld [vmem:[%s1 + $0xc] sm:$0xf]
  %v272 = vld [vmem:[%s1 + $0x10] sm:$0xf]
  %v273 = vld [vmem:[%s1 + $0x14] sm:$0xf]
  %v274 = vld [vmem:[%s1 + $0x18] sm:$0xf]
  %v275 = vld [vmem:[%s1 + $0x1c] sm:$0xf]
  %v276 = vld [vmem:[%s1 + $0x20] sm:$0xf]
  %v277 = vld [vmem:[%s1 + $0x24] sm:$0xf]
  %v278 = vld [vmem:[%s1 + $0x28] sm:$0xf]
  %v279 = vld [vmem:[%s1 + $0x2c] sm:$0xf]
  %v280 = vld [vmem:[%s1 + $0x30] sm:$0xf]
  %v281 = vld [vmem:[%s1 + $0x34] sm:$0xf]
  %v282 = vld [vmem:[%s1 + $0x38] sm:$0xf]
  %v283 = vld [vmem:[%s1 + $0x3c] sm:$0xf]
  %v540 = vunpack.c.l.b16 %v12
  %v541 = vunpack.c.l.b16 %v13
  %v542 = vunpack.c.l.b16 %v14
  %v543 = vunpack.c.l.b16 %v15
  %v544 = vunpack.c.l.b16 %v16
  %v545 = vunpack.c.l.b16 %v17
  %v546 = vunpack.c.l.b16 %v18
  %v547 = vunpack.c.l.b16 %v19
  %v548 = vunpack.c.l.b16 %v20
  %v549 = vunpack.c.l.b16 %v21
  %v550 = vunpack.c.l.b16 %v22
  %v551 = vunpack.c.l.b16 %v23
  %v552 = vunpack.c.l.b16 %v24
  %v553 = vunpack.c.l.b16 %v25
  %v554 = vunpack.c.l.b16 %v26
  %v555 = vunpack.c.l.b16 %v27
  %v556 = vunpack.c.l.b16 %v28
  %v557 = vunpack.c.l.b16 %v29
  %v558 = vunpack.c.l.b16 %v30
  %v559 = vunpack.c.l.b16 %v31
  %v560 = vunpack.c.l.b16 %v32
  %v561 = vunpack.c.l.b16 %v33
  %v562 = vunpack.c.l.b16 %v34
  %v563 = vunpack.c.l.b16 %v35
  %v564 = vunpack.c.l.b16 %v36
  %v565 = vunpack.c.l.b16 %v37
  %v566 = vunpack.c.l.b16 %v38
  %v567 = vunpack.c.l.b16 %v39
  %v568 = vunpack.c.l.b16 %v40
  %v569 = vunpack.c.l.b16 %v41
  %v570 = vunpack.c.l.b16 %v42
  %v571 = vunpack.c.l.b16 %v43
  %v572 = vunpack.c.l.b16 %v44
  %v573 = vunpack.c.l.b16 %v45
  %v574 = vunpack.c.l.b16 %v46
  %v575 = vunpack.c.l.b16 %v47
  %v576 = vunpack.c.l.b16 %v48
  %v577 = vunpack.c.l.b16 %v49
  %v578 = vunpack.c.l.b16 %v50
  %v579 = vunpack.c.l.b16 %v51
  %v580 = vunpack.c.l.b16 %v52
  %v581 = vunpack.c.l.b16 %v53
  %v582 = vunpack.c.l.b16 %v54
  %v583 = vunpack.c.l.b16 %v55
  %v584 = vunpack.c.l.b16 %v56
  %v585 = vunpack.c.l.b16 %v57
  %v586 = vunpack.c.l.b16 %v58
  %v587 = vunpack.c.l.b16 %v59
  %v588 = vunpack.c.l.b16 %v60
  %v589 = vunpack.c.l.b16 %v61
  %v590 = vunpack.c.l.b16 %v62
  %v591 = vunpack.c.l.b16 %v63
  %v592 = vunpack.c.l.b16 %v64
  %v593 = vunpack.c.l.b16 %v65
  %v594 = vunpack.c.l.b16 %v66
  %v595 = vunpack.c.l.b16 %v67
  %v596 = vunpack.c.l.b16 %v68
  %v597 = vunpack.c.l.b16 %v69
  %v598 = vunpack.c.l.b16 %v70
  %v599 = vunpack.c.l.b16 %v71
  %v600 = vunpack.c.l.b16 %v72
  %v601 = vunpack.c.l.b16 %v73
  %v602 = vunpack.c.l.b16 %v74
  %v603 = vunpack.c.l.b16 %v75
  %v604 = vunpack.c.l.b16 %v76
  %v605 = vunpack.c.l.b16 %v77
  %v606 = vunpack.c.l.b16 %v78
  %v607 = vunpack.c.l.b16 %v79
  %v608 = vunpack.c.l.b16 %v80
  %v609 = vunpack.c.l.b16 %v81
  %v610 = vunpack.c.l.b16 %v82
  %v611 = vunpack.c.l.b16 %v83
  %v612 = vunpack.c.l.b16 %v84
  %v613 = vunpack.c.l.b16 %v85
  %v614 = vunpack.c.l.b16 %v86
  %v615 = vunpack.c.l.b16 %v87
  %v616 = vunpack.c.l.b16 %v88
  %v617 = vunpack.c.l.b16 %v89
  %v618 = vunpack.c.l.b16 %v90
  %v619 = vunpack.c.l.b16 %v91
  %v620 = vunpack.c.l.b16 %v92
  %v621 = vunpack.c.l.b16 %v93
  %v622 = vunpack.c.l.b16 %v94
  %v623 = vunpack.c.l.b16 %v95
  %v624 = vunpack.c.l.b16 %v96
  %v625 = vunpack.c.l.b16 %v97
  %v626 = vunpack.c.l.b16 %v98
  %v627 = vunpack.c.l.b16 %v99
  %v628 = vunpack.c.l.b16 %v100
  %v629 = vunpack.c.l.b16 %v101
  %v630 = vunpack.c.l.b16 %v102
  %v631 = vunpack.c.l.b16 %v103
  %v632 = vunpack.c.l.b16 %v104
  %v633 = vunpack.c.l.b16 %v105
  %v634 = vunpack.c.l.b16 %v106
  %v635 = vunpack.c.l.b16 %v107
  %v636 = vunpack.c.l.b16 %v108
  %v637 = vunpack.c.l.b16 %v109
  %v638 = vunpack.c.l.b16 %v110
  %v639 = vunpack.c.l.b16 %v111
  %v640 = vunpack.c.l.b16 %v112
  %v641 = vunpack.c.l.b16 %v113
  %v642 = vunpack.c.l.b16 %v114
  %v643 = vunpack.c.l.b16 %v115
  %v644 = vunpack.c.l.b16 %v116
  %v645 = vunpack.c.l.b16 %v117
  %v646 = vunpack.c.l.b16 %v118
  %v647 = vunpack.c.l.b16 %v119
  %v648 = vunpack.c.l.b16 %v120
  %v649 = vunpack.c.l.b16 %v121
  %v650 = vunpack.c.l.b16 %v122
  %v651 = vunpack.c.l.b16 %v123
  %v652 = vunpack.c.l.b16 %v124
  %v653 = vunpack.c.l.b16 %v125
  %v654 = vunpack.c.l.b16 %v126
  %v655 = vunpack.c.l.b16 %v127
  %v656 = vunpack.c.l.b16 %v128
  %v657 = vunpack.c.l.b16 %v129
  %v658 = vunpack.c.l.b16 %v130
  %v659 = vunpack.c.l.b16 %v131
  %v660 = vunpack.c.l.b16 %v132
  %v661 = vunpack.c.l.b16 %v133
  %v662 = vunpack.c.l.b16 %v134
  %v663 = vunpack.c.l.b16 %v135
  %v664 = vunpack.c.l.b16 %v136
  %v665 = vunpack.c.l.b16 %v137
  %v666 = vunpack.c.l.b16 %v138
  %v667 = vunpack.c.l.b16 %v139
  %v668 = vunpack.c.l.b16 %v140
  %v669 = vunpack.c.l.b16 %v141
  %v670 = vunpack.c.l.b16 %v142
  %v671 = vunpack.c.l.b16 %v143
  %v672 = vunpack.c.l.b16 %v144
  %v673 = vunpack.c.l.b16 %v145
  %v674 = vunpack.c.l.b16 %v146
  %v675 = vunpack.c.l.b16 %v147
  %v676 = vunpack.c.l.b16 %v148
  %v677 = vunpack.c.l.b16 %v149
  %v678 = vunpack.c.l.b16 %v150
  %v679 = vunpack.c.l.b16 %v151
  %v680 = vunpack.c.l.b16 %v152
  %v681 = vunpack.c.l.b16 %v153
  %v682 = vunpack.c.l.b16 %v154
  %v683 = vunpack.c.l.b16 %v155
  %v684 = vunpack.c.l.b16 %v156
  %v685 = vunpack.c.l.b16 %v157
  %v686 = vunpack.c.l.b16 %v158
  %v687 = vunpack.c.l.b16 %v159
  %v688 = vunpack.c.l.b16 %v160
  %v689 = vunpack.c.l.b16 %v161
  %v690 = vunpack.c.l.b16 %v162
  %v691 = vunpack.c.l.b16 %v163
  %v692 = vunpack.c.l.b16 %v164
  %v693 = vunpack.c.l.b16 %v165
  %v694 = vunpack.c.l.b16 %v166
  %v695 = vunpack.c.l.b16 %v167
  %v696 = vunpack.c.l.b16 %v168
  %v697 = vunpack.c.l.b16 %v169
  %v698 = vunpack.c.l.b16 %v170
  %v699 = vunpack.c.l.b16 %v171
  %v700 = vunpack.c.l.b16 %v172
  %v701 = vunpack.c.l.b16 %v173
  %v702 = vunpack.c.l.b16 %v174
  %v703 = vunpack.c.l.b16 %v175
  %v704 = vunpack.c.l.b16 %v176
  %v705 = vunpack.c.l.b16 %v177
  %v706 = vunpack.c.l.b16 %v178
  %v707 = vunpack.c.l.b16 %v179
  %v708 = vunpack.c.l.b16 %v180
  %v709 = vunpack.c.l.b16 %v181
  %v710 = vunpack.c.l.b16 %v182
  %v711 = vunpack.c.l.b16 %v183
  %v712 = vunpack.c.l.b16 %v184
  %v713 = vunpack.c.l.b16 %v185
  %v714 = vunpack.c.l.b16 %v186
  %v715 = vunpack.c.l.b16 %v187
  %v716 = vunpack.c.l.b16 %v188
  %v717 = vunpack.c.l.b16 %v189
  %v718 = vunpack.c.l.b16 %v190
  %v719 = vunpack.c.l.b16 %v191
  %v720 = vunpack.c.l.b16 %v192
  %v721 = vunpack.c.l.b16 %v193
  %v722 = vunpack.c.l.b16 %v194
  %v723 = vunpack.c.l.b16 %v195
  %v724 = vunpack.c.l.b16 %v196
  %v725 = vunpack.c.l.b16 %v197
  %v726 = vunpack.c.l.b16 %v198
  %v727 = vunpack.c.l.b16 %v199
  %v728 = vunpack.c.l.b16 %v200
  %v729 = vunpack.c.l.b16 %v201
  %v730 = vunpack.c.l.b16 %v202
  %v731 = vunpack.c.l.b16 %v203
  %v732 = vunpack.c.l.b16 %v204
  %v733 = vunpack.c.l.b16 %v205
  %v734 = vunpack.c.l.b16 %v206
  %v735 = vunpack.c.l.b16 %v207
  %v736 = vunpack.c.l.b16 %v208
  %v737 = vunpack.c.l.b16 %v209
  %v738 = vunpack.c.l.b16 %v210
  %v739 = vunpack.c.l.b16 %v211
  %v740 = vunpack.c.l.b16 %v212
  %v741 = vunpack.c.l.b16 %v213
  %v742 = vunpack.c.l.b16 %v214
  %v743 = vunpack.c.l.b16 %v215
  %v744 = vunpack.c.l.b16 %v216
  %v745 = vunpack.c.l.b16 %v217
  %v746 = vunpack.c.l.b16 %v218
  %v747 = vunpack.c.l.b16 %v219
  %v748 = vunpack.c.l.b16 %v220
  %v749 = vunpack.c.l.b16 %v221
  %v750 = vunpack.c.l.b16 %v222
  %v751 = vunpack.c.l.b16 %v223
  %v752 = vunpack.c.l.b16 %v224
  %v753 = vunpack.c.l.b16 %v225
  %v754 = vunpack.c.l.b16 %v226
  %v755 = vunpack.c.l.b16 %v227
  %v756 = vunpack.c.l.b16 %v228
  %v757 = vunpack.c.l.b16 %v229
  %v758 = vunpack.c.l.b16 %v230
  %v759 = vunpack.c.l.b16 %v231
  %v760 = vunpack.c.l.b16 %v232
  %v761 = vunpack.c.l.b16 %v233
  %v762 = vunpack.c.l.b16 %v234
  %v763 = vunpack.c.l.b16 %v235
  %v764 = vunpack.c.l.b16 %v236
  %v765 = vunpack.c.l.b16 %v237
  %v766 = vunpack.c.l.b16 %v238
  %v767 = vunpack.c.l.b16 %v239
  %v768 = vunpack.c.l.b16 %v240
  %v769 = vunpack.c.l.b16 %v241
  %v770 = vunpack.c.l.b16 %v242
  %v771 = vunpack.c.l.b16 %v243
  %v772 = vunpack.c.l.b16 %v244
  %v773 = vunpack.c.l.b16 %v245
  %v774 = vunpack.c.l.b16 %v246
  %v775 = vunpack.c.l.b16 %v247
  %v776 = vunpack.c.l.b16 %v248
  %v777 = vunpack.c.l.b16 %v249
  %v778 = vunpack.c.l.b16 %v250
  %v779 = vunpack.c.l.b16 %v251
  %v780 = vunpack.c.l.b16 %v252
  %v781 = vunpack.c.l.b16 %v253
  %v782 = vunpack.c.l.b16 %v254
  %v783 = vunpack.c.l.b16 %v255
  %v784 = vunpack.c.l.b16 %v256
  %v785 = vunpack.c.l.b16 %v257
  %v786 = vunpack.c.l.b16 %v258
  %v787 = vunpack.c.l.b16 %v259
  %v788 = vunpack.c.l.b16 %v260
  %v789 = vunpack.c.l.b16 %v261
  %v790 = vunpack.c.l.b16 %v262
  %v791 = vunpack.c.l.b16 %v263
  %v792 = vunpack.c.l.b16 %v264
  %v793 = vunpack.c.l.b16 %v265
  %v794 = vunpack.c.l.b16 %v266
  %v795 = vunpack.c.l.b16 %v267
  %v796 = vpack.c.b16 %v541, %v540
  %v797 = vpack.c.b16 %v543, %v542
  %v798 = vpack.c.b16 %v545, %v544
  %v799 = vpack.c.b16 %v547, %v546
  %v800 = vpack.c.b16 %v549, %v548
  %v801 = vpack.c.b16 %v551, %v550
  %v802 = vpack.c.b16 %v553, %v552
  %v803 = vpack.c.b16 %v555, %v554
  %v804 = vpack.c.b16 %v557, %v556
  %v805 = vpack.c.b16 %v559, %v558
  %v806 = vpack.c.b16 %v561, %v560
  %v807 = vpack.c.b16 %v563, %v562
  %v808 = vpack.c.b16 %v565, %v564
  %v809 = vpack.c.b16 %v567, %v566
  %v810 = vpack.c.b16 %v569, %v568
  %v811 = vpack.c.b16 %v571, %v570
  %v812 = vpack.c.b16 %v573, %v572
  %v813 = vpack.c.b16 %v575, %v574
  %v814 = vpack.c.b16 %v577, %v576
  %v815 = vpack.c.b16 %v579, %v578
  %v816 = vpack.c.b16 %v581, %v580
  %v817 = vpack.c.b16 %v583, %v582
  %v818 = vpack.c.b16 %v585, %v584
  %v819 = vpack.c.b16 %v587, %v586
  %v820 = vpack.c.b16 %v589, %v588
  %v821 = vpack.c.b16 %v591, %v590
  %v822 = vpack.c.b16 %v593, %v592
  %v823 = vpack.c.b16 %v595, %v594
  %v824 = vpack.c.b16 %v597, %v596
  %v825 = vpack.c.b16 %v599, %v598
  %v826 = vpack.c.b16 %v601, %v600
  %v827 = vpack.c.b16 %v603, %v602
  %v828 = vpack.c.b16 %v605, %v604
  %v829 = vpack.c.b16 %v607, %v606
  %v830 = vpack.c.b16 %v609, %v608
  %v831 = vpack.c.b16 %v611, %v610
  %v832 = vpack.c.b16 %v613, %v612
  %v833 = vpack.c.b16 %v615, %v614
  %v834 = vpack.c.b16 %v617, %v616
  %v835 = vpack.c.b16 %v619, %v618
  %v836 = vpack.c.b16 %v621, %v620
  %v837 = vpack.c.b16 %v623, %v622
  %v838 = vpack.c.b16 %v625, %v624
  %v839 = vpack.c.b16 %v627, %v626
  %v840 = vpack.c.b16 %v629, %v628
  %v841 = vpack.c.b16 %v631, %v630
  %v842 = vpack.c.b16 %v633, %v632
  %v843 = vpack.c.b16 %v635, %v634
  %v844 = vpack.c.b16 %v637, %v636
  %v845 = vpack.c.b16 %v639, %v638
  %v846 = vpack.c.b16 %v641, %v640
  %v847 = vpack.c.b16 %v643, %v642
  %v848 = vpack.c.b16 %v645, %v644
  %v849 = vpack.c.b16 %v647, %v646
  %v850 = vpack.c.b16 %v649, %v648
  %v851 = vpack.c.b16 %v651, %v650
  %v852 = vpack.c.b16 %v653, %v652
  %v853 = vpack.c.b16 %v655, %v654
  %v854 = vpack.c.b16 %v657, %v656
  %v855 = vpack.c.b16 %v659, %v658
  %v856 = vpack.c.b16 %v661, %v660
  %v857 = vpack.c.b16 %v663, %v662
  %v858 = vpack.c.b16 %v665, %v664
  %v859 = vpack.c.b16 %v667, %v666
  %v860 = vpack.c.b16 %v669, %v668
  %v861 = vpack.c.b16 %v671, %v670
  %v862 = vpack.c.b16 %v673, %v672
  %v863 = vpack.c.b16 %v675, %v674
  %v864 = vpack.c.b16 %v677, %v676
  %v865 = vpack.c.b16 %v679, %v678
  %v866 = vpack.c.b16 %v681, %v680
  %v867 = vpack.c.b16 %v683, %v682
  %v868 = vpack.c.b16 %v685, %v684
  %v869 = vpack.c.b16 %v687, %v686
  %v870 = vpack.c.b16 %v689, %v688
  %v871 = vpack.c.b16 %v691, %v690
  %v872 = vpack.c.b16 %v693, %v692
  %v873 = vpack.c.b16 %v695, %v694
  %v874 = vpack.c.b16 %v697, %v696
  %v875 = vpack.c.b16 %v699, %v698
  %v876 = vpack.c.b16 %v701, %v700
  %v877 = vpack.c.b16 %v703, %v702
  %v878 = vpack.c.b16 %v705, %v704
  %v879 = vpack.c.b16 %v707, %v706
  %v880 = vpack.c.b16 %v709, %v708
  %v881 = vpack.c.b16 %v711, %v710
  %v882 = vpack.c.b16 %v713, %v712
  %v883 = vpack.c.b16 %v715, %v714
  %v884 = vpack.c.b16 %v717, %v716
  %v885 = vpack.c.b16 %v719, %v718
  %v886 = vpack.c.b16 %v721, %v720
  %v887 = vpack.c.b16 %v723, %v722
  %v888 = vpack.c.b16 %v725, %v724
  %v889 = vpack.c.b16 %v727, %v726
  %v890 = vpack.c.b16 %v729, %v728
  %v891 = vpack.c.b16 %v731, %v730
  %v892 = vpack.c.b16 %v733, %v732
  %v893 = vpack.c.b16 %v735, %v734
  %v894 = vpack.c.b16 %v737, %v736
  %v895 = vpack.c.b16 %v739, %v738
  %v896 = vpack.c.b16 %v741, %v740
  %v897 = vpack.c.b16 %v743, %v742
  %v898 = vpack.c.b16 %v745, %v744
  %v899 = vpack.c.b16 %v747, %v746
  %v900 = vpack.c.b16 %v749, %v748
  %v901 = vpack.c.b16 %v751, %v750
  %v902 = vpack.c.b16 %v753, %v752
  %v903 = vpack.c.b16 %v755, %v754
  %v904 = vpack.c.b16 %v757, %v756
  %v905 = vpack.c.b16 %v759, %v758
  %v906 = vpack.c.b16 %v761, %v760
  %v907 = vpack.c.b16 %v763, %v762
  %v908 = vpack.c.b16 %v765, %v764
  %v909 = vpack.c.b16 %v767, %v766
  %v910 = vpack.c.b16 %v769, %v768
  %v911 = vpack.c.b16 %v771, %v770
  %v912 = vpack.c.b16 %v773, %v772
  %v913 = vpack.c.b16 %v775, %v774
  %v914 = vpack.c.b16 %v777, %v776
  %v915 = vpack.c.b16 %v779, %v778
  %v916 = vpack.c.b16 %v781, %v780
  %v917 = vpack.c.b16 %v783, %v782
  %v918 = vpack.c.b16 %v785, %v784
  %v919 = vpack.c.b16 %v787, %v786
  %v920 = vpack.c.b16 %v789, %v788
  %v921 = vpack.c.b16 %v791, %v790
  %v922 = vpack.c.b16 %v793, %v792
  %v923 = vpack.c.b16 %v795, %v794
  %v1068 = vunpack.c.l.b16 %v268
  %v1069 = vunpack.c.l.b16 %v269
  %v1070 = vunpack.c.l.b16 %v270
  %v1071 = vunpack.c.l.b16 %v271
  %v1072 = vunpack.c.l.b16 %v272
  %v1073 = vunpack.c.l.b16 %v273
  %v1074 = vunpack.c.l.b16 %v274
  %v1075 = vunpack.c.l.b16 %v275
  %v1076 = vunpack.c.l.b16 %v276
  %v1077 = vunpack.c.l.b16 %v277
  %v1078 = vunpack.c.l.b16 %v278
  %v1079 = vunpack.c.l.b16 %v279
  %v1080 = vunpack.c.l.b16 %v280
  %v1081 = vunpack.c.l.b16 %v281
  %v1082 = vunpack.c.l.b16 %v282
  %v1083 = vunpack.c.l.b16 %v283
  %v1084 = vpack.c.b16 %v1069, %v1068
  %v1085 = vpack.c.b16 %v1071, %v1070
  %v1086 = vpack.c.b16 %v1073, %v1072
  %v1087 = vpack.c.b16 %v1075, %v1074
  %v1088 = vpack.c.b16 %v1077, %v1076
  %v1089 = vpack.c.b16 %v1079, %v1078
  %v1090 = vpack.c.b16 %v1081, %v1080
  %v1091 = vpack.c.b16 %v1083, %v1082
  %1100 = vmatprep.subr.bf16.mxu0 0
  %1101 = vmatpush1.bf16.msra.mxu0 %v1084
  %1102 = vmatprep.subr.bf16.mxu0 0
  %1103 = vmatpush1.bf16.msra.mxu0 %v1085
  %1104 = vmatprep.subr.bf16.mxu0 0
  %1105 = vmatpush1.bf16.msra.mxu0 %v1086
  %1106 = vmatprep.subr.bf16.mxu0 0
  %1107 = vmatpush1.bf16.msra.mxu0 %v1087
  %1108 = vmatprep.subr.bf16.mxu0 0
  %1109 = vmatpush1.bf16.msra.mxu0 %v1088
  %1110 = vmatprep.subr.bf16.mxu0 0
  %1111 = vmatpush1.bf16.msra.mxu0 %v1089
  %1112 = vmatprep.subr.bf16.mxu0 0
  %1113 = vmatpush1.bf16.msra.mxu0 %v1090
  %1114 = vmatprep.subr.bf16.mxu0 0
  %1115 = vmatpush1.bf16.msra.mxu0 %v1091
  %1116 = vmatprep.subr.bf16.mxu0 0
  %1117 = vmatpush1.bf16.msra.mxu0 0
  %1118 = vmatprep.subr.bf16.mxu0 0
  %1119 = vmatpush1.bf16.msra.mxu0 0
  %1120 = vmatprep.subr.bf16.mxu0 0
  %1121 = vmatpush1.bf16.msra.mxu0 0
  %1122 = vmatprep.subr.bf16.mxu0 0
  %1123 = vmatpush1.bf16.msra.mxu0 0
  %1124 = vmatprep.subr.bf16.mxu0 0
  %1125 = vmatpush1.bf16.msra.mxu0 0
  %1126 = vmatprep.subr.bf16.mxu0 0
  %1127 = vmatpush1.bf16.msra.mxu0 0
  %1128 = vmatprep.subr.bf16.mxu0 0
  %1129 = vmatpush1.bf16.msra.mxu0 0
  %1130 = vmatprep.subr.bf16.mxu0 0
  %1131 = vmatpush1.bf16.msra.mxu0 0
  %1132 = vmatprep.mubr.bf16.mxu0 0
  %1133 = vmatmul.mubr.bf16.gmra.mrb[0].mxu0 %v796
  %v1134 = vpop.f32.mrb[0].mxu0
  %v1135 = vadd.f32 0.0, %v1134
  %v1136 = vpop.f32.mrb[0].mxu0
  %v1137 = vpop.f32.mrb[0].mxu0
  %v1138 = vadd.f32 0.0, %v1137
  %v1139 = vpop.f32.mrb[0].mxu0
  %1140 = vmatprep.mubr.bf16.mxu0 0
  %1141 = vmatmul.mubr.bf16.gmra.mrb[0].mxu0 %v797
  %v1142 = vpop.f32.mrb[0].mxu0
  %v1143 = vadd.f32 0.0, %v1142
  %v1144 = vpop.f32.mrb[0].mxu0
  %v1145 = vpop.f32.mrb[0].mxu0
  %v1146 = vadd.f32 0.0, %v1145
  %v1147 = vpop.f32.mrb[0].mxu0
  %1148 = vmatprep.mubr.bf16.mxu0 0
  %1149 = vmatmul.mubr.bf16.gmra.mrb[0].mxu0 %v798
  %v1150 = vpop.f32.mrb[0].mxu0
  %v1151 = vadd.f32 0.0, %v1150
  %v1152 = vpop.f32.mrb[0].mxu0
  %v1153 = vpop.f32.mrb[0].mxu0
  %v1154 = vadd.f32 0.0, %v1153
  %v1155 = vpop.f32.mrb[0].mxu0
  %1156 = vmatprep.mubr.bf16.mxu0 0
  %1157 = vmatmul.mubr.bf16.gmra.mrb[0].mxu0 %v799
  %v1158 = vpop.f32.mrb[0].mxu0
  %v1159 = vadd.f32 0.0, %v1158
  %v1160 = vpop.f32.mrb[0].mxu0
  %v1161 = vpop.f32.mrb[0].mxu0
  %v1162 = vadd.f32 0.0, %v1161
  %v1163 = vpop.f32.mrb[0].mxu0
  %1164 = vmatprep.mubr.bf16.mxu0 0
  %1165 = vmatmul.mubr.bf16.gmra.mrb[0].mxu0 %v800
  %v1166 = vpop.f32.mrb[0].mxu0
  %v1167 = vadd.f32 0.0, %v1166
  %v1168 = vpop.f32.mrb[0].mxu0
  %v1169 = vpop.f32.mrb[0].mxu0
  %v1170 = vadd.f32 0.0, %v1169
  %v1171 = vpop.f32.mrb[0].mxu0
  %1172 = vmatprep.mubr.bf16.mxu0 0
  %1173 = vmatmul.mubr.bf16.gmra.mrb[0].mxu0 %v801
  %v1174 = vpop.f32.mrb[0].mxu0
  %v1175 = vadd.f32 0.0, %v1174
  %v1176 = vpop.f32.mrb[0].mxu0
  %v1177 = vpop.f32.mrb[0].mxu0
  %v1178 = vadd.f32 0.0, %v1177
  %v1179 = vpop.f32.mrb[0].mxu0
  %1180 = vmatprep.mubr.bf16.mxu0 0
  %1181 = vmatmul.mubr.bf16.gmra.mrb[0].mxu0 %v802
  %v1182 = vpop.f32.mrb[0].mxu0
  %v1183 = vadd.f32 0.0, %v1182
  %v1184 = vpop.f32.mrb[0].mxu0
  %v1185 = vpop.f32.mrb[0].mxu0
  %v1186 = vadd.f32 0.0, %v1185
  %v1187 = vpop.f32.mrb[0].mxu0
  %1188 = vmatprep.mubr.bf16.mxu0 0
  %1189 = vmatmul.mubr.bf16.gmra.mrb[0].mxu0 %v803
  %v1190 = vpop.f32.mrb[0].mxu0
  %v1191 = vadd.f32 0.0, %v1190
  %v1192 = vpop.f32.mrb[0].mxu0
  %v1193 = vpop.f32.mrb[0].mxu0
  %v1194 = vadd.f32 0.0, %v1193
  %v1195 = vpop.f32.mrb[0].mxu0
  %1196 = vmatprep.mubr.bf16.mxu0 0
  %1197 = vmatmul.mubr.bf16.gmra.mrb[0].mxu0 %v804
  %v1198 = vpop.f32.mrb[0].mxu0
  %v1199 = vadd.f32 0.0, %v1198
  %v1200 = vpop.f32.mrb[0].mxu0
  %v1201 = vpop.f32.mrb[0].mxu0
  %v1202 = vadd.f32 0.0, %v1201
  %v1203 = vpop.f32.mrb[0].mxu0
  %1204 = vmatprep.mubr.bf16.mxu0 0
  %1205 = vmatmul.mubr.bf16.gmra.mrb[0].mxu0 %v805
  %v1206 = vpop.f32.mrb[0].mxu0
  %v1207 = vadd.f32 0.0, %v1206
  %v1208 = vpop.f32.mrb[0].mxu0
  %v1209 = vpop.f32.mrb[0].mxu0
  %v1210 = vadd.f32 0.0, %v1209
  %v1211 = vpop.f32.mrb[0].mxu0
  %1212 = vmatprep.mubr.bf16.mxu0 0
  %1213 = vmatmul.mubr.bf16.gmra.mrb[0].mxu0 %v806
  %v1214 = vpop.f32.mrb[0].mxu0
  %v1215 = vadd.f32 0.0, %v1214
  %v1216 = vpop.f32.mrb[0].mxu0
  %v1217 = vpop.f32.mrb[0].mxu0
  %v1218 = vadd.f32 0.0, %v1217
  %v1219 = vpop.f32.mrb[0].mxu0
  %1220 = vmatprep.mubr.bf16.mxu0 0
  %1221 = vmatmul.mubr.bf16.gmra.mrb[0].mxu0 %v807
  %v1222 = vpop.f32.mrb[0].mxu0
  %v1223 = vadd.f32 0.0, %v1222
  %v1224 = vpop.f32.mrb[0].mxu0
  %v1225 = vpop.f32.mrb[0].mxu0
  %v1226 = vadd.f32 0.0, %v1225
  %v1227 = vpop.f32.mrb[0].mxu0
  %1228 = vmatprep.mubr.bf16.mxu0 0
  %1229 = vmatmul.mubr.bf16.gmra.mrb[0].mxu0 %v808
  %v1230 = vpop.f32.mrb[0].mxu0
  %v1231 = vadd.f32 0.0, %v1230
  %v1232 = vpop.f32.mrb[0].mxu0
  %v1233 = vpop.f32.mrb[0].mxu0
  %v1234 = vadd.f32 0.0, %v1233
  %v1235 = vpop.f32.mrb[0].mxu0
  %1236 = vmatprep.mubr.bf16.mxu0 0
  %1237 = vmatmul.mubr.bf16.gmra.mrb[0].mxu0 %v809
  %v1238 = vpop.f32.mrb[0].mxu0
  %v1239 = vadd.f32 0.0, %v1238
  %v1240 = vpop.f32.mrb[0].mxu0
  %v1241 = vpop.f32.mrb[0].mxu0
  %v1242 = vadd.f32 0.0, %v1241
  %v1243 = vpop.f32.mrb[0].mxu0
  %1244 = vmatprep.mubr.bf16.mxu0 0
  %1245 = vmatmul.mubr.bf16.gmra.mrb[0].mxu0 %v810
  %v1246 = vpop.f32.mrb[0].mxu0
  %v1247 = vadd.f32 0.0, %v1246
  %v1248 = vpop.f32.mrb[0].mxu0
  %v1249 = vpop.f32.mrb[0].mxu0
  %v1250 = vadd.f32 0.0, %v1249
  %v1251 = vpop.f32.mrb[0].mxu0
  %1252 = vmatprep.mubr.bf16.mxu0 0
  %1253 = vmatmul.mubr.bf16.gmra.mrb[0].mxu0 %v811
  %v1254 = vpop.f32.mrb[0].mxu0
  %v1255 = vadd.f32 0.0, %v1254
  %v1256 = vpop.f32.mrb[0].mxu0
  %v1257 = vpop.f32.mrb[0].mxu0
  %v1258 = vadd.f32 0.0, %v1257
  %v1259 = vpop.f32.mrb[0].mxu0
  %1260 = vmatprep.mubr.bf16.mxu0 0
  %1261 = vmatmul.mubr.bf16.gmra.mrb[0].mxu0 %v812
  %v1262 = vpop.f32.mrb[0].mxu0
  %v1263 = vadd.f32 0.0, %v1262
  %v1264 = vpop.f32.mrb[0].mxu0
  %v1265 = vpop.f32.mrb[0].mxu0
  %v1266 = vadd.f32 0.0, %v1265
  %v1267 = vpop.f32.mrb[0].mxu0
  %1268 = vmatprep.mubr.bf16.mxu0 0
  %1269 = vmatmul.mubr.bf16.gmra.mrb[0].mxu0 %v813
  %v1270 = vpop.f32.mrb[0].mxu0
  %v1271 = vadd.f32 0.0, %v1270
  %v1272 = vpop.f32.mrb[0].mxu0
  %v1273 = vpop.f32.mrb[0].mxu0
  %v1274 = vadd.f32 0.0, %v1273
  %v1275 = vpop.f32.mrb[0].mxu0
  %1276 = vmatprep.mubr.bf16.mxu0 0
  %1277 = vmatmul.mubr.bf16.gmra.mrb[0].mxu0 %v814
  %v1278 = vpop.f32.mrb[0].mxu0
  %v1279 = vadd.f32 0.0, %v1278
  %v1280 = vpop.f32.mrb[0].mxu0
  %v1281 = vpop.f32.mrb[0].mxu0
  %v1282 = vadd.f32 0.0, %v1281
  %v1283 = vpop.f32.mrb[0].mxu0
  %1284 = vmatprep.mubr.bf16.mxu0 0
  %1285 = vmatmul.mubr.bf16.gmra.mrb[0].mxu0 %v815
  %v1286 = vpop.f32.mrb[0].mxu0
  %v1287 = vadd.f32 0.0, %v1286
  %v1288 = vpop.f32.mrb[0].mxu0
  %v1289 = vpop.f32.mrb[0].mxu0
  %v1290 = vadd.f32 0.0, %v1289
  %v1291 = vpop.f32.mrb[0].mxu0
  %1292 = vmatprep.mubr.bf16.mxu0 0
  %1293 = vmatmul.mubr.bf16.gmra.mrb[0].mxu0 %v816
  %v1294 = vpop.f32.mrb[0].mxu0
  %v1295 = vadd.f32 0.0, %v1294
  %v1296 = vpop.f32.mrb[0].mxu0
  %v1297 = vpop.f32.mrb[0].mxu0
  %v1298 = vadd.f32 0.0, %v1297
  %v1299 = vpop.f32.mrb[0].mxu0
  %1300 = vmatprep.mubr.bf16.mxu0 0
  %1301 = vmatmul.mubr.bf16.gmra.mrb[0].mxu0 %v817
  %v1302 = vpop.f32.mrb[0].mxu0
  %v1303 = vadd.f32 0.0, %v1302
  %v1304 = vpop.f32.mrb[0].mxu0
  %v1305 = vpop.f32.mrb[0].mxu0
  %v1306 = vadd.f32 0.0, %v1305
  %v1307 = vpop.f32.mrb[0].mxu0
  %1308 = vmatprep.mubr.bf16.mxu0 0
  %1309 = vmatmul.mubr.bf16.gmra.mrb[0].mxu0 %v818
  %v1310 = vpop.f32.mrb[0].mxu0
  %v1311 = vadd.f32 0.0, %v1310
  %v1312 = vpop.f32.mrb[0].mxu0
  %v1313 = vpop.f32.mrb[0].mxu0
  %v1314 = vadd.f32 0.0, %v1313
  %v1315 = vpop.f32.mrb[0].mxu0
  %1316 = vmatprep.mubr.bf16.mxu0 0
  %1317 = vmatmul.mubr.bf16.gmra.mrb[0].mxu0 %v819
  %v1318 = vpop.f32.mrb[0].mxu0
  %v1319 = vadd.f32 0.0, %v1318
  %v1320 = vpop.f32.mrb[0].mxu0
  %v1321 = vpop.f32.mrb[0].mxu0
  %v1322 = vadd.f32 0.0, %v1321
  %v1323 = vpop.f32.mrb[0].mxu0
  %1324 = vmatprep.mubr.bf16.mxu0 0
  %1325 = vmatmul.mubr.bf16.gmra.mrb[0].mxu0 %v820
  %v1326 = vpop.f32.mrb[0].mxu0
  %v1327 = vadd.f32 0.0, %v1326
  %v1328 = vpop.f32.mrb[0].mxu0
  %v1329 = vpop.f32.mrb[0].mxu0
  %v1330 = vadd.f32 0.0, %v1329
  %v1331 = vpop.f32.mrb[0].mxu0
  %1332 = vmatprep.mubr.bf16.mxu0 0
  %1333 = vmatmul.mubr.bf16.gmra.mrb[0].mxu0 %v821
  %v1334 = vpop.f32.mrb[0].mxu0
  %v1335 = vadd.f32 0.0, %v1334
  %v1336 = vpop.f32.mrb[0].mxu0
  %v1337 = vpop.f32.mrb[0].mxu0
  %v1338 = vadd.f32 0.0, %v1337
  %v1339 = vpop.f32.mrb[0].mxu0
  %1340 = vmatprep.mubr.bf16.mxu0 0
  %1341 = vmatmul.mubr.bf16.gmra.mrb[0].mxu0 %v822
  %v1342 = vpop.f32.mrb[0].mxu0
  %v1343 = vadd.f32 0.0, %v1342
  %v1344 = vpop.f32.mrb[0].mxu0
  %v1345 = vpop.f32.mrb[0].mxu0
  %v1346 = vadd.f32 0.0, %v1345
  %v1347 = vpop.f32.mrb[0].mxu0
  %1348 = vmatprep.mubr.bf16.mxu0 0
  %1349 = vmatmul.mubr.bf16.gmra.mrb[0].mxu0 %v823
  %v1350 = vpop.f32.mrb[0].mxu0
  %v1351 = vadd.f32 0.0, %v1350
  %v1352 = vpop.f32.mrb[0].mxu0
  %v1353 = vpop.f32.mrb[0].mxu0
  %v1354 = vadd.f32 0.0, %v1353
  %v1355 = vpop.f32.mrb[0].mxu0
  %1356 = vmatprep.mubr.bf16.mxu0 0
  %1357 = vmatmul.mubr.bf16.gmra.mrb[0].mxu0 %v824
  %v1358 = vpop.f32.mrb[0].mxu0
  %v1359 = vadd.f32 0.0, %v1358
  %v1360 = vpop.f32.mrb[0].mxu0
  %v1361 = vpop.f32.mrb[0].mxu0
  %v1362 = vadd.f32 0.0, %v1361
  %v1363 = vpop.f32.mrb[0].mxu0
  %1364 = vmatprep.mubr.bf16.mxu0 0
  %1365 = vmatmul.mubr.bf16.gmra.mrb[0].mxu0 %v825
  %v1366 = vpop.f32.mrb[0].mxu0
  %v1367 = vadd.f32 0.0, %v1366
  %v1368 = vpop.f32.mrb[0].mxu0
  %v1369 = vpop.f32.mrb[0].mxu0
  %v1370 = vadd.f32 0.0, %v1369
  %v1371 = vpop.f32.mrb[0].mxu0
  %1372 = vmatprep.mubr.bf16.mxu0 0
  %1373 = vmatmul.mubr.bf16.gmra.mrb[0].mxu0 %v826
  %v1374 = vpop.f32.mrb[0].mxu0
  %v1375 = vadd.f32 0.0, %v1374
  %v1376 = vpop.f32.mrb[0].mxu0
  %v1377 = vpop.f32.mrb[0].mxu0
  %v1378 = vadd.f32 0.0, %v1377
  %v1379 = vpop.f32.mrb[0].mxu0
  %1380 = vmatprep.mubr.bf16.mxu0 0
  %1381 = vmatmul.mubr.bf16.gmra.mrb[0].mxu0 %v827
  %v1382 = vpop.f32.mrb[0].mxu0
  %v1383 = vadd.f32 0.0, %v1382
  %v1384 = vpop.f32.mrb[0].mxu0
  %v1385 = vpop.f32.mrb[0].mxu0
  %v1386 = vadd.f32 0.0, %v1385
  %v1387 = vpop.f32.mrb[0].mxu0
  %1388 = vmatprep.mubr.bf16.mxu0 0
  %1389 = vmatmul.mubr.bf16.gmra.mrb[0].mxu0 %v828
  %v1390 = vpop.f32.mrb[0].mxu0
  %v1391 = vadd.f32 0.0, %v1390
  %v1392 = vpop.f32.mrb[0].mxu0
  %v1393 = vpop.f32.mrb[0].mxu0
  %v1394 = vadd.f32 0.0, %v1393
  %v1395 = vpop.f32.mrb[0].mxu0
  %1396 = vmatprep.mubr.bf16.mxu0 0
  %1397 = vmatmul.mubr.bf16.gmra.mrb[0].mxu0 %v829
  %v1398 = vpop.f32.mrb[0].mxu0
  %v1399 = vadd.f32 0.0, %v1398
  %v1400 = vpop.f32.mrb[0].mxu0
  %v1401 = vpop.f32.mrb[0].mxu0
  %v1402 = vadd.f32 0.0, %v1401
  %v1403 = vpop.f32.mrb[0].mxu0
  %1404 = vmatprep.mubr.bf16.mxu0 0
  %1405 = vmatmul.mubr.bf16.gmra.mrb[0].mxu0 %v830
  %v1406 = vpop.f32.mrb[0].mxu0
  %v1407 = vadd.f32 0.0, %v1406
  %v1408 = vpop.f32.mrb[0].mxu0
  %v1409 = vpop.f32.mrb[0].mxu0
  %v1410 = vadd.f32 0.0, %v1409
  %v1411 = vpop.f32.mrb[0].mxu0
  %1412 = vmatprep.mubr.bf16.mxu0 0
  %1413 = vmatmul.mubr.bf16.gmra.mrb[0].mxu0 %v831
  %v1414 = vpop.f32.mrb[0].mxu0
  %v1415 = vadd.f32 0.0, %v1414
  %v1416 = vpop.f32.mrb[0].mxu0
  %v1417 = vpop.f32.mrb[0].mxu0
  %v1418 = vadd.f32 0.0, %v1417
  %v1419 = vpop.f32.mrb[0].mxu0
  %1420 = vmatprep.mubr.bf16.mxu0 0
  %1421 = vmatmul.mubr.bf16.gmra.mrb[0].mxu0 %v832
  %v1422 = vpop.f32.mrb[0].mxu0
  %v1423 = vadd.f32 0.0, %v1422
  %v1424 = vpop.f32.mrb[0].mxu0
  %v1425 = vpop.f32.mrb[0].mxu0
  %v1426 = vadd.f32 0.0, %v1425
  %v1427 = vpop.f32.mrb[0].mxu0
  %1428 = vmatprep.mubr.bf16.mxu0 0
  %1429 = vmatmul.mubr.bf16.gmra.mrb[0].mxu0 %v833
  %v1430 = vpop.f32.mrb[0].mxu0
  %v1431 = vadd.f32 0.0, %v1430
  %v1432 = vpop.f32.mrb[0].mxu0
  %v1433 = vpop.f32.mrb[0].mxu0
  %v1434 = vadd.f32 0.0, %v1433
  %v1435 = vpop.f32.mrb[0].mxu0
  %1436 = vmatprep.mubr.bf16.mxu0 0
  %1437 = vmatmul.mubr.bf16.gmra.mrb[0].mxu0 %v834
  %v1438 = vpop.f32.mrb[0].mxu0
  %v1439 = vadd.f32 0.0, %v1438
  %v1440 = vpop.f32.mrb[0].mxu0
  %v1441 = vpop.f32.mrb[0].mxu0
  %v1442 = vadd.f32 0.0, %v1441
  %v1443 = vpop.f32.mrb[0].mxu0
  %1444 = vmatprep.mubr.bf16.mxu0 0
  %1445 = vmatmul.mubr.bf16.gmra.mrb[0].mxu0 %v835
  %v1446 = vpop.f32.mrb[0].mxu0
  %v1447 = vadd.f32 0.0, %v1446
  %v1448 = vpop.f32.mrb[0].mxu0
  %v1449 = vpop.f32.mrb[0].mxu0
  %v1450 = vadd.f32 0.0, %v1449
  %v1451 = vpop.f32.mrb[0].mxu0
  %1452 = vmatprep.mubr.bf16.mxu0 0
  %1453 = vmatmul.mubr.bf16.gmra.mrb[0].mxu0 %v836
  %v1454 = vpop.f32.mrb[0].mxu0
  %v1455 = vadd.f32 0.0, %v1454
  %v1456 = vpop.f32.mrb[0].mxu0
  %v1457 = vpop.f32.mrb[0].mxu0
  %v1458 = vadd.f32 0.0, %v1457
  %v1459 = vpop.f32.mrb[0].mxu0
  %1460 = vmatprep.mubr.bf16.mxu0 0
  %1461 = vmatmul.mubr.bf16.gmra.mrb[0].mxu0 %v837
  %v1462 = vpop.f32.mrb[0].mxu0
  %v1463 = vadd.f32 0.0, %v1462
  %v1464 = vpop.f32.mrb[0].mxu0
  %v1465 = vpop.f32.mrb[0].mxu0
  %v1466 = vadd.f32 0.0, %v1465
  %v1467 = vpop.f32.mrb[0].mxu0
  %1468 = vmatprep.mubr.bf16.mxu0 0
  %1469 = vmatmul.mubr.bf16.gmra.mrb[0].mxu0 %v838
  %v1470 = vpop.f32.mrb[0].mxu0
  %v1471 = vadd.f32 0.0, %v1470
  %v1472 = vpop.f32.mrb[0].mxu0
  %v1473 = vpop.f32.mrb[0].mxu0
  %v1474 = vadd.f32 0.0, %v1473
  %v1475 = vpop.f32.mrb[0].mxu0
  %1476 = vmatprep.mubr.bf16.mxu0 0
  %1477 = vmatmul.mubr.bf16.gmra.mrb[0].mxu0 %v839
  %v1478 = vpop.f32.mrb[0].mxu0
  %v1479 = vadd.f32 0.0, %v1478
  %v1480 = vpop.f32.mrb[0].mxu0
  %v1481 = vpop.f32.mrb[0].mxu0
  %v1482 = vadd.f32 0.0, %v1481
  %v1483 = vpop.f32.mrb[0].mxu0
  %1484 = vmatprep.mubr.bf16.mxu0 0
  %1485 = vmatmul.mubr.bf16.gmra.mrb[0].mxu0 %v840
  %v1486 = vpop.f32.mrb[0].mxu0
  %v1487 = vadd.f32 0.0, %v1486
  %v1488 = vpop.f32.mrb[0].mxu0
  %v1489 = vpop.f32.mrb[0].mxu0
  %v1490 = vadd.f32 0.0, %v1489
  %v1491 = vpop.f32.mrb[0].mxu0
  %1492 = vmatprep.mubr.bf16.mxu0 0
  %1493 = vmatmul.mubr.bf16.gmra.mrb[0].mxu0 %v841
  %v1494 = vpop.f32.mrb[0].mxu0
  %v1495 = vadd.f32 0.0, %v1494
  %v1496 = vpop.f32.mrb[0].mxu0
  %v1497 = vpop.f32.mrb[0].mxu0
  %v1498 = vadd.f32 0.0, %v1497
  %v1499 = vpop.f32.mrb[0].mxu0
  %1500 = vmatprep.mubr.bf16.mxu0 0
  %1501 = vmatmul.mubr.bf16.gmra.mrb[0].mxu0 %v842
  %v1502 = vpop.f32.mrb[0].mxu0
  %v1503 = vadd.f32 0.0, %v1502
  %v1504 = vpop.f32.mrb[0].mxu0
  %v1505 = vpop.f32.mrb[0].mxu0
  %v1506 = vadd.f32 0.0, %v1505
  %v1507 = vpop.f32.mrb[0].mxu0
  %1508 = vmatprep.mubr.bf16.mxu0 0
  %1509 = vmatmul.mubr.bf16.gmra.mrb[0].mxu0 %v843
  %v1510 = vpop.f32.mrb[0].mxu0
  %v1511 = vadd.f32 0.0, %v1510
  %v1512 = vpop.f32.mrb[0].mxu0
  %v1513 = vpop.f32.mrb[0].mxu0
  %v1514 = vadd.f32 0.0, %v1513
  %v1515 = vpop.f32.mrb[0].mxu0
  %1516 = vmatprep.mubr.bf16.mxu0 0
  %1517 = vmatmul.mubr.bf16.gmra.mrb[0].mxu0 %v844
  %v1518 = vpop.f32.mrb[0].mxu0
  %v1519 = vadd.f32 0.0, %v1518
  %v1520 = vpop.f32.mrb[0].mxu0
  %v1521 = vpop.f32.mrb[0].mxu0
  %v1522 = vadd.f32 0.0, %v1521
  %v1523 = vpop.f32.mrb[0].mxu0
  %1524 = vmatprep.mubr.bf16.mxu0 0
  %1525 = vmatmul.mubr.bf16.gmra.mrb[0].mxu0 %v845
  %v1526 = vpop.f32.mrb[0].mxu0
  %v1527 = vadd.f32 0.0, %v1526
  %v1528 = vpop.f32.mrb[0].mxu0
  %v1529 = vpop.f32.mrb[0].mxu0
  %v1530 = vadd.f32 0.0, %v1529
  %v1531 = vpop.f32.mrb[0].mxu0
  %1532 = vmatprep.mubr.bf16.mxu0 0
  %1533 = vmatmul.mubr.bf16.gmra.mrb[0].mxu0 %v846
  %v1534 = vpop.f32.mrb[0].mxu0
  %v1535 = vadd.f32 0.0, %v1534
  %v1536 = vpop.f32.mrb[0].mxu0
  %v1537 = vpop.f32.mrb[0].mxu0
  %v1538 = vadd.f32 0.0, %v1537
  %v1539 = vpop.f32.mrb[0].mxu0
  %1540 = vmatprep.mubr.bf16.mxu0 0
  %1541 = vmatmul.mubr.bf16.gmra.mrb[0].mxu0 %v847
  %v1542 = vpop.f32.mrb[0].mxu0
  %v1543 = vadd.f32 0.0, %v1542
  %v1544 = vpop.f32.mrb[0].mxu0
  %v1545 = vpop.f32.mrb[0].mxu0
  %v1546 = vadd.f32 0.0, %v1545
  %v1547 = vpop.f32.mrb[0].mxu0
  %1548 = vmatprep.mubr.bf16.mxu0 0
  %1549 = vmatmul.mubr.bf16.gmra.mrb[0].mxu0 %v848
  %v1550 = vpop.f32.mrb[0].mxu0
  %v1551 = vadd.f32 0.0, %v1550
  %v1552 = vpop.f32.mrb[0].mxu0
  %v1553 = vpop.f32.mrb[0].mxu0
  %v1554 = vadd.f32 0.0, %v1553
  %v1555 = vpop.f32.mrb[0].mxu0
  %1556 = vmatprep.mubr.bf16.mxu0 0
  %1557 = vmatmul.mubr.bf16.gmra.mrb[0].mxu0 %v849
  %v1558 = vpop.f32.mrb[0].mxu0
  %v1559 = vadd.f32 0.0, %v1558
  %v1560 = vpop.f32.mrb[0].mxu0
  %v1561 = vpop.f32.mrb[0].mxu0
  %v1562 = vadd.f32 0.0, %v1561
  %v1563 = vpop.f32.mrb[0].mxu0
  %1564 = vmatprep.mubr.bf16.mxu0 0
  %1565 = vmatmul.mubr.bf16.gmra.mrb[0].mxu0 %v850
  %v1566 = vpop.f32.mrb[0].mxu0
  %v1567 = vadd.f32 0.0, %v1566
  %v1568 = vpop.f32.mrb[0].mxu0
  %v1569 = vpop.f32.mrb[0].mxu0
  %v1570 = vadd.f32 0.0, %v1569
  %v1571 = vpop.f32.mrb[0].mxu0
  %1572 = vmatprep.mubr.bf16.mxu0 0
  %1573 = vmatmul.mubr.bf16.gmra.mrb[0].mxu0 %v851
  %v1574 = vpop.f32.mrb[0].mxu0
  %v1575 = vadd.f32 0.0, %v1574
  %v1576 = vpop.f32.mrb[0].mxu0
  %v1577 = vpop.f32.mrb[0].mxu0
  %v1578 = vadd.f32 0.0, %v1577
  %v1579 = vpop.f32.mrb[0].mxu0
  %1580 = vmatprep.mubr.bf16.mxu0 0
  %1581 = vmatmul.mubr.bf16.gmra.mrb[0].mxu0 %v852
  %v1582 = vpop.f32.mrb[0].mxu0
  %v1583 = vadd.f32 0.0, %v1582
  %v1584 = vpop.f32.mrb[0].mxu0
  %v1585 = vpop.f32.mrb[0].mxu0
  %v1586 = vadd.f32 0.0, %v1585
  %v1587 = vpop.f32.mrb[0].mxu0
  %1588 = vmatprep.mubr.bf16.mxu0 0
  %1589 = vmatmul.mubr.bf16.gmra.mrb[0].mxu0 %v853
  %v1590 = vpop.f32.mrb[0].mxu0
  %v1591 = vadd.f32 0.0, %v1590
  %v1592 = vpop.f32.mrb[0].mxu0
  %v1593 = vpop.f32.mrb[0].mxu0
  %v1594 = vadd.f32 0.0, %v1593
  %v1595 = vpop.f32.mrb[0].mxu0
  %1596 = vmatprep.mubr.bf16.mxu0 0
  %1597 = vmatmul.mubr.bf16.gmra.mrb[0].mxu0 %v854
  %v1598 = vpop.f32.mrb[0].mxu0
  %v1599 = vadd.f32 0.0, %v1598
  %v1600 = vpop.f32.mrb[0].mxu0
  %v1601 = vpop.f32.mrb[0].mxu0
  %v1602 = vadd.f32 0.0, %v1601
  %v1603 = vpop.f32.mrb[0].mxu0
  %1604 = vmatprep.mubr.bf16.mxu0 0
  %1605 = vmatmul.mubr.bf16.gmra.mrb[0].mxu0 %v855
  %v1606 = vpop.f32.mrb[0].mxu0
  %v1607 = vadd.f32 0.0, %v1606
  %v1608 = vpop.f32.mrb[0].mxu0
  %v1609 = vpop.f32.mrb[0].mxu0
  %v1610 = vadd.f32 0.0, %v1609
  %v1611 = vpop.f32.mrb[0].mxu0
  %1612 = vmatprep.mubr.bf16.mxu0 0
  %1613 = vmatmul.mubr.bf16.gmra.mrb[0].mxu0 %v856
  %v1614 = vpop.f32.mrb[0].mxu0
  %v1615 = vadd.f32 0.0, %v1614
  %v1616 = vpop.f32.mrb[0].mxu0
  %v1617 = vpop.f32.mrb[0].mxu0
  %v1618 = vadd.f32 0.0, %v1617
  %v1619 = vpop.f32.mrb[0].mxu0
  %1620 = vmatprep.mubr.bf16.mxu0 0
  %1621 = vmatmul.mubr.bf16.gmra.mrb[0].mxu0 %v857
  %v1622 = vpop.f32.mrb[0].mxu0
  %v1623 = vadd.f32 0.0, %v1622
  %v1624 = vpop.f32.mrb[0].mxu0
  %v1625 = vpop.f32.mrb[0].mxu0
  %v1626 = vadd.f32 0.0, %v1625
  %v1627 = vpop.f32.mrb[0].mxu0
  %1628 = vmatprep.mubr.bf16.mxu0 0
  %1629 = vmatmul.mubr.bf16.gmra.mrb[0].mxu0 %v858
  %v1630 = vpop.f32.mrb[0].mxu0
  %v1631 = vadd.f32 0.0, %v1630
  %v1632 = vpop.f32.mrb[0].mxu0
  %v1633 = vpop.f32.mrb[0].mxu0
  %v1634 = vadd.f32 0.0, %v1633
  %v1635 = vpop.f32.mrb[0].mxu0
  %1636 = vmatprep.mubr.bf16.mxu0 0
  %1637 = vmatmul.mubr.bf16.gmra.mrb[0].mxu0 %v859
  %v1638 = vpop.f32.mrb[0].mxu0
  %v1639 = vadd.f32 0.0, %v1638
  %v1640 = vpop.f32.mrb[0].mxu0
  %v1641 = vpop.f32.mrb[0].mxu0
  %v1642 = vadd.f32 0.0, %v1641
  %v1643 = vpop.f32.mrb[0].mxu0
  %1644 = vmatprep.mubr.bf16.mxu0 0
  %1645 = vmatmul.mubr.bf16.gmra.mrb[0].mxu0 %v860
  %v1646 = vpop.f32.mrb[0].mxu0
  %v1647 = vadd.f32 0.0, %v1646
  %v1648 = vpop.f32.mrb[0].mxu0
  %v1649 = vpop.f32.mrb[0].mxu0
  %v1650 = vadd.f32 0.0, %v1649
  %v1651 = vpop.f32.mrb[0].mxu0
  %1652 = vmatprep.mubr.bf16.mxu0 0
  %1653 = vmatmul.mubr.bf16.gmra.mrb[0].mxu0 %v861
  %v1654 = vpop.f32.mrb[0].mxu0
  %v1655 = vadd.f32 0.0, %v1654
  %v1656 = vpop.f32.mrb[0].mxu0
  %v1657 = vpop.f32.mrb[0].mxu0
  %v1658 = vadd.f32 0.0, %v1657
  %v1659 = vpop.f32.mrb[0].mxu0
  %1660 = vmatprep.mubr.bf16.mxu0 0
  %1661 = vmatmul.mubr.bf16.gmra.mrb[0].mxu0 %v862
  %v1662 = vpop.f32.mrb[0].mxu0
  %v1663 = vadd.f32 0.0, %v1662
  %v1664 = vpop.f32.mrb[0].mxu0
  %v1665 = vpop.f32.mrb[0].mxu0
  %v1666 = vadd.f32 0.0, %v1665
  %v1667 = vpop.f32.mrb[0].mxu0
  %1668 = vmatprep.mubr.bf16.mxu0 0
  %1669 = vmatmul.mubr.bf16.gmra.mrb[0].mxu0 %v863
  %v1670 = vpop.f32.mrb[0].mxu0
  %v1671 = vadd.f32 0.0, %v1670
  %v1672 = vpop.f32.mrb[0].mxu0
  %v1673 = vpop.f32.mrb[0].mxu0
  %v1674 = vadd.f32 0.0, %v1673
  %v1675 = vpop.f32.mrb[0].mxu0
  %1676 = vmatprep.mubr.bf16.mxu0 0
  %1677 = vmatmul.mubr.bf16.gmra.mrb[0].mxu0 %v864
  %v1678 = vpop.f32.mrb[0].mxu0
  %v1679 = vadd.f32 0.0, %v1678
  %v1680 = vpop.f32.mrb[0].mxu0
  %v1681 = vpop.f32.mrb[0].mxu0
  %v1682 = vadd.f32 0.0, %v1681
  %v1683 = vpop.f32.mrb[0].mxu0
  %1684 = vmatprep.mubr.bf16.mxu0 0
  %1685 = vmatmul.mubr.bf16.gmra.mrb[0].mxu0 %v865
  %v1686 = vpop.f32.mrb[0].mxu0
  %v1687 = vadd.f32 0.0, %v1686
  %v1688 = vpop.f32.mrb[0].mxu0
  %v1689 = vpop.f32.mrb[0].mxu0
  %v1690 = vadd.f32 0.0, %v1689
  %v1691 = vpop.f32.mrb[0].mxu0
  %1692 = vmatprep.mubr.bf16.mxu0 0
  %1693 = vmatmul.mubr.bf16.gmra.mrb[0].mxu0 %v866
  %v1694 = vpop.f32.mrb[0].mxu0
  %v1695 = vadd.f32 0.0, %v1694
  %v1696 = vpop.f32.mrb[0].mxu0
  %v1697 = vpop.f32.mrb[0].mxu0
  %v1698 = vadd.f32 0.0, %v1697
  %v1699 = vpop.f32.mrb[0].mxu0
  %1700 = vmatprep.mubr.bf16.mxu0 0
  %1701 = vmatmul.mubr.bf16.gmra.mrb[0].mxu0 %v867
  %v1702 = vpop.f32.mrb[0].mxu0
  %v1703 = vadd.f32 0.0, %v1702
  %v1704 = vpop.f32.mrb[0].mxu0
  %v1705 = vpop.f32.mrb[0].mxu0
  %v1706 = vadd.f32 0.0, %v1705
  %v1707 = vpop.f32.mrb[0].mxu0
  %1708 = vmatprep.mubr.bf16.mxu0 0
  %1709 = vmatmul.mubr.bf16.gmra.mrb[0].mxu0 %v868
  %v1710 = vpop.f32.mrb[0].mxu0
  %v1711 = vadd.f32 0.0, %v1710
  %v1712 = vpop.f32.mrb[0].mxu0
  %v1713 = vpop.f32.mrb[0].mxu0
  %v1714 = vadd.f32 0.0, %v1713
  %v1715 = vpop.f32.mrb[0].mxu0
  %1716 = vmatprep.mubr.bf16.mxu0 0
  %1717 = vmatmul.mubr.bf16.gmra.mrb[0].mxu0 %v869
  %v1718 = vpop.f32.mrb[0].mxu0
  %v1719 = vadd.f32 0.0, %v1718
  %v1720 = vpop.f32.mrb[0].mxu0
  %v1721 = vpop.f32.mrb[0].mxu0
  %v1722 = vadd.f32 0.0, %v1721
  %v1723 = vpop.f32.mrb[0].mxu0
  %1724 = vmatprep.mubr.bf16.mxu0 0
  %1725 = vmatmul.mubr.bf16.gmra.mrb[0].mxu0 %v870
  %v1726 = vpop.f32.mrb[0].mxu0
  %v1727 = vadd.f32 0.0, %v1726
  %v1728 = vpop.f32.mrb[0].mxu0
  %v1729 = vpop.f32.mrb[0].mxu0
  %v1730 = vadd.f32 0.0, %v1729
  %v1731 = vpop.f32.mrb[0].mxu0
  %1732 = vmatprep.mubr.bf16.mxu0 0
  %1733 = vmatmul.mubr.bf16.gmra.mrb[0].mxu0 %v871
  %v1734 = vpop.f32.mrb[0].mxu0
  %v1735 = vadd.f32 0.0, %v1734
  %v1736 = vpop.f32.mrb[0].mxu0
  %v1737 = vpop.f32.mrb[0].mxu0
  %v1738 = vadd.f32 0.0, %v1737
  %v1739 = vpop.f32.mrb[0].mxu0
  %1740 = vmatprep.mubr.bf16.mxu0 0
  %1741 = vmatmul.mubr.bf16.gmra.mrb[0].mxu0 %v872
  %v1742 = vpop.f32.mrb[0].mxu0
  %v1743 = vadd.f32 0.0, %v1742
  %v1744 = vpop.f32.mrb[0].mxu0
  %v1745 = vpop.f32.mrb[0].mxu0
  %v1746 = vadd.f32 0.0, %v1745
  %v1747 = vpop.f32.mrb[0].mxu0
  %1748 = vmatprep.mubr.bf16.mxu0 0
  %1749 = vmatmul.mubr.bf16.gmra.mrb[0].mxu0 %v873
  %v1750 = vpop.f32.mrb[0].mxu0
  %v1751 = vadd.f32 0.0, %v1750
  %v1752 = vpop.f32.mrb[0].mxu0
  %v1753 = vpop.f32.mrb[0].mxu0
  %v1754 = vadd.f32 0.0, %v1753
  %v1755 = vpop.f32.mrb[0].mxu0
  %1756 = vmatprep.mubr.bf16.mxu0 0
  %1757 = vmatmul.mubr.bf16.gmra.mrb[0].mxu0 %v874
  %v1758 = vpop.f32.mrb[0].mxu0
  %v1759 = vadd.f32 0.0, %v1758
  %v1760 = vpop.f32.mrb[0].mxu0
  %v1761 = vpop.f32.mrb[0].mxu0
  %v1762 = vadd.f32 0.0, %v1761
  %v1763 = vpop.f32.mrb[0].mxu0
  %1764 = vmatprep.mubr.bf16.mxu0 0
  %1765 = vmatmul.mubr.bf16.gmra.mrb[0].mxu0 %v875
  %v1766 = vpop.f32.mrb[0].mxu0
  %v1767 = vadd.f32 0.0, %v1766
  %v1768 = vpop.f32.mrb[0].mxu0
  %v1769 = vpop.f32.mrb[0].mxu0
  %v1770 = vadd.f32 0.0, %v1769
  %v1771 = vpop.f32.mrb[0].mxu0
  %1772 = vmatprep.mubr.bf16.mxu0 0
  %1773 = vmatmul.mubr.bf16.gmra.mrb[0].mxu0 %v876
  %v1774 = vpop.f32.mrb[0].mxu0
  %v1775 = vadd.f32 0.0, %v1774
  %v1776 = vpop.f32.mrb[0].mxu0
  %v1777 = vpop.f32.mrb[0].mxu0
  %v1778 = vadd.f32 0.0, %v1777
  %v1779 = vpop.f32.mrb[0].mxu0
  %1780 = vmatprep.mubr.bf16.mxu0 0
  %1781 = vmatmul.mubr.bf16.gmra.mrb[0].mxu0 %v877
  %v1782 = vpop.f32.mrb[0].mxu0
  %v1783 = vadd.f32 0.0, %v1782
  %v1784 = vpop.f32.mrb[0].mxu0
  %v1785 = vpop.f32.mrb[0].mxu0
  %v1786 = vadd.f32 0.0, %v1785
  %v1787 = vpop.f32.mrb[0].mxu0
  %1788 = vmatprep.mubr.bf16.mxu0 0
  %1789 = vmatmul.mubr.bf16.gmra.mrb[0].mxu0 %v878
  %v1790 = vpop.f32.mrb[0].mxu0
  %v1791 = vadd.f32 0.0, %v1790
  %v1792 = vpop.f32.mrb[0].mxu0
  %v1793 = vpop.f32.mrb[0].mxu0
  %v1794 = vadd.f32 0.0, %v1793
  %v1795 = vpop.f32.mrb[0].mxu0
  %1796 = vmatprep.mubr.bf16.mxu0 0
  %1797 = vmatmul.mubr.bf16.gmra.mrb[0].mxu0 %v879
  %v1798 = vpop.f32.mrb[0].mxu0
  %v1799 = vadd.f32 0.0, %v1798
  %v1800 = vpop.f32.mrb[0].mxu0
  %v1801 = vpop.f32.mrb[0].mxu0
  %v1802 = vadd.f32 0.0, %v1801
  %v1803 = vpop.f32.mrb[0].mxu0
  %1804 = vmatprep.mubr.bf16.mxu0 0
  %1805 = vmatmul.mubr.bf16.gmra.mrb[0].mxu0 %v880
  %v1806 = vpop.f32.mrb[0].mxu0
  %v1807 = vadd.f32 0.0, %v1806
  %v1808 = vpop.f32.mrb[0].mxu0
  %v1809 = vpop.f32.mrb[0].mxu0
  %v1810 = vadd.f32 0.0, %v1809
  %v1811 = vpop.f32.mrb[0].mxu0
  %1812 = vmatprep.mubr.bf16.mxu0 0
  %1813 = vmatmul.mubr.bf16.gmra.mrb[0].mxu0 %v881
  %v1814 = vpop.f32.mrb[0].mxu0
  %v1815 = vadd.f32 0.0, %v1814
  %v1816 = vpop.f32.mrb[0].mxu0
  %v1817 = vpop.f32.mrb[0].mxu0
  %v1818 = vadd.f32 0.0, %v1817
  %v1819 = vpop.f32.mrb[0].mxu0
  %1820 = vmatprep.mubr.bf16.mxu0 0
  %1821 = vmatmul.mubr.bf16.gmra.mrb[0].mxu0 %v882
  %v1822 = vpop.f32.mrb[0].mxu0
  %v1823 = vadd.f32 0.0, %v1822
  %v1824 = vpop.f32.mrb[0].mxu0
  %v1825 = vpop.f32.mrb[0].mxu0
  %v1826 = vadd.f32 0.0, %v1825
  %v1827 = vpop.f32.mrb[0].mxu0
  %1828 = vmatprep.mubr.bf16.mxu0 0
  %1829 = vmatmul.mubr.bf16.gmra.mrb[0].mxu0 %v883
  %v1830 = vpop.f32.mrb[0].mxu0
  %v1831 = vadd.f32 0.0, %v1830
  %v1832 = vpop.f32.mrb[0].mxu0
  %v1833 = vpop.f32.mrb[0].mxu0
  %v1834 = vadd.f32 0.0, %v1833
  %v1835 = vpop.f32.mrb[0].mxu0
  %1836 = vmatprep.mubr.bf16.mxu0 0
  %1837 = vmatmul.mubr.bf16.gmra.mrb[0].mxu0 %v884
  %v1838 = vpop.f32.mrb[0].mxu0
  %v1839 = vadd.f32 0.0, %v1838
  %v1840 = vpop.f32.mrb[0].mxu0
  %v1841 = vpop.f32.mrb[0].mxu0
  %v1842 = vadd.f32 0.0, %v1841
  %v1843 = vpop.f32.mrb[0].mxu0
  %1844 = vmatprep.mubr.bf16.mxu0 0
  %1845 = vmatmul.mubr.bf16.gmra.mrb[0].mxu0 %v885
  %v1846 = vpop.f32.mrb[0].mxu0
  %v1847 = vadd.f32 0.0, %v1846
  %v1848 = vpop.f32.mrb[0].mxu0
  %v1849 = vpop.f32.mrb[0].mxu0
  %v1850 = vadd.f32 0.0, %v1849
  %v1851 = vpop.f32.mrb[0].mxu0
  %1852 = vmatprep.mubr.bf16.mxu0 0
  %1853 = vmatmul.mubr.bf16.gmra.mrb[0].mxu0 %v886
  %v1854 = vpop.f32.mrb[0].mxu0
  %v1855 = vadd.f32 0.0, %v1854
  %v1856 = vpop.f32.mrb[0].mxu0
  %v1857 = vpop.f32.mrb[0].mxu0
  %v1858 = vadd.f32 0.0, %v1857
  %v1859 = vpop.f32.mrb[0].mxu0
  %1860 = vmatprep.mubr.bf16.mxu0 0
  %1861 = vmatmul.mubr.bf16.gmra.mrb[0].mxu0 %v887
  %v1862 = vpop.f32.mrb[0].mxu0
  %v1863 = vadd.f32 0.0, %v1862
  %v1864 = vpop.f32.mrb[0].mxu0
  %v1865 = vpop.f32.mrb[0].mxu0
  %v1866 = vadd.f32 0.0, %v1865
  %v1867 = vpop.f32.mrb[0].mxu0
  %1868 = vmatprep.mubr.bf16.mxu0 0
  %1869 = vmatmul.mubr.bf16.gmra.mrb[0].mxu0 %v888
  %v1870 = vpop.f32.mrb[0].mxu0
  %v1871 = vadd.f32 0.0, %v1870
  %v1872 = vpop.f32.mrb[0].mxu0
  %v1873 = vpop.f32.mrb[0].mxu0
  %v1874 = vadd.f32 0.0, %v1873
  %v1875 = vpop.f32.mrb[0].mxu0
  %1876 = vmatprep.mubr.bf16.mxu0 0
  %1877 = vmatmul.mubr.bf16.gmra.mrb[0].mxu0 %v889
  %v1878 = vpop.f32.mrb[0].mxu0
  %v1879 = vadd.f32 0.0, %v1878
  %v1880 = vpop.f32.mrb[0].mxu0
  %v1881 = vpop.f32.mrb[0].mxu0
  %v1882 = vadd.f32 0.0, %v1881
  %v1883 = vpop.f32.mrb[0].mxu0
  %1884 = vmatprep.mubr.bf16.mxu0 0
  %1885 = vmatmul.mubr.bf16.gmra.mrb[0].mxu0 %v890
  %v1886 = vpop.f32.mrb[0].mxu0
  %v1887 = vadd.f32 0.0, %v1886
  %v1888 = vpop.f32.mrb[0].mxu0
  %v1889 = vpop.f32.mrb[0].mxu0
  %v1890 = vadd.f32 0.0, %v1889
  %v1891 = vpop.f32.mrb[0].mxu0
  %1892 = vmatprep.mubr.bf16.mxu0 0
  %1893 = vmatmul.mubr.bf16.gmra.mrb[0].mxu0 %v891
  %v1894 = vpop.f32.mrb[0].mxu0
  %v1895 = vadd.f32 0.0, %v1894
  %v1896 = vpop.f32.mrb[0].mxu0
  %v1897 = vpop.f32.mrb[0].mxu0
  %v1898 = vadd.f32 0.0, %v1897
  %v1899 = vpop.f32.mrb[0].mxu0
  %1900 = vmatprep.mubr.bf16.mxu0 0
  %1901 = vmatmul.mubr.bf16.gmra.mrb[0].mxu0 %v892
  %v1902 = vpop.f32.mrb[0].mxu0
  %v1903 = vadd.f32 0.0, %v1902
  %v1904 = vpop.f32.mrb[0].mxu0
  %v1905 = vpop.f32.mrb[0].mxu0
  %v1906 = vadd.f32 0.0, %v1905
  %v1907 = vpop.f32.mrb[0].mxu0
  %1908 = vmatprep.mubr.bf16.mxu0 0
  %1909 = vmatmul.mubr.bf16.gmra.mrb[0].mxu0 %v893
  %v1910 = vpop.f32.mrb[0].mxu0
  %v1911 = vadd.f32 0.0, %v1910
  %v1912 = vpop.f32.mrb[0].mxu0
  %v1913 = vpop.f32.mrb[0].mxu0
  %v1914 = vadd.f32 0.0, %v1913
  %v1915 = vpop.f32.mrb[0].mxu0
  %1916 = vmatprep.mubr.bf16.mxu0 0
  %1917 = vmatmul.mubr.bf16.gmra.mrb[0].mxu0 %v894
  %v1918 = vpop.f32.mrb[0].mxu0
  %v1919 = vadd.f32 0.0, %v1918
  %v1920 = vpop.f32.mrb[0].mxu0
  %v1921 = vpop.f32.mrb[0].mxu0
  %v1922 = vadd.f32 0.0, %v1921
  %v1923 = vpop.f32.mrb[0].mxu0
  %1924 = vmatprep.mubr.bf16.mxu0 0
  %1925 = vmatmul.mubr.bf16.gmra.mrb[0].mxu0 %v895
  %v1926 = vpop.f32.mrb[0].mxu0
  %v1927 = vadd.f32 0.0, %v1926
  %v1928 = vpop.f32.mrb[0].mxu0
  %v1929 = vpop.f32.mrb[0].mxu0
  %v1930 = vadd.f32 0.0, %v1929
  %v1931 = vpop.f32.mrb[0].mxu0
  %1932 = vmatprep.mubr.bf16.mxu0 0
  %1933 = vmatmul.mubr.bf16.gmra.mrb[0].mxu0 %v896
  %v1934 = vpop.f32.mrb[0].mxu0
  %v1935 = vadd.f32 0.0, %v1934
  %v1936 = vpop.f32.mrb[0].mxu0
  %v1937 = vpop.f32.mrb[0].mxu0
  %v1938 = vadd.f32 0.0, %v1937
  %v1939 = vpop.f32.mrb[0].mxu0
  %1940 = vmatprep.mubr.bf16.mxu0 0
  %1941 = vmatmul.mubr.bf16.gmra.mrb[0].mxu0 %v897
  %v1942 = vpop.f32.mrb[0].mxu0
  %v1943 = vadd.f32 0.0, %v1942
  %v1944 = vpop.f32.mrb[0].mxu0
  %v1945 = vpop.f32.mrb[0].mxu0
  %v1946 = vadd.f32 0.0, %v1945
  %v1947 = vpop.f32.mrb[0].mxu0
  %1948 = vmatprep.mubr.bf16.mxu0 0
  %1949 = vmatmul.mubr.bf16.gmra.mrb[0].mxu0 %v898
  %v1950 = vpop.f32.mrb[0].mxu0
  %v1951 = vadd.f32 0.0, %v1950
  %v1952 = vpop.f32.mrb[0].mxu0
  %v1953 = vpop.f32.mrb[0].mxu0
  %v1954 = vadd.f32 0.0, %v1953
  %v1955 = vpop.f32.mrb[0].mxu0
  %1956 = vmatprep.mubr.bf16.mxu0 0
  %1957 = vmatmul.mubr.bf16.gmra.mrb[0].mxu0 %v899
  %v1958 = vpop.f32.mrb[0].mxu0
  %v1959 = vadd.f32 0.0, %v1958
  %v1960 = vpop.f32.mrb[0].mxu0
  %v1961 = vpop.f32.mrb[0].mxu0
  %v1962 = vadd.f32 0.0, %v1961
  %v1963 = vpop.f32.mrb[0].mxu0
  %1964 = vmatprep.mubr.bf16.mxu0 0
  %1965 = vmatmul.mubr.bf16.gmra.mrb[0].mxu0 %v900
  %v1966 = vpop.f32.mrb[0].mxu0
  %v1967 = vadd.f32 0.0, %v1966
  %v1968 = vpop.f32.mrb[0].mxu0
  %v1969 = vpop.f32.mrb[0].mxu0
  %v1970 = vadd.f32 0.0, %v1969
  %v1971 = vpop.f32.mrb[0].mxu0
  %1972 = vmatprep.mubr.bf16.mxu0 0
  %1973 = vmatmul.mubr.bf16.gmra.mrb[0].mxu0 %v901
  %v1974 = vpop.f32.mrb[0].mxu0
  %v1975 = vadd.f32 0.0, %v1974
  %v1976 = vpop.f32.mrb[0].mxu0
  %v1977 = vpop.f32.mrb[0].mxu0
  %v1978 = vadd.f32 0.0, %v1977
  %v1979 = vpop.f32.mrb[0].mxu0
  %1980 = vmatprep.mubr.bf16.mxu0 0
  %1981 = vmatmul.mubr.bf16.gmra.mrb[0].mxu0 %v902
  %v1982 = vpop.f32.mrb[0].mxu0
  %v1983 = vadd.f32 0.0, %v1982
  %v1984 = vpop.f32.mrb[0].mxu0
  %v1985 = vpop.f32.mrb[0].mxu0
  %v1986 = vadd.f32 0.0, %v1985
  %v1987 = vpop.f32.mrb[0].mxu0
  %1988 = vmatprep.mubr.bf16.mxu0 0
  %1989 = vmatmul.mubr.bf16.gmra.mrb[0].mxu0 %v903
  %v1990 = vpop.f32.mrb[0].mxu0
  %v1991 = vadd.f32 0.0, %v1990
  %v1992 = vpop.f32.mrb[0].mxu0
  %v1993 = vpop.f32.mrb[0].mxu0
  %v1994 = vadd.f32 0.0, %v1993
  %v1995 = vpop.f32.mrb[0].mxu0
  %1996 = vmatprep.mubr.bf16.mxu0 0
  %1997 = vmatmul.mubr.bf16.gmra.mrb[0].mxu0 %v904
  %v1998 = vpop.f32.mrb[0].mxu0
  %v1999 = vadd.f32 0.0, %v1998
  %v2000 = vpop.f32.mrb[0].mxu0
  %v2001 = vpop.f32.mrb[0].mxu0
  %v2002 = vadd.f32 0.0, %v2001
  %v2003 = vpop.f32.mrb[0].mxu0
  %2004 = vmatprep.mubr.bf16.mxu0 0
  %2005 = vmatmul.mubr.bf16.gmra.mrb[0].mxu0 %v905
  %v2006 = vpop.f32.mrb[0].mxu0
  %v2007 = vadd.f32 0.0, %v2006
  %v2008 = vpop.f32.mrb[0].mxu0
  %v2009 = vpop.f32.mrb[0].mxu0
  %v2010 = vadd.f32 0.0, %v2009
  %v2011 = vpop.f32.mrb[0].mxu0
  %2012 = vmatprep.mubr.bf16.mxu0 0
  %2013 = vmatmul.mubr.bf16.gmra.mrb[0].mxu0 %v906
  %v2014 = vpop.f32.mrb[0].mxu0
  %v2015 = vadd.f32 0.0, %v2014
  %v2016 = vpop.f32.mrb[0].mxu0
  %v2017 = vpop.f32.mrb[0].mxu0
  %v2018 = vadd.f32 0.0, %v2017
  %v2019 = vpop.f32.mrb[0].mxu0
  %2020 = vmatprep.mubr.bf16.mxu0 0
  %2021 = vmatmul.mubr.bf16.gmra.mrb[0].mxu0 %v907
  %v2022 = vpop.f32.mrb[0].mxu0
  %v2023 = vadd.f32 0.0, %v2022
  %v2024 = vpop.f32.mrb[0].mxu0
  %v2025 = vpop.f32.mrb[0].mxu0
  %v2026 = vadd.f32 0.0, %v2025
  %v2027 = vpop.f32.mrb[0].mxu0
  %2028 = vmatprep.mubr.bf16.mxu0 0
  %2029 = vmatmul.mubr.bf16.gmra.mrb[0].mxu0 %v908
  %v2030 = vpop.f32.mrb[0].mxu0
  %v2031 = vadd.f32 0.0, %v2030
  %v2032 = vpop.f32.mrb[0].mxu0
  %v2033 = vpop.f32.mrb[0].mxu0
  %v2034 = vadd.f32 0.0, %v2033
  %v2035 = vpop.f32.mrb[0].mxu0
  %2036 = vmatprep.mubr.bf16.mxu0 0
  %2037 = vmatmul.mubr.bf16.gmra.mrb[0].mxu0 %v909
  %v2038 = vpop.f32.mrb[0].mxu0
  %v2039 = vadd.f32 0.0, %v2038
  %v2040 = vpop.f32.mrb[0].mxu0
  %v2041 = vpop.f32.mrb[0].mxu0
  %v2042 = vadd.f32 0.0, %v2041
  %v2043 = vpop.f32.mrb[0].mxu0
  %2044 = vmatprep.mubr.bf16.mxu0 0
  %2045 = vmatmul.mubr.bf16.gmra.mrb[0].mxu0 %v910
  %v2046 = vpop.f32.mrb[0].mxu0
  %v2047 = vadd.f32 0.0, %v2046
  %v2048 = vpop.f32.mrb[0].mxu0
  %v2049 = vpop.f32.mrb[0].mxu0
  %v2050 = vadd.f32 0.0, %v2049
  %v2051 = vpop.f32.mrb[0].mxu0
  %2052 = vmatprep.mubr.bf16.mxu0 0
  %2053 = vmatmul.mubr.bf16.gmra.mrb[0].mxu0 %v911
  %v2054 = vpop.f32.mrb[0].mxu0
  %v2055 = vadd.f32 0.0, %v2054
  %v2056 = vpop.f32.mrb[0].mxu0
  %v2057 = vpop.f32.mrb[0].mxu0
  %v2058 = vadd.f32 0.0, %v2057
  %v2059 = vpop.f32.mrb[0].mxu0
  %2060 = vmatprep.mubr.bf16.mxu0 0
  %2061 = vmatmul.mubr.bf16.gmra.mrb[0].mxu0 %v912
  %v2062 = vpop.f32.mrb[0].mxu0
  %v2063 = vadd.f32 0.0, %v2062
  %v2064 = vpop.f32.mrb[0].mxu0
  %v2065 = vpop.f32.mrb[0].mxu0
  %v2066 = vadd.f32 0.0, %v2065
  %v2067 = vpop.f32.mrb[0].mxu0
  %2068 = vmatprep.mubr.bf16.mxu0 0
  %2069 = vmatmul.mubr.bf16.gmra.mrb[0].mxu0 %v913
  %v2070 = vpop.f32.mrb[0].mxu0
  %v2071 = vadd.f32 0.0, %v2070
  %v2072 = vpop.f32.mrb[0].mxu0
  %v2073 = vpop.f32.mrb[0].mxu0
  %v2074 = vadd.f32 0.0, %v2073
  %v2075 = vpop.f32.mrb[0].mxu0
  %2076 = vmatprep.mubr.bf16.mxu0 0
  %2077 = vmatmul.mubr.bf16.gmra.mrb[0].mxu0 %v914
  %v2078 = vpop.f32.mrb[0].mxu0
  %v2079 = vadd.f32 0.0, %v2078
  %v2080 = vpop.f32.mrb[0].mxu0
  %v2081 = vpop.f32.mrb[0].mxu0
  %v2082 = vadd.f32 0.0, %v2081
  %v2083 = vpop.f32.mrb[0].mxu0
  %2084 = vmatprep.mubr.bf16.mxu0 0
  %2085 = vmatmul.mubr.bf16.gmra.mrb[0].mxu0 %v915
  %v2086 = vpop.f32.mrb[0].mxu0
  %v2087 = vadd.f32 0.0, %v2086
  %v2088 = vpop.f32.mrb[0].mxu0
  %v2089 = vpop.f32.mrb[0].mxu0
  %v2090 = vadd.f32 0.0, %v2089
  %v2091 = vpop.f32.mrb[0].mxu0
  %2092 = vmatprep.mubr.bf16.mxu0 0
  %2093 = vmatmul.mubr.bf16.gmra.mrb[0].mxu0 %v916
  %v2094 = vpop.f32.mrb[0].mxu0
  %v2095 = vadd.f32 0.0, %v2094
  %v2096 = vpop.f32.mrb[0].mxu0
  %v2097 = vpop.f32.mrb[0].mxu0
  %v2098 = vadd.f32 0.0, %v2097
  %v2099 = vpop.f32.mrb[0].mxu0
  %2100 = vmatprep.mubr.bf16.mxu0 0
  %2101 = vmatmul.mubr.bf16.gmra.mrb[0].mxu0 %v917
  %v2102 = vpop.f32.mrb[0].mxu0
  %v2103 = vadd.f32 0.0, %v2102
  %v2104 = vpop.f32.mrb[0].mxu0
  %v2105 = vpop.f32.mrb[0].mxu0
  %v2106 = vadd.f32 0.0, %v2105
  %v2107 = vpop.f32.mrb[0].mxu0
  %2108 = vmatprep.mubr.bf16.mxu0 0
  %2109 = vmatmul.mubr.bf16.gmra.mrb[0].mxu0 %v918
  %v2110 = vpop.f32.mrb[0].mxu0
  %v2111 = vadd.f32 0.0, %v2110
  %v2112 = vpop.f32.mrb[0].mxu0
  %v2113 = vpop.f32.mrb[0].mxu0
  %v2114 = vadd.f32 0.0, %v2113
  %v2115 = vpop.f32.mrb[0].mxu0
  %2116 = vmatprep.mubr.bf16.mxu0 0
  %2117 = vmatmul.mubr.bf16.gmra.mrb[0].mxu0 %v919
  %v2118 = vpop.f32.mrb[0].mxu0
  %v2119 = vadd.f32 0.0, %v2118
  %v2120 = vpop.f32.mrb[0].mxu0
  %v2121 = vpop.f32.mrb[0].mxu0
  %v2122 = vadd.f32 0.0, %v2121
  %v2123 = vpop.f32.mrb[0].mxu0
  %2124 = vmatprep.mubr.bf16.mxu0 0
  %2125 = vmatmul.mubr.bf16.gmra.mrb[0].mxu0 %v920
  %v2126 = vpop.f32.mrb[0].mxu0
  %v2127 = vadd.f32 0.0, %v2126
  %v2128 = vpop.f32.mrb[0].mxu0
  %v2129 = vpop.f32.mrb[0].mxu0
  %v2130 = vadd.f32 0.0, %v2129
  %v2131 = vpop.f32.mrb[0].mxu0
  %2132 = vmatprep.mubr.bf16.mxu0 0
  %2133 = vmatmul.mubr.bf16.gmra.mrb[0].mxu0 %v921
  %v2134 = vpop.f32.mrb[0].mxu0
  %v2135 = vadd.f32 0.0, %v2134
  %v2136 = vpop.f32.mrb[0].mxu0
  %v2137 = vpop.f32.mrb[0].mxu0
  %v2138 = vadd.f32 0.0, %v2137
  %v2139 = vpop.f32.mrb[0].mxu0
  %2140 = vmatprep.mubr.bf16.mxu0 0
  %2141 = vmatmul.mubr.bf16.gmra.mrb[0].mxu0 %v922
  %v2142 = vpop.f32.mrb[0].mxu0
  %v2143 = vadd.f32 0.0, %v2142
  %v2144 = vpop.f32.mrb[0].mxu0
  %v2145 = vpop.f32.mrb[0].mxu0
  %v2146 = vadd.f32 0.0, %v2145
  %v2147 = vpop.f32.mrb[0].mxu0
  %2148 = vmatprep.mubr.bf16.mxu0 0
  %2149 = vmatmul.mubr.bf16.gmra.mrb[0].mxu0 %v923
  %v2150 = vpop.f32.mrb[0].mxu0
  %v2151 = vadd.f32 0.0, %v2150
  %v2152 = vpop.f32.mrb[0].mxu0
  %v2153 = vpop.f32.mrb[0].mxu0
  %v2154 = vadd.f32 0.0, %v2153
  %v2155 = vpop.f32.mrb[0].mxu0
  %2156 = vdwg.mxu0
  %v2157 = vtanh.pop %v1135
  %v2158 = vtanh.pop %v1138
  %v2159 = vtanh.pop %v1143
  %v2160 = vtanh.pop %v1146
  %v2161 = vtanh.pop %v1151
  %v2162 = vtanh.pop %v1154
  %v2163 = vtanh.pop %v1159
  %v2164 = vtanh.pop %v1162
  %v2165 = vtanh.pop %v1167
  %v2166 = vtanh.pop %v1170
  %v2167 = vtanh.pop %v1175
  %v2168 = vtanh.pop %v1178
  %v2169 = vtanh.pop %v1183
  %v2170 = vtanh.pop %v1186
  %v2171 = vtanh.pop %v1191
  %v2172 = vtanh.pop %v1194
  %v2173 = vtanh.pop %v1199
  %v2174 = vtanh.pop %v1202
  %v2175 = vtanh.pop %v1207
  %v2176 = vtanh.pop %v1210
  %v2177 = vtanh.pop %v1215
  %v2178 = vtanh.pop %v1218
  %v2179 = vtanh.pop %v1223
  %v2180 = vtanh.pop %v1226
  %v2181 = vtanh.pop %v1231
  %v2182 = vtanh.pop %v1234
  %v2183 = vtanh.pop %v1239
  %v2184 = vtanh.pop %v1242
  %v2185 = vtanh.pop %v1247
  %v2186 = vtanh.pop %v1250
  %v2187 = vtanh.pop %v1255
  %v2188 = vtanh.pop %v1258
  %v2189 = vtanh.pop %v1263
  %v2190 = vtanh.pop %v1266
  %v2191 = vtanh.pop %v1271
  %v2192 = vtanh.pop %v1274
  %v2193 = vtanh.pop %v1279
  %v2194 = vtanh.pop %v1282
  %v2195 = vtanh.pop %v1287
  %v2196 = vtanh.pop %v1290
  %v2197 = vtanh.pop %v1295
  %v2198 = vtanh.pop %v1298
  %v2199 = vtanh.pop %v1303
  %v2200 = vtanh.pop %v1306
  %v2201 = vtanh.pop %v1311
  %v2202 = vtanh.pop %v1314
  %v2203 = vtanh.pop %v1319
  %v2204 = vtanh.pop %v1322
  %v2205 = vtanh.pop %v1327
  %v2206 = vtanh.pop %v1330
  %v2207 = vtanh.pop %v1335
  %v2208 = vtanh.pop %v1338
  %v2209 = vtanh.pop %v1343
  %v2210 = vtanh.pop %v1346
  %v2211 = vtanh.pop %v1351
  %v2212 = vtanh.pop %v1354
  %v2213 = vtanh.pop %v1359
  %v2214 = vtanh.pop %v1362
  %v2215 = vtanh.pop %v1367
  %v2216 = vtanh.pop %v1370
  %v2217 = vtanh.pop %v1375
  %v2218 = vtanh.pop %v1378
  %v2219 = vtanh.pop %v1383
  %v2220 = vtanh.pop %v1386
  %v2221 = vtanh.pop %v1391
  %v2222 = vtanh.pop %v1394
  %v2223 = vtanh.pop %v1399
  %v2224 = vtanh.pop %v1402
  %v2225 = vtanh.pop %v1407
  %v2226 = vtanh.pop %v1410
  %v2227 = vtanh.pop %v1415
  %v2228 = vtanh.pop %v1418
  %v2229 = vtanh.pop %v1423
  %v2230 = vtanh.pop %v1426
  %v2231 = vtanh.pop %v1431
  %v2232 = vtanh.pop %v1434
  %v2233 = vtanh.pop %v1439
  %v2234 = vtanh.pop %v1442
  %v2235 = vtanh.pop %v1447
  %v2236 = vtanh.pop %v1450
  %v2237 = vtanh.pop %v1455
  %v2238 = vtanh.pop %v1458
  %v2239 = vtanh.pop %v1463
  %v2240 = vtanh.pop %v1466
  %v2241 = vtanh.pop %v1471
  %v2242 = vtanh.pop %v1474
  %v2243 = vtanh.pop %v1479
  %v2244 = vtanh.pop %v1482
  %v2245 = vtanh.pop %v1487
  %v2246 = vtanh.pop %v1490
  %v2247 = vtanh.pop %v1495
  %v2248 = vtanh.pop %v1498
  %v2249 = vtanh.pop %v1503
  %v2250 = vtanh.pop %v1506
  %v2251 = vtanh.pop %v1511
  %v2252 = vtanh.pop %v1514
  %v2253 = vtanh.pop %v1519
  %v2254 = vtanh.pop %v1522
  %v2255 = vtanh.pop %v1527
  %v2256 = vtanh.pop %v1530
  %v2257 = vtanh.pop %v1535
  %v2258 = vtanh.pop %v1538
  %v2259 = vtanh.pop %v1543
  %v2260 = vtanh.pop %v1546
  %v2261 = vtanh.pop %v1551
  %v2262 = vtanh.pop %v1554
  %v2263 = vtanh.pop %v1559
  %v2264 = vtanh.pop %v1562
  %v2265 = vtanh.pop %v1567
  %v2266 = vtanh.pop %v1570
  %v2267 = vtanh.pop %v1575
  %v2268 = vtanh.pop %v1578
  %v2269 = vtanh.pop %v1583
  %v2270 = vtanh.pop %v1586
  %v2271 = vtanh.pop %v1591
  %v2272 = vtanh.pop %v1594
  %v2273 = vtanh.pop %v1599
  %v2274 = vtanh.pop %v1602
  %v2275 = vtanh.pop %v1607
  %v2276 = vtanh.pop %v1610
  %v2277 = vtanh.pop %v1615
  %v2278 = vtanh.pop %v1618
  %v2279 = vtanh.pop %v1623
  %v2280 = vtanh.pop %v1626
  %v2281 = vtanh.pop %v1631
  %v2282 = vtanh.pop %v1634
  %v2283 = vtanh.pop %v1639
  %v2284 = vtanh.pop %v1642
  %v2285 = vtanh.pop %v1647
  %v2286 = vtanh.pop %v1650
  %v2287 = vtanh.pop %v1655
  %v2288 = vtanh.pop %v1658
  %v2289 = vtanh.pop %v1663
  %v2290 = vtanh.pop %v1666
  %v2291 = vtanh.pop %v1671
  %v2292 = vtanh.pop %v1674
  %v2293 = vtanh.pop %v1679
  %v2294 = vtanh.pop %v1682
  %v2295 = vtanh.pop %v1687
  %v2296 = vtanh.pop %v1690
  %v2297 = vtanh.pop %v1695
  %v2298 = vtanh.pop %v1698
  %v2299 = vtanh.pop %v1703
  %v2300 = vtanh.pop %v1706
  %v2301 = vtanh.pop %v1711
  %v2302 = vtanh.pop %v1714
  %v2303 = vtanh.pop %v1719
  %v2304 = vtanh.pop %v1722
  %v2305 = vtanh.pop %v1727
  %v2306 = vtanh.pop %v1730
  %v2307 = vtanh.pop %v1735
  %v2308 = vtanh.pop %v1738
  %v2309 = vtanh.pop %v1743
  %v2310 = vtanh.pop %v1746
  %v2311 = vtanh.pop %v1751
  %v2312 = vtanh.pop %v1754
  %v2313 = vtanh.pop %v1759
  %v2314 = vtanh.pop %v1762
  %v2315 = vtanh.pop %v1767
  %v2316 = vtanh.pop %v1770
  %v2317 = vtanh.pop %v1775
  %v2318 = vtanh.pop %v1778
  %v2319 = vtanh.pop %v1783
  %v2320 = vtanh.pop %v1786
  %v2321 = vtanh.pop %v1791
  %v2322 = vtanh.pop %v1794
  %v2323 = vtanh.pop %v1799
  %v2324 = vtanh.pop %v1802
  %v2325 = vtanh.pop %v1807
  %v2326 = vtanh.pop %v1810
  %v2327 = vtanh.pop %v1815
  %v2328 = vtanh.pop %v1818
  %v2329 = vtanh.pop %v1823
  %v2330 = vtanh.pop %v1826
  %v2331 = vtanh.pop %v1831
  %v2332 = vtanh.pop %v1834
  %v2333 = vtanh.pop %v1839
  %v2334 = vtanh.pop %v1842
  %v2335 = vtanh.pop %v1847
  %v2336 = vtanh.pop %v1850
  %v2337 = vtanh.pop %v1855
  %v2338 = vtanh.pop %v1858
  %v2339 = vtanh.pop %v1863
  %v2340 = vtanh.pop %v1866
  %v2341 = vtanh.pop %v1871
  %v2342 = vtanh.pop %v1874
  %v2343 = vtanh.pop %v1879
  %v2344 = vtanh.pop %v1882
  %v2345 = vtanh.pop %v1887
  %v2346 = vtanh.pop %v1890
  %v2347 = vtanh.pop %v1895
  %v2348 = vtanh.pop %v1898
  %v2349 = vtanh.pop %v1903
  %v2350 = vtanh.pop %v1906
  %v2351 = vtanh.pop %v1911
  %v2352 = vtanh.pop %v1914
  %v2353 = vtanh.pop %v1919
  %v2354 = vtanh.pop %v1922
  %v2355 = vtanh.pop %v1927
  %v2356 = vtanh.pop %v1930
  %v2357 = vtanh.pop %v1935
  %v2358 = vtanh.pop %v1938
  %v2359 = vtanh.pop %v1943
  %v2360 = vtanh.pop %v1946
  %v2361 = vtanh.pop %v1951
  %v2362 = vtanh.pop %v1954
  %v2363 = vtanh.pop %v1959
  %v2364 = vtanh.pop %v1962
  %v2365 = vtanh.pop %v1967
  %v2366 = vtanh.pop %v1970
  %v2367 = vtanh.pop %v1975
  %v2368 = vtanh.pop %v1978
  %v2369 = vtanh.pop %v1983
  %v2370 = vtanh.pop %v1986
  %v2371 = vtanh.pop %v1991
  %v2372 = vtanh.pop %v1994
  %v2373 = vtanh.pop %v1999
  %v2374 = vtanh.pop %v2002
  %v2375 = vtanh.pop %v2007
  %v2376 = vtanh.pop %v2010
  %v2377 = vtanh.pop %v2015
  %v2378 = vtanh.pop %v2018
  %v2379 = vtanh.pop %v2023
  %v2380 = vtanh.pop %v2026
  %v2381 = vtanh.pop %v2031
  %v2382 = vtanh.pop %v2034
  %v2383 = vtanh.pop %v2039
  %v2384 = vtanh.pop %v2042
  %v2385 = vtanh.pop %v2047
  %v2386 = vtanh.pop %v2050
  %v2387 = vtanh.pop %v2055
  %v2388 = vtanh.pop %v2058
  %v2389 = vtanh.pop %v2063
  %v2390 = vtanh.pop %v2066
  %v2391 = vtanh.pop %v2071
  %v2392 = vtanh.pop %v2074
  %v2393 = vtanh.pop %v2079
  %v2394 = vtanh.pop %v2082
  %v2395 = vtanh.pop %v2087
  %v2396 = vtanh.pop %v2090
  %v2397 = vtanh.pop %v2095
  %v2398 = vtanh.pop %v2098
  %v2399 = vtanh.pop %v2103
  %v2400 = vtanh.pop %v2106
  %v2401 = vtanh.pop %v2111
  %v2402 = vtanh.pop %v2114
  %v2403 = vtanh.pop %v2119
  %v2404 = vtanh.pop %v2122
  %v2405 = vtanh.pop %v2127
  %v2406 = vtanh.pop %v2130
  %v2407 = vtanh.pop %v2135
  %v2408 = vtanh.pop %v2138
  %v2409 = vtanh.pop %v2143
  %v2410 = vtanh.pop %v2146
  %v2411 = vtanh.pop %v2151
  %v2412 = vtanh.pop %v2154
  %2413 = vst [vmem:[%s2] sm:$0xff] %v2157
  %2414 = vst [vmem:[%s2 + $0x8] sm:$0xff] %v2158
  %2415 = vst [vmem:[%s2 + $0x10] sm:$0xff] %v2159
  %2416 = vst [vmem:[%s2 + $0x18] sm:$0xff] %v2160
  %2417 = vst [vmem:[%s2 + $0x20] sm:$0xff] %v2161
  %2418 = vst [vmem:[%s2 + $0x28] sm:$0xff] %v2162
  %2419 = vst [vmem:[%s2 + $0x30] sm:$0xff] %v2163
  %2420 = vst [vmem:[%s2 + $0x38] sm:$0xff] %v2164
  %2421 = vst [vmem:[%s2 + $0x40] sm:$0xff] %v2165
  %2422 = vst [vmem:[%s2 + $0x48] sm:$0xff] %v2166
  %2423 = vst [vmem:[%s2 + $0x50] sm:$0xff] %v2167
  %2424 = vst [vmem:[%s2 + $0x58] sm:$0xff] %v2168
  %2425 = vst [vmem:[%s2 + $0x60] sm:$0xff] %v2169
  %2426 = vst [vmem:[%s2 + $0x68] sm:$0xff] %v2170
  %2427 = vst [vmem:[%s2 + $0x70] sm:$0xff] %v2171
  %2428 = vst [vmem:[%s2 + $0x78] sm:$0xff] %v2172
  %2429 = vst [vmem:[%s2 + $0x80] sm:$0xff] %v2173
  %2430 = vst [vmem:[%s2 + $0x88] sm:$0xff] %v2174
  %2431 = vst [vmem:[%s2 + $0x90] sm:$0xff] %v2175
  %2432 = vst [vmem:[%s2 + $0x98] sm:$0xff] %v2176
  %2433 = vst [vmem:[%s2 + $0xa0] sm:$0xff] %v2177
  %2434 = vst [vmem:[%s2 + $0xa8] sm:$0xff] %v2178
  %2435 = vst [vmem:[%s2 + $0xb0] sm:$0xff] %v2179
  %2436 = vst [vmem:[%s2 + $0xb8] sm:$0xff] %v2180
  %2437 = vst [vmem:[%s2 + $0xc0] sm:$0xff] %v2181
  %2438 = vst [vmem:[%s2 + $0xc8] sm:$0xff] %v2182
  %2439 = vst [vmem:[%s2 + $0xd0] sm:$0xff] %v2183
  %2440 = vst [vmem:[%s2 + $0xd8] sm:$0xff] %v2184
  %2441 = vst [vmem:[%s2 + $0xe0] sm:$0xff] %v2185
  %2442 = vst [vmem:[%s2 + $0xe8] sm:$0xff] %v2186
  %2443 = vst [vmem:[%s2 + $0xf0] sm:$0xff] %v2187
  %2444 = vst [vmem:[%s2 + $0xf8] sm:$0xff] %v2188
  %2445 = vst [vmem:[%s2 + $0x100] sm:$0xff] %v2189
  %2446 = vst [vmem:[%s2 + $0x108] sm:$0xff] %v2190
  %2447 = vst [vmem:[%s2 + $0x110] sm:$0xff] %v2191
  %2448 = vst [vmem:[%s2 + $0x118] sm:$0xff] %v2192
  %2449 = vst [vmem:[%s2 + $0x120] sm:$0xff] %v2193
  %2450 = vst [vmem:[%s2 + $0x128] sm:$0xff] %v2194
  %2451 = vst [vmem:[%s2 + $0x130] sm:$0xff] %v2195
  %2452 = vst [vmem:[%s2 + $0x138] sm:$0xff] %v2196
  %2453 = vst [vmem:[%s2 + $0x140] sm:$0xff] %v2197
  %2454 = vst [vmem:[%s2 + $0x148] sm:$0xff] %v2198
  %2455 = vst [vmem:[%s2 + $0x150] sm:$0xff] %v2199
  %2456 = vst [vmem:[%s2 + $0x158] sm:$0xff] %v2200
  %2457 = vst [vmem:[%s2 + $0x160] sm:$0xff] %v2201
  %2458 = vst [vmem:[%s2 + $0x168] sm:$0xff] %v2202
  %2459 = vst [vmem:[%s2 + $0x170] sm:$0xff] %v2203
  %2460 = vst [vmem:[%s2 + $0x178] sm:$0xff] %v2204
  %2461 = vst [vmem:[%s2 + $0x180] sm:$0xff] %v2205
  %2462 = vst [vmem:[%s2 + $0x188] sm:$0xff] %v2206
  %2463 = vst [vmem:[%s2 + $0x190] sm:$0xff] %v2207
  %2464 = vst [vmem:[%s2 + $0x198] sm:$0xff] %v2208
  %2465 = vst [vmem:[%s2 + $0x1a0] sm:$0xff] %v2209
  %2466 = vst [vmem:[%s2 + $0x1a8] sm:$0xff] %v2210
  %2467 = vst [vmem:[%s2 + $0x1b0] sm:$0xff] %v2211
  %2468 = vst [vmem:[%s2 + $0x1b8] sm:$0xff] %v2212
  %2469 = vst [vmem:[%s2 + $0x1c0] sm:$0xff] %v2213
  %2470 = vst [vmem:[%s2 + $0x1c8] sm:$0xff] %v2214
  %2471 = vst [vmem:[%s2 + $0x1d0] sm:$0xff] %v2215
  %2472 = vst [vmem:[%s2 + $0x1d8] sm:$0xff] %v2216
  %2473 = vst [vmem:[%s2 + $0x1e0] sm:$0xff] %v2217
  %2474 = vst [vmem:[%s2 + $0x1e8] sm:$0xff] %v2218
  %2475 = vst [vmem:[%s2 + $0x1f0] sm:$0xff] %v2219
  %2476 = vst [vmem:[%s2 + $0x1f8] sm:$0xff] %v2220
  %2477 = vst [vmem:[%s2 + $0x200] sm:$0xff] %v2221
  %2478 = vst [vmem:[%s2 + $0x208] sm:$0xff] %v2222
  %2479 = vst [vmem:[%s2 + $0x210] sm:$0xff] %v2223
  %2480 = vst [vmem:[%s2 + $0x218] sm:$0xff] %v2224
  %2481 = vst [vmem:[%s2 + $0x220] sm:$0xff] %v2225
  %2482 = vst [vmem:[%s2 + $0x228] sm:$0xff] %v2226
  %2483 = vst [vmem:[%s2 + $0x230] sm:$0xff] %v2227
  %2484 = vst [vmem:[%s2 + $0x238] sm:$0xff] %v2228
  %2485 = vst [vmem:[%s2 + $0x240] sm:$0xff] %v2229
  %2486 = vst [vmem:[%s2 + $0x248] sm:$0xff] %v2230
  %2487 = vst [vmem:[%s2 + $0x250] sm:$0xff] %v2231
  %2488 = vst [vmem:[%s2 + $0x258] sm:$0xff] %v2232
  %2489 = vst [vmem:[%s2 + $0x260] sm:$0xff] %v2233
  %2490 = vst [vmem:[%s2 + $0x268] sm:$0xff] %v2234
  %2491 = vst [vmem:[%s2 + $0x270] sm:$0xff] %v2235
  %2492 = vst [vmem:[%s2 + $0x278] sm:$0xff] %v2236
  %2493 = vst [vmem:[%s2 + $0x280] sm:$0xff] %v2237
  %2494 = vst [vmem:[%s2 + $0x288] sm:$0xff] %v2238
  %2495 = vst [vmem:[%s2 + $0x290] sm:$0xff] %v2239
  %2496 = vst [vmem:[%s2 + $0x298] sm:$0xff] %v2240
  %2497 = vst [vmem:[%s2 + $0x2a0] sm:$0xff] %v2241
  %2498 = vst [vmem:[%s2 + $0x2a8] sm:$0xff] %v2242
  %2499 = vst [vmem:[%s2 + $0x2b0] sm:$0xff] %v2243
  %2500 = vst [vmem:[%s2 + $0x2b8] sm:$0xff] %v2244
  %2501 = vst [vmem:[%s2 + $0x2c0] sm:$0xff] %v2245
  %2502 = vst [vmem:[%s2 + $0x2c8] sm:$0xff] %v2246
  %2503 = vst [vmem:[%s2 + $0x2d0] sm:$0xff] %v2247
  %2504 = vst [vmem:[%s2 + $0x2d8] sm:$0xff] %v2248
  %2505 = vst [vmem:[%s2 + $0x2e0] sm:$0xff] %v2249
  %2506 = vst [vmem:[%s2 + $0x2e8] sm:$0xff] %v2250
  %2507 = vst [vmem:[%s2 + $0x2f0] sm:$0xff] %v2251
  %2508 = vst [vmem:[%s2 + $0x2f8] sm:$0xff] %v2252
  %2509 = vst [vmem:[%s2 + $0x300] sm:$0xff] %v2253
  %2510 = vst [vmem:[%s2 + $0x308] sm:$0xff] %v2254
  %2511 = vst [vmem:[%s2 + $0x310] sm:$0xff] %v2255
  %2512 = vst [vmem:[%s2 + $0x318] sm:$0xff] %v2256
  %2513 = vst [vmem:[%s2 + $0x320] sm:$0xff] %v2257
  %2514 = vst [vmem:[%s2 + $0x328] sm:$0xff] %v2258
  %2515 = vst [vmem:[%s2 + $0x330] sm:$0xff] %v2259
  %2516 = vst [vmem:[%s2 + $0x338] sm:$0xff] %v2260
  %2517 = vst [vmem:[%s2 + $0x340] sm:$0xff] %v2261
  %2518 = vst [vmem:[%s2 + $0x348] sm:$0xff] %v2262
  %2519 = vst [vmem:[%s2 + $0x350] sm:$0xff] %v2263
  %2520 = vst [vmem:[%s2 + $0x358] sm:$0xff] %v2264
  %2521 = vst [vmem:[%s2 + $0x360] sm:$0xff] %v2265
  %2522 = vst [vmem:[%s2 + $0x368] sm:$0xff] %v2266
  %2523 = vst [vmem:[%s2 + $0x370] sm:$0xff] %v2267
  %2524 = vst [vmem:[%s2 + $0x378] sm:$0xff] %v2268
  %2525 = vst [vmem:[%s2 + $0x380] sm:$0xff] %v2269
  %2526 = vst [vmem:[%s2 + $0x388] sm:$0xff] %v2270
  %2527 = vst [vmem:[%s2 + $0x390] sm:$0xff] %v2271
  %2528 = vst [vmem:[%s2 + $0x398] sm:$0xff] %v2272
  %2529 = vst [vmem:[%s2 + $0x3a0] sm:$0xff] %v2273
  %2530 = vst [vmem:[%s2 + $0x3a8] sm:$0xff] %v2274
  %2531 = vst [vmem:[%s2 + $0x3b0] sm:$0xff] %v2275
  %2532 = vst [vmem:[%s2 + $0x3b8] sm:$0xff] %v2276
  %2533 = vst [vmem:[%s2 + $0x3c0] sm:$0xff] %v2277
  %2534 = vst [vmem:[%s2 + $0x3c8] sm:$0xff] %v2278
  %2535 = vst [vmem:[%s2 + $0x3d0] sm:$0xff] %v2279
  %2536 = vst [vmem:[%s2 + $0x3d8] sm:$0xff] %v2280
  %2537 = vst [vmem:[%s2 + $0x3e0] sm:$0xff] %v2281
  %2538 = vst [vmem:[%s2 + $0x3e8] sm:$0xff] %v2282
  %2539 = vst [vmem:[%s2 + $0x3f0] sm:$0xff] %v2283
  %2540 = vst [vmem:[%s2 + $0x3f8] sm:$0xff] %v2284
  %2541 = vst [vmem:[%s2 + $0x400] sm:$0xff] %v2285
  %2542 = vst [vmem:[%s2 + $0x408] sm:$0xff] %v2286
  %2543 = vst [vmem:[%s2 + $0x410] sm:$0xff] %v2287
  %2544 = vst [vmem:[%s2 + $0x418] sm:$0xff] %v2288
  %2545 = vst [vmem:[%s2 + $0x420] sm:$0xff] %v2289
  %2546 = vst [vmem:[%s2 + $0x428] sm:$0xff] %v2290
  %2547 = vst [vmem:[%s2 + $0x430] sm:$0xff] %v2291
  %2548 = vst [vmem:[%s2 + $0x438] sm:$0xff] %v2292
  %2549 = vst [vmem:[%s2 + $0x440] sm:$0xff] %v2293
  %2550 = vst [vmem:[%s2 + $0x448] sm:$0xff] %v2294
  %2551 = vst [vmem:[%s2 + $0x450] sm:$0xff] %v2295
  %2552 = vst [vmem:[%s2 + $0x458] sm:$0xff] %v2296
  %2553 = vst [vmem:[%s2 + $0x460] sm:$0xff] %v2297
  %2554 = vst [vmem:[%s2 + $0x468] sm:$0xff] %v2298
  %2555 = vst [vmem:[%s2 + $0x470] sm:$0xff] %v2299
  %2556 = vst [vmem:[%s2 + $0x478] sm:$0xff] %v2300
  %2557 = vst [vmem:[%s2 + $0x480] sm:$0xff] %v2301
  %2558 = vst [vmem:[%s2 + $0x488] sm:$0xff] %v2302
  %2559 = vst [vmem:[%s2 + $0x490] sm:$0xff] %v2303
  %2560 = vst [vmem:[%s2 + $0x498] sm:$0xff] %v2304
  %2561 = vst [vmem:[%s2 + $0x4a0] sm:$0xff] %v2305
  %2562 = vst [vmem:[%s2 + $0x4a8] sm:$0xff] %v2306
  %2563 = vst [vmem:[%s2 + $0x4b0] sm:$0xff] %v2307
  %2564 = vst [vmem:[%s2 + $0x4b8] sm:$0xff] %v2308
  %2565 = vst [vmem:[%s2 + $0x4c0] sm:$0xff] %v2309
  %2566 = vst [vmem:[%s2 + $0x4c8] sm:$0xff] %v2310
  %2567 = vst [vmem:[%s2 + $0x4d0] sm:$0xff] %v2311
  %2568 = vst [vmem:[%s2 + $0x4d8] sm:$0xff] %v2312
  %2569 = vst [vmem:[%s2 + $0x4e0] sm:$0xff] %v2313
  %2570 = vst [vmem:[%s2 + $0x4e8] sm:$0xff] %v2314
  %2571 = vst [vmem:[%s2 + $0x4f0] sm:$0xff] %v2315
  %2572 = vst [vmem:[%s2 + $0x4f8] sm:$0xff] %v2316
  %2573 = vst [vmem:[%s2 + $0x500] sm:$0xff] %v2317
  %2574 = vst [vmem:[%s2 + $0x508] sm:$0xff] %v2318
  %2575 = vst [vmem:[%s2 + $0x510] sm:$0xff] %v2319
  %2576 = vst [vmem:[%s2 + $0x518] sm:$0xff] %v2320
  %2577 = vst [vmem:[%s2 + $0x520] sm:$0xff] %v2321
  %2578 = vst [vmem:[%s2 + $0x528] sm:$0xff] %v2322
  %2579 = vst [vmem:[%s2 + $0x530] sm:$0xff] %v2323
  %2580 = vst [vmem:[%s2 + $0x538] sm:$0xff] %v2324
  %2581 = vst [vmem:[%s2 + $0x540] sm:$0xff] %v2325
  %2582 = vst [vmem:[%s2 + $0x548] sm:$0xff] %v2326
  %2583 = vst [vmem:[%s2 + $0x550] sm:$0xff] %v2327
  %2584 = vst [vmem:[%s2 + $0x558] sm:$0xff] %v2328
  %2585 = vst [vmem:[%s2 + $0x560] sm:$0xff] %v2329
  %2586 = vst [vmem:[%s2 + $0x568] sm:$0xff] %v2330
  %2587 = vst [vmem:[%s2 + $0x570] sm:$0xff] %v2331
  %2588 = vst [vmem:[%s2 + $0x578] sm:$0xff] %v2332
  %2589 = vst [vmem:[%s2 + $0x580] sm:$0xff] %v2333
  %2590 = vst [vmem:[%s2 + $0x588] sm:$0xff] %v2334
  %2591 = vst [vmem:[%s2 + $0x590] sm:$0xff] %v2335
  %2592 = vst [vmem:[%s2 + $0x598] sm:$0xff] %v2336
  %2593 = vst [vmem:[%s2 + $0x5a0] sm:$0xff] %v2337
  %2594 = vst [vmem:[%s2 + $0x5a8] sm:$0xff] %v2338
  %2595 = vst [vmem:[%s2 + $0x5b0] sm:$0xff] %v2339
  %2596 = vst [vmem:[%s2 + $0x5b8] sm:$0xff] %v2340
  %2597 = vst [vmem:[%s2 + $0x5c0] sm:$0xff] %v2341
  %2598 = vst [vmem:[%s2 + $0x5c8] sm:$0xff] %v2342
  %2599 = vst [vmem:[%s2 + $0x5d0] sm:$0xff] %v2343
  %2600 = vst [vmem:[%s2 + $0x5d8] sm:$0xff] %v2344
  %2601 = vst [vmem:[%s2 + $0x5e0] sm:$0xff] %v2345
  %2602 = vst [vmem:[%s2 + $0x5e8] sm:$0xff] %v2346
  %2603 = vst [vmem:[%s2 + $0x5f0] sm:$0xff] %v2347
  %2604 = vst [vmem:[%s2 + $0x5f8] sm:$0xff] %v2348
  %2605 = vst [vmem:[%s2 + $0x600] sm:$0xff] %v2349
  %2606 = vst [vmem:[%s2 + $0x608] sm:$0xff] %v2350
  %2607 = vst [vmem:[%s2 + $0x610] sm:$0xff] %v2351
  %2608 = vst [vmem:[%s2 + $0x618] sm:$0xff] %v2352
  %2609 = vst [vmem:[%s2 + $0x620] sm:$0xff] %v2353
  %2610 = vst [vmem:[%s2 + $0x628] sm:$0xff] %v2354
  %2611 = vst [vmem:[%s2 + $0x630] sm:$0xff] %v2355
  %2612 = vst [vmem:[%s2 + $0x638] sm:$0xff] %v2356
  %2613 = vst [vmem:[%s2 + $0x640] sm:$0xff] %v2357
  %2614 = vst [vmem:[%s2 + $0x648] sm:$0xff] %v2358
  %2615 = vst [vmem:[%s2 + $0x650] sm:$0xff] %v2359
  %2616 = vst [vmem:[%s2 + $0x658] sm:$0xff] %v2360
  %2617 = vst [vmem:[%s2 + $0x660] sm:$0xff] %v2361
  %2618 = vst [vmem:[%s2 + $0x668] sm:$0xff] %v2362
  %2619 = vst [vmem:[%s2 + $0x670] sm:$0xff] %v2363
  %2620 = vst [vmem:[%s2 + $0x678] sm:$0xff] %v2364
  %2621 = vst [vmem:[%s2 + $0x680] sm:$0xff] %v2365
  %2622 = vst [vmem:[%s2 + $0x688] sm:$0xff] %v2366
  %2623 = vst [vmem:[%s2 + $0x690] sm:$0xff] %v2367
  %2624 = vst [vmem:[%s2 + $0x698] sm:$0xff] %v2368
  %2625 = vst [vmem:[%s2 + $0x6a0] sm:$0xff] %v2369
  %2626 = vst [vmem:[%s2 + $0x6a8] sm:$0xff] %v2370
  %2627 = vst [vmem:[%s2 + $0x6b0] sm:$0xff] %v2371
  %2628 = vst [vmem:[%s2 + $0x6b8] sm:$0xff] %v2372
  %2629 = vst [vmem:[%s2 + $0x6c0] sm:$0xff] %v2373
  %2630 = vst [vmem:[%s2 + $0x6c8] sm:$0xff] %v2374
  %2631 = vst [vmem:[%s2 + $0x6d0] sm:$0xff] %v2375
  %2632 = vst [vmem:[%s2 + $0x6d8] sm:$0xff] %v2376
  %2633 = vst [vmem:[%s2 + $0x6e0] sm:$0xff] %v2377
  %2634 = vst [vmem:[%s2 + $0x6e8] sm:$0xff] %v2378
  %2635 = vst [vmem:[%s2 + $0x6f0] sm:$0xff] %v2379
  %2636 = vst [vmem:[%s2 + $0x6f8] sm:$0xff] %v2380
  %2637 = vst [vmem:[%s2 + $0x700] sm:$0xff] %v2381
  %2638 = vst [vmem:[%s2 + $0x708] sm:$0xff] %v2382
  %2639 = vst [vmem:[%s2 + $0x710] sm:$0xff] %v2383
  %2640 = vst [vmem:[%s2 + $0x718] sm:$0xff] %v2384
  %2641 = vst [vmem:[%s2 + $0x720] sm:$0xff] %v2385
  %2642 = vst [vmem:[%s2 + $0x728] sm:$0xff] %v2386
  %2643 = vst [vmem:[%s2 + $0x730] sm:$0xff] %v2387
  %2644 = vst [vmem:[%s2 + $0x738] sm:$0xff] %v2388
  %2645 = vst [vmem:[%s2 + $0x740] sm:$0xff] %v2389
  %2646 = vst [vmem:[%s2 + $0x748] sm:$0xff] %v2390
  %2647 = vst [vmem:[%s2 + $0x750] sm:$0xff] %v2391
  %2648 = vst [vmem:[%s2 + $0x758] sm:$0xff] %v2392
  %2649 = vst [vmem:[%s2 + $0x760] sm:$0xff] %v2393
  %2650 = vst [vmem:[%s2 + $0x768] sm:$0xff] %v2394
  %2651 = vst [vmem:[%s2 + $0x770] sm:$0xff] %v2395
  %2652 = vst [vmem:[%s2 + $0x778] sm:$0xff] %v2396
  %2653 = vst [vmem:[%s2 + $0x780] sm:$0xff] %v2397
  %2654 = vst [vmem:[%s2 + $0x788] sm:$0xff] %v2398
  %2655 = vst [vmem:[%s2 + $0x790] sm:$0xff] %v2399
  %2656 = vst [vmem:[%s2 + $0x798] sm:$0xff] %v2400
  %2657 = vst [vmem:[%s2 + $0x7a0] sm:$0xff] %v2401
  %2658 = vst [vmem:[%s2 + $0x7a8] sm:$0xff] %v2402
  %2659 = vst [vmem:[%s2 + $0x7b0] sm:$0xff] %v2403
  %2660 = vst [vmem:[%s2 + $0x7b8] sm:$0xff] %v2404
  %2661 = vst [vmem:[%s2 + $0x7c0] sm:$0xff] %v2405
  %2662 = vst [vmem:[%s2 + $0x7c8] sm:$0xff] %v2406
  %2663 = vst [vmem:[%s2 + $0x7d0] sm:$0xff] %v2407
  %2664 = vst [vmem:[%s2 + $0x7d8] sm:$0xff] %v2408
  %2665 = vst [vmem:[%s2 + $0x7e0] sm:$0xff] %v2409
  %2666 = vst [vmem:[%s2 + $0x7e8] sm:$0xff] %v2410
  %2667 = vst [vmem:[%s2 + $0x7f0] sm:$0xff] %v2411
  %2668 = vst [vmem:[%s2 + $0x7f8] sm:$0xff] %v2412
  // Predicated region
  $region10: #{generator_forward.9} parent=0 // pred_check
    _
  $region11: #{generator_forward.9} parent=0 // pred_check_branch
    %2670 = sbr.rel (0) target = $region13
  $region12: #{generator_forward.9} parent=0 // pred_region
    _
  $region13: #{generator_forward.9} parent=0 // pred_fallthru
    _
  // Predicated region
  $region14: #{generator_forward.9} parent=0 // pred_check
    _
  $region15: #{generator_forward.9} parent=0 // pred_check_branch
    %2672 = sbr.rel (0) target = $region17
  $region16: #{generator_forward.9} parent=0 // pred_region
    _
  $region17: #{generator_forward.9} parent=0 // pred_fallthru
    _

</llo_original>
